<compile_context>
chip_gen: v7x
topology: tpu7x:2x2x1
jax: 0.10.0
libtpu: 0.0.40
codegen_flags: <defaults>
</compile_context>

<pallas_src>
import functools

import jax
import jax.numpy as jnp
from jax import lax
from jax.experimental import pallas as pl
from jax.experimental.pallas import tpu as pltpu

SELU_ALPHA = 1.6732632423543772
SELU_SCALE = 1.0507009873554805
LN_EPS = 1e-5
BN_EPS = 1e-5
NEG_INF = -1e9

_ND_PER_BLK = 14   # D-wide parameter rows per conformer block
_NFF_PER_BLK = 2   # FF-wide parameter rows per conformer block


# ------------------------------ fused kernel -------------------------------

def _model_kernel(frames_ref, masks_ref, kbias_ref, vec_d_ref, vec_ff_ref,
                  vec_in_ref, ssl_b_ref, ssl_w_ref, ll_w_ref, w_ff_ref,
                  w_d_ref, w_qkv_ref, w_glu_ref, fc5_ref, out_ref,
                  *, n_blocks, heads, kernel_size, dims):
    f32, bf16 = jnp.float32, jnp.bfloat16
    D, FF, INNER = dims
    dh = D // heads
    K = kernel_size
    pad_l = K // 2
    R = kbias_ref.shape[0]              # packed rows = items_per_step * t_pad
    scale = float(dh) ** -0.5
    wd_stride = 2 * FF + D + INNER      # rows per block inside w_d

    def vrow(ref, r):                   # one parameter row -> (1, width)
        return ref[r:r + 1, :]

    def mm(x, w, b=None):               # bf16 operands, f32 accumulation (MXU)
        y = jnp.dot(x.astype(bf16), w, preferred_element_type=f32)
        return y if b is None else y + b

    def ln(x, g, b):
        mu = jnp.mean(x, axis=-1, keepdims=True)
        var = jnp.mean(jnp.square(x - mu), axis=-1, keepdims=True)
        return (x - mu) * lax.rsqrt(var + LN_EPS) * g + b

    def swish(y):
        return y * jax.nn.sigmoid(y)

    cls_mask = masks_ref[:, 0:1]        # (R,1) 1.0 at class-token rows
    frame_mask = masks_ref[:, 1:2]      # (R,1) 1.0 at real frame rows
    kbias = kbias_ref[...]              # (R,R) block-diag key-padding bias

    # ---- frontend: SSL proxy -> LL (first_bn folded in) -> SELU ------------
    # TODO(synk): the real SSLModel is a pretrained wav2vec2-XLSR checkpoint;
    # replaced by a deterministic framing + linear projection proxy.
    frames = frames_ref[0]                                    # (R, F)
    feat = mm(frames, ssl_w_ref[...], ssl_b_ref[...])         # (R, 1024)
    h = mm(feat, ll_w_ref[...], vrow(vec_d_ref, 0))           # (R, D)
    h = SELU_SCALE * jnp.where(h > 0, h, SELU_ALPHA * (jnp.exp(h) - 1.0))

    # residual stream: class-token rows + masked frame rows (pad rows -> 0)
    x = cls_mask * vrow(vec_d_ref, 1) + frame_mask * h

    for bi in range(n_blocks):
        vd = 2 + bi * _ND_PER_BLK
        vf = bi * _NFF_PER_BLK
        vi = bi * (3 + K)
        wf = bi * (2 * D)
        wd = bi * wd_stride
        wq = bi * D
        wg = bi * (2 * D)

        # vec_d rows: 0 ff1_g 1 ff1_b 2 ff1_b2 3 at_g 4 at_b 5 bo
        #             6 cv_g 7 cv_b 8 pw2_b 9 ff2_g 10 ff2_b 11 ff2_b2
        #             12 post_ln_g 13 post_ln_b

        # ---- FF1 (half-step residual) ----
        t = ln(x, vrow(vec_d_ref, vd + 0), vrow(vec_d_ref, vd + 1))
        t = swish(mm(t, w_ff_ref[wf:wf + D, :], vrow(vec_ff_ref, vf + 0)))
        x = x + 0.5 * mm(t, w_d_ref[wd:wd + FF, :], vrow(vec_d_ref, vd + 2))

        # ---- multi-head self-attention (fused QKV, single bf16 cast) ----
        xn = ln(x, vrow(vec_d_ref, vd + 3), vrow(vec_d_ref, vd + 4))
        qkv = mm(xn, w_qkv_ref[wq:wq + D, :]).astype(bf16)    # (R, 3D) bf16
        o_heads = []
        for hd in range(heads):
            qh = qkv[:, hd * dh:(hd + 1) * dh]
            kh = qkv[:, D + hd * dh:D + (hd + 1) * dh]
            vh = qkv[:, 2 * D + hd * dh:2 * D + (hd + 1) * dh]
            s = lax.dot_general(qh, kh, (((1,), (1,)), ((), ())),
                                preferred_element_type=f32) * scale + kbias
            s = s - jnp.max(s, axis=-1, keepdims=True)
            pe = jnp.exp(s)
            p = (pe / jnp.sum(pe, axis=-1, keepdims=True)).astype(bf16)
            o_heads.append(
                jnp.dot(p, vh, preferred_element_type=f32).astype(bf16))
        # TODO(synk): lucidrains Attention also adds a Shaw-style relative
        # positional bias (nn.Embedding(2*512+1, dim_head)); omitted here.
        wo_base = wd + FF
        attn_out = vrow(vec_d_ref, vd + 5)                    # bo
        for hd in range(heads):                               # adjacent dots
            attn_out = attn_out + jnp.dot(
                o_heads[hd],
                w_d_ref[wo_base + hd * dh:wo_base + (hd + 1) * dh, :],
                preferred_element_type=f32)
        x = x + attn_out

        # ---- conv module: pw1+GLU, depthwise via roll+mask (BN folded), pw2 ----
        cn = ln(x, vrow(vec_d_ref, vd + 6), vrow(vec_d_ref, vd + 7))
        g = (mm(cn, w_glu_ref[wg:wg + D, :], vrow(vec_in_ref, vi + 0))
             * jax.nn.sigmoid(mm(cn, w_glu_ref[wg + D:wg + 2 * D, :],
                                 vrow(vec_in_ref, vi + 1))))  # (R, INNER) f32
        acc = None
        for k in range(K):
            d = k - pad_l
            # rolled[t] = g[t + d]  (jnp.roll convention); invalid rows masked
            rolled = g if d == 0 else pltpu.roll(g, shift=(-d) % R, axis=0)
            tap = (rolled * masks_ref[:, 2 + k:3 + k]
                   * vrow(vec_in_ref, vi + 3 + k))
            acc = tap if acc is None else acc + tap
        acc = acc + vrow(vec_in_ref, vi + 2)                  # dw bias (BN folded)
        pw2 = w_d_ref[wd + FF + D:wd + FF + D + INNER, :]
        x = x + mm(swish(acc), pw2, vrow(vec_d_ref, vd + 8))

        # ---- FF2 (half-step residual) + post-LN ----
        t = ln(x, vrow(vec_d_ref, vd + 9), vrow(vec_d_ref, vd + 10))
        t = swish(mm(t, w_ff_ref[wf + D:wf + 2 * D, :],
                     vrow(vec_ff_ref, vf + 1)))
        x = x + 0.5 * mm(t, w_d_ref[wd + FF + D + INNER:wd + wd_stride, :],
                         vrow(vec_d_ref, vd + 11))
        x = ln(x, vrow(vec_d_ref, vd + 12), vrow(vec_d_ref, vd + 13))

    # ---- classifier head: fc5 on every row; class rows selected on host ----
    logits = mm(x, fc5_ref[0:D, :].astype(bf16), vrow(fc5_ref, D))
    out_ref[0] = logits


# ------------------------------ python wrapper ------------------------------

def _const_spec(arr):
    nd = arr.ndim
    return pl.BlockSpec(arr.shape, lambda s, _nd=nd: (0,) * _nd)


def model_forward(x, params, cfg):
    """x: (B, L, 1) raw audio -> (B, 2) logits."""
    B = x.shape[0]
    T, F = cfg["frames"], cfg["frame_len"]
    D = cfg["emb_size"]
    heads = cfg["heads"]
    K = cfg["kernel_size"]
    FF = cfg["ff_mult"] * D
    INNER = cfg["exp_fac"] * D
    n_blocks = len(params["blocks"])
    pad_l = K // 2

    t_real = T + 1                       # class token + T frames
    t_pad = -(-t_real // 8) * 8          # round up to a multiple of 8 sublanes

    # batch packing: as many items per grid step as fit in <=256 matmul rows,
    # preferring >=2 grid steps so both v7x TensorCores have work.
    divs = [d for d in range(1, B + 1) if B % d == 0 and d * t_pad <= 256] or [1]
    two = [d for d in divs if B // d >= 2]
    bp = max(two) if two else max(divs)
    n_steps = B // bp
    R = bp * t_pad                       # packed rows per grid step

    f32, bf16 = jnp.float32, jnp.bfloat16

    def r1(v):
        return jnp.asarray(v, f32).reshape(1, -1)

    # ---- frames, packed bp items per grid step along the row axis ----
    wav = x[..., 0]                                      # x.squeeze(-1)
    frames = wav.reshape(B, T, F)
    # row 0 of every item reserved for the class token, tail rows zero padding
    frames_p = jnp.pad(frames, ((0, 0), (1, t_pad - t_real), (0, 0)))
    frames_packed = frames_p.reshape(n_steps, R, F).astype(f32)

    # ---- precomputed masks (host side) ----
    rows = jnp.arange(R)
    r_in = rows % t_pad                                  # row within item
    item = rows // t_pad
    cls_m = (r_in == 0).astype(f32)
    frm_m = ((r_in >= 1) & (r_in < t_real)).astype(f32)
    conv_cols = []
    for k in range(K):
        src = r_in + (k - pad_l)
        conv_cols.append(((src >= 0) & (src < t_real)).astype(f32))
    masks = jnp.stack([cls_m, frm_m] + conv_cols, axis=1)          # (R, 2+K)
    kbias = jnp.where((item[:, None] == item[None, :])
                      & (r_in < t_real)[None, :],
                      0.0, NEG_INF).astype(f32)                    # (R, R)

    # ---- fold BatchNorm2d(1) (eval, scalar stats) into LL -- exact ----
    g0, b0, m0, v0 = params["first_bn"]
    s0 = g0 / jnp.sqrt(v0 + BN_EPS)
    ll_w = (params["ll_w"] * s0).astype(bf16)
    ll_b = params["ll_b"] * s0 + (b0 - m0 * s0)

    # ---- packed parameter arrays (consolidated DMAs, fetched once) ----
    vec_d_rows = [r1(ll_b), r1(params["class_token"])]
    vec_ff_rows, vec_in_rows = [], []
    w_ff_p, w_d_p, w_qkv_p, w_glu_p = [], [], [], []

    for blk in params["blocks"]:
        ff1, at, cv, ff2 = blk["ff1"], blk["attn"], blk["conv"], blk["ff2"]
        # fold BatchNorm1d (eval) into the depthwise conv -- exact.
        bn_g, bn_b, bn_m, bn_v = cv["bn"]
        bns = bn_g / jnp.sqrt(bn_v + BN_EPS)
        dw_w_f = cv["dw_w"] * bns[None, :]
        dw_b_f = cv["dw_b"] * bns + (bn_b - bn_m * bns)

        vec_d_rows += [r1(ff1["ln_g"]), r1(ff1["ln_b"]), r1(ff1["b2"]),
                       r1(at["ln_g"]), r1(at["ln_b"]), r1(at["bo"]),
                       r1(cv["ln_g"]), r1(cv["ln_b"]), r1(cv["pw2_b"]),
                       r1(ff2["ln_g"]), r1(ff2["ln_b"]), r1(ff2["b2"]),
                       r1(blk["post_ln_g"]), r1(blk["post_ln_b"])]
        vec_ff_rows += [r1(ff1["b1"]), r1(ff2["b1"])]
        vec_in_rows += [r1(cv["pw1_ba"]), r1(cv["pw1_bb"]), r1(dw_b_f),
                        jnp.asarray(dw_w_f, f32)]                  # (K, INNER)
        w_ff_p += [ff1["w1"], ff2["w1"]]
        w_d_p += [ff1["w2"], at["wo"], cv["pw2_w"], ff2["w2"]]
        w_qkv_p += [at["wqkv"]]
        w_glu_p += [cv["pw1_wa"], cv["pw1_wb"]]

    vec_d = jnp.concatenate(vec_d_rows, axis=0)
    vec_ff = jnp.concatenate(vec_ff_rows, axis=0)
    vec_in = jnp.concatenate(vec_in_rows, axis=0)
    w_ff = jnp.concatenate(w_ff_p, axis=0).astype(bf16)
    w_d = jnp.concatenate(w_d_p, axis=0).astype(bf16)
    w_qkv = jnp.concatenate(w_qkv_p, axis=0).astype(bf16)
    w_glu = jnp.concatenate(w_glu_p, axis=0).astype(bf16)
    fc5 = jnp.concatenate([params["fc5_w"],
                           params["fc5_b"].reshape(1, -1)], axis=0).astype(f32)

    flat = [frames_packed, masks, kbias, vec_d, vec_ff, vec_in,
            r1(params["ssl_b"]), params["ssl_w"].astype(bf16), ll_w,
            w_ff, w_d, w_qkv, w_glu, fc5]

    in_specs = [pl.BlockSpec((1, R, F), lambda s: (s, 0, 0))]
    in_specs += [_const_spec(a) for a in flat[1:]]

    out = pl.pallas_call(
        functools.partial(_model_kernel, n_blocks=n_blocks, heads=heads,
                          kernel_size=K, dims=(D, FF, INNER)),
        grid=(n_steps,),
        in_specs=in_specs,
        out_specs=pl.BlockSpec((1, R, 2), lambda s: (s, 0, 0)),
        out_shape=jax.ShapeDtypeStruct((n_steps, R, 2), jnp.float32),
        compiler_params=pltpu.CompilerParams(
            dimension_semantics=("parallel",)),   # batch steps across TCs
    )(*flat)
    # row 0 of every packed item carries the class-token logits
    return out.reshape(B, t_pad, 2)[:, 0, :]


# --------------------------- deterministic init -----------------------------

def init_params(key, cfg):
    D = cfg["emb_size"]
    FF = cfg["ff_mult"] * D
    inner = cfg["exp_fac"] * D
    K = cfg["kernel_size"]
    F = cfg["frame_len"]
    SSL = 1024
    keys = iter(jax.random.split(key, 256))

    def w(shape, scale=0.02):
        return (scale * jax.random.normal(next(keys), shape)).astype(jnp.float32)

    zeros = lambda s: jnp.zeros(s, jnp.float32)
    ones = lambda s: jnp.ones(s, jnp.float32)

    def ff_params():
        return dict(ln_g=ones((D,)), ln_b=zeros((D,)),
                    w1=w((D, FF)), b1=zeros((FF,)),
                    w2=w((FF, D)), b2=zeros((D,)))

    def block_params():
        return dict(
            ff1=ff_params(),
            attn=dict(ln_g=ones((D,)), ln_b=zeros((D,)),
                      wqkv=w((D, 3 * D)),            # fused to_q / to_kv
                      wo=w((D, D)), bo=zeros((D,))),
            conv=dict(ln_g=ones((D,)), ln_b=zeros((D,)),
                      pw1_wa=w((D, inner)), pw1_ba=zeros((inner,)),  # GLU value
                      pw1_wb=w((D, inner)), pw1_bb=zeros((inner,)),  # GLU gate
                      dw_w=w((K, inner)), dw_b=zeros((inner,)),
                      # rows: gamma, beta, running_mean, running_var (eval BN1d)
                      bn=jnp.stack([ones((inner,)), zeros((inner,)),
                                    zeros((inner,)), ones((inner,))]),
                      pw2_w=w((inner, D)), pw2_b=zeros((D,))),
            ff2=ff_params(),
            post_ln_g=ones((D,)), post_ln_b=zeros((D,)),
        )

    return dict(
        ssl_w=w((F, SSL)), ssl_b=zeros((SSL,)),
        ll_w=w((SSL, D)), ll_b=zeros((D,)),
        # gamma, beta, running_mean, running_var for BatchNorm2d(1), eval mode
        first_bn=jnp.array([1.0, 0.0, 0.0, 1.0], jnp.float32),
        class_token=jax.random.uniform(next(keys), (D,), jnp.float32),
        blocks=[block_params() for _ in range(cfg["n_encoders"])],
        fc5_w=w((D, 2)), fc5_b=zeros((2,)),
    )


# --------------------------------- main -------------------------------------

if __name__ == "__main__":
    cfg = dict(emb_size=32, heads=4, ff_mult=4, exp_fac=2, kernel_size=7,
               n_encoders=2, frames=8, frame_len=160)
    params = init_params(jax.random.PRNGKey(1), cfg)

    B = 4
    L = cfg["frames"] * cfg["frame_len"]
    x = jax.random.normal(jax.random.PRNGKey(0), (B, L, 1), jnp.float32)

    fwd = jax.jit(lambda inp: model_forward(inp, params, cfg))
    out = jax.block_until_ready(fwd(x))

    assert out.shape == (B, 2), out.shape
    assert bool(jnp.all(jnp.isfinite(out)))
    print("KERNEL_OK")
</pallas_src>

<mosaic_0001>
module attributes {stable_mosaic.version = 11 : i64} {
  func.func @_model_kernel(%arg0: i32, %arg1: memref<1x32x160xf32, #tpu.memory_space<vmem>>, %arg2: memref<32x9xf32, #tpu.memory_space<vmem>>, %arg3: memref<32x32xf32, #tpu.memory_space<vmem>>, %arg4: memref<30x32xf32, #tpu.memory_space<vmem>>, %arg5: memref<4x128xf32, #tpu.memory_space<vmem>>, %arg6: memref<20x64xf32, #tpu.memory_space<vmem>>, %arg7: memref<1x1024xf32, #tpu.memory_space<vmem>>, %arg8: memref<160x1024xbf16, #tpu.memory_space<vmem>>, %arg9: memref<1024x32xbf16, #tpu.memory_space<vmem>>, %arg10: memref<128x128xbf16, #tpu.memory_space<vmem>>, %arg11: memref<704x32xbf16, #tpu.memory_space<vmem>>, %arg12: memref<64x96xbf16, #tpu.memory_space<vmem>>, %arg13: memref<128x64xbf16, #tpu.memory_space<vmem>>, %arg14: memref<33x2xf32, #tpu.memory_space<vmem>>, %arg15: memref<1x32x2xf32, #tpu.memory_space<vmem>>) attributes {dimension_semantics = [#tpu.dimension_semantics<parallel>], iteration_bounds = array<i64: 2>, scalar_prefetch = 0 : i64, scratch_operands = 0 : i64, tpu.core_type = #tpu.core_type<tc>, window_params = [{transform_indices = @transform_0, window_bounds = array<i64: 1, 32, 160>}, {pipeline_mode = #tpu.pipeline_mode<synchronous>, transform_indices = @transform_1, window_bounds = array<i64: 32, 9>}, {pipeline_mode = #tpu.pipeline_mode<synchronous>, transform_indices = @transform_2, window_bounds = array<i64: 32, 32>}, {pipeline_mode = #tpu.pipeline_mode<synchronous>, transform_indices = @transform_3, window_bounds = array<i64: 30, 32>}, {pipeline_mode = #tpu.pipeline_mode<synchronous>, transform_indices = @transform_4, window_bounds = array<i64: 4, 128>}, {pipeline_mode = #tpu.pipeline_mode<synchronous>, transform_indices = @transform_5, window_bounds = array<i64: 20, 64>}, {pipeline_mode = #tpu.pipeline_mode<synchronous>, transform_indices = @transform_6, window_bounds = array<i64: 1, 1024>}, {pipeline_mode = #tpu.pipeline_mode<synchronous>, transform_indices = @transform_7, window_bounds = array<i64: 160, 1024>}, {pipeline_mode = #tpu.pipeline_mode<synchronous>, transform_indices = @transform_8, window_bounds = array<i64: 1024, 32>}, {pipeline_mode = #tpu.pipeline_mode<synchronous>, transform_indices = @transform_9, window_bounds = array<i64: 128, 128>}, {pipeline_mode = #tpu.pipeline_mode<synchronous>, transform_indices = @transform_10, window_bounds = array<i64: 704, 32>}, {pipeline_mode = #tpu.pipeline_mode<synchronous>, transform_indices = @transform_11, window_bounds = array<i64: 64, 96>}, {pipeline_mode = #tpu.pipeline_mode<synchronous>, transform_indices = @transform_12, window_bounds = array<i64: 128, 64>}, {pipeline_mode = #tpu.pipeline_mode<synchronous>, transform_indices = @transform_13, window_bounds = array<i64: 33, 2>}, {transform_indices = @transform_14, window_bounds = array<i64: 1, 32, 2>}]} {
    %c0 = arith.constant 0 : index
    %c0_0 = arith.constant 0 : index
    %0 = vector.load %arg2[%c0, %c0_0] : memref<32x9xf32, #tpu.memory_space<vmem>>, vector<32x1xf32>
    %c0_1 = arith.constant 0 : index
    %c1 = arith.constant 1 : index
    %1 = vector.load %arg2[%c0_1, %c1] : memref<32x9xf32, #tpu.memory_space<vmem>>, vector<32x1xf32>
    %c0_2 = arith.constant 0 : index
    %c0_3 = arith.constant 0 : index
    %2 = vector.load %arg3[%c0_2, %c0_3] : memref<32x32xf32, #tpu.memory_space<vmem>>, vector<32x32xf32>
    %c0_4 = arith.constant 0 : index
    %c0_5 = arith.constant 0 : index
    %c0_6 = arith.constant 0 : index
    %3 = vector.load %arg1[%c0_4, %c0_5, %c0_6] : memref<1x32x160xf32, #tpu.memory_space<vmem>>, vector<1x32x160xf32>
    %4 = vector.shape_cast %3 : vector<1x32x160xf32> to vector<32x160xf32>
    %c0_7 = arith.constant 0 : index
    %c0_8 = arith.constant 0 : index
    %5 = vector.load %arg8[%c0_7, %c0_8] : memref<160x1024xbf16, #tpu.memory_space<vmem>>, vector<160x1024xbf16>
    %c0_9 = arith.constant 0 : index
    %c0_10 = arith.constant 0 : index
    %6 = vector.load %arg7[%c0_9, %c0_10] : memref<1x1024xf32, #tpu.memory_space<vmem>>, vector<1x1024xf32>
    %7 = arith.truncf %4 : vector<32x160xf32> to vector<32x160xbf16>
    %cst = arith.constant dense<0.000000e+00> : vector<32x1024xf32>
    %8 = tpu.matmul %7, %5, %cst {dimension_numbers = #tpu.dot_dimension_numbers<[1], [0], [0], [1], [0, 0, 1, 1], [], []>} : vector<32x160xbf16>, vector<160x1024xbf16>, vector<32x1024xf32> -> vector<32x1024xf32>
    %9 = vector.broadcast %6 : vector<1x1024xf32> to vector<32x1024xf32>
    %10 = arith.addf %8, %9 : vector<32x1024xf32>
    %c0_11 = arith.constant 0 : index
    %c0_12 = arith.constant 0 : index
    %11 = vector.load %arg9[%c0_11, %c0_12] : memref<1024x32xbf16, #tpu.memory_space<vmem>>, vector<1024x32xbf16>
    %c0_13 = arith.constant 0 : index
    %c0_14 = arith.constant 0 : index
    %12 = vector.load %arg4[%c0_13, %c0_14] : memref<30x32xf32, #tpu.memory_space<vmem>>, vector<1x32xf32>
    %13 = arith.truncf %10 : vector<32x1024xf32> to vector<32x1024xbf16>
    %cst_15 = arith.constant dense<0.000000e+00> : vector<32x32xf32>
    %14 = tpu.matmul %13, %11, %cst_15 {dimension_numbers = #tpu.dot_dimension_numbers<[1], [0], [0], [1], [0, 0, 1, 1], [], []>} : vector<32x1024xbf16>, vector<1024x32xbf16>, vector<32x32xf32> -> vector<32x32xf32>
    %15 = vector.broadcast %12 : vector<1x32xf32> to vector<32x32xf32>
    %16 = arith.addf %14, %15 : vector<32x32xf32>
    %cst_16 = arith.constant 0.000000e+00 : f32
    %17 = vector.broadcast %cst_16 : f32 to vector<32x32xf32>
    %18 = arith.cmpf ogt, %16, %17 : vector<32x32xf32>
    %19 = math.exp %16 : vector<32x32xf32>
    %cst_17 = arith.constant 1.000000e+00 : f32
    %20 = vector.broadcast %cst_17 : f32 to vector<32x32xf32>
    %21 = arith.subf %19, %20 : vector<32x32xf32>
    %cst_18 = arith.constant 1.67326319 : f32
    %22 = vector.broadcast %cst_18 : f32 to vector<32x32xf32>
    %23 = arith.mulf %22, %21 : vector<32x32xf32>
    %24 = arith.select %18, %16, %23 : vector<32x32xi1>, vector<32x32xf32>
    %cst_19 = arith.constant 1.05070102 : f32
    %25 = vector.broadcast %cst_19 : f32 to vector<32x32xf32>
    %26 = arith.mulf %25, %24 : vector<32x32xf32>
    %c1_20 = arith.constant 1 : index
    %c0_21 = arith.constant 0 : index
    %27 = vector.load %arg4[%c1_20, %c0_21] : memref<30x32xf32, #tpu.memory_space<vmem>>, vector<1x32xf32>
    %28 = vector.broadcast %0 : vector<32x1xf32> to vector<32x32xf32>
    %29 = vector.broadcast %27 : vector<1x32xf32> to vector<32x32xf32>
    %30 = arith.mulf %28, %29 : vector<32x32xf32>
    %31 = vector.broadcast %1 : vector<32x1xf32> to vector<32x32xf32>
    %32 = arith.mulf %31, %26 : vector<32x32xf32>
    %33 = arith.addf %30, %32 : vector<32x32xf32>
    %c2 = arith.constant 2 : index
    %c0_22 = arith.constant 0 : index
    %34 = vector.load %arg4[%c2, %c0_22] : memref<30x32xf32, #tpu.memory_space<vmem>>, vector<1x32xf32>
    %c3 = arith.constant 3 : index
    %c0_23 = arith.constant 0 : index
    %35 = vector.load %arg4[%c3, %c0_23] : memref<30x32xf32, #tpu.memory_space<vmem>>, vector<1x32xf32>
    %cst_24 = arith.constant dense<0.000000e+00> : vector<32xf32>
    %36 = vector.multi_reduction <add>, %33, %cst_24 [1] : vector<32x32xf32> to vector<32xf32>
    %37 = vector.shape_cast %36 : vector<32xf32> to vector<32x1xf32>
    %cst_25 = arith.constant 3.200000e+01 : f32
    %38 = vector.broadcast %cst_25 : f32 to vector<32x1xf32>
    %39 = arith.divf %37, %38 : vector<32x1xf32>
    %40 = vector.broadcast %39 : vector<32x1xf32> to vector<32x32xf32>
    %41 = arith.subf %33, %40 : vector<32x32xf32>
    %42 = arith.mulf %41, %41 : vector<32x32xf32>
    %cst_26 = arith.constant dense<0.000000e+00> : vector<32xf32>
    %43 = vector.multi_reduction <add>, %42, %cst_26 [1] : vector<32x32xf32> to vector<32xf32>
    %44 = vector.shape_cast %43 : vector<32xf32> to vector<32x1xf32>
    %cst_27 = arith.constant 3.200000e+01 : f32
    %45 = vector.broadcast %cst_27 : f32 to vector<32x1xf32>
    %46 = arith.divf %44, %45 : vector<32x1xf32>
    %47 = vector.broadcast %39 : vector<32x1xf32> to vector<32x32xf32>
    %48 = arith.subf %33, %47 : vector<32x32xf32>
    %cst_28 = arith.constant 9.99999974E-6 : f32
    %49 = vector.broadcast %cst_28 : f32 to vector<32x1xf32>
    %50 = arith.addf %46, %49 : vector<32x1xf32>
    %51 = math.rsqrt %50 : vector<32x1xf32>
    %52 = vector.broadcast %51 : vector<32x1xf32> to vector<32x32xf32>
    %53 = arith.mulf %48, %52 : vector<32x32xf32>
    %54 = vector.broadcast %34 : vector<1x32xf32> to vector<32x32xf32>
    %55 = arith.mulf %53, %54 : vector<32x32xf32>
    %56 = vector.broadcast %35 : vector<1x32xf32> to vector<32x32xf32>
    %57 = arith.addf %55, %56 : vector<32x32xf32>
    %c0_29 = arith.constant 0 : index
    %c0_30 = arith.constant 0 : index
    %58 = vector.load %arg10[%c0_29, %c0_30] : memref<128x128xbf16, #tpu.memory_space<vmem>>, vector<32x128xbf16>
    %c0_31 = arith.constant 0 : index
    %c0_32 = arith.constant 0 : index
    %59 = vector.load %arg5[%c0_31, %c0_32] : memref<4x128xf32, #tpu.memory_space<vmem>>, vector<1x128xf32>
    %60 = arith.truncf %57 : vector<32x32xf32> to vector<32x32xbf16>
    %cst_33 = arith.constant dense<0.000000e+00> : vector<32x128xf32>
    %61 = tpu.matmul %60, %58, %cst_33 {dimension_numbers = #tpu.dot_dimension_numbers<[1], [0], [0], [1], [0, 0, 1, 1], [], []>} : vector<32x32xbf16>, vector<32x128xbf16>, vector<32x128xf32> -> vector<32x128xf32>
    %62 = vector.broadcast %59 : vector<1x128xf32> to vector<32x128xf32>
    %63 = arith.addf %61, %62 : vector<32x128xf32>
    %64 = arith.negf %63 : vector<32x128xf32>
    %65 = math.exp %64 : vector<32x128xf32>
    %cst_34 = arith.constant 1.000000e+00 : f32
    %66 = vector.broadcast %cst_34 : f32 to vector<32x128xf32>
    %67 = arith.addf %66, %65 : vector<32x128xf32>
    %68 = arith.divf %66, %67 : vector<32x128xf32>
    %69 = arith.mulf %63, %68 : vector<32x128xf32>
    %c0_35 = arith.constant 0 : index
    %c0_36 = arith.constant 0 : index
    %70 = vector.load %arg11[%c0_35, %c0_36] : memref<704x32xbf16, #tpu.memory_space<vmem>>, vector<128x32xbf16>
    %c4 = arith.constant 4 : index
    %c0_37 = arith.constant 0 : index
    %71 = vector.load %arg4[%c4, %c0_37] : memref<30x32xf32, #tpu.memory_space<vmem>>, vector<1x32xf32>
    %72 = arith.truncf %69 : vector<32x128xf32> to vector<32x128xbf16>
    %cst_38 = arith.constant dense<0.000000e+00> : vector<32x32xf32>
    %73 = tpu.matmul %72, %70, %cst_38 {dimension_numbers = #tpu.dot_dimension_numbers<[1], [0], [0], [1], [0, 0, 1, 1], [], []>} : vector<32x128xbf16>, vector<128x32xbf16>, vector<32x32xf32> -> vector<32x32xf32>
    %74 = vector.broadcast %71 : vector<1x32xf32> to vector<32x32xf32>
    %75 = arith.addf %73, %74 : vector<32x32xf32>
    %cst_39 = arith.constant 5.000000e-01 : f32
    %76 = vector.broadcast %cst_39 : f32 to vector<32x32xf32>
    %77 = arith.mulf %76, %75 : vector<32x32xf32>
    %78 = arith.addf %33, %77 : vector<32x32xf32>
    %c5 = arith.constant 5 : index
    %c0_40 = arith.constant 0 : index
    %79 = vector.load %arg4[%c5, %c0_40] : memref<30x32xf32, #tpu.memory_space<vmem>>, vector<1x32xf32>
    %c6 = arith.constant 6 : index
    %c0_41 = arith.constant 0 : index
    %80 = vector.load %arg4[%c6, %c0_41] : memref<30x32xf32, #tpu.memory_space<vmem>>, vector<1x32xf32>
    %cst_42 = arith.constant dense<0.000000e+00> : vector<32xf32>
    %81 = vector.multi_reduction <add>, %78, %cst_42 [1] : vector<32x32xf32> to vector<32xf32>
    %82 = vector.shape_cast %81 : vector<32xf32> to vector<32x1xf32>
    %cst_43 = arith.constant 3.200000e+01 : f32
    %83 = vector.broadcast %cst_43 : f32 to vector<32x1xf32>
    %84 = arith.divf %82, %83 : vector<32x1xf32>
    %85 = vector.broadcast %84 : vector<32x1xf32> to vector<32x32xf32>
    %86 = arith.subf %78, %85 : vector<32x32xf32>
    %87 = arith.mulf %86, %86 : vector<32x32xf32>
    %cst_44 = arith.constant dense<0.000000e+00> : vector<32xf32>
    %88 = vector.multi_reduction <add>, %87, %cst_44 [1] : vector<32x32xf32> to vector<32xf32>
    %89 = vector.shape_cast %88 : vector<32xf32> to vector<32x1xf32>
    %cst_45 = arith.constant 3.200000e+01 : f32
    %90 = vector.broadcast %cst_45 : f32 to vector<32x1xf32>
    %91 = arith.divf %89, %90 : vector<32x1xf32>
    %92 = vector.broadcast %84 : vector<32x1xf32> to vector<32x32xf32>
    %93 = arith.subf %78, %92 : vector<32x32xf32>
    %cst_46 = arith.constant 9.99999974E-6 : f32
    %94 = vector.broadcast %cst_46 : f32 to vector<32x1xf32>
    %95 = arith.addf %91, %94 : vector<32x1xf32>
    %96 = math.rsqrt %95 : vector<32x1xf32>
    %97 = vector.broadcast %96 : vector<32x1xf32> to vector<32x32xf32>
    %98 = arith.mulf %93, %97 : vector<32x32xf32>
    %99 = vector.broadcast %79 : vector<1x32xf32> to vector<32x32xf32>
    %100 = arith.mulf %98, %99 : vector<32x32xf32>
    %101 = vector.broadcast %80 : vector<1x32xf32> to vector<32x32xf32>
    %102 = arith.addf %100, %101 : vector<32x32xf32>
    %c0_47 = arith.constant 0 : index
    %c0_48 = arith.constant 0 : index
    %103 = vector.load %arg12[%c0_47, %c0_48] : memref<64x96xbf16, #tpu.memory_space<vmem>>, vector<32x96xbf16>
    %104 = arith.truncf %102 : vector<32x32xf32> to vector<32x32xbf16>
    %cst_49 = arith.constant dense<0.000000e+00> : vector<32x96xf32>
    %105 = tpu.matmul %104, %103, %cst_49 {dimension_numbers = #tpu.dot_dimension_numbers<[1], [0], [0], [1], [0, 0, 1, 1], [], []>} : vector<32x32xbf16>, vector<32x96xbf16>, vector<32x96xf32> -> vector<32x96xf32>
    %106 = arith.truncf %105 : vector<32x96xf32> to vector<32x96xbf16>
    %107 = vector.extract_strided_slice %106 {offsets = [0, 0], sizes = [32, 8], strides = [1, 1]} : vector<32x96xbf16> to vector<32x8xbf16>
    %108 = vector.extract_strided_slice %106 {offsets = [0, 32], sizes = [32, 8], strides = [1, 1]} : vector<32x96xbf16> to vector<32x8xbf16>
    %109 = vector.extract_strided_slice %106 {offsets = [0, 64], sizes = [32, 8], strides = [1, 1]} : vector<32x96xbf16> to vector<32x8xbf16>
    %cst_50 = arith.constant dense<0.000000e+00> : vector<32x32xf32>
    %110 = tpu.matmul %107, %108, %cst_50 {dimension_numbers = #tpu.dot_dimension_numbers<[1], [1], [0], [0], [0, 0, 1, 0], [], []>} : vector<32x8xbf16>, vector<32x8xbf16>, vector<32x32xf32> -> vector<32x32xf32>
    %cst_51 = arith.constant 0.353553385 : f32
    %111 = vector.broadcast %cst_51 : f32 to vector<32x32xf32>
    %112 = arith.mulf %110, %111 : vector<32x32xf32>
    %113 = arith.addf %112, %2 : vector<32x32xf32>
    %cst_52 = arith.constant dense<0xFF800000> : vector<32xf32>
    %114 = vector.multi_reduction <maximumf>, %113, %cst_52 [1] : vector<32x32xf32> to vector<32xf32>
    %115 = vector.shape_cast %114 : vector<32xf32> to vector<32x1xf32>
    %116 = vector.broadcast %115 : vector<32x1xf32> to vector<32x32xf32>
    %117 = arith.subf %113, %116 : vector<32x32xf32>
    %118 = math.exp %117 : vector<32x32xf32>
    %cst_53 = arith.constant dense<0.000000e+00> : vector<32xf32>
    %119 = vector.multi_reduction <add>, %118, %cst_53 [1] : vector<32x32xf32> to vector<32xf32>
    %120 = vector.shape_cast %119 : vector<32xf32> to vector<32x1xf32>
    %121 = vector.broadcast %120 : vector<32x1xf32> to vector<32x32xf32>
    %122 = arith.divf %118, %121 : vector<32x32xf32>
    %123 = arith.truncf %122 : vector<32x32xf32> to vector<32x32xbf16>
    %cst_54 = arith.constant dense<0.000000e+00> : vector<32x8xf32>
    %124 = tpu.matmul %123, %109, %cst_54 {dimension_numbers = #tpu.dot_dimension_numbers<[1], [0], [0], [1], [0, 0, 1, 1], [], []>} : vector<32x32xbf16>, vector<32x8xbf16>, vector<32x8xf32> -> vector<32x8xf32>
    %125 = arith.truncf %124 : vector<32x8xf32> to vector<32x8xbf16>
    %126 = vector.extract_strided_slice %106 {offsets = [0, 8], sizes = [32, 8], strides = [1, 1]} : vector<32x96xbf16> to vector<32x8xbf16>
    %127 = vector.extract_strided_slice %106 {offsets = [0, 40], sizes = [32, 8], strides = [1, 1]} : vector<32x96xbf16> to vector<32x8xbf16>
    %128 = vector.extract_strided_slice %106 {offsets = [0, 72], sizes = [32, 8], strides = [1, 1]} : vector<32x96xbf16> to vector<32x8xbf16>
    %cst_55 = arith.constant dense<0.000000e+00> : vector<32x32xf32>
    %129 = tpu.matmul %126, %127, %cst_55 {dimension_numbers = #tpu.dot_dimension_numbers<[1], [1], [0], [0], [0, 0, 1, 0], [], []>} : vector<32x8xbf16>, vector<32x8xbf16>, vector<32x32xf32> -> vector<32x32xf32>
    %cst_56 = arith.constant 0.353553385 : f32
    %130 = vector.broadcast %cst_56 : f32 to vector<32x32xf32>
    %131 = arith.mulf %129, %130 : vector<32x32xf32>
    %132 = arith.addf %131, %2 : vector<32x32xf32>
    %cst_57 = arith.constant dense<0xFF800000> : vector<32xf32>
    %133 = vector.multi_reduction <maximumf>, %132, %cst_57 [1] : vector<32x32xf32> to vector<32xf32>
    %134 = vector.shape_cast %133 : vector<32xf32> to vector<32x1xf32>
    %135 = vector.broadcast %134 : vector<32x1xf32> to vector<32x32xf32>
    %136 = arith.subf %132, %135 : vector<32x32xf32>
    %137 = math.exp %136 : vector<32x32xf32>
    %cst_58 = arith.constant dense<0.000000e+00> : vector<32xf32>
    %138 = vector.multi_reduction <add>, %137, %cst_58 [1] : vector<32x32xf32> to vector<32xf32>
    %139 = vector.shape_cast %138 : vector<32xf32> to vector<32x1xf32>
    %140 = vector.broadcast %139 : vector<32x1xf32> to vector<32x32xf32>
    %141 = arith.divf %137, %140 : vector<32x32xf32>
    %142 = arith.truncf %141 : vector<32x32xf32> to vector<32x32xbf16>
    %cst_59 = arith.constant dense<0.000000e+00> : vector<32x8xf32>
    %143 = tpu.matmul %142, %128, %cst_59 {dimension_numbers = #tpu.dot_dimension_numbers<[1], [0], [0], [1], [0, 0, 1, 1], [], []>} : vector<32x32xbf16>, vector<32x8xbf16>, vector<32x8xf32> -> vector<32x8xf32>
    %144 = arith.truncf %143 : vector<32x8xf32> to vector<32x8xbf16>
    %145 = vector.extract_strided_slice %106 {offsets = [0, 16], sizes = [32, 8], strides = [1, 1]} : vector<32x96xbf16> to vector<32x8xbf16>
    %146 = vector.extract_strided_slice %106 {offsets = [0, 48], sizes = [32, 8], strides = [1, 1]} : vector<32x96xbf16> to vector<32x8xbf16>
    %147 = vector.extract_strided_slice %106 {offsets = [0, 80], sizes = [32, 8], strides = [1, 1]} : vector<32x96xbf16> to vector<32x8xbf16>
    %cst_60 = arith.constant dense<0.000000e+00> : vector<32x32xf32>
    %148 = tpu.matmul %145, %146, %cst_60 {dimension_numbers = #tpu.dot_dimension_numbers<[1], [1], [0], [0], [0, 0, 1, 0], [], []>} : vector<32x8xbf16>, vector<32x8xbf16>, vector<32x32xf32> -> vector<32x32xf32>
    %cst_61 = arith.constant 0.353553385 : f32
    %149 = vector.broadcast %cst_61 : f32 to vector<32x32xf32>
    %150 = arith.mulf %148, %149 : vector<32x32xf32>
    %151 = arith.addf %150, %2 : vector<32x32xf32>
    %cst_62 = arith.constant dense<0xFF800000> : vector<32xf32>
    %152 = vector.multi_reduction <maximumf>, %151, %cst_62 [1] : vector<32x32xf32> to vector<32xf32>
    %153 = vector.shape_cast %152 : vector<32xf32> to vector<32x1xf32>
    %154 = vector.broadcast %153 : vector<32x1xf32> to vector<32x32xf32>
    %155 = arith.subf %151, %154 : vector<32x32xf32>
    %156 = math.exp %155 : vector<32x32xf32>
    %cst_63 = arith.constant dense<0.000000e+00> : vector<32xf32>
    %157 = vector.multi_reduction <add>, %156, %cst_63 [1] : vector<32x32xf32> to vector<32xf32>
    %158 = vector.shape_cast %157 : vector<32xf32> to vector<32x1xf32>
    %159 = vector.broadcast %158 : vector<32x1xf32> to vector<32x32xf32>
    %160 = arith.divf %156, %159 : vector<32x32xf32>
    %161 = arith.truncf %160 : vector<32x32xf32> to vector<32x32xbf16>
    %cst_64 = arith.constant dense<0.000000e+00> : vector<32x8xf32>
    %162 = tpu.matmul %161, %147, %cst_64 {dimension_numbers = #tpu.dot_dimension_numbers<[1], [0], [0], [1], [0, 0, 1, 1], [], []>} : vector<32x32xbf16>, vector<32x8xbf16>, vector<32x8xf32> -> vector<32x8xf32>
    %163 = arith.truncf %162 : vector<32x8xf32> to vector<32x8xbf16>
    %164 = vector.extract_strided_slice %106 {offsets = [0, 24], sizes = [32, 8], strides = [1, 1]} : vector<32x96xbf16> to vector<32x8xbf16>
    %165 = vector.extract_strided_slice %106 {offsets = [0, 56], sizes = [32, 8], strides = [1, 1]} : vector<32x96xbf16> to vector<32x8xbf16>
    %166 = vector.extract_strided_slice %106 {offsets = [0, 88], sizes = [32, 8], strides = [1, 1]} : vector<32x96xbf16> to vector<32x8xbf16>
    %cst_65 = arith.constant dense<0.000000e+00> : vector<32x32xf32>
    %167 = tpu.matmul %164, %165, %cst_65 {dimension_numbers = #tpu.dot_dimension_numbers<[1], [1], [0], [0], [0, 0, 1, 0], [], []>} : vector<32x8xbf16>, vector<32x8xbf16>, vector<32x32xf32> -> vector<32x32xf32>
    %cst_66 = arith.constant 0.353553385 : f32
    %168 = vector.broadcast %cst_66 : f32 to vector<32x32xf32>
    %169 = arith.mulf %167, %168 : vector<32x32xf32>
    %170 = arith.addf %169, %2 : vector<32x32xf32>
    %cst_67 = arith.constant dense<0xFF800000> : vector<32xf32>
    %171 = vector.multi_reduction <maximumf>, %170, %cst_67 [1] : vector<32x32xf32> to vector<32xf32>
    %172 = vector.shape_cast %171 : vector<32xf32> to vector<32x1xf32>
    %173 = vector.broadcast %172 : vector<32x1xf32> to vector<32x32xf32>
    %174 = arith.subf %170, %173 : vector<32x32xf32>
    %175 = math.exp %174 : vector<32x32xf32>
    %cst_68 = arith.constant dense<0.000000e+00> : vector<32xf32>
    %176 = vector.multi_reduction <add>, %175, %cst_68 [1] : vector<32x32xf32> to vector<32xf32>
    %177 = vector.shape_cast %176 : vector<32xf32> to vector<32x1xf32>
    %178 = vector.broadcast %177 : vector<32x1xf32> to vector<32x32xf32>
    %179 = arith.divf %175, %178 : vector<32x32xf32>
    %180 = arith.truncf %179 : vector<32x32xf32> to vector<32x32xbf16>
    %cst_69 = arith.constant dense<0.000000e+00> : vector<32x8xf32>
    %181 = tpu.matmul %180, %166, %cst_69 {dimension_numbers = #tpu.dot_dimension_numbers<[1], [0], [0], [1], [0, 0, 1, 1], [], []>} : vector<32x32xbf16>, vector<32x8xbf16>, vector<32x8xf32> -> vector<32x8xf32>
    %182 = arith.truncf %181 : vector<32x8xf32> to vector<32x8xbf16>
    %c7 = arith.constant 7 : index
    %c0_70 = arith.constant 0 : index
    %183 = vector.load %arg4[%c7, %c0_70] : memref<30x32xf32, #tpu.memory_space<vmem>>, vector<1x32xf32>
    %c128 = arith.constant 128 : index
    %c0_71 = arith.constant 0 : index
    %184 = vector.load %arg11[%c128, %c0_71] : memref<704x32xbf16, #tpu.memory_space<vmem>>, vector<8x32xbf16>
    %cst_72 = arith.constant dense<0.000000e+00> : vector<32x32xf32>
    %185 = tpu.matmul %125, %184, %cst_72 {dimension_numbers = #tpu.dot_dimension_numbers<[1], [0], [0], [1], [0, 0, 1, 1], [], []>} : vector<32x8xbf16>, vector<8x32xbf16>, vector<32x32xf32> -> vector<32x32xf32>
    %186 = vector.broadcast %183 : vector<1x32xf32> to vector<32x32xf32>
    %187 = arith.addf %186, %185 : vector<32x32xf32>
    %c136 = arith.constant 136 : index
    %c0_73 = arith.constant 0 : index
    %188 = vector.load %arg11[%c136, %c0_73] : memref<704x32xbf16, #tpu.memory_space<vmem>>, vector<8x32xbf16>
    %cst_74 = arith.constant dense<0.000000e+00> : vector<32x32xf32>
    %189 = tpu.matmul %144, %188, %cst_74 {dimension_numbers = #tpu.dot_dimension_numbers<[1], [0], [0], [1], [0, 0, 1, 1], [], []>} : vector<32x8xbf16>, vector<8x32xbf16>, vector<32x32xf32> -> vector<32x32xf32>
    %190 = arith.addf %187, %189 : vector<32x32xf32>
    %c144 = arith.constant 144 : index
    %c0_75 = arith.constant 0 : index
    %191 = vector.load %arg11[%c144, %c0_75] : memref<704x32xbf16, #tpu.memory_space<vmem>>, vector<8x32xbf16>
    %cst_76 = arith.constant dense<0.000000e+00> : vector<32x32xf32>
    %192 = tpu.matmul %163, %191, %cst_76 {dimension_numbers = #tpu.dot_dimension_numbers<[1], [0], [0], [1], [0, 0, 1, 1], [], []>} : vector<32x8xbf16>, vector<8x32xbf16>, vector<32x32xf32> -> vector<32x32xf32>
    %193 = arith.addf %190, %192 : vector<32x32xf32>
    %c152 = arith.constant 152 : index
    %c0_77 = arith.constant 0 : index
    %194 = vector.load %arg11[%c152, %c0_77] : memref<704x32xbf16, #tpu.memory_space<vmem>>, vector<8x32xbf16>
    %cst_78 = arith.constant dense<0.000000e+00> : vector<32x32xf32>
    %195 = tpu.matmul %182, %194, %cst_78 {dimension_numbers = #tpu.dot_dimension_numbers<[1], [0], [0], [1], [0, 0, 1, 1], [], []>} : vector<32x8xbf16>, vector<8x32xbf16>, vector<32x32xf32> -> vector<32x32xf32>
    %196 = arith.addf %193, %195 : vector<32x32xf32>
    %197 = arith.addf %78, %196 : vector<32x32xf32>
    %c8 = arith.constant 8 : index
    %c0_79 = arith.constant 0 : index
    %198 = vector.load %arg4[%c8, %c0_79] : memref<30x32xf32, #tpu.memory_space<vmem>>, vector<1x32xf32>
    %c9 = arith.constant 9 : index
    %c0_80 = arith.constant 0 : index
    %199 = vector.load %arg4[%c9, %c0_80] : memref<30x32xf32, #tpu.memory_space<vmem>>, vector<1x32xf32>
    %cst_81 = arith.constant dense<0.000000e+00> : vector<32xf32>
    %200 = vector.multi_reduction <add>, %197, %cst_81 [1] : vector<32x32xf32> to vector<32xf32>
    %201 = vector.shape_cast %200 : vector<32xf32> to vector<32x1xf32>
    %cst_82 = arith.constant 3.200000e+01 : f32
    %202 = vector.broadcast %cst_82 : f32 to vector<32x1xf32>
    %203 = arith.divf %201, %202 : vector<32x1xf32>
    %204 = vector.broadcast %203 : vector<32x1xf32> to vector<32x32xf32>
    %205 = arith.subf %197, %204 : vector<32x32xf32>
    %206 = arith.mulf %205, %205 : vector<32x32xf32>
    %cst_83 = arith.constant dense<0.000000e+00> : vector<32xf32>
    %207 = vector.multi_reduction <add>, %206, %cst_83 [1] : vector<32x32xf32> to vector<32xf32>
    %208 = vector.shape_cast %207 : vector<32xf32> to vector<32x1xf32>
    %cst_84 = arith.constant 3.200000e+01 : f32
    %209 = vector.broadcast %cst_84 : f32 to vector<32x1xf32>
    %210 = arith.divf %208, %209 : vector<32x1xf32>
    %211 = vector.broadcast %203 : vector<32x1xf32> to vector<32x32xf32>
    %212 = arith.subf %197, %211 : vector<32x32xf32>
    %cst_85 = arith.constant 9.99999974E-6 : f32
    %213 = vector.broadcast %cst_85 : f32 to vector<32x1xf32>
    %214 = arith.addf %210, %213 : vector<32x1xf32>
    %215 = math.rsqrt %214 : vector<32x1xf32>
    %216 = vector.broadcast %215 : vector<32x1xf32> to vector<32x32xf32>
    %217 = arith.mulf %212, %216 : vector<32x32xf32>
    %218 = vector.broadcast %198 : vector<1x32xf32> to vector<32x32xf32>
    %219 = arith.mulf %217, %218 : vector<32x32xf32>
    %220 = vector.broadcast %199 : vector<1x32xf32> to vector<32x32xf32>
    %221 = arith.addf %219, %220 : vector<32x32xf32>
    %c0_86 = arith.constant 0 : index
    %c0_87 = arith.constant 0 : index
    %222 = vector.load %arg13[%c0_86, %c0_87] : memref<128x64xbf16, #tpu.memory_space<vmem>>, vector<32x64xbf16>
    %c0_88 = arith.constant 0 : index
    %c0_89 = arith.constant 0 : index
    %223 = vector.load %arg6[%c0_88, %c0_89] : memref<20x64xf32, #tpu.memory_space<vmem>>, vector<1x64xf32>
    %224 = arith.truncf %221 : vector<32x32xf32> to vector<32x32xbf16>
    %cst_90 = arith.constant dense<0.000000e+00> : vector<32x64xf32>
    %225 = tpu.matmul %224, %222, %cst_90 {dimension_numbers = #tpu.dot_dimension_numbers<[1], [0], [0], [1], [0, 0, 1, 1], [], []>} : vector<32x32xbf16>, vector<32x64xbf16>, vector<32x64xf32> -> vector<32x64xf32>
    %226 = vector.broadcast %223 : vector<1x64xf32> to vector<32x64xf32>
    %227 = arith.addf %225, %226 : vector<32x64xf32>
    %c32 = arith.constant 32 : index
    %c0_91 = arith.constant 0 : index
    %228 = vector.load %arg13[%c32, %c0_91] : memref<128x64xbf16, #tpu.memory_space<vmem>>, vector<32x64xbf16>
    %c1_92 = arith.constant 1 : index
    %c0_93 = arith.constant 0 : index
    %229 = vector.load %arg6[%c1_92, %c0_93] : memref<20x64xf32, #tpu.memory_space<vmem>>, vector<1x64xf32>
    %230 = arith.truncf %221 : vector<32x32xf32> to vector<32x32xbf16>
    %cst_94 = arith.constant dense<0.000000e+00> : vector<32x64xf32>
    %231 = tpu.matmul %230, %228, %cst_94 {dimension_numbers = #tpu.dot_dimension_numbers<[1], [0], [0], [1], [0, 0, 1, 1], [], []>} : vector<32x32xbf16>, vector<32x64xbf16>, vector<32x64xf32> -> vector<32x64xf32>
    %232 = vector.broadcast %229 : vector<1x64xf32> to vector<32x64xf32>
    %233 = arith.addf %231, %232 : vector<32x64xf32>
    %234 = arith.negf %233 : vector<32x64xf32>
    %235 = math.exp %234 : vector<32x64xf32>
    %cst_95 = arith.constant 1.000000e+00 : f32
    %236 = vector.broadcast %cst_95 : f32 to vector<32x64xf32>
    %237 = arith.addf %236, %235 : vector<32x64xf32>
    %238 = arith.divf %236, %237 : vector<32x64xf32>
    %239 = arith.mulf %227, %238 : vector<32x64xf32>
    %c3_i32 = arith.constant 3 : i32
    %240 = tpu.dynamic_rotate %239 by %c3_i32 dim 0 : vector<32x64xf32>, i32 -> vector<32x64xf32>
    %c0_96 = arith.constant 0 : index
    %c2_97 = arith.constant 2 : index
    %241 = vector.load %arg2[%c0_96, %c2_97] : memref<32x9xf32, #tpu.memory_space<vmem>>, vector<32x1xf32>
    %242 = vector.broadcast %241 : vector<32x1xf32> to vector<32x64xf32>
    %243 = arith.mulf %240, %242 : vector<32x64xf32>
    %c3_98 = arith.constant 3 : index
    %c0_99 = arith.constant 0 : index
    %244 = vector.load %arg6[%c3_98, %c0_99] : memref<20x64xf32, #tpu.memory_space<vmem>>, vector<1x64xf32>
    %245 = vector.broadcast %244 : vector<1x64xf32> to vector<32x64xf32>
    %246 = arith.mulf %243, %245 : vector<32x64xf32>
    %c2_i32 = arith.constant 2 : i32
    %247 = tpu.dynamic_rotate %239 by %c2_i32 dim 0 : vector<32x64xf32>, i32 -> vector<32x64xf32>
    %c0_100 = arith.constant 0 : index
    %c3_101 = arith.constant 3 : index
    %248 = vector.load %arg2[%c0_100, %c3_101] : memref<32x9xf32, #tpu.memory_space<vmem>>, vector<32x1xf32>
    %249 = vector.broadcast %248 : vector<32x1xf32> to vector<32x64xf32>
    %250 = arith.mulf %247, %249 : vector<32x64xf32>
    %c4_102 = arith.constant 4 : index
    %c0_103 = arith.constant 0 : index
    %251 = vector.load %arg6[%c4_102, %c0_103] : memref<20x64xf32, #tpu.memory_space<vmem>>, vector<1x64xf32>
    %252 = vector.broadcast %251 : vector<1x64xf32> to vector<32x64xf32>
    %253 = arith.mulf %250, %252 : vector<32x64xf32>
    %254 = arith.addf %246, %253 : vector<32x64xf32>
    %c1_i32 = arith.constant 1 : i32
    %255 = tpu.dynamic_rotate %239 by %c1_i32 dim 0 : vector<32x64xf32>, i32 -> vector<32x64xf32>
    %c0_104 = arith.constant 0 : index
    %c4_105 = arith.constant 4 : index
    %256 = vector.load %arg2[%c0_104, %c4_105] : memref<32x9xf32, #tpu.memory_space<vmem>>, vector<32x1xf32>
    %257 = vector.broadcast %256 : vector<32x1xf32> to vector<32x64xf32>
    %258 = arith.mulf %255, %257 : vector<32x64xf32>
    %c5_106 = arith.constant 5 : index
    %c0_107 = arith.constant 0 : index
    %259 = vector.load %arg6[%c5_106, %c0_107] : memref<20x64xf32, #tpu.memory_space<vmem>>, vector<1x64xf32>
    %260 = vector.broadcast %259 : vector<1x64xf32> to vector<32x64xf32>
    %261 = arith.mulf %258, %260 : vector<32x64xf32>
    %262 = arith.addf %254, %261 : vector<32x64xf32>
    %c0_108 = arith.constant 0 : index
    %c5_109 = arith.constant 5 : index
    %263 = vector.load %arg2[%c0_108, %c5_109] : memref<32x9xf32, #tpu.memory_space<vmem>>, vector<32x1xf32>
    %264 = vector.broadcast %263 : vector<32x1xf32> to vector<32x64xf32>
    %265 = arith.mulf %239, %264 : vector<32x64xf32>
    %c6_110 = arith.constant 6 : index
    %c0_111 = arith.constant 0 : index
    %266 = vector.load %arg6[%c6_110, %c0_111] : memref<20x64xf32, #tpu.memory_space<vmem>>, vector<1x64xf32>
    %267 = vector.broadcast %266 : vector<1x64xf32> to vector<32x64xf32>
    %268 = arith.mulf %265, %267 : vector<32x64xf32>
    %269 = arith.addf %262, %268 : vector<32x64xf32>
    %c31_i32 = arith.constant 31 : i32
    %270 = tpu.dynamic_rotate %239 by %c31_i32 dim 0 : vector<32x64xf32>, i32 -> vector<32x64xf32>
    %c0_112 = arith.constant 0 : index
    %c6_113 = arith.constant 6 : index
    %271 = vector.load %arg2[%c0_112, %c6_113] : memref<32x9xf32, #tpu.memory_space<vmem>>, vector<32x1xf32>
    %272 = vector.broadcast %271 : vector<32x1xf32> to vector<32x64xf32>
    %273 = arith.mulf %270, %272 : vector<32x64xf32>
    %c7_114 = arith.constant 7 : index
    %c0_115 = arith.constant 0 : index
    %274 = vector.load %arg6[%c7_114, %c0_115] : memref<20x64xf32, #tpu.memory_space<vmem>>, vector<1x64xf32>
    %275 = vector.broadcast %274 : vector<1x64xf32> to vector<32x64xf32>
    %276 = arith.mulf %273, %275 : vector<32x64xf32>
    %277 = arith.addf %269, %276 : vector<32x64xf32>
    %c30_i32 = arith.constant 30 : i32
    %278 = tpu.dynamic_rotate %239 by %c30_i32 dim 0 : vector<32x64xf32>, i32 -> vector<32x64xf32>
    %c0_116 = arith.constant 0 : index
    %c7_117 = arith.constant 7 : index
    %279 = vector.load %arg2[%c0_116, %c7_117] : memref<32x9xf32, #tpu.memory_space<vmem>>, vector<32x1xf32>
    %280 = vector.broadcast %279 : vector<32x1xf32> to vector<32x64xf32>
    %281 = arith.mulf %278, %280 : vector<32x64xf32>
    %c8_118 = arith.constant 8 : index
    %c0_119 = arith.constant 0 : index
    %282 = vector.load %arg6[%c8_118, %c0_119] : memref<20x64xf32, #tpu.memory_space<vmem>>, vector<1x64xf32>
    %283 = vector.broadcast %282 : vector<1x64xf32> to vector<32x64xf32>
    %284 = arith.mulf %281, %283 : vector<32x64xf32>
    %285 = arith.addf %277, %284 : vector<32x64xf32>
    %c29_i32 = arith.constant 29 : i32
    %286 = tpu.dynamic_rotate %239 by %c29_i32 dim 0 : vector<32x64xf32>, i32 -> vector<32x64xf32>
    %c0_120 = arith.constant 0 : index
    %c8_121 = arith.constant 8 : index
    %287 = vector.load %arg2[%c0_120, %c8_121] : memref<32x9xf32, #tpu.memory_space<vmem>>, vector<32x1xf32>
    %288 = vector.broadcast %287 : vector<32x1xf32> to vector<32x64xf32>
    %289 = arith.mulf %286, %288 : vector<32x64xf32>
    %c9_122 = arith.constant 9 : index
    %c0_123 = arith.constant 0 : index
    %290 = vector.load %arg6[%c9_122, %c0_123] : memref<20x64xf32, #tpu.memory_space<vmem>>, vector<1x64xf32>
    %291 = vector.broadcast %290 : vector<1x64xf32> to vector<32x64xf32>
    %292 = arith.mulf %289, %291 : vector<32x64xf32>
    %293 = arith.addf %285, %292 : vector<32x64xf32>
    %c2_124 = arith.constant 2 : index
    %c0_125 = arith.constant 0 : index
    %294 = vector.load %arg6[%c2_124, %c0_125] : memref<20x64xf32, #tpu.memory_space<vmem>>, vector<1x64xf32>
    %295 = vector.broadcast %294 : vector<1x64xf32> to vector<32x64xf32>
    %296 = arith.addf %293, %295 : vector<32x64xf32>
    %c160 = arith.constant 160 : index
    %c0_126 = arith.constant 0 : index
    %297 = vector.load %arg11[%c160, %c0_126] : memref<704x32xbf16, #tpu.memory_space<vmem>>, vector<64x32xbf16>
    %298 = arith.negf %296 : vector<32x64xf32>
    %299 = math.exp %298 : vector<32x64xf32>
    %cst_127 = arith.constant 1.000000e+00 : f32
    %300 = vector.broadcast %cst_127 : f32 to vector<32x64xf32>
    %301 = arith.addf %300, %299 : vector<32x64xf32>
    %302 = arith.divf %300, %301 : vector<32x64xf32>
    %303 = arith.mulf %296, %302 : vector<32x64xf32>
    %c10 = arith.constant 10 : index
    %c0_128 = arith.constant 0 : index
    %304 = vector.load %arg4[%c10, %c0_128] : memref<30x32xf32, #tpu.memory_space<vmem>>, vector<1x32xf32>
    %305 = arith.truncf %303 : vector<32x64xf32> to vector<32x64xbf16>
    %cst_129 = arith.constant dense<0.000000e+00> : vector<32x32xf32>
    %306 = tpu.matmul %305, %297, %cst_129 {dimension_numbers = #tpu.dot_dimension_numbers<[1], [0], [0], [1], [0, 0, 1, 1], [], []>} : vector<32x64xbf16>, vector<64x32xbf16>, vector<32x32xf32> -> vector<32x32xf32>
    %307 = vector.broadcast %304 : vector<1x32xf32> to vector<32x32xf32>
    %308 = arith.addf %306, %307 : vector<32x32xf32>
    %309 = arith.addf %197, %308 : vector<32x32xf32>
    %c11 = arith.constant 11 : index
    %c0_130 = arith.constant 0 : index
    %310 = vector.load %arg4[%c11, %c0_130] : memref<30x32xf32, #tpu.memory_space<vmem>>, vector<1x32xf32>
    %c12 = arith.constant 12 : index
    %c0_131 = arith.constant 0 : index
    %311 = vector.load %arg4[%c12, %c0_131] : memref<30x32xf32, #tpu.memory_space<vmem>>, vector<1x32xf32>
    %cst_132 = arith.constant dense<0.000000e+00> : vector<32xf32>
    %312 = vector.multi_reduction <add>, %309, %cst_132 [1] : vector<32x32xf32> to vector<32xf32>
    %313 = vector.shape_cast %312 : vector<32xf32> to vector<32x1xf32>
    %cst_133 = arith.constant 3.200000e+01 : f32
    %314 = vector.broadcast %cst_133 : f32 to vector<32x1xf32>
    %315 = arith.divf %313, %314 : vector<32x1xf32>
    %316 = vector.broadcast %315 : vector<32x1xf32> to vector<32x32xf32>
    %317 = arith.subf %309, %316 : vector<32x32xf32>
    %318 = arith.mulf %317, %317 : vector<32x32xf32>
    %cst_134 = arith.constant dense<0.000000e+00> : vector<32xf32>
    %319 = vector.multi_reduction <add>, %318, %cst_134 [1] : vector<32x32xf32> to vector<32xf32>
    %320 = vector.shape_cast %319 : vector<32xf32> to vector<32x1xf32>
    %cst_135 = arith.constant 3.200000e+01 : f32
    %321 = vector.broadcast %cst_135 : f32 to vector<32x1xf32>
    %322 = arith.divf %320, %321 : vector<32x1xf32>
    %323 = vector.broadcast %315 : vector<32x1xf32> to vector<32x32xf32>
    %324 = arith.subf %309, %323 : vector<32x32xf32>
    %cst_136 = arith.constant 9.99999974E-6 : f32
    %325 = vector.broadcast %cst_136 : f32 to vector<32x1xf32>
    %326 = arith.addf %322, %325 : vector<32x1xf32>
    %327 = math.rsqrt %326 : vector<32x1xf32>
    %328 = vector.broadcast %327 : vector<32x1xf32> to vector<32x32xf32>
    %329 = arith.mulf %324, %328 : vector<32x32xf32>
    %330 = vector.broadcast %310 : vector<1x32xf32> to vector<32x32xf32>
    %331 = arith.mulf %329, %330 : vector<32x32xf32>
    %332 = vector.broadcast %311 : vector<1x32xf32> to vector<32x32xf32>
    %333 = arith.addf %331, %332 : vector<32x32xf32>
    %c32_137 = arith.constant 32 : index
    %c0_138 = arith.constant 0 : index
    %334 = vector.load %arg10[%c32_137, %c0_138] : memref<128x128xbf16, #tpu.memory_space<vmem>>, vector<32x128xbf16>
    %c1_139 = arith.constant 1 : index
    %c0_140 = arith.constant 0 : index
    %335 = vector.load %arg5[%c1_139, %c0_140] : memref<4x128xf32, #tpu.memory_space<vmem>>, vector<1x128xf32>
    %336 = arith.truncf %333 : vector<32x32xf32> to vector<32x32xbf16>
    %cst_141 = arith.constant dense<0.000000e+00> : vector<32x128xf32>
    %337 = tpu.matmul %336, %334, %cst_141 {dimension_numbers = #tpu.dot_dimension_numbers<[1], [0], [0], [1], [0, 0, 1, 1], [], []>} : vector<32x32xbf16>, vector<32x128xbf16>, vector<32x128xf32> -> vector<32x128xf32>
    %338 = vector.broadcast %335 : vector<1x128xf32> to vector<32x128xf32>
    %339 = arith.addf %337, %338 : vector<32x128xf32>
    %340 = arith.negf %339 : vector<32x128xf32>
    %341 = math.exp %340 : vector<32x128xf32>
    %cst_142 = arith.constant 1.000000e+00 : f32
    %342 = vector.broadcast %cst_142 : f32 to vector<32x128xf32>
    %343 = arith.addf %342, %341 : vector<32x128xf32>
    %344 = arith.divf %342, %343 : vector<32x128xf32>
    %345 = arith.mulf %339, %344 : vector<32x128xf32>
    %c224 = arith.constant 224 : index
    %c0_143 = arith.constant 0 : index
    %346 = vector.load %arg11[%c224, %c0_143] : memref<704x32xbf16, #tpu.memory_space<vmem>>, vector<128x32xbf16>
    %c13 = arith.constant 13 : index
    %c0_144 = arith.constant 0 : index
    %347 = vector.load %arg4[%c13, %c0_144] : memref<30x32xf32, #tpu.memory_space<vmem>>, vector<1x32xf32>
    %348 = arith.truncf %345 : vector<32x128xf32> to vector<32x128xbf16>
    %cst_145 = arith.constant dense<0.000000e+00> : vector<32x32xf32>
    %349 = tpu.matmul %348, %346, %cst_145 {dimension_numbers = #tpu.dot_dimension_numbers<[1], [0], [0], [1], [0, 0, 1, 1], [], []>} : vector<32x128xbf16>, vector<128x32xbf16>, vector<32x32xf32> -> vector<32x32xf32>
    %350 = vector.broadcast %347 : vector<1x32xf32> to vector<32x32xf32>
    %351 = arith.addf %349, %350 : vector<32x32xf32>
    %cst_146 = arith.constant 5.000000e-01 : f32
    %352 = vector.broadcast %cst_146 : f32 to vector<32x32xf32>
    %353 = arith.mulf %352, %351 : vector<32x32xf32>
    %354 = arith.addf %309, %353 : vector<32x32xf32>
    %c14 = arith.constant 14 : index
    %c0_147 = arith.constant 0 : index
    %355 = vector.load %arg4[%c14, %c0_147] : memref<30x32xf32, #tpu.memory_space<vmem>>, vector<1x32xf32>
    %c15 = arith.constant 15 : index
    %c0_148 = arith.constant 0 : index
    %356 = vector.load %arg4[%c15, %c0_148] : memref<30x32xf32, #tpu.memory_space<vmem>>, vector<1x32xf32>
    %cst_149 = arith.constant dense<0.000000e+00> : vector<32xf32>
    %357 = vector.multi_reduction <add>, %354, %cst_149 [1] : vector<32x32xf32> to vector<32xf32>
    %358 = vector.shape_cast %357 : vector<32xf32> to vector<32x1xf32>
    %cst_150 = arith.constant 3.200000e+01 : f32
    %359 = vector.broadcast %cst_150 : f32 to vector<32x1xf32>
    %360 = arith.divf %358, %359 : vector<32x1xf32>
    %361 = vector.broadcast %360 : vector<32x1xf32> to vector<32x32xf32>
    %362 = arith.subf %354, %361 : vector<32x32xf32>
    %363 = arith.mulf %362, %362 : vector<32x32xf32>
    %cst_151 = arith.constant dense<0.000000e+00> : vector<32xf32>
    %364 = vector.multi_reduction <add>, %363, %cst_151 [1] : vector<32x32xf32> to vector<32xf32>
    %365 = vector.shape_cast %364 : vector<32xf32> to vector<32x1xf32>
    %cst_152 = arith.constant 3.200000e+01 : f32
    %366 = vector.broadcast %cst_152 : f32 to vector<32x1xf32>
    %367 = arith.divf %365, %366 : vector<32x1xf32>
    %368 = vector.broadcast %360 : vector<32x1xf32> to vector<32x32xf32>
    %369 = arith.subf %354, %368 : vector<32x32xf32>
    %cst_153 = arith.constant 9.99999974E-6 : f32
    %370 = vector.broadcast %cst_153 : f32 to vector<32x1xf32>
    %371 = arith.addf %367, %370 : vector<32x1xf32>
    %372 = math.rsqrt %371 : vector<32x1xf32>
    %373 = vector.broadcast %372 : vector<32x1xf32> to vector<32x32xf32>
    %374 = arith.mulf %369, %373 : vector<32x32xf32>
    %375 = vector.broadcast %355 : vector<1x32xf32> to vector<32x32xf32>
    %376 = arith.mulf %374, %375 : vector<32x32xf32>
    %377 = vector.broadcast %356 : vector<1x32xf32> to vector<32x32xf32>
    %378 = arith.addf %376, %377 : vector<32x32xf32>
    %c16 = arith.constant 16 : index
    %c0_154 = arith.constant 0 : index
    %379 = vector.load %arg4[%c16, %c0_154] : memref<30x32xf32, #tpu.memory_space<vmem>>, vector<1x32xf32>
    %c17 = arith.constant 17 : index
    %c0_155 = arith.constant 0 : index
    %380 = vector.load %arg4[%c17, %c0_155] : memref<30x32xf32, #tpu.memory_space<vmem>>, vector<1x32xf32>
    %cst_156 = arith.constant dense<0.000000e+00> : vector<32xf32>
    %381 = vector.multi_reduction <add>, %378, %cst_156 [1] : vector<32x32xf32> to vector<32xf32>
    %382 = vector.shape_cast %381 : vector<32xf32> to vector<32x1xf32>
    %cst_157 = arith.constant 3.200000e+01 : f32
    %383 = vector.broadcast %cst_157 : f32 to vector<32x1xf32>
    %384 = arith.divf %382, %383 : vector<32x1xf32>
    %385 = vector.broadcast %384 : vector<32x1xf32> to vector<32x32xf32>
    %386 = arith.subf %378, %385 : vector<32x32xf32>
    %387 = arith.mulf %386, %386 : vector<32x32xf32>
    %cst_158 = arith.constant dense<0.000000e+00> : vector<32xf32>
    %388 = vector.multi_reduction <add>, %387, %cst_158 [1] : vector<32x32xf32> to vector<32xf32>
    %389 = vector.shape_cast %388 : vector<32xf32> to vector<32x1xf32>
    %cst_159 = arith.constant 3.200000e+01 : f32
    %390 = vector.broadcast %cst_159 : f32 to vector<32x1xf32>
    %391 = arith.divf %389, %390 : vector<32x1xf32>
    %392 = vector.broadcast %384 : vector<32x1xf32> to vector<32x32xf32>
    %393 = arith.subf %378, %392 : vector<32x32xf32>
    %cst_160 = arith.constant 9.99999974E-6 : f32
    %394 = vector.broadcast %cst_160 : f32 to vector<32x1xf32>
    %395 = arith.addf %391, %394 : vector<32x1xf32>
    %396 = math.rsqrt %395 : vector<32x1xf32>
    %397 = vector.broadcast %396 : vector<32x1xf32> to vector<32x32xf32>
    %398 = arith.mulf %393, %397 : vector<32x32xf32>
    %399 = vector.broadcast %379 : vector<1x32xf32> to vector<32x32xf32>
    %400 = arith.mulf %398, %399 : vector<32x32xf32>
    %401 = vector.broadcast %380 : vector<1x32xf32> to vector<32x32xf32>
    %402 = arith.addf %400, %401 : vector<32x32xf32>
    %c64 = arith.constant 64 : index
    %c0_161 = arith.constant 0 : index
    %403 = vector.load %arg10[%c64, %c0_161] : memref<128x128xbf16, #tpu.memory_space<vmem>>, vector<32x128xbf16>
    %c2_162 = arith.constant 2 : index
    %c0_163 = arith.constant 0 : index
    %404 = vector.load %arg5[%c2_162, %c0_163] : memref<4x128xf32, #tpu.memory_space<vmem>>, vector<1x128xf32>
    %405 = arith.truncf %402 : vector<32x32xf32> to vector<32x32xbf16>
    %cst_164 = arith.constant dense<0.000000e+00> : vector<32x128xf32>
    %406 = tpu.matmul %405, %403, %cst_164 {dimension_numbers = #tpu.dot_dimension_numbers<[1], [0], [0], [1], [0, 0, 1, 1], [], []>} : vector<32x32xbf16>, vector<32x128xbf16>, vector<32x128xf32> -> vector<32x128xf32>
    %407 = vector.broadcast %404 : vector<1x128xf32> to vector<32x128xf32>
    %408 = arith.addf %406, %407 : vector<32x128xf32>
    %409 = arith.negf %408 : vector<32x128xf32>
    %410 = math.exp %409 : vector<32x128xf32>
    %cst_165 = arith.constant 1.000000e+00 : f32
    %411 = vector.broadcast %cst_165 : f32 to vector<32x128xf32>
    %412 = arith.addf %411, %410 : vector<32x128xf32>
    %413 = arith.divf %411, %412 : vector<32x128xf32>
    %414 = arith.mulf %408, %413 : vector<32x128xf32>
    %c352 = arith.constant 352 : index
    %c0_166 = arith.constant 0 : index
    %415 = vector.load %arg11[%c352, %c0_166] : memref<704x32xbf16, #tpu.memory_space<vmem>>, vector<128x32xbf16>
    %c18 = arith.constant 18 : index
    %c0_167 = arith.constant 0 : index
    %416 = vector.load %arg4[%c18, %c0_167] : memref<30x32xf32, #tpu.memory_space<vmem>>, vector<1x32xf32>
    %417 = arith.truncf %414 : vector<32x128xf32> to vector<32x128xbf16>
    %cst_168 = arith.constant dense<0.000000e+00> : vector<32x32xf32>
    %418 = tpu.matmul %417, %415, %cst_168 {dimension_numbers = #tpu.dot_dimension_numbers<[1], [0], [0], [1], [0, 0, 1, 1], [], []>} : vector<32x128xbf16>, vector<128x32xbf16>, vector<32x32xf32> -> vector<32x32xf32>
    %419 = vector.broadcast %416 : vector<1x32xf32> to vector<32x32xf32>
    %420 = arith.addf %418, %419 : vector<32x32xf32>
    %cst_169 = arith.constant 5.000000e-01 : f32
    %421 = vector.broadcast %cst_169 : f32 to vector<32x32xf32>
    %422 = arith.mulf %421, %420 : vector<32x32xf32>
    %423 = arith.addf %378, %422 : vector<32x32xf32>
    %c19 = arith.constant 19 : index
    %c0_170 = arith.constant 0 : index
    %424 = vector.load %arg4[%c19, %c0_170] : memref<30x32xf32, #tpu.memory_space<vmem>>, vector<1x32xf32>
    %c20 = arith.constant 20 : index
    %c0_171 = arith.constant 0 : index
    %425 = vector.load %arg4[%c20, %c0_171] : memref<30x32xf32, #tpu.memory_space<vmem>>, vector<1x32xf32>
    %cst_172 = arith.constant dense<0.000000e+00> : vector<32xf32>
    %426 = vector.multi_reduction <add>, %423, %cst_172 [1] : vector<32x32xf32> to vector<32xf32>
    %427 = vector.shape_cast %426 : vector<32xf32> to vector<32x1xf32>
    %cst_173 = arith.constant 3.200000e+01 : f32
    %428 = vector.broadcast %cst_173 : f32 to vector<32x1xf32>
    %429 = arith.divf %427, %428 : vector<32x1xf32>
    %430 = vector.broadcast %429 : vector<32x1xf32> to vector<32x32xf32>
    %431 = arith.subf %423, %430 : vector<32x32xf32>
    %432 = arith.mulf %431, %431 : vector<32x32xf32>
    %cst_174 = arith.constant dense<0.000000e+00> : vector<32xf32>
    %433 = vector.multi_reduction <add>, %432, %cst_174 [1] : vector<32x32xf32> to vector<32xf32>
    %434 = vector.shape_cast %433 : vector<32xf32> to vector<32x1xf32>
    %cst_175 = arith.constant 3.200000e+01 : f32
    %435 = vector.broadcast %cst_175 : f32 to vector<32x1xf32>
    %436 = arith.divf %434, %435 : vector<32x1xf32>
    %437 = vector.broadcast %429 : vector<32x1xf32> to vector<32x32xf32>
    %438 = arith.subf %423, %437 : vector<32x32xf32>
    %cst_176 = arith.constant 9.99999974E-6 : f32
    %439 = vector.broadcast %cst_176 : f32 to vector<32x1xf32>
    %440 = arith.addf %436, %439 : vector<32x1xf32>
    %441 = math.rsqrt %440 : vector<32x1xf32>
    %442 = vector.broadcast %441 : vector<32x1xf32> to vector<32x32xf32>
    %443 = arith.mulf %438, %442 : vector<32x32xf32>
    %444 = vector.broadcast %424 : vector<1x32xf32> to vector<32x32xf32>
    %445 = arith.mulf %443, %444 : vector<32x32xf32>
    %446 = vector.broadcast %425 : vector<1x32xf32> to vector<32x32xf32>
    %447 = arith.addf %445, %446 : vector<32x32xf32>
    %c32_177 = arith.constant 32 : index
    %c0_178 = arith.constant 0 : index
    %448 = vector.load %arg12[%c32_177, %c0_178] : memref<64x96xbf16, #tpu.memory_space<vmem>>, vector<32x96xbf16>
    %449 = arith.truncf %447 : vector<32x32xf32> to vector<32x32xbf16>
    %cst_179 = arith.constant dense<0.000000e+00> : vector<32x96xf32>
    %450 = tpu.matmul %449, %448, %cst_179 {dimension_numbers = #tpu.dot_dimension_numbers<[1], [0], [0], [1], [0, 0, 1, 1], [], []>} : vector<32x32xbf16>, vector<32x96xbf16>, vector<32x96xf32> -> vector<32x96xf32>
    %451 = arith.truncf %450 : vector<32x96xf32> to vector<32x96xbf16>
    %452 = vector.extract_strided_slice %451 {offsets = [0, 0], sizes = [32, 8], strides = [1, 1]} : vector<32x96xbf16> to vector<32x8xbf16>
    %453 = vector.extract_strided_slice %451 {offsets = [0, 32], sizes = [32, 8], strides = [1, 1]} : vector<32x96xbf16> to vector<32x8xbf16>
    %454 = vector.extract_strided_slice %451 {offsets = [0, 64], sizes = [32, 8], strides = [1, 1]} : vector<32x96xbf16> to vector<32x8xbf16>
    %cst_180 = arith.constant dense<0.000000e+00> : vector<32x32xf32>
    %455 = tpu.matmul %452, %453, %cst_180 {dimension_numbers = #tpu.dot_dimension_numbers<[1], [1], [0], [0], [0, 0, 1, 0], [], []>} : vector<32x8xbf16>, vector<32x8xbf16>, vector<32x32xf32> -> vector<32x32xf32>
    %cst_181 = arith.constant 0.353553385 : f32
    %456 = vector.broadcast %cst_181 : f32 to vector<32x32xf32>
    %457 = arith.mulf %455, %456 : vector<32x32xf32>
    %458 = arith.addf %457, %2 : vector<32x32xf32>
    %cst_182 = arith.constant dense<0xFF800000> : vector<32xf32>
    %459 = vector.multi_reduction <maximumf>, %458, %cst_182 [1] : vector<32x32xf32> to vector<32xf32>
    %460 = vector.shape_cast %459 : vector<32xf32> to vector<32x1xf32>
    %461 = vector.broadcast %460 : vector<32x1xf32> to vector<32x32xf32>
    %462 = arith.subf %458, %461 : vector<32x32xf32>
    %463 = math.exp %462 : vector<32x32xf32>
    %cst_183 = arith.constant dense<0.000000e+00> : vector<32xf32>
    %464 = vector.multi_reduction <add>, %463, %cst_183 [1] : vector<32x32xf32> to vector<32xf32>
    %465 = vector.shape_cast %464 : vector<32xf32> to vector<32x1xf32>
    %466 = vector.broadcast %465 : vector<32x1xf32> to vector<32x32xf32>
    %467 = arith.divf %463, %466 : vector<32x32xf32>
    %468 = arith.truncf %467 : vector<32x32xf32> to vector<32x32xbf16>
    %cst_184 = arith.constant dense<0.000000e+00> : vector<32x8xf32>
    %469 = tpu.matmul %468, %454, %cst_184 {dimension_numbers = #tpu.dot_dimension_numbers<[1], [0], [0], [1], [0, 0, 1, 1], [], []>} : vector<32x32xbf16>, vector<32x8xbf16>, vector<32x8xf32> -> vector<32x8xf32>
    %470 = arith.truncf %469 : vector<32x8xf32> to vector<32x8xbf16>
    %471 = vector.extract_strided_slice %451 {offsets = [0, 8], sizes = [32, 8], strides = [1, 1]} : vector<32x96xbf16> to vector<32x8xbf16>
    %472 = vector.extract_strided_slice %451 {offsets = [0, 40], sizes = [32, 8], strides = [1, 1]} : vector<32x96xbf16> to vector<32x8xbf16>
    %473 = vector.extract_strided_slice %451 {offsets = [0, 72], sizes = [32, 8], strides = [1, 1]} : vector<32x96xbf16> to vector<32x8xbf16>
    %cst_185 = arith.constant dense<0.000000e+00> : vector<32x32xf32>
    %474 = tpu.matmul %471, %472, %cst_185 {dimension_numbers = #tpu.dot_dimension_numbers<[1], [1], [0], [0], [0, 0, 1, 0], [], []>} : vector<32x8xbf16>, vector<32x8xbf16>, vector<32x32xf32> -> vector<32x32xf32>
    %cst_186 = arith.constant 0.353553385 : f32
    %475 = vector.broadcast %cst_186 : f32 to vector<32x32xf32>
    %476 = arith.mulf %474, %475 : vector<32x32xf32>
    %477 = arith.addf %476, %2 : vector<32x32xf32>
    %cst_187 = arith.constant dense<0xFF800000> : vector<32xf32>
    %478 = vector.multi_reduction <maximumf>, %477, %cst_187 [1] : vector<32x32xf32> to vector<32xf32>
    %479 = vector.shape_cast %478 : vector<32xf32> to vector<32x1xf32>
    %480 = vector.broadcast %479 : vector<32x1xf32> to vector<32x32xf32>
    %481 = arith.subf %477, %480 : vector<32x32xf32>
    %482 = math.exp %481 : vector<32x32xf32>
    %cst_188 = arith.constant dense<0.000000e+00> : vector<32xf32>
    %483 = vector.multi_reduction <add>, %482, %cst_188 [1] : vector<32x32xf32> to vector<32xf32>
    %484 = vector.shape_cast %483 : vector<32xf32> to vector<32x1xf32>
    %485 = vector.broadcast %484 : vector<32x1xf32> to vector<32x32xf32>
    %486 = arith.divf %482, %485 : vector<32x32xf32>
    %487 = arith.truncf %486 : vector<32x32xf32> to vector<32x32xbf16>
    %cst_189 = arith.constant dense<0.000000e+00> : vector<32x8xf32>
    %488 = tpu.matmul %487, %473, %cst_189 {dimension_numbers = #tpu.dot_dimension_numbers<[1], [0], [0], [1], [0, 0, 1, 1], [], []>} : vector<32x32xbf16>, vector<32x8xbf16>, vector<32x8xf32> -> vector<32x8xf32>
    %489 = arith.truncf %488 : vector<32x8xf32> to vector<32x8xbf16>
    %490 = vector.extract_strided_slice %451 {offsets = [0, 16], sizes = [32, 8], strides = [1, 1]} : vector<32x96xbf16> to vector<32x8xbf16>
    %491 = vector.extract_strided_slice %451 {offsets = [0, 48], sizes = [32, 8], strides = [1, 1]} : vector<32x96xbf16> to vector<32x8xbf16>
    %492 = vector.extract_strided_slice %451 {offsets = [0, 80], sizes = [32, 8], strides = [1, 1]} : vector<32x96xbf16> to vector<32x8xbf16>
    %cst_190 = arith.constant dense<0.000000e+00> : vector<32x32xf32>
    %493 = tpu.matmul %490, %491, %cst_190 {dimension_numbers = #tpu.dot_dimension_numbers<[1], [1], [0], [0], [0, 0, 1, 0], [], []>} : vector<32x8xbf16>, vector<32x8xbf16>, vector<32x32xf32> -> vector<32x32xf32>
    %cst_191 = arith.constant 0.353553385 : f32
    %494 = vector.broadcast %cst_191 : f32 to vector<32x32xf32>
    %495 = arith.mulf %493, %494 : vector<32x32xf32>
    %496 = arith.addf %495, %2 : vector<32x32xf32>
    %cst_192 = arith.constant dense<0xFF800000> : vector<32xf32>
    %497 = vector.multi_reduction <maximumf>, %496, %cst_192 [1] : vector<32x32xf32> to vector<32xf32>
    %498 = vector.shape_cast %497 : vector<32xf32> to vector<32x1xf32>
    %499 = vector.broadcast %498 : vector<32x1xf32> to vector<32x32xf32>
    %500 = arith.subf %496, %499 : vector<32x32xf32>
    %501 = math.exp %500 : vector<32x32xf32>
    %cst_193 = arith.constant dense<0.000000e+00> : vector<32xf32>
    %502 = vector.multi_reduction <add>, %501, %cst_193 [1] : vector<32x32xf32> to vector<32xf32>
    %503 = vector.shape_cast %502 : vector<32xf32> to vector<32x1xf32>
    %504 = vector.broadcast %503 : vector<32x1xf32> to vector<32x32xf32>
    %505 = arith.divf %501, %504 : vector<32x32xf32>
    %506 = arith.truncf %505 : vector<32x32xf32> to vector<32x32xbf16>
    %cst_194 = arith.constant dense<0.000000e+00> : vector<32x8xf32>
    %507 = tpu.matmul %506, %492, %cst_194 {dimension_numbers = #tpu.dot_dimension_numbers<[1], [0], [0], [1], [0, 0, 1, 1], [], []>} : vector<32x32xbf16>, vector<32x8xbf16>, vector<32x8xf32> -> vector<32x8xf32>
    %508 = arith.truncf %507 : vector<32x8xf32> to vector<32x8xbf16>
    %509 = vector.extract_strided_slice %451 {offsets = [0, 24], sizes = [32, 8], strides = [1, 1]} : vector<32x96xbf16> to vector<32x8xbf16>
    %510 = vector.extract_strided_slice %451 {offsets = [0, 56], sizes = [32, 8], strides = [1, 1]} : vector<32x96xbf16> to vector<32x8xbf16>
    %511 = vector.extract_strided_slice %451 {offsets = [0, 88], sizes = [32, 8], strides = [1, 1]} : vector<32x96xbf16> to vector<32x8xbf16>
    %cst_195 = arith.constant dense<0.000000e+00> : vector<32x32xf32>
    %512 = tpu.matmul %509, %510, %cst_195 {dimension_numbers = #tpu.dot_dimension_numbers<[1], [1], [0], [0], [0, 0, 1, 0], [], []>} : vector<32x8xbf16>, vector<32x8xbf16>, vector<32x32xf32> -> vector<32x32xf32>
    %cst_196 = arith.constant 0.353553385 : f32
    %513 = vector.broadcast %cst_196 : f32 to vector<32x32xf32>
    %514 = arith.mulf %512, %513 : vector<32x32xf32>
    %515 = arith.addf %514, %2 : vector<32x32xf32>
    %cst_197 = arith.constant dense<0xFF800000> : vector<32xf32>
    %516 = vector.multi_reduction <maximumf>, %515, %cst_197 [1] : vector<32x32xf32> to vector<32xf32>
    %517 = vector.shape_cast %516 : vector<32xf32> to vector<32x1xf32>
    %518 = vector.broadcast %517 : vector<32x1xf32> to vector<32x32xf32>
    %519 = arith.subf %515, %518 : vector<32x32xf32>
    %520 = math.exp %519 : vector<32x32xf32>
    %cst_198 = arith.constant dense<0.000000e+00> : vector<32xf32>
    %521 = vector.multi_reduction <add>, %520, %cst_198 [1] : vector<32x32xf32> to vector<32xf32>
    %522 = vector.shape_cast %521 : vector<32xf32> to vector<32x1xf32>
    %523 = vector.broadcast %522 : vector<32x1xf32> to vector<32x32xf32>
    %524 = arith.divf %520, %523 : vector<32x32xf32>
    %525 = arith.truncf %524 : vector<32x32xf32> to vector<32x32xbf16>
    %cst_199 = arith.constant dense<0.000000e+00> : vector<32x8xf32>
    %526 = tpu.matmul %525, %511, %cst_199 {dimension_numbers = #tpu.dot_dimension_numbers<[1], [0], [0], [1], [0, 0, 1, 1], [], []>} : vector<32x32xbf16>, vector<32x8xbf16>, vector<32x8xf32> -> vector<32x8xf32>
    %527 = arith.truncf %526 : vector<32x8xf32> to vector<32x8xbf16>
    %c21 = arith.constant 21 : index
    %c0_200 = arith.constant 0 : index
    %528 = vector.load %arg4[%c21, %c0_200] : memref<30x32xf32, #tpu.memory_space<vmem>>, vector<1x32xf32>
    %c480 = arith.constant 480 : index
    %c0_201 = arith.constant 0 : index
    %529 = vector.load %arg11[%c480, %c0_201] : memref<704x32xbf16, #tpu.memory_space<vmem>>, vector<8x32xbf16>
    %cst_202 = arith.constant dense<0.000000e+00> : vector<32x32xf32>
    %530 = tpu.matmul %470, %529, %cst_202 {dimension_numbers = #tpu.dot_dimension_numbers<[1], [0], [0], [1], [0, 0, 1, 1], [], []>} : vector<32x8xbf16>, vector<8x32xbf16>, vector<32x32xf32> -> vector<32x32xf32>
    %531 = vector.broadcast %528 : vector<1x32xf32> to vector<32x32xf32>
    %532 = arith.addf %531, %530 : vector<32x32xf32>
    %c488 = arith.constant 488 : index
    %c0_203 = arith.constant 0 : index
    %533 = vector.load %arg11[%c488, %c0_203] : memref<704x32xbf16, #tpu.memory_space<vmem>>, vector<8x32xbf16>
    %cst_204 = arith.constant dense<0.000000e+00> : vector<32x32xf32>
    %534 = tpu.matmul %489, %533, %cst_204 {dimension_numbers = #tpu.dot_dimension_numbers<[1], [0], [0], [1], [0, 0, 1, 1], [], []>} : vector<32x8xbf16>, vector<8x32xbf16>, vector<32x32xf32> -> vector<32x32xf32>
    %535 = arith.addf %532, %534 : vector<32x32xf32>
    %c496 = arith.constant 496 : index
    %c0_205 = arith.constant 0 : index
    %536 = vector.load %arg11[%c496, %c0_205] : memref<704x32xbf16, #tpu.memory_space<vmem>>, vector<8x32xbf16>
    %cst_206 = arith.constant dense<0.000000e+00> : vector<32x32xf32>
    %537 = tpu.matmul %508, %536, %cst_206 {dimension_numbers = #tpu.dot_dimension_numbers<[1], [0], [0], [1], [0, 0, 1, 1], [], []>} : vector<32x8xbf16>, vector<8x32xbf16>, vector<32x32xf32> -> vector<32x32xf32>
    %538 = arith.addf %535, %537 : vector<32x32xf32>
    %c504 = arith.constant 504 : index
    %c0_207 = arith.constant 0 : index
    %539 = vector.load %arg11[%c504, %c0_207] : memref<704x32xbf16, #tpu.memory_space<vmem>>, vector<8x32xbf16>
    %cst_208 = arith.constant dense<0.000000e+00> : vector<32x32xf32>
    %540 = tpu.matmul %527, %539, %cst_208 {dimension_numbers = #tpu.dot_dimension_numbers<[1], [0], [0], [1], [0, 0, 1, 1], [], []>} : vector<32x8xbf16>, vector<8x32xbf16>, vector<32x32xf32> -> vector<32x32xf32>
    %541 = arith.addf %538, %540 : vector<32x32xf32>
    %542 = arith.addf %423, %541 : vector<32x32xf32>
    %c22 = arith.constant 22 : index
    %c0_209 = arith.constant 0 : index
    %543 = vector.load %arg4[%c22, %c0_209] : memref<30x32xf32, #tpu.memory_space<vmem>>, vector<1x32xf32>
    %c23 = arith.constant 23 : index
    %c0_210 = arith.constant 0 : index
    %544 = vector.load %arg4[%c23, %c0_210] : memref<30x32xf32, #tpu.memory_space<vmem>>, vector<1x32xf32>
    %cst_211 = arith.constant dense<0.000000e+00> : vector<32xf32>
    %545 = vector.multi_reduction <add>, %542, %cst_211 [1] : vector<32x32xf32> to vector<32xf32>
    %546 = vector.shape_cast %545 : vector<32xf32> to vector<32x1xf32>
    %cst_212 = arith.constant 3.200000e+01 : f32
    %547 = vector.broadcast %cst_212 : f32 to vector<32x1xf32>
    %548 = arith.divf %546, %547 : vector<32x1xf32>
    %549 = vector.broadcast %548 : vector<32x1xf32> to vector<32x32xf32>
    %550 = arith.subf %542, %549 : vector<32x32xf32>
    %551 = arith.mulf %550, %550 : vector<32x32xf32>
    %cst_213 = arith.constant dense<0.000000e+00> : vector<32xf32>
    %552 = vector.multi_reduction <add>, %551, %cst_213 [1] : vector<32x32xf32> to vector<32xf32>
    %553 = vector.shape_cast %552 : vector<32xf32> to vector<32x1xf32>
    %cst_214 = arith.constant 3.200000e+01 : f32
    %554 = vector.broadcast %cst_214 : f32 to vector<32x1xf32>
    %555 = arith.divf %553, %554 : vector<32x1xf32>
    %556 = vector.broadcast %548 : vector<32x1xf32> to vector<32x32xf32>
    %557 = arith.subf %542, %556 : vector<32x32xf32>
    %cst_215 = arith.constant 9.99999974E-6 : f32
    %558 = vector.broadcast %cst_215 : f32 to vector<32x1xf32>
    %559 = arith.addf %555, %558 : vector<32x1xf32>
    %560 = math.rsqrt %559 : vector<32x1xf32>
    %561 = vector.broadcast %560 : vector<32x1xf32> to vector<32x32xf32>
    %562 = arith.mulf %557, %561 : vector<32x32xf32>
    %563 = vector.broadcast %543 : vector<1x32xf32> to vector<32x32xf32>
    %564 = arith.mulf %562, %563 : vector<32x32xf32>
    %565 = vector.broadcast %544 : vector<1x32xf32> to vector<32x32xf32>
    %566 = arith.addf %564, %565 : vector<32x32xf32>
    %c64_216 = arith.constant 64 : index
    %c0_217 = arith.constant 0 : index
    %567 = vector.load %arg13[%c64_216, %c0_217] : memref<128x64xbf16, #tpu.memory_space<vmem>>, vector<32x64xbf16>
    %c10_218 = arith.constant 10 : index
    %c0_219 = arith.constant 0 : index
    %568 = vector.load %arg6[%c10_218, %c0_219] : memref<20x64xf32, #tpu.memory_space<vmem>>, vector<1x64xf32>
    %569 = arith.truncf %566 : vector<32x32xf32> to vector<32x32xbf16>
    %cst_220 = arith.constant dense<0.000000e+00> : vector<32x64xf32>
    %570 = tpu.matmul %569, %567, %cst_220 {dimension_numbers = #tpu.dot_dimension_numbers<[1], [0], [0], [1], [0, 0, 1, 1], [], []>} : vector<32x32xbf16>, vector<32x64xbf16>, vector<32x64xf32> -> vector<32x64xf32>
    %571 = vector.broadcast %568 : vector<1x64xf32> to vector<32x64xf32>
    %572 = arith.addf %570, %571 : vector<32x64xf32>
    %c96 = arith.constant 96 : index
    %c0_221 = arith.constant 0 : index
    %573 = vector.load %arg13[%c96, %c0_221] : memref<128x64xbf16, #tpu.memory_space<vmem>>, vector<32x64xbf16>
    %c11_222 = arith.constant 11 : index
    %c0_223 = arith.constant 0 : index
    %574 = vector.load %arg6[%c11_222, %c0_223] : memref<20x64xf32, #tpu.memory_space<vmem>>, vector<1x64xf32>
    %575 = arith.truncf %566 : vector<32x32xf32> to vector<32x32xbf16>
    %cst_224 = arith.constant dense<0.000000e+00> : vector<32x64xf32>
    %576 = tpu.matmul %575, %573, %cst_224 {dimension_numbers = #tpu.dot_dimension_numbers<[1], [0], [0], [1], [0, 0, 1, 1], [], []>} : vector<32x32xbf16>, vector<32x64xbf16>, vector<32x64xf32> -> vector<32x64xf32>
    %577 = vector.broadcast %574 : vector<1x64xf32> to vector<32x64xf32>
    %578 = arith.addf %576, %577 : vector<32x64xf32>
    %579 = arith.negf %578 : vector<32x64xf32>
    %580 = math.exp %579 : vector<32x64xf32>
    %cst_225 = arith.constant 1.000000e+00 : f32
    %581 = vector.broadcast %cst_225 : f32 to vector<32x64xf32>
    %582 = arith.addf %581, %580 : vector<32x64xf32>
    %583 = arith.divf %581, %582 : vector<32x64xf32>
    %584 = arith.mulf %572, %583 : vector<32x64xf32>
    %c3_i32_226 = arith.constant 3 : i32
    %585 = tpu.dynamic_rotate %584 by %c3_i32_226 dim 0 : vector<32x64xf32>, i32 -> vector<32x64xf32>
    %c0_227 = arith.constant 0 : index
    %c2_228 = arith.constant 2 : index
    %586 = vector.load %arg2[%c0_227, %c2_228] : memref<32x9xf32, #tpu.memory_space<vmem>>, vector<32x1xf32>
    %587 = vector.broadcast %586 : vector<32x1xf32> to vector<32x64xf32>
    %588 = arith.mulf %585, %587 : vector<32x64xf32>
    %c13_229 = arith.constant 13 : index
    %c0_230 = arith.constant 0 : index
    %589 = vector.load %arg6[%c13_229, %c0_230] : memref<20x64xf32, #tpu.memory_space<vmem>>, vector<1x64xf32>
    %590 = vector.broadcast %589 : vector<1x64xf32> to vector<32x64xf32>
    %591 = arith.mulf %588, %590 : vector<32x64xf32>
    %c2_i32_231 = arith.constant 2 : i32
    %592 = tpu.dynamic_rotate %584 by %c2_i32_231 dim 0 : vector<32x64xf32>, i32 -> vector<32x64xf32>
    %c0_232 = arith.constant 0 : index
    %c3_233 = arith.constant 3 : index
    %593 = vector.load %arg2[%c0_232, %c3_233] : memref<32x9xf32, #tpu.memory_space<vmem>>, vector<32x1xf32>
    %594 = vector.broadcast %593 : vector<32x1xf32> to vector<32x64xf32>
    %595 = arith.mulf %592, %594 : vector<32x64xf32>
    %c14_234 = arith.constant 14 : index
    %c0_235 = arith.constant 0 : index
    %596 = vector.load %arg6[%c14_234, %c0_235] : memref<20x64xf32, #tpu.memory_space<vmem>>, vector<1x64xf32>
    %597 = vector.broadcast %596 : vector<1x64xf32> to vector<32x64xf32>
    %598 = arith.mulf %595, %597 : vector<32x64xf32>
    %599 = arith.addf %591, %598 : vector<32x64xf32>
    %c1_i32_236 = arith.constant 1 : i32
    %600 = tpu.dynamic_rotate %584 by %c1_i32_236 dim 0 : vector<32x64xf32>, i32 -> vector<32x64xf32>
    %c0_237 = arith.constant 0 : index
    %c4_238 = arith.constant 4 : index
    %601 = vector.load %arg2[%c0_237, %c4_238] : memref<32x9xf32, #tpu.memory_space<vmem>>, vector<32x1xf32>
    %602 = vector.broadcast %601 : vector<32x1xf32> to vector<32x64xf32>
    %603 = arith.mulf %600, %602 : vector<32x64xf32>
    %c15_239 = arith.constant 15 : index
    %c0_240 = arith.constant 0 : index
    %604 = vector.load %arg6[%c15_239, %c0_240] : memref<20x64xf32, #tpu.memory_space<vmem>>, vector<1x64xf32>
    %605 = vector.broadcast %604 : vector<1x64xf32> to vector<32x64xf32>
    %606 = arith.mulf %603, %605 : vector<32x64xf32>
    %607 = arith.addf %599, %606 : vector<32x64xf32>
    %c0_241 = arith.constant 0 : index
    %c5_242 = arith.constant 5 : index
    %608 = vector.load %arg2[%c0_241, %c5_242] : memref<32x9xf32, #tpu.memory_space<vmem>>, vector<32x1xf32>
    %609 = vector.broadcast %608 : vector<32x1xf32> to vector<32x64xf32>
    %610 = arith.mulf %584, %609 : vector<32x64xf32>
    %c16_243 = arith.constant 16 : index
    %c0_244 = arith.constant 0 : index
    %611 = vector.load %arg6[%c16_243, %c0_244] : memref<20x64xf32, #tpu.memory_space<vmem>>, vector<1x64xf32>
    %612 = vector.broadcast %611 : vector<1x64xf32> to vector<32x64xf32>
    %613 = arith.mulf %610, %612 : vector<32x64xf32>
    %614 = arith.addf %607, %613 : vector<32x64xf32>
    %c31_i32_245 = arith.constant 31 : i32
    %615 = tpu.dynamic_rotate %584 by %c31_i32_245 dim 0 : vector<32x64xf32>, i32 -> vector<32x64xf32>
    %c0_246 = arith.constant 0 : index
    %c6_247 = arith.constant 6 : index
    %616 = vector.load %arg2[%c0_246, %c6_247] : memref<32x9xf32, #tpu.memory_space<vmem>>, vector<32x1xf32>
    %617 = vector.broadcast %616 : vector<32x1xf32> to vector<32x64xf32>
    %618 = arith.mulf %615, %617 : vector<32x64xf32>
    %c17_248 = arith.constant 17 : index
    %c0_249 = arith.constant 0 : index
    %619 = vector.load %arg6[%c17_248, %c0_249] : memref<20x64xf32, #tpu.memory_space<vmem>>, vector<1x64xf32>
    %620 = vector.broadcast %619 : vector<1x64xf32> to vector<32x64xf32>
    %621 = arith.mulf %618, %620 : vector<32x64xf32>
    %622 = arith.addf %614, %621 : vector<32x64xf32>
    %c30_i32_250 = arith.constant 30 : i32
    %623 = tpu.dynamic_rotate %584 by %c30_i32_250 dim 0 : vector<32x64xf32>, i32 -> vector<32x64xf32>
    %c0_251 = arith.constant 0 : index
    %c7_252 = arith.constant 7 : index
    %624 = vector.load %arg2[%c0_251, %c7_252] : memref<32x9xf32, #tpu.memory_space<vmem>>, vector<32x1xf32>
    %625 = vector.broadcast %624 : vector<32x1xf32> to vector<32x64xf32>
    %626 = arith.mulf %623, %625 : vector<32x64xf32>
    %c18_253 = arith.constant 18 : index
    %c0_254 = arith.constant 0 : index
    %627 = vector.load %arg6[%c18_253, %c0_254] : memref<20x64xf32, #tpu.memory_space<vmem>>, vector<1x64xf32>
    %628 = vector.broadcast %627 : vector<1x64xf32> to vector<32x64xf32>
    %629 = arith.mulf %626, %628 : vector<32x64xf32>
    %630 = arith.addf %622, %629 : vector<32x64xf32>
    %c29_i32_255 = arith.constant 29 : i32
    %631 = tpu.dynamic_rotate %584 by %c29_i32_255 dim 0 : vector<32x64xf32>, i32 -> vector<32x64xf32>
    %c0_256 = arith.constant 0 : index
    %c8_257 = arith.constant 8 : index
    %632 = vector.load %arg2[%c0_256, %c8_257] : memref<32x9xf32, #tpu.memory_space<vmem>>, vector<32x1xf32>
    %633 = vector.broadcast %632 : vector<32x1xf32> to vector<32x64xf32>
    %634 = arith.mulf %631, %633 : vector<32x64xf32>
    %c19_258 = arith.constant 19 : index
    %c0_259 = arith.constant 0 : index
    %635 = vector.load %arg6[%c19_258, %c0_259] : memref<20x64xf32, #tpu.memory_space<vmem>>, vector<1x64xf32>
    %636 = vector.broadcast %635 : vector<1x64xf32> to vector<32x64xf32>
    %637 = arith.mulf %634, %636 : vector<32x64xf32>
    %638 = arith.addf %630, %637 : vector<32x64xf32>
    %c12_260 = arith.constant 12 : index
    %c0_261 = arith.constant 0 : index
    %639 = vector.load %arg6[%c12_260, %c0_261] : memref<20x64xf32, #tpu.memory_space<vmem>>, vector<1x64xf32>
    %640 = vector.broadcast %639 : vector<1x64xf32> to vector<32x64xf32>
    %641 = arith.addf %638, %640 : vector<32x64xf32>
    %c512 = arith.constant 512 : index
    %c0_262 = arith.constant 0 : index
    %642 = vector.load %arg11[%c512, %c0_262] : memref<704x32xbf16, #tpu.memory_space<vmem>>, vector<64x32xbf16>
    %643 = arith.negf %641 : vector<32x64xf32>
    %644 = math.exp %643 : vector<32x64xf32>
    %cst_263 = arith.constant 1.000000e+00 : f32
    %645 = vector.broadcast %cst_263 : f32 to vector<32x64xf32>
    %646 = arith.addf %645, %644 : vector<32x64xf32>
    %647 = arith.divf %645, %646 : vector<32x64xf32>
    %648 = arith.mulf %641, %647 : vector<32x64xf32>
    %c24 = arith.constant 24 : index
    %c0_264 = arith.constant 0 : index
    %649 = vector.load %arg4[%c24, %c0_264] : memref<30x32xf32, #tpu.memory_space<vmem>>, vector<1x32xf32>
    %650 = arith.truncf %648 : vector<32x64xf32> to vector<32x64xbf16>
    %cst_265 = arith.constant dense<0.000000e+00> : vector<32x32xf32>
    %651 = tpu.matmul %650, %642, %cst_265 {dimension_numbers = #tpu.dot_dimension_numbers<[1], [0], [0], [1], [0, 0, 1, 1], [], []>} : vector<32x64xbf16>, vector<64x32xbf16>, vector<32x32xf32> -> vector<32x32xf32>
    %652 = vector.broadcast %649 : vector<1x32xf32> to vector<32x32xf32>
    %653 = arith.addf %651, %652 : vector<32x32xf32>
    %654 = arith.addf %542, %653 : vector<32x32xf32>
    %c25 = arith.constant 25 : index
    %c0_266 = arith.constant 0 : index
    %655 = vector.load %arg4[%c25, %c0_266] : memref<30x32xf32, #tpu.memory_space<vmem>>, vector<1x32xf32>
    %c26 = arith.constant 26 : index
    %c0_267 = arith.constant 0 : index
    %656 = vector.load %arg4[%c26, %c0_267] : memref<30x32xf32, #tpu.memory_space<vmem>>, vector<1x32xf32>
    %cst_268 = arith.constant dense<0.000000e+00> : vector<32xf32>
    %657 = vector.multi_reduction <add>, %654, %cst_268 [1] : vector<32x32xf32> to vector<32xf32>
    %658 = vector.shape_cast %657 : vector<32xf32> to vector<32x1xf32>
    %cst_269 = arith.constant 3.200000e+01 : f32
    %659 = vector.broadcast %cst_269 : f32 to vector<32x1xf32>
    %660 = arith.divf %658, %659 : vector<32x1xf32>
    %661 = vector.broadcast %660 : vector<32x1xf32> to vector<32x32xf32>
    %662 = arith.subf %654, %661 : vector<32x32xf32>
    %663 = arith.mulf %662, %662 : vector<32x32xf32>
    %cst_270 = arith.constant dense<0.000000e+00> : vector<32xf32>
    %664 = vector.multi_reduction <add>, %663, %cst_270 [1] : vector<32x32xf32> to vector<32xf32>
    %665 = vector.shape_cast %664 : vector<32xf32> to vector<32x1xf32>
    %cst_271 = arith.constant 3.200000e+01 : f32
    %666 = vector.broadcast %cst_271 : f32 to vector<32x1xf32>
    %667 = arith.divf %665, %666 : vector<32x1xf32>
    %668 = vector.broadcast %660 : vector<32x1xf32> to vector<32x32xf32>
    %669 = arith.subf %654, %668 : vector<32x32xf32>
    %cst_272 = arith.constant 9.99999974E-6 : f32
    %670 = vector.broadcast %cst_272 : f32 to vector<32x1xf32>
    %671 = arith.addf %667, %670 : vector<32x1xf32>
    %672 = math.rsqrt %671 : vector<32x1xf32>
    %673 = vector.broadcast %672 : vector<32x1xf32> to vector<32x32xf32>
    %674 = arith.mulf %669, %673 : vector<32x32xf32>
    %675 = vector.broadcast %655 : vector<1x32xf32> to vector<32x32xf32>
    %676 = arith.mulf %674, %675 : vector<32x32xf32>
    %677 = vector.broadcast %656 : vector<1x32xf32> to vector<32x32xf32>
    %678 = arith.addf %676, %677 : vector<32x32xf32>
    %c96_273 = arith.constant 96 : index
    %c0_274 = arith.constant 0 : index
    %679 = vector.load %arg10[%c96_273, %c0_274] : memref<128x128xbf16, #tpu.memory_space<vmem>>, vector<32x128xbf16>
    %c3_275 = arith.constant 3 : index
    %c0_276 = arith.constant 0 : index
    %680 = vector.load %arg5[%c3_275, %c0_276] : memref<4x128xf32, #tpu.memory_space<vmem>>, vector<1x128xf32>
    %681 = arith.truncf %678 : vector<32x32xf32> to vector<32x32xbf16>
    %cst_277 = arith.constant dense<0.000000e+00> : vector<32x128xf32>
    %682 = tpu.matmul %681, %679, %cst_277 {dimension_numbers = #tpu.dot_dimension_numbers<[1], [0], [0], [1], [0, 0, 1, 1], [], []>} : vector<32x32xbf16>, vector<32x128xbf16>, vector<32x128xf32> -> vector<32x128xf32>
    %683 = vector.broadcast %680 : vector<1x128xf32> to vector<32x128xf32>
    %684 = arith.addf %682, %683 : vector<32x128xf32>
    %685 = arith.negf %684 : vector<32x128xf32>
    %686 = math.exp %685 : vector<32x128xf32>
    %cst_278 = arith.constant 1.000000e+00 : f32
    %687 = vector.broadcast %cst_278 : f32 to vector<32x128xf32>
    %688 = arith.addf %687, %686 : vector<32x128xf32>
    %689 = arith.divf %687, %688 : vector<32x128xf32>
    %690 = arith.mulf %684, %689 : vector<32x128xf32>
    %c576 = arith.constant 576 : index
    %c0_279 = arith.constant 0 : index
    %691 = vector.load %arg11[%c576, %c0_279] : memref<704x32xbf16, #tpu.memory_space<vmem>>, vector<128x32xbf16>
    %c27 = arith.constant 27 : index
    %c0_280 = arith.constant 0 : index
    %692 = vector.load %arg4[%c27, %c0_280] : memref<30x32xf32, #tpu.memory_space<vmem>>, vector<1x32xf32>
    %693 = arith.truncf %690 : vector<32x128xf32> to vector<32x128xbf16>
    %cst_281 = arith.constant dense<0.000000e+00> : vector<32x32xf32>
    %694 = tpu.matmul %693, %691, %cst_281 {dimension_numbers = #tpu.dot_dimension_numbers<[1], [0], [0], [1], [0, 0, 1, 1], [], []>} : vector<32x128xbf16>, vector<128x32xbf16>, vector<32x32xf32> -> vector<32x32xf32>
    %695 = vector.broadcast %692 : vector<1x32xf32> to vector<32x32xf32>
    %696 = arith.addf %694, %695 : vector<32x32xf32>
    %cst_282 = arith.constant 5.000000e-01 : f32
    %697 = vector.broadcast %cst_282 : f32 to vector<32x32xf32>
    %698 = arith.mulf %697, %696 : vector<32x32xf32>
    %699 = arith.addf %654, %698 : vector<32x32xf32>
    %c28 = arith.constant 28 : index
    %c0_283 = arith.constant 0 : index
    %700 = vector.load %arg4[%c28, %c0_283] : memref<30x32xf32, #tpu.memory_space<vmem>>, vector<1x32xf32>
    %c29 = arith.constant 29 : index
    %c0_284 = arith.constant 0 : index
    %701 = vector.load %arg4[%c29, %c0_284] : memref<30x32xf32, #tpu.memory_space<vmem>>, vector<1x32xf32>
    %cst_285 = arith.constant dense<0.000000e+00> : vector<32xf32>
    %702 = vector.multi_reduction <add>, %699, %cst_285 [1] : vector<32x32xf32> to vector<32xf32>
    %703 = vector.shape_cast %702 : vector<32xf32> to vector<32x1xf32>
    %cst_286 = arith.constant 3.200000e+01 : f32
    %704 = vector.broadcast %cst_286 : f32 to vector<32x1xf32>
    %705 = arith.divf %703, %704 : vector<32x1xf32>
    %706 = vector.broadcast %705 : vector<32x1xf32> to vector<32x32xf32>
    %707 = arith.subf %699, %706 : vector<32x32xf32>
    %708 = arith.mulf %707, %707 : vector<32x32xf32>
    %cst_287 = arith.constant dense<0.000000e+00> : vector<32xf32>
    %709 = vector.multi_reduction <add>, %708, %cst_287 [1] : vector<32x32xf32> to vector<32xf32>
    %710 = vector.shape_cast %709 : vector<32xf32> to vector<32x1xf32>
    %cst_288 = arith.constant 3.200000e+01 : f32
    %711 = vector.broadcast %cst_288 : f32 to vector<32x1xf32>
    %712 = arith.divf %710, %711 : vector<32x1xf32>
    %713 = vector.broadcast %705 : vector<32x1xf32> to vector<32x32xf32>
    %714 = arith.subf %699, %713 : vector<32x32xf32>
    %cst_289 = arith.constant 9.99999974E-6 : f32
    %715 = vector.broadcast %cst_289 : f32 to vector<32x1xf32>
    %716 = arith.addf %712, %715 : vector<32x1xf32>
    %717 = math.rsqrt %716 : vector<32x1xf32>
    %718 = vector.broadcast %717 : vector<32x1xf32> to vector<32x32xf32>
    %719 = arith.mulf %714, %718 : vector<32x32xf32>
    %720 = vector.broadcast %700 : vector<1x32xf32> to vector<32x32xf32>
    %721 = arith.mulf %719, %720 : vector<32x32xf32>
    %722 = vector.broadcast %701 : vector<1x32xf32> to vector<32x32xf32>
    %723 = arith.addf %721, %722 : vector<32x32xf32>
    %c0_290 = arith.constant 0 : index
    %c0_291 = arith.constant 0 : index
    %724 = vector.load %arg14[%c0_290, %c0_291] : memref<33x2xf32, #tpu.memory_space<vmem>>, vector<32x2xf32>
    %725 = arith.truncf %724 : vector<32x2xf32> to vector<32x2xbf16>
    %c32_292 = arith.constant 32 : index
    %c0_293 = arith.constant 0 : index
    %726 = vector.load %arg14[%c32_292, %c0_293] : memref<33x2xf32, #tpu.memory_space<vmem>>, vector<1x2xf32>
    %727 = arith.truncf %723 : vector<32x32xf32> to vector<32x32xbf16>
    %cst_294 = arith.constant dense<0.000000e+00> : vector<32x2xf32>
    %728 = tpu.matmul %727, %725, %cst_294 {dimension_numbers = #tpu.dot_dimension_numbers<[1], [0], [0], [1], [0, 0, 1, 1], [], []>} : vector<32x32xbf16>, vector<32x2xbf16>, vector<32x2xf32> -> vector<32x2xf32>
    %729 = vector.broadcast %726 : vector<1x2xf32> to vector<32x2xf32>
    %730 = arith.addf %728, %729 : vector<32x2xf32>
    %c0_295 = arith.constant 0 : index
    %c0_296 = arith.constant 0 : index
    %c0_297 = arith.constant 0 : index
    %731 = vector.load %arg15[%c0_295, %c0_296, %c0_297] : memref<1x32x2xf32, #tpu.memory_space<vmem>>, vector<1x32x2xf32>
    %732 = vector.shape_cast %731 : vector<1x32x2xf32> to vector<32x2xf32>
    %733 = vector.shape_cast %730 : vector<32x2xf32> to vector<1x32x2xf32>
    tpu.vector_store %arg15[%c0_295, %c0_296, %c0_297], %733 {strides = array<i32>} : memref<1x32x2xf32, #tpu.memory_space<vmem>>, vector<1x32x2xf32>,
    return
  }
  func.func @transform_0(%arg0: i32) -> (i32, i32, i32) {
    %c0_i32 = arith.constant 0 : i32
    %c0_i32_0 = arith.constant 0 : i32
    %c0_i32_1 = arith.constant 0 : i32
    return %arg0, %c0_i32, %c0_i32_0 : i32, i32, i32
  }
  func.func @transform_1(%arg0: i32) -> (i32, i32) {
    %c0_i32 = arith.constant 0 : i32
    %c0_i32_0 = arith.constant 0 : i32
    %c0_i32_1 = arith.constant 0 : i32
    return %c0_i32, %c0_i32_0 : i32, i32
  }
  func.func @transform_2(%arg0: i32) -> (i32, i32) {
    %c0_i32 = arith.constant 0 : i32
    %c0_i32_0 = arith.constant 0 : i32
    %c0_i32_1 = arith.constant 0 : i32
    return %c0_i32, %c0_i32_0 : i32, i32
  }
  func.func @transform_3(%arg0: i32) -> (i32, i32) {
    %c0_i32 = arith.constant 0 : i32
    %c0_i32_0 = arith.constant 0 : i32
    %c0_i32_1 = arith.constant 0 : i32
    return %c0_i32, %c0_i32_0 : i32, i32
  }
  func.func @transform_4(%arg0: i32) -> (i32, i32) {
    %c0_i32 = arith.constant 0 : i32
    %c0_i32_0 = arith.constant 0 : i32
    %c0_i32_1 = arith.constant 0 : i32
    return %c0_i32, %c0_i32_0 : i32, i32
  }
  func.func @transform_5(%arg0: i32) -> (i32, i32) {
    %c0_i32 = arith.constant 0 : i32
    %c0_i32_0 = arith.constant 0 : i32
    %c0_i32_1 = arith.constant 0 : i32
    return %c0_i32, %c0_i32_0 : i32, i32
  }
  func.func @transform_6(%arg0: i32) -> (i32, i32) {
    %c0_i32 = arith.constant 0 : i32
    %c0_i32_0 = arith.constant 0 : i32
    %c0_i32_1 = arith.constant 0 : i32
    return %c0_i32, %c0_i32_0 : i32, i32
  }
  func.func @transform_7(%arg0: i32) -> (i32, i32) {
    %c0_i32 = arith.constant 0 : i32
    %c0_i32_0 = arith.constant 0 : i32
    %c0_i32_1 = arith.constant 0 : i32
    return %c0_i32, %c0_i32_0 : i32, i32
  }
  func.func @transform_8(%arg0: i32) -> (i32, i32) {
    %c0_i32 = arith.constant 0 : i32
    %c0_i32_0 = arith.constant 0 : i32
    %c0_i32_1 = arith.constant 0 : i32
    return %c0_i32, %c0_i32_0 : i32, i32
  }
  func.func @transform_9(%arg0: i32) -> (i32, i32) {
    %c0_i32 = arith.constant 0 : i32
    %c0_i32_0 = arith.constant 0 : i32
    %c0_i32_1 = arith.constant 0 : i32
    return %c0_i32, %c0_i32_0 : i32, i32
  }
  func.func @transform_10(%arg0: i32) -> (i32, i32) {
    %c0_i32 = arith.constant 0 : i32
    %c0_i32_0 = arith.constant 0 : i32
    %c0_i32_1 = arith.constant 0 : i32
    return %c0_i32, %c0_i32_0 : i32, i32
  }
  func.func @transform_11(%arg0: i32) -> (i32, i32) {
    %c0_i32 = arith.constant 0 : i32
    %c0_i32_0 = arith.constant 0 : i32
    %c0_i32_1 = arith.constant 0 : i32
    return %c0_i32, %c0_i32_0 : i32, i32
  }
  func.func @transform_12(%arg0: i32) -> (i32, i32) {
    %c0_i32 = arith.constant 0 : i32
    %c0_i32_0 = arith.constant 0 : i32
    %c0_i32_1 = arith.constant 0 : i32
    return %c0_i32, %c0_i32_0 : i32, i32
  }
  func.func @transform_13(%arg0: i32) -> (i32, i32) {
    %c0_i32 = arith.constant 0 : i32
    %c0_i32_0 = arith.constant 0 : i32
    %c0_i32_1 = arith.constant 0 : i32
    return %c0_i32, %c0_i32_0 : i32, i32
  }
  func.func @transform_14(%arg0: i32) -> (i32, i32, i32) {
    %c0_i32 = arith.constant 0 : i32
    %c0_i32_0 = arith.constant 0 : i32
    %c0_i32_1 = arith.constant 0 : i32
    return %arg0, %c0_i32, %c0_i32_0 : i32, i32, i32
  }
}

</mosaic_0001>

<llo_original>
// kernel: squeeze.18
$region0: #{squeeze.18}
  %s0 = inlined_call_operand.vmem [shape: f32[4,1280], index: 0, kind: input, shape index: {}]
  %s1 = inlined_call_operand.vmem [shape: f32[4,8,160], index: 1, kind: output, shape index: {}]
  $region1: #{squeeze.18} parent=0
    #allocation0 [shape = 'u8[40960]{0}', space=vmem, size = 0xa000, scoped, tag = 'scoped mem for input reshape']
    %s3 = sshllo.u32 0, 4
    %s4 = smul.addr 4, 9
    %s5 = scalar_lea.vmem %s0, %s4
    %v6 = vld [vmem:[%s5] sm:%s3]
    %s7 = scalar_lea.vmem [#allocation0], 72
    %8 = vst [vmem:[%s7] sm:%s3] %v6
    %s9 = smul.addr 4, 8
    %s10 = scalar_lea.vmem %s0, %s9
    %v11 = vld [vmem:[%s10] sm:%s3]
    %s12 = scalar_lea.vmem [#allocation0], 64
    %13 = vst [vmem:[%s12] sm:%s3] %v11
    %s14 = smul.addr 4, 7
    %s15 = scalar_lea.vmem %s0, %s14
    %v16 = vld [vmem:[%s15] sm:%s3]
    %s17 = scalar_lea.vmem [#allocation0], 56
    %18 = vst [vmem:[%s17] sm:%s3] %v16
    %s19 = smul.addr 4, 6
    %s20 = scalar_lea.vmem %s0, %s19
    %v21 = vld [vmem:[%s20] sm:%s3]
    %s22 = scalar_lea.vmem [#allocation0], 48
    %23 = vst [vmem:[%s22] sm:%s3] %v21
    %s24 = smul.addr 4, 5
    %s25 = scalar_lea.vmem %s0, %s24
    %v26 = vld [vmem:[%s25] sm:%s3]
    %s27 = scalar_lea.vmem [#allocation0], 40
    %28 = vst [vmem:[%s27] sm:%s3] %v26
    %s29 = smul.addr 4, 4
    %s30 = scalar_lea.vmem %s0, %s29
    %v31 = vld [vmem:[%s30] sm:%s3]
    %s32 = scalar_lea.vmem [#allocation0], 32
    %33 = vst [vmem:[%s32] sm:%s3] %v31
    %s34 = smul.addr 4, 3
    %s35 = scalar_lea.vmem %s0, %s34
    %v36 = vld [vmem:[%s35] sm:%s3]
    %s37 = scalar_lea.vmem [#allocation0], 24
    %38 = vst [vmem:[%s37] sm:%s3] %v36
    %s39 = smul.addr 4, 2
    %s40 = scalar_lea.vmem %s0, %s39
    %v41 = vld [vmem:[%s40] sm:%s3]
    %s42 = scalar_lea.vmem [#allocation0], 16
    %43 = vst [vmem:[%s42] sm:%s3] %v41
    %s44 = scalar_lea.vmem %s0, 4
    %v45 = vld [vmem:[%s44] sm:%s3]
    %s46 = scalar_lea.vmem [#allocation0], 8
    %47 = vst [vmem:[%s46] sm:%s3] %v45
    %v48 = vld [vmem:[%s0] sm:%s3]
    %49 = vst [vmem:[#allocation0] sm:%s3] %v48
    %s50 = scalar_lea.vmem [#allocation0], 8
    %v51 = vld [vmem:[%s50] sm:$0xf]
    %vm52 = vcmask 261120
    %s53 = scalar_lea.vmem %s1, 8
    %54 = vst.msk [vmem:[%s53] ss:$16 sm:$0x3] %vm52, %v51
    %s55 = scalar_lea.vmem %s1, 8
    %56 = vst.msk [vmem:[%s55] ss:$16 sm:$0xc] %vm52, %v51
    %s57 = scalar_lea.vmem [#allocation0], 48
    %v58 = vld [vmem:[%s57] sm:$0xf]
    %vm59 = vcmask 261120
    %s60 = scalar_lea.vmem %s1, 12
    %61 = vst.msk [vmem:[%s60] ss:$16 sm:$0x3] %vm59, %v58
    %s62 = scalar_lea.vmem %s1, 12
    %63 = vst.msk [vmem:[%s62] ss:$16 sm:$0xc] %vm59, %v58
    %v64 = vld [vmem:[#allocation0] sm:$0xf]
    %65 = vst [vmem:[%s1] ss:$16 sm:$0x3] %v64
    %66 = vst [vmem:[%s1] ss:$16 sm:$0xc] %v64
    %s67 = scalar_lea.vmem [#allocation0], 40
    %v68 = vld [vmem:[%s67] sm:$0xf]
    %s69 = scalar_lea.vmem %s1, 4
    %70 = vst [vmem:[%s69] ss:$16 sm:$0x3] %v68
    %s71 = scalar_lea.vmem %s1, 4
    %72 = vst [vmem:[%s71] ss:$16 sm:$0xc] %v68
    %s73 = scalar_lea.vmem [#allocation0], 16
    %s74 = smov 3
    %v75 = vld [vmem:[%s73] ss:$40 sm:%s74]
    %s76 = scalar_lea.vmem [#allocation0], 4294967233
    %s77 = smov 12
    %v78 = vld [vmem:[%s76] ss:$40 sm:%s77]
    %vm79 = vcmask 1043458
    %v80 = vsel %vm79, %v78, %v75
    %s81 = scalar_lea.vmem [#allocation0], 4294967154
    %s82 = smov 48
    %v83 = vld [vmem:[%s81] ss:$40 sm:%s82]
    %vm84 = vcmask 1045508
    %v85 = vsel %vm84, %v83, %v80
    %s86 = scalar_lea.vmem [#allocation0], 4294967075
    %s87 = smov 192
    %v88 = vld [vmem:[%s86] ss:$40 sm:%s87]
    %vm89 = vcmask 1047558
    %v90 = vsel %vm89, %v88, %v85
    %s91 = scalar_lea.vmem [#allocation0], 16
    %s92 = smov 3
    %v93 = vld [vmem:[%s91] ss:$40 sm:%s92]
    %s94 = scalar_lea.vmem [#allocation0], 4294967233
    %s95 = smov 12
    %v96 = vld [vmem:[%s94] ss:$40 sm:%s95]
    %vm97 = vcmask 1043458
    %v98 = vsel %vm97, %v96, %v93
    %s99 = scalar_lea.vmem [#allocation0], 4294967154
    %s100 = smov 48
    %v101 = vld [vmem:[%s99] ss:$40 sm:%s100]
    %vm102 = vcmask 1045508
    %v103 = vsel %vm102, %v101, %v98
    %s104 = scalar_lea.vmem [#allocation0], 4294967075
    %s105 = smov 192
    %v106 = vld [vmem:[%s104] ss:$40 sm:%s105]
    %vm107 = vcmask 1047558
    %v108 = vsel %vm107, %v106, %v103
    %vm109 = vcmask 261120
    %v110 = vsel %vm109, %v108, %v90
    %111 = vrot.lane.b32.xlu0 %v110, 96
    %v112 = vpop.permute.xlu0 %111
    %vm113 = vcmask 261120
    %s114 = scalar_lea.vmem %s1, 9
    %115 = vst.msk [vmem:[%s114] ss:$4 sm:$0x3] %vm113, %v112
    %s116 = scalar_lea.vmem %s1, 17
    %117 = vst.msk [vmem:[%s116] ss:$4 sm:$0xc] %vm113, %v112
    %s118 = scalar_lea.vmem %s1, 25
    %119 = vst.msk [vmem:[%s118] ss:$4 sm:$0x30] %vm113, %v112
    %s120 = scalar_lea.vmem %s1, 33
    %121 = vst.msk [vmem:[%s120] ss:$4 sm:$0xc0] %vm113, %v112
    %vm122 = vcmask 1048320
    %s123 = scalar_lea.vmem %s1, 1
    %124 = vst.msk [vmem:[%s123] ss:$4 sm:$0x3] %vm122, %v112
    %s125 = scalar_lea.vmem %s1, 9
    %126 = vst.msk [vmem:[%s125] ss:$4 sm:$0xc] %vm122, %v112
    %s127 = scalar_lea.vmem %s1, 17
    %128 = vst.msk [vmem:[%s127] ss:$4 sm:$0x30] %vm122, %v112
    %s129 = scalar_lea.vmem %s1, 25
    %130 = vst.msk [vmem:[%s129] ss:$4 sm:$0xc0] %vm122, %v112
    %s131 = scalar_lea.vmem [#allocation0], 8
    %s132 = smov 3
    %v133 = vld [vmem:[%s131] ss:$40 sm:%s132]
    %s134 = scalar_lea.vmem [#allocation0], 4294967225
    %s135 = smov 12
    %v136 = vld [vmem:[%s134] ss:$40 sm:%s135]
    %vm137 = vcmask 1043458
    %v138 = vsel %vm137, %v136, %v133
    %s139 = scalar_lea.vmem [#allocation0], 4294967146
    %s140 = smov 48
    %v141 = vld [vmem:[%s139] ss:$40 sm:%s140]
    %vm142 = vcmask 1045508
    %v143 = vsel %vm142, %v141, %v138
    %s144 = scalar_lea.vmem [#allocation0], 4294967067
    %s145 = smov 192
    %v146 = vld [vmem:[%s144] ss:$40 sm:%s145]
    %vm147 = vcmask 1047558
    %v148 = vsel %vm147, %v146, %v143
    %149 = vrot.lane.b32.xlu0 %v148, 96
    %v150 = vpop.permute.xlu0 %149
    %vm151 = vcmask 785408
    %s152 = scalar_lea.vmem %s1, 1
    %153 = vst.msk [vmem:[%s152] ss:$4 sm:$0x3] %vm151, %v150
    %s154 = scalar_lea.vmem %s1, 9
    %155 = vst.msk [vmem:[%s154] ss:$4 sm:$0xc] %vm151, %v150
    %s156 = scalar_lea.vmem %s1, 17
    %157 = vst.msk [vmem:[%s156] ss:$4 sm:$0x30] %vm151, %v150
    %s158 = scalar_lea.vmem %s1, 25
    %159 = vst.msk [vmem:[%s158] ss:$4 sm:$0xc0] %vm151, %v150
    %s160 = scalar_lea.vmem [#allocation0], 24
    %s161 = smov 3
    %v162 = vld [vmem:[%s160] ss:$40 sm:%s161]
    %s163 = scalar_lea.vmem [#allocation0], 4294967241
    %s164 = smov 12
    %v165 = vld [vmem:[%s163] ss:$40 sm:%s164]
    %vm166 = vcmask 1043458
    %v167 = vsel %vm166, %v165, %v162
    %s168 = scalar_lea.vmem [#allocation0], 4294967162
    %s169 = smov 48
    %v170 = vld [vmem:[%s168] ss:$40 sm:%s169]
    %vm171 = vcmask 1045508
    %v172 = vsel %vm171, %v170, %v167
    %s173 = scalar_lea.vmem [#allocation0], 4294967083
    %s174 = smov 192
    %v175 = vld [vmem:[%s173] ss:$40 sm:%s174]
    %vm176 = vcmask 1047558
    %v177 = vsel %vm176, %v175, %v172
    %s178 = scalar_lea.vmem [#allocation0], 24
    %s179 = smov 3
    %v180 = vld [vmem:[%s178] ss:$40 sm:%s179]
    %s181 = scalar_lea.vmem [#allocation0], 4294967241
    %s182 = smov 12
    %v183 = vld [vmem:[%s181] ss:$40 sm:%s182]
    %vm184 = vcmask 1043458
    %v185 = vsel %vm184, %v183, %v180
    %s186 = scalar_lea.vmem [#allocation0], 4294967162
    %s187 = smov 48
    %v188 = vld [vmem:[%s186] ss:$40 sm:%s187]
    %vm189 = vcmask 1045508
    %v190 = vsel %vm189, %v188, %v185
    %s191 = scalar_lea.vmem [#allocation0], 4294967083
    %s192 = smov 192
    %v193 = vld [vmem:[%s191] ss:$40 sm:%s192]
    %vm194 = vcmask 1047558
    %v195 = vsel %vm194, %v193, %v190
    %vm196 = vcmask 523264
    %v197 = vsel %vm196, %v195, %v177
    %198 = vrot.lane.b32.xlu0 %v197, 64
    %v199 = vpop.permute.xlu0 %198
    %vm200 = vcmask 261120
    %s201 = scalar_lea.vmem %s1, 10
    %202 = vst.msk [vmem:[%s201] ss:$4 sm:$0x3] %vm200, %v199
    %s203 = scalar_lea.vmem %s1, 18
    %204 = vst.msk [vmem:[%s203] ss:$4 sm:$0xc] %vm200, %v199
    %s205 = scalar_lea.vmem %s1, 26
    %206 = vst.msk [vmem:[%s205] ss:$4 sm:$0x30] %vm200, %v199
    %s207 = scalar_lea.vmem %s1, 34
    %208 = vst.msk [vmem:[%s207] ss:$4 sm:$0xc0] %vm200, %v199
    %vm209 = vcmask 1048064
    %s210 = scalar_lea.vmem %s1, 2
    %211 = vst.msk [vmem:[%s210] ss:$4 sm:$0x3] %vm209, %v199
    %s212 = scalar_lea.vmem %s1, 10
    %213 = vst.msk [vmem:[%s212] ss:$4 sm:$0xc] %vm209, %v199
    %s214 = scalar_lea.vmem %s1, 18
    %215 = vst.msk [vmem:[%s214] ss:$4 sm:$0x30] %vm209, %v199
    %s216 = scalar_lea.vmem %s1, 26
    %217 = vst.msk [vmem:[%s216] ss:$4 sm:$0xc0] %vm209, %v199
    %s218 = scalar_lea.vmem [#allocation0], 16
    %s219 = smov 3
    %v220 = vld [vmem:[%s218] ss:$40 sm:%s219]
    %s221 = scalar_lea.vmem [#allocation0], 4294967233
    %s222 = smov 12
    %v223 = vld [vmem:[%s221] ss:$40 sm:%s222]
    %vm224 = vcmask 1043458
    %v225 = vsel %vm224, %v223, %v220
    %s226 = scalar_lea.vmem [#allocation0], 4294967154
    %s227 = smov 48
    %v228 = vld [vmem:[%s226] ss:$40 sm:%s227]
    %vm229 = vcmask 1045508
    %v230 = vsel %vm229, %v228, %v225
    %s231 = scalar_lea.vmem [#allocation0], 4294967075
    %s232 = smov 192
    %v233 = vld [vmem:[%s231] ss:$40 sm:%s232]
    %vm234 = vcmask 1047558
    %v235 = vsel %vm234, %v233, %v230
    %236 = vrot.lane.b32.xlu0 %v235, 64
    %v237 = vpop.permute.xlu0 %236
    %vm238 = vcmask 523264
    %s239 = scalar_lea.vmem %s1, 2
    %240 = vst.msk [vmem:[%s239] ss:$4 sm:$0x3] %vm238, %v237
    %s241 = scalar_lea.vmem %s1, 10
    %242 = vst.msk [vmem:[%s241] ss:$4 sm:$0xc] %vm238, %v237
    %s243 = scalar_lea.vmem %s1, 18
    %244 = vst.msk [vmem:[%s243] ss:$4 sm:$0x30] %vm238, %v237
    %s245 = scalar_lea.vmem %s1, 26
    %246 = vst.msk [vmem:[%s245] ss:$4 sm:$0xc0] %vm238, %v237
    %s247 = scalar_lea.vmem [#allocation0], 24
    %s248 = smov 3
    %v249 = vld [vmem:[%s247] ss:$40 sm:%s248]
    %s250 = scalar_lea.vmem [#allocation0], 4294967248
    %s251 = smov 12
    %v252 = vld [vmem:[%s250] ss:$40 sm:%s251]
    %vm253 = vcmask 1043458
    %v254 = vsel %vm253, %v252, %v249
    %s255 = scalar_lea.vmem [#allocation0], 4294967161
    %s256 = smov 48
    %v257 = vld [vmem:[%s255] ss:$40 sm:%s256]
    %vm258 = vcmask 1045508
    %v259 = vsel %vm258, %v257, %v254
    %s260 = scalar_lea.vmem [#allocation0], 4294967089
    %s261 = smov 192
    %v262 = vld [vmem:[%s260] ss:$40 sm:%s261]
    %vm263 = vcmask 1047558
    %v264 = vsel %vm263, %v262, %v259
    %s265 = scalar_lea.vmem [#allocation0], 32
    %s266 = smov 3
    %v267 = vld [vmem:[%s265] ss:$40 sm:%s266]
    %s268 = scalar_lea.vmem [#allocation0], 4294967249
    %s269 = smov 12
    %v270 = vld [vmem:[%s268] ss:$40 sm:%s269]
    %vm271 = vcmask 1043458
    %v272 = vsel %vm271, %v270, %v267
    %s273 = scalar_lea.vmem [#allocation0], 4294967170
    %s274 = smov 48
    %v275 = vld [vmem:[%s273] ss:$40 sm:%s274]
    %vm276 = vcmask 1045508
    %v277 = vsel %vm276, %v275, %v272
    %s278 = scalar_lea.vmem [#allocation0], 4294967091
    %s279 = smov 192
    %v280 = vld [vmem:[%s278] ss:$40 sm:%s279]
    %vm281 = vcmask 1047558
    %v282 = vsel %vm281, %v280, %v277
    %vm283 = vcmask 785408
    %v284 = vsel %vm283, %v282, %v264
    %285 = vrot.lane.b32.xlu0 %v284, 32
    %v286 = vpop.permute.xlu0 %285
    %vm287 = vcmask 261120
    %s288 = scalar_lea.vmem %s1, 3
    %289 = vst.msk [vmem:[%s288] ss:$4 sm:$0xff] %vm287, %v286
    %vm290 = vcmask 1047808
    %s291 = scalar_lea.vmem %s1, 3
    %292 = vst.msk [vmem:[%s291] ss:$4 sm:$0x3] %vm290, %v286
    %s293 = scalar_lea.vmem %s1, 11
    %294 = vst.msk [vmem:[%s293] ss:$4 sm:$0xc] %vm290, %v286
    %s295 = scalar_lea.vmem %s1, 19
    %296 = vst.msk [vmem:[%s295] ss:$4 sm:$0x30] %vm290, %v286
    %s297 = scalar_lea.vmem %s1, 27
    %298 = vst.msk [vmem:[%s297] ss:$4 sm:$0xc0] %vm290, %v286
    %s299 = scalar_lea.vmem [#allocation0], 26
    %s300 = smov 3
    %v301 = vld [vmem:[%s299] ss:$40 sm:%s300]
    %s302 = scalar_lea.vmem [#allocation0], 4294967250
    %s303 = smov 12
    %v304 = vld [vmem:[%s302] ss:$40 sm:%s303]
    %vm305 = vcmask 1043458
    %v306 = vsel %vm305, %v304, %v301
    %s307 = scalar_lea.vmem [#allocation0], 4294967163
    %s308 = smov 48
    %v309 = vld [vmem:[%s307] ss:$40 sm:%s308]
    %vm310 = vcmask 1045508
    %v311 = vsel %vm310, %v309, %v306
    %s312 = scalar_lea.vmem [#allocation0], 4294967091
    %s313 = smov 192
    %v314 = vld [vmem:[%s312] ss:$40 sm:%s313]
    %vm315 = vcmask 1047558
    %v316 = vsel %vm315, %v314, %v311
    %317 = vrot.lane.b32.xlu0 %v316, 32
    %v318 = vpop.permute.xlu0 %317
    %vm319 = vcmask 261120
    %s320 = scalar_lea.vmem %s1, 35
    %321 = vst.msk [vmem:[%s320] ss:$4 sm:$0xff] %vm319, %v318

// kernel: _lambda_.1
$region0: #{_lambda_.1}
  #allocation0 [shape = 'u32[]', space=smem, size = 0x4, offset = 0x4, fixed_abs, tag = 'smem constant byte address 0x4 - core index']
  #allocation1 [shape = 'u32[144,128]{1,0:T(1,128)}', space=vmem, size = 0x12000, scoped, tag = 'internal scratch']
  %s0 = inlined_call_operand.vmem [shape: f32[2,32,160], index: 0, kind: input, shape index: {}]
  %s1 = inlined_call_operand.vmem [shape: f32[32,9], index: 1, kind: input, shape index: {}]
  %s2 = inlined_call_operand.vmem [shape: f32[32,32], index: 2, kind: input, shape index: {}]
  %s3 = inlined_call_operand.vmem [shape: f32[30,32], index: 3, kind: input, shape index: {}]
  %s4 = inlined_call_operand.vmem [shape: f32[4,128], index: 4, kind: input, shape index: {}]
  %s5 = inlined_call_operand.vmem [shape: f32[20,64], index: 5, kind: input, shape index: {}]
  %s6 = inlined_call_operand.vmem [shape: f32[1,1024], index: 6, kind: input, shape index: {}]
  %s7 = inlined_call_operand.vmem [shape: bf16[160,1024], index: 7, kind: input, shape index: {}]
  %s8 = inlined_call_operand.vmem [shape: bf16[1024,32], index: 8, kind: input, shape index: {}]
  %s9 = inlined_call_operand.vmem [shape: bf16[128,128], index: 9, kind: input, shape index: {}]
  %s10 = inlined_call_operand.vmem [shape: bf16[704,32], index: 10, kind: input, shape index: {}]
  %s11 = inlined_call_operand.vmem [shape: bf16[64,96], index: 11, kind: input, shape index: {}]
  %s12 = inlined_call_operand.vmem [shape: bf16[128,64], index: 12, kind: input, shape index: {}]
  %s13 = inlined_call_operand.vmem [shape: f32[33,2], index: 13, kind: input, shape index: {}]
  %s14 = inlined_call_operand.vmem [shape: f32[2,32,2], index: 14, kind: output, shape index: {}]
  %s15 = sld [smem:[#allocation0]]
  $region89: #{_lambda_.1} parent=0
    _
  %s17 = ssub.s32 1, %s15
  %s18 = scalar_select 0, %s17, %s15
  loop: start=0, step=1, limit=4
  $region2: #{_lambda_.1} parent=0 // loop_pre_header
    _
  $region3: #{_lambda_.1} parent=0 // loop_header
    %s20 = sphi 0, %s24
    %p21 = scmp.ge.s32.totalorder %s20, 4
    %s30 = sphi 0, %s32
    %s33 = sphi 0, %s30
    %s34 = sphi 0, %s33
    %s50 = sphi 0, %s34
    %s54 = sphi 0, %s54
    %s56 = sphi 0, %s54
    %s57 = sphi 0, %s56
    %s71 = sphi 0, %s57
    %s75 = sphi 0, %s75
    %s77 = sphi 0, %s75
    %s78 = sphi 0, %s77
    %s92 = sphi 0, %s78
    %s96 = sphi 0, %s96
    %s98 = sphi 0, %s96
    %s99 = sphi 0, %s98
    %s113 = sphi 0, %s99
    %s117 = sphi 0, %s117
    %s119 = sphi 0, %s117
    %s120 = sphi 0, %s119
    %s134 = sphi 0, %s120
    %s138 = sphi 0, %s138
    %s140 = sphi 0, %s138
    %s141 = sphi 0, %s140
    %s155 = sphi 0, %s141
    %s159 = sphi 0, %s159
    %s161 = sphi 0, %s159
    %s162 = sphi 0, %s161
    %s176 = sphi 0, %s162
    %s180 = sphi 0, %s180
    %s182 = sphi 0, %s180
    %s183 = sphi 0, %s182
    %s197 = sphi 0, %s183
    %s201 = sphi 0, %s201
    %s203 = sphi 0, %s201
    %s204 = sphi 0, %s203
    %s218 = sphi 0, %s204
    %s222 = sphi 0, %s222
    %s224 = sphi 0, %s222
    %s225 = sphi 0, %s224
    %s239 = sphi 0, %s225
    %s243 = sphi 0, %s243
    %s245 = sphi 0, %s243
    %s246 = sphi 0, %s245
    %s260 = sphi 0, %s246
    %s264 = sphi 0, %s264
    %s266 = sphi 0, %s264
    %s267 = sphi 0, %s266
    %s281 = sphi 0, %s267
    %s285 = sphi 0, %s285
    %s287 = sphi 0, %s285
    %s288 = sphi 0, %s287
    %s302 = sphi 0, %s288
    %s306 = sphi 0, %s306
    %s308 = sphi 0, %s306
    %s309 = sphi 0, %s308
    %s323 = sphi 0, %s309
    %s329 = sphi 0, %s331
    %s332 = sphi 0, %s329
    %s333 = sphi 0, %s332
    %s349 = sphi 0, %s333
  $region4: #{_lambda_.1} parent=0 // loop_header_branch
    %23 = sbr.rel (%p21) target = $region8
  $region5: #{_lambda_.1} parent=0 // loop_body
    %s25 = ssub.s32 %s20, 1
    %s26 = ssub.s32 %s20, 2
    %s27 = sadd.s32 %s20, 1
    %s28 = ssub.s32 %s20, %s27
    %p29 = scmp.eq.s32.totalorder %s28, 0
    %s31 = sadd.s32 %s30, 1
    %s32 = scalar_select %p29, %s30, %s31
    %p35 = pneg %p29
    %p36 = scmp.eq.s32.totalorder %s20, 1
    %p37 = por %p35, %p36
    %p38 = scmp.ne.s32.totalorder %s30, %s33
    %p39 = scmp.eq.s32.totalorder %s20, 0
    %p40 = por %p38, %p39
    %p41 = scmp.ne.s32.totalorder %s30, %s33
    %p42 = scmp.eq.s32.totalorder %s25, 1
    %p43 = por %p41, %p42
    %p44 = scmp.ne.s32.totalorder %s33, %s34
    %p45 = scmp.eq.s32.totalorder %s25, 0
    %p46 = por %p44, %p45
    %p47 = scmp.ne.s32.totalorder %s33, %s34
    %p48 = scmp.eq.s32.totalorder %s26, 1
    %p49 = por %p47, %p48
    %p51 = scmp.ne.s32.totalorder %s34, %s50
    %p52 = scmp.eq.s32.totalorder %s26, 0
    %p53 = por %p51, %p52
    %s55 = sadd.s32 %s54, 1
    %p58 = scmp.eq.s32.totalorder %s20, 1
    %p59 = scmp.ne.s32.totalorder %s54, %s56
    %p60 = scmp.eq.s32.totalorder %s20, 0
    %p61 = por %p59, %p60
    %p62 = scmp.ne.s32.totalorder %s54, %s56
    %p63 = scmp.eq.s32.totalorder %s25, 1
    %p64 = por %p62, %p63
    %p65 = scmp.ne.s32.totalorder %s56, %s57
    %p66 = scmp.eq.s32.totalorder %s25, 0
    %p67 = por %p65, %p66
    %p68 = scmp.ne.s32.totalorder %s56, %s57
    %p69 = scmp.eq.s32.totalorder %s26, 1
    %p70 = por %p68, %p69
    %p72 = scmp.ne.s32.totalorder %s57, %s71
    %p73 = scmp.eq.s32.totalorder %s26, 0
    %p74 = por %p72, %p73
    %s76 = sadd.s32 %s75, 1
    %p79 = scmp.eq.s32.totalorder %s20, 1
    %p80 = scmp.ne.s32.totalorder %s75, %s77
    %p81 = scmp.eq.s32.totalorder %s20, 0
    %p82 = por %p80, %p81
    %p83 = scmp.ne.s32.totalorder %s75, %s77
    %p84 = scmp.eq.s32.totalorder %s25, 1
    %p85 = por %p83, %p84
    %p86 = scmp.ne.s32.totalorder %s77, %s78
    %p87 = scmp.eq.s32.totalorder %s25, 0
    %p88 = por %p86, %p87
    %p89 = scmp.ne.s32.totalorder %s77, %s78
    %p90 = scmp.eq.s32.totalorder %s26, 1
    %p91 = por %p89, %p90
    %p93 = scmp.ne.s32.totalorder %s78, %s92
    %p94 = scmp.eq.s32.totalorder %s26, 0
    %p95 = por %p93, %p94
    %s97 = sadd.s32 %s96, 1
    %p100 = scmp.eq.s32.totalorder %s20, 1
    %p101 = scmp.ne.s32.totalorder %s96, %s98
    %p102 = scmp.eq.s32.totalorder %s20, 0
    %p103 = por %p101, %p102
    %p104 = scmp.ne.s32.totalorder %s96, %s98
    %p105 = scmp.eq.s32.totalorder %s25, 1
    %p106 = por %p104, %p105
    %p107 = scmp.ne.s32.totalorder %s98, %s99
    %p108 = scmp.eq.s32.totalorder %s25, 0
    %p109 = por %p107, %p108
    %p110 = scmp.ne.s32.totalorder %s98, %s99
    %p111 = scmp.eq.s32.totalorder %s26, 1
    %p112 = por %p110, %p111
    %p114 = scmp.ne.s32.totalorder %s99, %s113
    %p115 = scmp.eq.s32.totalorder %s26, 0
    %p116 = por %p114, %p115
    %s118 = sadd.s32 %s117, 1
    %p121 = scmp.eq.s32.totalorder %s20, 1
    %p122 = scmp.ne.s32.totalorder %s117, %s119
    %p123 = scmp.eq.s32.totalorder %s20, 0
    %p124 = por %p122, %p123
    %p125 = scmp.ne.s32.totalorder %s117, %s119
    %p126 = scmp.eq.s32.totalorder %s25, 1
    %p127 = por %p125, %p126
    %p128 = scmp.ne.s32.totalorder %s119, %s120
    %p129 = scmp.eq.s32.totalorder %s25, 0
    %p130 = por %p128, %p129
    %p131 = scmp.ne.s32.totalorder %s119, %s120
    %p132 = scmp.eq.s32.totalorder %s26, 1
    %p133 = por %p131, %p132
    %p135 = scmp.ne.s32.totalorder %s120, %s134
    %p136 = scmp.eq.s32.totalorder %s26, 0
    %p137 = por %p135, %p136
    %s139 = sadd.s32 %s138, 1
    %p142 = scmp.eq.s32.totalorder %s20, 1
    %p143 = scmp.ne.s32.totalorder %s138, %s140
    %p144 = scmp.eq.s32.totalorder %s20, 0
    %p145 = por %p143, %p144
    %p146 = scmp.ne.s32.totalorder %s138, %s140
    %p147 = scmp.eq.s32.totalorder %s25, 1
    %p148 = por %p146, %p147
    %p149 = scmp.ne.s32.totalorder %s140, %s141
    %p150 = scmp.eq.s32.totalorder %s25, 0
    %p151 = por %p149, %p150
    %p152 = scmp.ne.s32.totalorder %s140, %s141
    %p153 = scmp.eq.s32.totalorder %s26, 1
    %p154 = por %p152, %p153
    %p156 = scmp.ne.s32.totalorder %s141, %s155
    %p157 = scmp.eq.s32.totalorder %s26, 0
    %p158 = por %p156, %p157
    %s160 = sadd.s32 %s159, 1
    %p163 = scmp.eq.s32.totalorder %s20, 1
    %p164 = scmp.ne.s32.totalorder %s159, %s161
    %p165 = scmp.eq.s32.totalorder %s20, 0
    %p166 = por %p164, %p165
    %p167 = scmp.ne.s32.totalorder %s159, %s161
    %p168 = scmp.eq.s32.totalorder %s25, 1
    %p169 = por %p167, %p168
    %p170 = scmp.ne.s32.totalorder %s161, %s162
    %p171 = scmp.eq.s32.totalorder %s25, 0
    %p172 = por %p170, %p171
    %p173 = scmp.ne.s32.totalorder %s161, %s162
    %p174 = scmp.eq.s32.totalorder %s26, 1
    %p175 = por %p173, %p174
    %p177 = scmp.ne.s32.totalorder %s162, %s176
    %p178 = scmp.eq.s32.totalorder %s26, 0
    %p179 = por %p177, %p178
    %s181 = sadd.s32 %s180, 1
    %p184 = scmp.eq.s32.totalorder %s20, 1
    %p185 = scmp.ne.s32.totalorder %s180, %s182
    %p186 = scmp.eq.s32.totalorder %s20, 0
    %p187 = por %p185, %p186
    %p188 = scmp.ne.s32.totalorder %s180, %s182
    %p189 = scmp.eq.s32.totalorder %s25, 1
    %p190 = por %p188, %p189
    %p191 = scmp.ne.s32.totalorder %s182, %s183
    %p192 = scmp.eq.s32.totalorder %s25, 0
    %p193 = por %p191, %p192
    %p194 = scmp.ne.s32.totalorder %s182, %s183
    %p195 = scmp.eq.s32.totalorder %s26, 1
    %p196 = por %p194, %p195
    %p198 = scmp.ne.s32.totalorder %s183, %s197
    %p199 = scmp.eq.s32.totalorder %s26, 0
    %p200 = por %p198, %p199
    %s202 = sadd.s32 %s201, 1
    %p205 = scmp.eq.s32.totalorder %s20, 1
    %p206 = scmp.ne.s32.totalorder %s201, %s203
    %p207 = scmp.eq.s32.totalorder %s20, 0
    %p208 = por %p206, %p207
    %p209 = scmp.ne.s32.totalorder %s201, %s203
    %p210 = scmp.eq.s32.totalorder %s25, 1
    %p211 = por %p209, %p210
    %p212 = scmp.ne.s32.totalorder %s203, %s204
    %p213 = scmp.eq.s32.totalorder %s25, 0
    %p214 = por %p212, %p213
    %p215 = scmp.ne.s32.totalorder %s203, %s204
    %p216 = scmp.eq.s32.totalorder %s26, 1
    %p217 = por %p215, %p216
    %p219 = scmp.ne.s32.totalorder %s204, %s218
    %p220 = scmp.eq.s32.totalorder %s26, 0
    %p221 = por %p219, %p220
    %s223 = sadd.s32 %s222, 1
    %p226 = scmp.eq.s32.totalorder %s20, 1
    %p227 = scmp.ne.s32.totalorder %s222, %s224
    %p228 = scmp.eq.s32.totalorder %s20, 0
    %p229 = por %p227, %p228
    %p230 = scmp.ne.s32.totalorder %s222, %s224
    %p231 = scmp.eq.s32.totalorder %s25, 1
    %p232 = por %p230, %p231
    %p233 = scmp.ne.s32.totalorder %s224, %s225
    %p234 = scmp.eq.s32.totalorder %s25, 0
    %p235 = por %p233, %p234
    %p236 = scmp.ne.s32.totalorder %s224, %s225
    %p237 = scmp.eq.s32.totalorder %s26, 1
    %p238 = por %p236, %p237
    %p240 = scmp.ne.s32.totalorder %s225, %s239
    %p241 = scmp.eq.s32.totalorder %s26, 0
    %p242 = por %p240, %p241
    %s244 = sadd.s32 %s243, 1
    %p247 = scmp.eq.s32.totalorder %s20, 1
    %p248 = scmp.ne.s32.totalorder %s243, %s245
    %p249 = scmp.eq.s32.totalorder %s20, 0
    %p250 = por %p248, %p249
    %p251 = scmp.ne.s32.totalorder %s243, %s245
    %p252 = scmp.eq.s32.totalorder %s25, 1
    %p253 = por %p251, %p252
    %p254 = scmp.ne.s32.totalorder %s245, %s246
    %p255 = scmp.eq.s32.totalorder %s25, 0
    %p256 = por %p254, %p255
    %p257 = scmp.ne.s32.totalorder %s245, %s246
    %p258 = scmp.eq.s32.totalorder %s26, 1
    %p259 = por %p257, %p258
    %p261 = scmp.ne.s32.totalorder %s246, %s260
    %p262 = scmp.eq.s32.totalorder %s26, 0
    %p263 = por %p261, %p262
    %s265 = sadd.s32 %s264, 1
    %p268 = scmp.eq.s32.totalorder %s20, 1
    %p269 = scmp.ne.s32.totalorder %s264, %s266
    %p270 = scmp.eq.s32.totalorder %s20, 0
    %p271 = por %p269, %p270
    %p272 = scmp.ne.s32.totalorder %s264, %s266
    %p273 = scmp.eq.s32.totalorder %s25, 1
    %p274 = por %p272, %p273
    %p275 = scmp.ne.s32.totalorder %s266, %s267
    %p276 = scmp.eq.s32.totalorder %s25, 0
    %p277 = por %p275, %p276
    %p278 = scmp.ne.s32.totalorder %s266, %s267
    %p279 = scmp.eq.s32.totalorder %s26, 1
    %p280 = por %p278, %p279
    %p282 = scmp.ne.s32.totalorder %s267, %s281
    %p283 = scmp.eq.s32.totalorder %s26, 0
    %p284 = por %p282, %p283
    %s286 = sadd.s32 %s285, 1
    %p289 = scmp.eq.s32.totalorder %s20, 1
    %p290 = scmp.ne.s32.totalorder %s285, %s287
    %p291 = scmp.eq.s32.totalorder %s20, 0
    %p292 = por %p290, %p291
    %p293 = scmp.ne.s32.totalorder %s285, %s287
    %p294 = scmp.eq.s32.totalorder %s25, 1
    %p295 = por %p293, %p294
    %p296 = scmp.ne.s32.totalorder %s287, %s288
    %p297 = scmp.eq.s32.totalorder %s25, 0
    %p298 = por %p296, %p297
    %p299 = scmp.ne.s32.totalorder %s287, %s288
    %p300 = scmp.eq.s32.totalorder %s26, 1
    %p301 = por %p299, %p300
    %p303 = scmp.ne.s32.totalorder %s288, %s302
    %p304 = scmp.eq.s32.totalorder %s26, 0
    %p305 = por %p303, %p304
    %s307 = sadd.s32 %s306, 1
    %p310 = scmp.eq.s32.totalorder %s20, 1
    %p311 = scmp.ne.s32.totalorder %s306, %s308
    %p312 = scmp.eq.s32.totalorder %s20, 0
    %p313 = por %p311, %p312
    %p314 = scmp.ne.s32.totalorder %s306, %s308
    %p315 = scmp.eq.s32.totalorder %s25, 1
    %p316 = por %p314, %p315
    %p317 = scmp.ne.s32.totalorder %s308, %s309
    %p318 = scmp.eq.s32.totalorder %s25, 0
    %p319 = por %p317, %p318
    %p320 = scmp.ne.s32.totalorder %s308, %s309
    %p321 = scmp.eq.s32.totalorder %s26, 1
    %p322 = por %p320, %p321
    %p324 = scmp.ne.s32.totalorder %s309, %s323
    %p325 = scmp.eq.s32.totalorder %s26, 0
    %p326 = por %p324, %p325
    %s327 = ssub.s32 %s20, %s27
    %p328 = scmp.eq.s32.totalorder %s327, 0
    %s330 = sadd.s32 %s329, 1
    %s331 = scalar_select %p328, %s329, %s330
    %p334 = pneg %p328
    %p335 = scmp.eq.s32.totalorder %s20, 1
    %p336 = por %p334, %p335
    %p337 = scmp.ne.s32.totalorder %s329, %s332
    %p338 = scmp.eq.s32.totalorder %s20, 0
    %p339 = por %p337, %p338
    %p340 = scmp.ne.s32.totalorder %s329, %s332
    %p341 = scmp.eq.s32.totalorder %s25, 1
    %p342 = por %p340, %p341
    %p343 = scmp.ne.s32.totalorder %s332, %s333
    %p344 = scmp.eq.s32.totalorder %s25, 0
    %p345 = por %p343, %p344
    %p346 = scmp.ne.s32.totalorder %s332, %s333
    %p347 = scmp.eq.s32.totalorder %s26, 1
    %p348 = por %p346, %p347
    %p350 = scmp.ne.s32.totalorder %s333, %s349
    %p351 = scmp.eq.s32.totalorder %s26, 0
    %p352 = por %p350, %p351
    %p353 = scmp.le.s32.totalorder 1, %s20
    %p354 = scmp.lt.s32.totalorder %s20, 3
    %p355 = pnand %p353, %p354
    %p356 = pneg %p355
    // Predicated region
    $region9: #{_lambda_.1} parent=5 // pred_check
      _
    $region10: #{_lambda_.1} parent=5 // pred_check_branch
      %358 = sbr.rel (%p355) target = $region12
    $region11: #{_lambda_.1} parent=5 // pred_region
      %s359 = ssub.s32 %s20, 1
      // Predicated region
      $region13: #{_lambda_.1} parent=11 // pred_check
        %p360 = pneg %p67
      $region14: #{_lambda_.1} parent=11 // pred_check_branch
        %362 = sbr.rel (%p360) target = $region16
      $region15: #{_lambda_.1} parent=11 // pred_region
        _
      $region16: #{_lambda_.1} parent=11 // pred_fallthru
        _
      // Predicated region
      $region17: #{_lambda_.1} parent=11 // pred_check
        %p363 = pneg %p88
      $region18: #{_lambda_.1} parent=11 // pred_check_branch
        %365 = sbr.rel (%p363) target = $region20
      $region19: #{_lambda_.1} parent=11 // pred_region
        _
      $region20: #{_lambda_.1} parent=11 // pred_fallthru
        _
      // Predicated region
      $region21: #{_lambda_.1} parent=11 // pred_check
        %p366 = pneg %p109
      $region22: #{_lambda_.1} parent=11 // pred_check_branch
        %368 = sbr.rel (%p366) target = $region24
      $region23: #{_lambda_.1} parent=11 // pred_region
        _
      $region24: #{_lambda_.1} parent=11 // pred_fallthru
        _
      // Predicated region
      $region25: #{_lambda_.1} parent=11 // pred_check
        %p369 = pneg %p130
      $region26: #{_lambda_.1} parent=11 // pred_check_branch
        %371 = sbr.rel (%p369) target = $region28
      $region27: #{_lambda_.1} parent=11 // pred_region
        _
      $region28: #{_lambda_.1} parent=11 // pred_fallthru
        _
      // Predicated region
      $region29: #{_lambda_.1} parent=11 // pred_check
        %p372 = pneg %p151
      $region30: #{_lambda_.1} parent=11 // pred_check_branch
        %374 = sbr.rel (%p372) target = $region32
      $region31: #{_lambda_.1} parent=11 // pred_region
        _
      $region32: #{_lambda_.1} parent=11 // pred_fallthru
        _
      // Predicated region
      $region33: #{_lambda_.1} parent=11 // pred_check
        %p375 = pneg %p172
      $region34: #{_lambda_.1} parent=11 // pred_check_branch
        %377 = sbr.rel (%p375) target = $region36
      $region35: #{_lambda_.1} parent=11 // pred_region
        _
      $region36: #{_lambda_.1} parent=11 // pred_fallthru
        _
      // Predicated region
      $region37: #{_lambda_.1} parent=11 // pred_check
        %p378 = pneg %p193
      $region38: #{_lambda_.1} parent=11 // pred_check_branch
        %380 = sbr.rel (%p378) target = $region40
      $region39: #{_lambda_.1} parent=11 // pred_region
        _
      $region40: #{_lambda_.1} parent=11 // pred_fallthru
        _
      // Predicated region
      $region41: #{_lambda_.1} parent=11 // pred_check
        %p381 = pneg %p214
      $region42: #{_lambda_.1} parent=11 // pred_check_branch
        %383 = sbr.rel (%p381) target = $region44
      $region43: #{_lambda_.1} parent=11 // pred_region
        _
      $region44: #{_lambda_.1} parent=11 // pred_fallthru
        _
      // Predicated region
      $region45: #{_lambda_.1} parent=11 // pred_check
        %p384 = pneg %p235
      $region46: #{_lambda_.1} parent=11 // pred_check_branch
        %386 = sbr.rel (%p384) target = $region48
      $region47: #{_lambda_.1} parent=11 // pred_region
        _
      $region48: #{_lambda_.1} parent=11 // pred_fallthru
        _
      // Predicated region
      $region49: #{_lambda_.1} parent=11 // pred_check
        %p387 = pneg %p256
      $region50: #{_lambda_.1} parent=11 // pred_check_branch
        %389 = sbr.rel (%p387) target = $region52
      $region51: #{_lambda_.1} parent=11 // pred_region
        _
      $region52: #{_lambda_.1} parent=11 // pred_fallthru
        _
      // Predicated region
      $region53: #{_lambda_.1} parent=11 // pred_check
        %p390 = pneg %p277
      $region54: #{_lambda_.1} parent=11 // pred_check_branch
        %392 = sbr.rel (%p390) target = $region56
      $region55: #{_lambda_.1} parent=11 // pred_region
        _
      $region56: #{_lambda_.1} parent=11 // pred_fallthru
        _
      // Predicated region
      $region57: #{_lambda_.1} parent=11 // pred_check
        %p393 = pneg %p298
      $region58: #{_lambda_.1} parent=11 // pred_check_branch
        %395 = sbr.rel (%p393) target = $region60
      $region59: #{_lambda_.1} parent=11 // pred_region
        _
      $region60: #{_lambda_.1} parent=11 // pred_fallthru
        _
      // Predicated region
      $region61: #{_lambda_.1} parent=11 // pred_check
        %p396 = pneg %p319
      $region62: #{_lambda_.1} parent=11 // pred_check_branch
        %398 = sbr.rel (%p396) target = $region64
      $region63: #{_lambda_.1} parent=11 // pred_region
        _
      $region64: #{_lambda_.1} parent=11 // pred_fallthru
        _
    $region12: #{_lambda_.1} parent=5 // pred_fallthru
      _
    %p399 = scmp.lt.s32.totalorder %s20, 2
    // Predicated region
    $region65: #{_lambda_.1} parent=5 // pred_check
      %p400 = pneg %p399
    $region66: #{_lambda_.1} parent=5 // pred_check_branch
      %402 = sbr.rel (%p400) target = $region68
    $region67: #{_lambda_.1} parent=5 // pred_region
      // Predicated region
      $region69: #{_lambda_.1} parent=67 // pred_check
        %p403 = pneg %p40
      $region70: #{_lambda_.1} parent=67 // pred_check_branch
        %405 = sbr.rel (%p403) target = $region72
      $region71: #{_lambda_.1} parent=67 // pred_region
        %p406 = scmp.lt.s32.totalorder %s20, 1
        %s407 = scalar_select %p406, %s20, 1
        %s408 = smul.addr %s407, 8
        %s409 = smul.addr %s408, 8
        %s410 = scalar_lea.vmem %s0, %s409
      $region72: #{_lambda_.1} parent=67 // pred_fallthru
        _
    $region68: #{_lambda_.1} parent=5 // pred_fallthru
      _
    %p411 = scmp.le.s32.totalorder 1, %s20
    %p412 = scmp.lt.s32.totalorder %s20, 3
    %p413 = pnand %p411, %p412
    %p414 = pneg %p413
    // Predicated region
    $region73: #{_lambda_.1} parent=5 // pred_check
      _
    $region74: #{_lambda_.1} parent=5 // pred_check_branch
      %416 = sbr.rel (%p413) target = $region76
    $region75: #{_lambda_.1} parent=5 // pred_region
      %s417 = ssub.s32 %s20, 1
      %p418 = scmp.lt.s32.totalorder %s25, 1
      %s419 = scalar_select %p418, %s25, 1
      %s420 = smul.addr %s419, 8
      %s421 = smul.addr %s420, 8
      %s422 = scalar_lea.vmem %s0, %s421
      %p423 = pneg %p46
      %p424 = pneg %p43
      %p425 = pneg %p67
      %p426 = pneg %p64
      %p427 = pneg %p88
      %p428 = pneg %p85
      %p429 = pneg %p109
      %p430 = pneg %p106
      %p431 = pneg %p130
      %p432 = pneg %p127
      %p433 = pneg %p151
      %p434 = pneg %p148
      %p435 = pneg %p172
      %p436 = pneg %p169
      %p437 = pneg %p193
      %p438 = pneg %p190
      %p439 = pneg %p214
      %p440 = pneg %p211
      %p441 = pneg %p235
      %p442 = pneg %p232
      %p443 = pneg %p256
      %p444 = pneg %p253
      %p445 = pneg %p277
      %p446 = pneg %p274
      %p447 = pneg %p298
      %p448 = pneg %p295
      %p449 = pneg %p319
      %p450 = pneg %p316
      %p451 = pneg %p345
      %p452 = pneg %p342
      %p453 = scmp.lt.s32.totalorder %s25, 1
      %s454 = scalar_select %p453, %s25, 1
      %s455 = smul.addr %s454, 4
      %s456 = smul.addr %s455, 8
      %s457 = scalar_lea.vmem %s14, %s456
      %p458 = scmp.lt.s32.totalorder %s25, 1
      %s459 = scalar_select %p458, %s25, 1
      %s460 = smul.addr %s459, 8
      %s461 = smul.addr %s460, 8
      %s462 = scalar_lea.vmem %s0, %s461
      %p463 = scmp.lt.s32.totalorder %s25, 1
      %s464 = scalar_select %p463, %s25, 1
      %s465 = smul.addr %s464, 4
      %s466 = smul.addr %s465, 8
      %s467 = scalar_lea.vmem %s14, %s466
      %v469 = vld [vmem:[%s1] sm:$0xff]
      %v470 = vld [vmem:[%s1 + $0x8] sm:$0xff]
      %v471 = vld [vmem:[%s1 + $0x10] sm:$0xff]
      %v472 = vld [vmem:[%s1 + $0x18] sm:$0xff]
      %v473 = vld [vmem:[%s2] sm:$0xff]
      %v474 = vld [vmem:[%s2 + $0x8] sm:$0xff]
      %v475 = vld [vmem:[%s2 + $0x10] sm:$0xff]
      %v476 = vld [vmem:[%s2 + $0x18] sm:$0xff]
      %v477 = vld [vmem:[%s462] sm:$0xff]
      %v478 = vld [vmem:[%s462 + $0x8] sm:$0xff]
      %v479 = vld [vmem:[%s462 + $0x10] sm:$0xff]
      %v480 = vld [vmem:[%s462 + $0x18] sm:$0xff]
      %v481 = vld [vmem:[%s462 + $0x20] sm:$0xff]
      %v482 = vld [vmem:[%s462 + $0x28] sm:$0xff]
      %v483 = vld [vmem:[%s462 + $0x30] sm:$0xff]
      %v484 = vld [vmem:[%s462 + $0x38] sm:$0xff]
      %v485 = vld [vmem:[%s7] sm:$0xff]
      %v486 = vld [vmem:[%s7 + $0x8] sm:$0xff]
      %v487 = vld [vmem:[%s7 + $0x10] sm:$0xff]
      %v488 = vld [vmem:[%s7 + $0x18] sm:$0xff]
      %v489 = vld [vmem:[%s7 + $0x20] sm:$0xff]
      %v490 = vld [vmem:[%s7 + $0x28] sm:$0xff]
      %v491 = vld [vmem:[%s7 + $0x30] sm:$0xff]
      %v492 = vld [vmem:[%s7 + $0x38] sm:$0xff]
      %v493 = vld [vmem:[%s7 + $0x40] sm:$0xff]
      %v494 = vld [vmem:[%s7 + $0x48] sm:$0xff]
      %v495 = vld [vmem:[%s7 + $0x50] sm:$0xff]
      %v496 = vld [vmem:[%s7 + $0x58] sm:$0xff]
      %v497 = vld [vmem:[%s7 + $0x60] sm:$0xff]
      %v498 = vld [vmem:[%s7 + $0x68] sm:$0xff]
      %v499 = vld [vmem:[%s7 + $0x70] sm:$0xff]
      %v500 = vld [vmem:[%s7 + $0x78] sm:$0xff]
      %v501 = vld [vmem:[%s7 + $0x80] sm:$0xff]
      %v502 = vld [vmem:[%s7 + $0x88] sm:$0xff]
      %v503 = vld [vmem:[%s7 + $0x90] sm:$0xff]
      %v504 = vld [vmem:[%s7 + $0x98] sm:$0xff]
      %v505 = vld [vmem:[%s7 + $0xa0] sm:$0xff]
      %v506 = vld [vmem:[%s7 + $0xa8] sm:$0xff]
      %v507 = vld [vmem:[%s7 + $0xb0] sm:$0xff]
      %v508 = vld [vmem:[%s7 + $0xb8] sm:$0xff]
      %v509 = vld [vmem:[%s7 + $0xc0] sm:$0xff]
      %v510 = vld [vmem:[%s7 + $0xc8] sm:$0xff]
      %v511 = vld [vmem:[%s7 + $0xd0] sm:$0xff]
      %v512 = vld [vmem:[%s7 + $0xd8] sm:$0xff]
      %v513 = vld [vmem:[%s7 + $0xe0] sm:$0xff]
      %v514 = vld [vmem:[%s7 + $0xe8] sm:$0xff]
      %v515 = vld [vmem:[%s7 + $0xf0] sm:$0xff]
      %v516 = vld [vmem:[%s7 + $0xf8] sm:$0xff]
      %v517 = vld [vmem:[%s7 + $0x100] sm:$0xff]
      %v518 = vld [vmem:[%s7 + $0x108] sm:$0xff]
      %v519 = vld [vmem:[%s7 + $0x110] sm:$0xff]
      %v520 = vld [vmem:[%s7 + $0x118] sm:$0xff]
      %v521 = vld [vmem:[%s7 + $0x120] sm:$0xff]
      %v522 = vld [vmem:[%s7 + $0x128] sm:$0xff]
      %v523 = vld [vmem:[%s7 + $0x130] sm:$0xff]
      %v524 = vld [vmem:[%s7 + $0x138] sm:$0xff]
      %v525 = vld [vmem:[%s7 + $0x140] sm:$0xff]
      %v526 = vld [vmem:[%s7 + $0x148] sm:$0xff]
      %v527 = vld [vmem:[%s7 + $0x150] sm:$0xff]
      %v528 = vld [vmem:[%s7 + $0x158] sm:$0xff]
      %v529 = vld [vmem:[%s7 + $0x160] sm:$0xff]
      %v530 = vld [vmem:[%s7 + $0x168] sm:$0xff]
      %v531 = vld [vmem:[%s7 + $0x170] sm:$0xff]
      %v532 = vld [vmem:[%s7 + $0x178] sm:$0xff]
      %v533 = vld [vmem:[%s7 + $0x180] sm:$0xff]
      %v534 = vld [vmem:[%s7 + $0x188] sm:$0xff]
      %v535 = vld [vmem:[%s7 + $0x190] sm:$0xff]
      %v536 = vld [vmem:[%s7 + $0x198] sm:$0xff]
      %v537 = vld [vmem:[%s7 + $0x1a0] sm:$0xff]
      %v538 = vld [vmem:[%s7 + $0x1a8] sm:$0xff]
      %v539 = vld [vmem:[%s7 + $0x1b0] sm:$0xff]
      %v540 = vld [vmem:[%s7 + $0x1b8] sm:$0xff]
      %v541 = vld [vmem:[%s7 + $0x1c0] sm:$0xff]
      %v542 = vld [vmem:[%s7 + $0x1c8] sm:$0xff]
      %v543 = vld [vmem:[%s7 + $0x1d0] sm:$0xff]
      %v544 = vld [vmem:[%s7 + $0x1d8] sm:$0xff]
      %v545 = vld [vmem:[%s7 + $0x1e0] sm:$0xff]
      %v546 = vld [vmem:[%s7 + $0x1e8] sm:$0xff]
      %v547 = vld [vmem:[%s7 + $0x1f0] sm:$0xff]
      %v548 = vld [vmem:[%s7 + $0x1f8] sm:$0xff]
      %v549 = vld [vmem:[%s7 + $0x200] sm:$0xff]
      %v550 = vld [vmem:[%s7 + $0x208] sm:$0xff]
      %v551 = vld [vmem:[%s7 + $0x210] sm:$0xff]
      %v552 = vld [vmem:[%s7 + $0x218] sm:$0xff]
      %v553 = vld [vmem:[%s7 + $0x220] sm:$0xff]
      %v554 = vld [vmem:[%s7 + $0x228] sm:$0xff]
      %v555 = vld [vmem:[%s7 + $0x230] sm:$0xff]
      %v556 = vld [vmem:[%s7 + $0x238] sm:$0xff]
      %v557 = vld [vmem:[%s7 + $0x240] sm:$0xff]
      %v558 = vld [vmem:[%s7 + $0x248] sm:$0xff]
      %v559 = vld [vmem:[%s7 + $0x250] sm:$0xff]
      %v560 = vld [vmem:[%s7 + $0x258] sm:$0xff]
      %v561 = vld [vmem:[%s7 + $0x260] sm:$0xff]
      %v562 = vld [vmem:[%s7 + $0x268] sm:$0xff]
      %v563 = vld [vmem:[%s7 + $0x270] sm:$0xff]
      %v564 = vld [vmem:[%s7 + $0x278] sm:$0xff]
      %v565 = vld [vmem:[%s6] sm:$0xff]
      %v566 = vpack.c.bf16 %v479, %v477
      %v567 = vpack.c.bf16 %v480, %v478
      %v568 = vpack.c.bf16 %v483, %v481
      %v569 = vpack.c.bf16 %v484, %v482
      %v571 = vlaneseq
      %v572 = vshrl.u32 %v571, 7
      %v573 = vsub.s32 0, %v572
      %v574 = vrot.slane %v565, %v573
      %v575 = vlaneseq
      %v576 = vshrl.u32 %v575, 7
      %v577 = vsub.s32 1, %v576
      %v578 = vrot.slane %v565, %v577
      %v579 = vlaneseq
      %v580 = vshrl.u32 %v579, 7
      %v581 = vsub.s32 2, %v580
      %v582 = vrot.slane %v565, %v581
      %v583 = vlaneseq
      %v584 = vshrl.u32 %v583, 7
      %v585 = vsub.s32 3, %v584
      %v586 = vrot.slane %v565, %v585
      %v587 = vlaneseq
      %v588 = vshrl.u32 %v587, 7
      %v589 = vsub.s32 4, %v588
      %v590 = vrot.slane %v565, %v589
      %v591 = vlaneseq
      %v592 = vshrl.u32 %v591, 7
      %v593 = vsub.s32 5, %v592
      %v594 = vrot.slane %v565, %v593
      %v595 = vlaneseq
      %v596 = vshrl.u32 %v595, 7
      %v597 = vsub.s32 6, %v596
      %v598 = vrot.slane %v565, %v597
      %v599 = vlaneseq
      %v600 = vshrl.u32 %v599, 7
      %v601 = vsub.s32 7, %v600
      %v602 = vrot.slane %v565, %v601
      %v691 = vunpack.c.l.b16 %v485
      %v692 = vunpack.c.h.b16 %v485
      %v693 = vunpack.c.l.b16 %v486
      %v694 = vunpack.c.h.b16 %v486
      %v695 = vunpack.c.l.b16 %v487
      %v696 = vunpack.c.h.b16 %v487
      %v697 = vunpack.c.l.b16 %v488
      %v698 = vunpack.c.h.b16 %v488
      %v699 = vunpack.c.l.b16 %v489
      %v700 = vunpack.c.h.b16 %v489
      %v701 = vunpack.c.l.b16 %v490
      %v702 = vunpack.c.h.b16 %v490
      %v703 = vunpack.c.l.b16 %v491
      %v704 = vunpack.c.h.b16 %v491
      %v705 = vunpack.c.l.b16 %v492
      %v706 = vunpack.c.h.b16 %v492
      %v707 = vunpack.c.l.b16 %v493
      %v708 = vunpack.c.h.b16 %v493
      %v709 = vunpack.c.l.b16 %v494
      %v710 = vunpack.c.h.b16 %v494
      %v711 = vunpack.c.l.b16 %v495
      %v712 = vunpack.c.h.b16 %v495
      %v713 = vunpack.c.l.b16 %v496
      %v714 = vunpack.c.h.b16 %v496
      %v715 = vunpack.c.l.b16 %v497
      %v716 = vunpack.c.h.b16 %v497
      %v717 = vunpack.c.l.b16 %v498
      %v718 = vunpack.c.h.b16 %v498
      %v719 = vunpack.c.l.b16 %v499
      %v720 = vunpack.c.h.b16 %v499
      %v721 = vunpack.c.l.b16 %v500
      %v722 = vunpack.c.h.b16 %v500
      %v723 = vunpack.c.l.b16 %v501
      %v724 = vunpack.c.h.b16 %v501
      %v725 = vunpack.c.l.b16 %v502
      %v726 = vunpack.c.h.b16 %v502
      %v727 = vunpack.c.l.b16 %v503
      %v728 = vunpack.c.h.b16 %v503
      %v729 = vunpack.c.l.b16 %v504
      %v730 = vunpack.c.h.b16 %v504
      %v731 = vunpack.c.l.b16 %v505
      %v732 = vunpack.c.h.b16 %v505
      %v733 = vunpack.c.l.b16 %v506
      %v734 = vunpack.c.h.b16 %v506
      %v735 = vunpack.c.l.b16 %v507
      %v736 = vunpack.c.h.b16 %v507
      %v737 = vunpack.c.l.b16 %v508
      %v738 = vunpack.c.h.b16 %v508
      %v739 = vunpack.c.l.b16 %v509
      %v740 = vunpack.c.h.b16 %v509
      %v741 = vunpack.c.l.b16 %v510
      %v742 = vunpack.c.h.b16 %v510
      %v743 = vunpack.c.l.b16 %v511
      %v744 = vunpack.c.h.b16 %v511
      %v745 = vunpack.c.l.b16 %v512
      %v746 = vunpack.c.h.b16 %v512
      %v747 = vunpack.c.l.b16 %v513
      %v748 = vunpack.c.h.b16 %v513
      %v749 = vunpack.c.l.b16 %v514
      %v750 = vunpack.c.h.b16 %v514
      %v751 = vunpack.c.l.b16 %v515
      %v752 = vunpack.c.h.b16 %v515
      %v753 = vunpack.c.l.b16 %v516
      %v754 = vunpack.c.h.b16 %v516
      %v755 = vunpack.c.l.b16 %v517
      %v756 = vunpack.c.h.b16 %v517
      %v757 = vunpack.c.l.b16 %v518
      %v758 = vunpack.c.h.b16 %v518
      %v759 = vunpack.c.l.b16 %v519
      %v760 = vunpack.c.h.b16 %v519
      %v761 = vunpack.c.l.b16 %v520
      %v762 = vunpack.c.h.b16 %v520
      %v763 = vunpack.c.l.b16 %v521
      %v764 = vunpack.c.h.b16 %v521
      %v765 = vunpack.c.l.b16 %v522
      %v766 = vunpack.c.h.b16 %v522
      %v767 = vunpack.c.l.b16 %v523
      %v768 = vunpack.c.h.b16 %v523
      %v769 = vunpack.c.l.b16 %v524
      %v770 = vunpack.c.h.b16 %v524
      %v771 = vunpack.c.l.b16 %v525
      %v772 = vunpack.c.h.b16 %v525
      %v773 = vunpack.c.l.b16 %v526
      %v774 = vunpack.c.h.b16 %v526
      %v775 = vunpack.c.l.b16 %v527
      %v776 = vunpack.c.h.b16 %v527
      %v777 = vunpack.c.l.b16 %v528
      %v778 = vunpack.c.h.b16 %v528
      %v779 = vunpack.c.l.b16 %v529
      %v780 = vunpack.c.h.b16 %v529
      %v781 = vunpack.c.l.b16 %v530
      %v782 = vunpack.c.h.b16 %v530
      %v783 = vunpack.c.l.b16 %v531
      %v784 = vunpack.c.h.b16 %v531
      %v785 = vunpack.c.l.b16 %v532
      %v786 = vunpack.c.h.b16 %v532
      %v787 = vunpack.c.l.b16 %v533
      %v788 = vunpack.c.h.b16 %v533
      %v789 = vunpack.c.l.b16 %v534
      %v790 = vunpack.c.h.b16 %v534
      %v791 = vunpack.c.l.b16 %v535
      %v792 = vunpack.c.h.b16 %v535
      %v793 = vunpack.c.l.b16 %v536
      %v794 = vunpack.c.h.b16 %v536
      %v795 = vunpack.c.l.b16 %v537
      %v796 = vunpack.c.h.b16 %v537
      %v797 = vunpack.c.l.b16 %v538
      %v798 = vunpack.c.h.b16 %v538
      %v799 = vunpack.c.l.b16 %v539
      %v800 = vunpack.c.h.b16 %v539
      %v801 = vunpack.c.l.b16 %v540
      %v802 = vunpack.c.h.b16 %v540
      %v803 = vunpack.c.l.b16 %v541
      %v804 = vunpack.c.h.b16 %v541
      %v805 = vunpack.c.l.b16 %v542
      %v806 = vunpack.c.h.b16 %v542
      %v807 = vunpack.c.l.b16 %v543
      %v808 = vunpack.c.h.b16 %v543
      %v809 = vunpack.c.l.b16 %v544
      %v810 = vunpack.c.h.b16 %v544
      %v811 = vunpack.c.l.b16 %v545
      %v812 = vunpack.c.h.b16 %v545
      %v813 = vunpack.c.l.b16 %v546
      %v814 = vunpack.c.h.b16 %v546
      %v815 = vunpack.c.l.b16 %v547
      %v816 = vunpack.c.h.b16 %v547
      %v817 = vunpack.c.l.b16 %v548
      %v818 = vunpack.c.h.b16 %v548
      %v819 = vunpack.c.l.b16 %v549
      %v820 = vunpack.c.h.b16 %v549
      %v821 = vunpack.c.l.b16 %v550
      %v822 = vunpack.c.h.b16 %v550
      %v823 = vunpack.c.l.b16 %v551
      %v824 = vunpack.c.h.b16 %v551
      %v825 = vunpack.c.l.b16 %v552
      %v826 = vunpack.c.h.b16 %v552
      %v827 = vunpack.c.l.b16 %v553
      %v828 = vunpack.c.h.b16 %v553
      %v829 = vunpack.c.l.b16 %v554
      %v830 = vunpack.c.h.b16 %v554
      %v831 = vunpack.c.l.b16 %v555
      %v832 = vunpack.c.h.b16 %v555
      %v833 = vunpack.c.l.b16 %v556
      %v834 = vunpack.c.h.b16 %v556
      %v835 = vunpack.c.l.b16 %v557
      %v836 = vunpack.c.h.b16 %v557
      %v837 = vunpack.c.l.b16 %v558
      %v838 = vunpack.c.h.b16 %v558
      %v839 = vunpack.c.l.b16 %v559
      %v840 = vunpack.c.h.b16 %v559
      %v841 = vunpack.c.l.b16 %v560
      %v842 = vunpack.c.h.b16 %v560
      %v843 = vunpack.c.l.b16 %v561
      %v844 = vunpack.c.h.b16 %v561
      %v845 = vunpack.c.l.b16 %v562
      %v846 = vunpack.c.h.b16 %v562
      %v847 = vunpack.c.l.b16 %v563
      %v848 = vunpack.c.h.b16 %v563
      %v849 = vunpack.c.l.b16 %v564
      %v850 = vunpack.c.h.b16 %v564
      %v851 = vpack.c.b16 %v699, %v691
      %v852 = vpack.c.b16 %v700, %v692
      %v853 = vpack.c.b16 %v701, %v693
      %v854 = vpack.c.b16 %v702, %v694
      %v855 = vpack.c.b16 %v703, %v695
      %v856 = vpack.c.b16 %v704, %v696
      %v857 = vpack.c.b16 %v705, %v697
      %v858 = vpack.c.b16 %v706, %v698
      %v859 = vpack.c.b16 %v715, %v707
      %v860 = vpack.c.b16 %v716, %v708
      %v861 = vpack.c.b16 %v717, %v709
      %v862 = vpack.c.b16 %v718, %v710
      %v863 = vpack.c.b16 %v719, %v711
      %v864 = vpack.c.b16 %v720, %v712
      %v865 = vpack.c.b16 %v721, %v713
      %v866 = vpack.c.b16 %v722, %v714
      %v867 = vpack.c.b16 %v731, %v723
      %v868 = vpack.c.b16 %v732, %v724
      %v869 = vpack.c.b16 %v733, %v725
      %v870 = vpack.c.b16 %v734, %v726
      %v871 = vpack.c.b16 %v735, %v727
      %v872 = vpack.c.b16 %v736, %v728
      %v873 = vpack.c.b16 %v737, %v729
      %v874 = vpack.c.b16 %v738, %v730
      %v875 = vpack.c.b16 %v747, %v739
      %v876 = vpack.c.b16 %v748, %v740
      %v877 = vpack.c.b16 %v749, %v741
      %v878 = vpack.c.b16 %v750, %v742
      %v879 = vpack.c.b16 %v751, %v743
      %v880 = vpack.c.b16 %v752, %v744
      %v881 = vpack.c.b16 %v753, %v745
      %v882 = vpack.c.b16 %v754, %v746
      %v883 = vpack.c.b16 %v763, %v755
      %v884 = vpack.c.b16 %v764, %v756
      %v885 = vpack.c.b16 %v765, %v757
      %v886 = vpack.c.b16 %v766, %v758
      %v887 = vpack.c.b16 %v767, %v759
      %v888 = vpack.c.b16 %v768, %v760
      %v889 = vpack.c.b16 %v769, %v761
      %v890 = vpack.c.b16 %v770, %v762
      %v891 = vpack.c.b16 %v779, %v771
      %v892 = vpack.c.b16 %v780, %v772
      %v893 = vpack.c.b16 %v781, %v773
      %v894 = vpack.c.b16 %v782, %v774
      %v895 = vpack.c.b16 %v783, %v775
      %v896 = vpack.c.b16 %v784, %v776
      %v897 = vpack.c.b16 %v785, %v777
      %v898 = vpack.c.b16 %v786, %v778
      %v899 = vpack.c.b16 %v795, %v787
      %v900 = vpack.c.b16 %v796, %v788
      %v901 = vpack.c.b16 %v797, %v789
      %v902 = vpack.c.b16 %v798, %v790
      %v903 = vpack.c.b16 %v799, %v791
      %v904 = vpack.c.b16 %v800, %v792
      %v905 = vpack.c.b16 %v801, %v793
      %v906 = vpack.c.b16 %v802, %v794
      %v907 = vpack.c.b16 %v811, %v803
      %v908 = vpack.c.b16 %v812, %v804
      %v909 = vpack.c.b16 %v813, %v805
      %v910 = vpack.c.b16 %v814, %v806
      %v911 = vpack.c.b16 %v815, %v807
      %v912 = vpack.c.b16 %v816, %v808
      %v913 = vpack.c.b16 %v817, %v809
      %v914 = vpack.c.b16 %v818, %v810
      %v915 = vpack.c.b16 %v827, %v819
      %v916 = vpack.c.b16 %v828, %v820
      %v917 = vpack.c.b16 %v829, %v821
      %v918 = vpack.c.b16 %v830, %v822
      %v919 = vpack.c.b16 %v831, %v823
      %v920 = vpack.c.b16 %v832, %v824
      %v921 = vpack.c.b16 %v833, %v825
      %v922 = vpack.c.b16 %v834, %v826
      %v923 = vpack.c.b16 %v843, %v835
      %v924 = vpack.c.b16 %v844, %v836
      %v925 = vpack.c.b16 %v845, %v837
      %v926 = vpack.c.b16 %v846, %v838
      %v927 = vpack.c.b16 %v847, %v839
      %v928 = vpack.c.b16 %v848, %v840
      %v929 = vpack.c.b16 %v849, %v841
      %v930 = vpack.c.b16 %v850, %v842
      %vm1011 = vcmask 261120
      %v1013 = vsel %vm1011, %v567, 0
      %v1016 = vsel %vm1011, %v569, 0
      %1018 = vmatprep.subr.bf16.mxu0 %v852
      %1019 = vmatpush1.bf16.msra.mxu0 %v851
      %1020 = vmatprep.subr.bf16.mxu0 %v860
      %1021 = vmatpush1.bf16.msra.mxu0 %v859
      %1022 = vmatprep.subr.bf16.mxu0 %v868
      %1023 = vmatpush1.bf16.msra.mxu0 %v867
      %1024 = vmatprep.subr.bf16.mxu0 %v876
      %1025 = vmatpush1.bf16.msra.mxu0 %v875
      %1026 = vmatprep.subr.bf16.mxu0 %v884
      %1027 = vmatpush1.bf16.msra.mxu0 %v883
      %1028 = vmatprep.subr.bf16.mxu0 %v892
      %1029 = vmatpush1.bf16.msra.mxu0 %v891
      %1030 = vmatprep.subr.bf16.mxu0 %v900
      %1031 = vmatpush1.bf16.msra.mxu0 %v899
      %1032 = vmatprep.subr.bf16.mxu0 %v908
      %1033 = vmatpush1.bf16.msra.mxu0 %v907
      %1034 = vmatprep.subr.bf16.mxu0 %v916
      %1035 = vmatpush1.bf16.msra.mxu0 %v915
      %1036 = vmatprep.subr.bf16.mxu0 %v924
      %1037 = vmatpush1.bf16.msra.mxu0 %v923
      %1038 = vmatprep.subr.bf16.mxu0 0
      %1039 = vmatpush1.bf16.msra.mxu0 0
      %1040 = vmatprep.subr.bf16.mxu0 0
      %1041 = vmatpush1.bf16.msra.mxu0 0
      %1042 = vmatprep.subr.bf16.mxu0 0
      %1043 = vmatpush1.bf16.msra.mxu0 0
      %1044 = vmatprep.subr.bf16.mxu0 0
      %1045 = vmatpush1.bf16.msra.mxu0 0
      %1046 = vmatprep.subr.bf16.mxu0 0
      %1047 = vmatpush1.bf16.msra.mxu0 0
      %1048 = vmatprep.subr.bf16.mxu0 0
      %1049 = vmatpush1.bf16.msra.mxu0 0
      %1050 = vmatprep.mubr.bf16.mxu0 %v1013
      %1051 = vmatmul.mubr.bf16.gmra.mrb[0].mxu0 %v566
      %v1052 = vpop.f32.mrb[0].mxu0
      %v1053 = vadd.f32 %v574, %v1052
      %v1054 = vpop.f32.mrb[0].mxu0
      %v1055 = vadd.f32 %v578, %v1054
      %v1056 = vpop.f32.mrb[0].mxu0
      %v1057 = vadd.f32 %v574, %v1056
      %v1058 = vpop.f32.mrb[0].mxu0
      %v1059 = vadd.f32 %v578, %v1058
      %1060 = vmatprep.mubr.bf16.mxu0 %v1016
      %1061 = vmatmul.mubr.bf16.gmra.mrb[0].mxu0 %v568
      %v1062 = vpop.f32.mrb[0].mxu0
      %v1063 = vadd.f32 %v574, %v1062
      %v1064 = vpop.f32.mrb[0].mxu0
      %v1065 = vadd.f32 %v578, %v1064
      %v1066 = vpop.f32.mrb[0].mxu0
      %v1067 = vadd.f32 %v574, %v1066
      %v1068 = vpop.f32.mrb[0].mxu0
      %v1069 = vadd.f32 %v578, %v1068
      %1070 = vdwg.mxu0
      %1071 = vmatprep.subr.bf16.mxu0 %v854
      %1072 = vmatpush1.bf16.msra.mxu0 %v853
      %1073 = vmatprep.subr.bf16.mxu0 %v862
      %1074 = vmatpush1.bf16.msra.mxu0 %v861
      %1075 = vmatprep.subr.bf16.mxu0 %v870
      %1076 = vmatpush1.bf16.msra.mxu0 %v869
      %1077 = vmatprep.subr.bf16.mxu0 %v878
      %1078 = vmatpush1.bf16.msra.mxu0 %v877
      %1079 = vmatprep.subr.bf16.mxu0 %v886
      %1080 = vmatpush1.bf16.msra.mxu0 %v885
      %1081 = vmatprep.subr.bf16.mxu0 %v894
      %1082 = vmatpush1.bf16.msra.mxu0 %v893
      %1083 = vmatprep.subr.bf16.mxu0 %v902
      %1084 = vmatpush1.bf16.msra.mxu0 %v901
      %1085 = vmatprep.subr.bf16.mxu0 %v910
      %1086 = vmatpush1.bf16.msra.mxu0 %v909
      %1087 = vmatprep.subr.bf16.mxu0 %v918
      %1088 = vmatpush1.bf16.msra.mxu0 %v917
      %1089 = vmatprep.subr.bf16.mxu0 %v926
      %1090 = vmatpush1.bf16.msra.mxu0 %v925
      %1091 = vmatprep.subr.bf16.mxu0 0
      %1092 = vmatpush1.bf16.msra.mxu0 0
      %1093 = vmatprep.subr.bf16.mxu0 0
      %1094 = vmatpush1.bf16.msra.mxu0 0
      %1095 = vmatprep.subr.bf16.mxu0 0
      %1096 = vmatpush1.bf16.msra.mxu0 0
      %1097 = vmatprep.subr.bf16.mxu0 0
      %1098 = vmatpush1.bf16.msra.mxu0 0
      %1099 = vmatprep.subr.bf16.mxu0 0
      %1100 = vmatpush1.bf16.msra.mxu0 0
      %1101 = vmatprep.subr.bf16.mxu0 0
      %1102 = vmatpush1.bf16.msra.mxu0 0
      %1103 = vmatprep.mubr.bf16.mxu0 %v1013
      %1104 = vmatmul.mubr.bf16.gmra.mrb[0].mxu0 %v566
      %v1105 = vpop.f32.mrb[0].mxu0
      %v1106 = vadd.f32 %v582, %v1105
      %v1107 = vpop.f32.mrb[0].mxu0
      %v1108 = vadd.f32 %v586, %v1107
      %v1109 = vpop.f32.mrb[0].mxu0
      %v1110 = vadd.f32 %v582, %v1109
      %v1111 = vpop.f32.mrb[0].mxu0
      %v1112 = vadd.f32 %v586, %v1111
      %1113 = vmatprep.mubr.bf16.mxu0 %v1016
      %1114 = vmatmul.mubr.bf16.gmra.mrb[0].mxu0 %v568
      %v1115 = vpop.f32.mrb[0].mxu0
      %v1116 = vadd.f32 %v582, %v1115
      %v1117 = vpop.f32.mrb[0].mxu0
      %v1118 = vadd.f32 %v586, %v1117
      %v1119 = vpop.f32.mrb[0].mxu0
      %v1120 = vadd.f32 %v582, %v1119
      %v1121 = vpop.f32.mrb[0].mxu0
      %v1122 = vadd.f32 %v586, %v1121
      %1123 = vdwg.mxu0
      %1124 = vmatprep.subr.bf16.mxu0 %v856
      %1125 = vmatpush1.bf16.msra.mxu0 %v855
      %1126 = vmatprep.subr.bf16.mxu0 %v864
      %1127 = vmatpush1.bf16.msra.mxu0 %v863
      %1128 = vmatprep.subr.bf16.mxu0 %v872
      %1129 = vmatpush1.bf16.msra.mxu0 %v871
      %1130 = vmatprep.subr.bf16.mxu0 %v880
      %1131 = vmatpush1.bf16.msra.mxu0 %v879
      %1132 = vmatprep.subr.bf16.mxu0 %v888
      %1133 = vmatpush1.bf16.msra.mxu0 %v887
      %1134 = vmatprep.subr.bf16.mxu0 %v896
      %1135 = vmatpush1.bf16.msra.mxu0 %v895
      %1136 = vmatprep.subr.bf16.mxu0 %v904
      %1137 = vmatpush1.bf16.msra.mxu0 %v903
      %1138 = vmatprep.subr.bf16.mxu0 %v912
      %1139 = vmatpush1.bf16.msra.mxu0 %v911
      %1140 = vmatprep.subr.bf16.mxu0 %v920
      %1141 = vmatpush1.bf16.msra.mxu0 %v919
      %1142 = vmatprep.subr.bf16.mxu0 %v928
      %1143 = vmatpush1.bf16.msra.mxu0 %v927
      %1144 = vmatprep.subr.bf16.mxu0 0
      %1145 = vmatpush1.bf16.msra.mxu0 0
      %1146 = vmatprep.subr.bf16.mxu0 0
      %1147 = vmatpush1.bf16.msra.mxu0 0
      %1148 = vmatprep.subr.bf16.mxu0 0
      %1149 = vmatpush1.bf16.msra.mxu0 0
      %1150 = vmatprep.subr.bf16.mxu0 0
      %1151 = vmatpush1.bf16.msra.mxu0 0
      %1152 = vmatprep.subr.bf16.mxu0 0
      %1153 = vmatpush1.bf16.msra.mxu0 0
      %1154 = vmatprep.subr.bf16.mxu0 0
      %1155 = vmatpush1.bf16.msra.mxu0 0
      %1156 = vmatprep.mubr.bf16.mxu0 %v1013
      %1157 = vmatmul.mubr.bf16.gmra.mrb[0].mxu0 %v566
      %v1158 = vpop.f32.mrb[0].mxu0
      %v1159 = vadd.f32 %v590, %v1158
      %v1160 = vpop.f32.mrb[0].mxu0
      %v1161 = vadd.f32 %v594, %v1160
      %v1162 = vpop.f32.mrb[0].mxu0
      %v1163 = vadd.f32 %v590, %v1162
      %v1164 = vpop.f32.mrb[0].mxu0
      %v1165 = vadd.f32 %v594, %v1164
      %1166 = vmatprep.mubr.bf16.mxu0 %v1016
      %1167 = vmatmul.mubr.bf16.gmra.mrb[0].mxu0 %v568
      %v1168 = vpop.f32.mrb[0].mxu0
      %v1169 = vadd.f32 %v590, %v1168
      %v1170 = vpop.f32.mrb[0].mxu0
      %v1171 = vadd.f32 %v594, %v1170
      %v1172 = vpop.f32.mrb[0].mxu0
      %v1173 = vadd.f32 %v590, %v1172
      %v1174 = vpop.f32.mrb[0].mxu0
      %v1175 = vadd.f32 %v594, %v1174
      %1176 = vdwg.mxu0
      %1177 = vmatprep.subr.bf16.mxu0 %v858
      %1178 = vmatpush1.bf16.msra.mxu0 %v857
      %1179 = vmatprep.subr.bf16.mxu0 %v866
      %1180 = vmatpush1.bf16.msra.mxu0 %v865
      %1181 = vmatprep.subr.bf16.mxu0 %v874
      %1182 = vmatpush1.bf16.msra.mxu0 %v873
      %1183 = vmatprep.subr.bf16.mxu0 %v882
      %1184 = vmatpush1.bf16.msra.mxu0 %v881
      %1185 = vmatprep.subr.bf16.mxu0 %v890
      %1186 = vmatpush1.bf16.msra.mxu0 %v889
      %1187 = vmatprep.subr.bf16.mxu0 %v898
      %1188 = vmatpush1.bf16.msra.mxu0 %v897
      %1189 = vmatprep.subr.bf16.mxu0 %v906
      %1190 = vmatpush1.bf16.msra.mxu0 %v905
      %1191 = vmatprep.subr.bf16.mxu0 %v914
      %1192 = vmatpush1.bf16.msra.mxu0 %v913
      %1193 = vmatprep.subr.bf16.mxu0 %v922
      %1194 = vmatpush1.bf16.msra.mxu0 %v921
      %1195 = vmatprep.subr.bf16.mxu0 %v930
      %1196 = vmatpush1.bf16.msra.mxu0 %v929
      %1197 = vmatprep.subr.bf16.mxu0 0
      %1198 = vmatpush1.bf16.msra.mxu0 0
      %1199 = vmatprep.subr.bf16.mxu0 0
      %1200 = vmatpush1.bf16.msra.mxu0 0
      %1201 = vmatprep.subr.bf16.mxu0 0
      %1202 = vmatpush1.bf16.msra.mxu0 0
      %1203 = vmatprep.subr.bf16.mxu0 0
      %1204 = vmatpush1.bf16.msra.mxu0 0
      %1205 = vmatprep.subr.bf16.mxu0 0
      %1206 = vmatpush1.bf16.msra.mxu0 0
      %1207 = vmatprep.subr.bf16.mxu0 0
      %1208 = vmatpush1.bf16.msra.mxu0 0
      %1209 = vmatprep.mubr.bf16.mxu0 %v1013
      %1210 = vmatmul.mubr.bf16.gmra.mrb[0].mxu0 %v566
      %v1211 = vpop.f32.mrb[0].mxu0
      %v1212 = vadd.f32 %v598, %v1211
      %v1213 = vpop.f32.mrb[0].mxu0
      %v1214 = vadd.f32 %v602, %v1213
      %v1215 = vpop.f32.mrb[0].mxu0
      %v1216 = vadd.f32 %v598, %v1215
      %v1217 = vpop.f32.mrb[0].mxu0
      %v1218 = vadd.f32 %v602, %v1217
      %1219 = vmatprep.mubr.bf16.mxu0 %v1016
      %1220 = vmatmul.mubr.bf16.gmra.mrb[0].mxu0 %v568
      %v1221 = vpop.f32.mrb[0].mxu0
      %v1222 = vadd.f32 %v598, %v1221
      %v1223 = vpop.f32.mrb[0].mxu0
      %v1224 = vadd.f32 %v602, %v1223
      %v1225 = vpop.f32.mrb[0].mxu0
      %v1226 = vadd.f32 %v598, %v1225
      %v1227 = vpop.f32.mrb[0].mxu0
      %v1228 = vadd.f32 %v602, %v1227
      %1229 = vdwg.mxu0
      %v1230 = vld [vmem:[%s8] sm:$0xf]
      %v1231 = vld [vmem:[%s8 + $0x4] sm:$0xf]
      %v1232 = vld [vmem:[%s8 + $0x8] sm:$0xf]
      %v1233 = vld [vmem:[%s8 + $0xc] sm:$0xf]
      %v1234 = vld [vmem:[%s8 + $0x10] sm:$0xf]
      %v1235 = vld [vmem:[%s8 + $0x14] sm:$0xf]
      %v1236 = vld [vmem:[%s8 + $0x18] sm:$0xf]
      %v1237 = vld [vmem:[%s8 + $0x1c] sm:$0xf]
      %v1238 = vld [vmem:[%s8 + $0x20] sm:$0xf]
      %v1239 = vld [vmem:[%s8 + $0x24] sm:$0xf]
      %v1240 = vld [vmem:[%s8 + $0x28] sm:$0xf]
      %v1241 = vld [vmem:[%s8 + $0x2c] sm:$0xf]
      %v1242 = vld [vmem:[%s8 + $0x30] sm:$0xf]
      %v1243 = vld [vmem:[%s8 + $0x34] sm:$0xf]
      %v1244 = vld [vmem:[%s8 + $0x38] sm:$0xf]
      %v1245 = vld [vmem:[%s8 + $0x3c] sm:$0xf]
      %v1246 = vld [vmem:[%s8 + $0x40] sm:$0xf]
      %v1247 = vld [vmem:[%s8 + $0x44] sm:$0xf]
      %v1248 = vld [vmem:[%s8 + $0x48] sm:$0xf]
      %v1249 = vld [vmem:[%s8 + $0x4c] sm:$0xf]
      %v1250 = vld [vmem:[%s8 + $0x50] sm:$0xf]
      %v1251 = vld [vmem:[%s8 + $0x54] sm:$0xf]
      %v1252 = vld [vmem:[%s8 + $0x58] sm:$0xf]
      %v1253 = vld [vmem:[%s8 + $0x5c] sm:$0xf]
      %v1254 = vld [vmem:[%s8 + $0x60] sm:$0xf]
      %v1255 = vld [vmem:[%s8 + $0x64] sm:$0xf]
      %v1256 = vld [vmem:[%s8 + $0x68] sm:$0xf]
      %v1257 = vld [vmem:[%s8 + $0x6c] sm:$0xf]
      %v1258 = vld [vmem:[%s8 + $0x70] sm:$0xf]
      %v1259 = vld [vmem:[%s8 + $0x74] sm:$0xf]
      %v1260 = vld [vmem:[%s8 + $0x78] sm:$0xf]
      %v1261 = vld [vmem:[%s8 + $0x7c] sm:$0xf]
      %v1262 = vld [vmem:[%s8 + $0x80] sm:$0xf]
      %v1263 = vld [vmem:[%s8 + $0x84] sm:$0xf]
      %v1264 = vld [vmem:[%s8 + $0x88] sm:$0xf]
      %v1265 = vld [vmem:[%s8 + $0x8c] sm:$0xf]
      %v1266 = vld [vmem:[%s8 + $0x90] sm:$0xf]
      %v1267 = vld [vmem:[%s8 + $0x94] sm:$0xf]
      %v1268 = vld [vmem:[%s8 + $0x98] sm:$0xf]
      %v1269 = vld [vmem:[%s8 + $0x9c] sm:$0xf]
      %v1270 = vld [vmem:[%s8 + $0xa0] sm:$0xf]
      %v1271 = vld [vmem:[%s8 + $0xa4] sm:$0xf]
      %v1272 = vld [vmem:[%s8 + $0xa8] sm:$0xf]
      %v1273 = vld [vmem:[%s8 + $0xac] sm:$0xf]
      %v1274 = vld [vmem:[%s8 + $0xb0] sm:$0xf]
      %v1275 = vld [vmem:[%s8 + $0xb4] sm:$0xf]
      %v1276 = vld [vmem:[%s8 + $0xb8] sm:$0xf]
      %v1277 = vld [vmem:[%s8 + $0xbc] sm:$0xf]
      %v1278 = vld [vmem:[%s8 + $0xc0] sm:$0xf]
      %v1279 = vld [vmem:[%s8 + $0xc4] sm:$0xf]
      %v1280 = vld [vmem:[%s8 + $0xc8] sm:$0xf]
      %v1281 = vld [vmem:[%s8 + $0xcc] sm:$0xf]
      %v1282 = vld [vmem:[%s8 + $0xd0] sm:$0xf]
      %v1283 = vld [vmem:[%s8 + $0xd4] sm:$0xf]
      %v1284 = vld [vmem:[%s8 + $0xd8] sm:$0xf]
      %v1285 = vld [vmem:[%s8 + $0xdc] sm:$0xf]
      %v1286 = vld [vmem:[%s8 + $0xe0] sm:$0xf]
      %v1287 = vld [vmem:[%s8 + $0xe4] sm:$0xf]
      %v1288 = vld [vmem:[%s8 + $0xe8] sm:$0xf]
      %v1289 = vld [vmem:[%s8 + $0xec] sm:$0xf]
      %v1290 = vld [vmem:[%s8 + $0xf0] sm:$0xf]
      %v1291 = vld [vmem:[%s8 + $0xf4] sm:$0xf]
      %v1292 = vld [vmem:[%s8 + $0xf8] sm:$0xf]
      %v1293 = vld [vmem:[%s8 + $0xfc] sm:$0xf]
      %v1294 = vld [vmem:[%s8 + $0x100] sm:$0xf]
      %v1295 = vld [vmem:[%s8 + $0x104] sm:$0xf]
      %v1296 = vld [vmem:[%s8 + $0x108] sm:$0xf]
      %v1297 = vld [vmem:[%s8 + $0x10c] sm:$0xf]
      %v1298 = vld [vmem:[%s8 + $0x110] sm:$0xf]
      %v1299 = vld [vmem:[%s8 + $0x114] sm:$0xf]
      %v1300 = vld [vmem:[%s8 + $0x118] sm:$0xf]
      %v1301 = vld [vmem:[%s8 + $0x11c] sm:$0xf]
      %v1302 = vld [vmem:[%s8 + $0x120] sm:$0xf]
      %v1303 = vld [vmem:[%s8 + $0x124] sm:$0xf]
      %v1304 = vld [vmem:[%s8 + $0x128] sm:$0xf]
      %v1305 = vld [vmem:[%s8 + $0x12c] sm:$0xf]
      %v1306 = vld [vmem:[%s8 + $0x130] sm:$0xf]
      %v1307 = vld [vmem:[%s8 + $0x134] sm:$0xf]
      %v1308 = vld [vmem:[%s8 + $0x138] sm:$0xf]
      %v1309 = vld [vmem:[%s8 + $0x13c] sm:$0xf]
      %v1310 = vld [vmem:[%s8 + $0x140] sm:$0xf]
      %v1311 = vld [vmem:[%s8 + $0x144] sm:$0xf]
      %v1312 = vld [vmem:[%s8 + $0x148] sm:$0xf]
      %v1313 = vld [vmem:[%s8 + $0x14c] sm:$0xf]
      %v1314 = vld [vmem:[%s8 + $0x150] sm:$0xf]
      %v1315 = vld [vmem:[%s8 + $0x154] sm:$0xf]
      %v1316 = vld [vmem:[%s8 + $0x158] sm:$0xf]
      %v1317 = vld [vmem:[%s8 + $0x15c] sm:$0xf]
      %v1318 = vld [vmem:[%s8 + $0x160] sm:$0xf]
      %v1319 = vld [vmem:[%s8 + $0x164] sm:$0xf]
      %v1320 = vld [vmem:[%s8 + $0x168] sm:$0xf]
      %v1321 = vld [vmem:[%s8 + $0x16c] sm:$0xf]
      %v1322 = vld [vmem:[%s8 + $0x170] sm:$0xf]
      %v1323 = vld [vmem:[%s8 + $0x174] sm:$0xf]
      %v1324 = vld [vmem:[%s8 + $0x178] sm:$0xf]
      %v1325 = vld [vmem:[%s8 + $0x17c] sm:$0xf]
      %v1326 = vld [vmem:[%s8 + $0x180] sm:$0xf]
      %v1327 = vld [vmem:[%s8 + $0x184] sm:$0xf]
      %v1328 = vld [vmem:[%s8 + $0x188] sm:$0xf]
      %v1329 = vld [vmem:[%s8 + $0x18c] sm:$0xf]
      %v1330 = vld [vmem:[%s8 + $0x190] sm:$0xf]
      %v1331 = vld [vmem:[%s8 + $0x194] sm:$0xf]
      %v1332 = vld [vmem:[%s8 + $0x198] sm:$0xf]
      %v1333 = vld [vmem:[%s8 + $0x19c] sm:$0xf]
      %v1334 = vld [vmem:[%s8 + $0x1a0] sm:$0xf]
      %v1335 = vld [vmem:[%s8 + $0x1a4] sm:$0xf]
      %v1336 = vld [vmem:[%s8 + $0x1a8] sm:$0xf]
      %v1337 = vld [vmem:[%s8 + $0x1ac] sm:$0xf]
      %v1338 = vld [vmem:[%s8 + $0x1b0] sm:$0xf]
      %v1339 = vld [vmem:[%s8 + $0x1b4] sm:$0xf]
      %v1340 = vld [vmem:[%s8 + $0x1b8] sm:$0xf]
      %v1341 = vld [vmem:[%s8 + $0x1bc] sm:$0xf]
      %v1342 = vld [vmem:[%s8 + $0x1c0] sm:$0xf]
      %v1343 = vld [vmem:[%s8 + $0x1c4] sm:$0xf]
      %v1344 = vld [vmem:[%s8 + $0x1c8] sm:$0xf]
      %v1345 = vld [vmem:[%s8 + $0x1cc] sm:$0xf]
      %v1346 = vld [vmem:[%s8 + $0x1d0] sm:$0xf]
      %v1347 = vld [vmem:[%s8 + $0x1d4] sm:$0xf]
      %v1348 = vld [vmem:[%s8 + $0x1d8] sm:$0xf]
      %v1349 = vld [vmem:[%s8 + $0x1dc] sm:$0xf]
      %v1350 = vld [vmem:[%s8 + $0x1e0] sm:$0xf]
      %v1351 = vld [vmem:[%s8 + $0x1e4] sm:$0xf]
      %v1352 = vld [vmem:[%s8 + $0x1e8] sm:$0xf]
      %v1353 = vld [vmem:[%s8 + $0x1ec] sm:$0xf]
      %v1354 = vld [vmem:[%s8 + $0x1f0] sm:$0xf]
      %v1355 = vld [vmem:[%s8 + $0x1f4] sm:$0xf]
      %v1356 = vld [vmem:[%s8 + $0x1f8] sm:$0xf]
      %v1357 = vld [vmem:[%s8 + $0x1fc] sm:$0xf]
      %v1358 = vld [vmem:[%s3] sm:$0x1]
      %v1359 = vpack.c.bf16 %v1057, %v1053
      %v1360 = vpack.c.bf16 %v1059, %v1055
      %v1361 = vpack.c.bf16 %v1110, %v1106
      %v1362 = vpack.c.bf16 %v1112, %v1108
      %v1363 = vpack.c.bf16 %v1163, %v1159
      %v1364 = vpack.c.bf16 %v1165, %v1161
      %v1365 = vpack.c.bf16 %v1216, %v1212
      %v1366 = vpack.c.bf16 %v1218, %v1214
      %v1367 = vpack.c.bf16 %v1067, %v1063
      %v1368 = vpack.c.bf16 %v1069, %v1065
      %v1369 = vpack.c.bf16 %v1120, %v1116
      %v1370 = vpack.c.bf16 %v1122, %v1118
      %v1371 = vpack.c.bf16 %v1173, %v1169
      %v1372 = vpack.c.bf16 %v1175, %v1171
      %v1373 = vpack.c.bf16 %v1226, %v1222
      %v1374 = vpack.c.bf16 %v1228, %v1224
      %v1375 = vlaneseq
      %v1376 = vshrl.u32 %v1375, 7
      %v1377 = vsub.s32 0, %v1376
      %v1378 = vrot.slane %v1358, %v1377
      %v1507 = vunpack.c.l.b16 %v1230
      %v1508 = vunpack.c.l.b16 %v1231
      %v1509 = vunpack.c.l.b16 %v1232
      %v1510 = vunpack.c.l.b16 %v1233
      %v1511 = vunpack.c.l.b16 %v1234
      %v1512 = vunpack.c.l.b16 %v1235
      %v1513 = vunpack.c.l.b16 %v1236
      %v1514 = vunpack.c.l.b16 %v1237
      %v1515 = vunpack.c.l.b16 %v1238
      %v1516 = vunpack.c.l.b16 %v1239
      %v1517 = vunpack.c.l.b16 %v1240
      %v1518 = vunpack.c.l.b16 %v1241
      %v1519 = vunpack.c.l.b16 %v1242
      %v1520 = vunpack.c.l.b16 %v1243
      %v1521 = vunpack.c.l.b16 %v1244
      %v1522 = vunpack.c.l.b16 %v1245
      %v1523 = vunpack.c.l.b16 %v1246
      %v1524 = vunpack.c.l.b16 %v1247
      %v1525 = vunpack.c.l.b16 %v1248
      %v1526 = vunpack.c.l.b16 %v1249
      %v1527 = vunpack.c.l.b16 %v1250
      %v1528 = vunpack.c.l.b16 %v1251
      %v1529 = vunpack.c.l.b16 %v1252
      %v1530 = vunpack.c.l.b16 %v1253
      %v1531 = vunpack.c.l.b16 %v1254
      %v1532 = vunpack.c.l.b16 %v1255
      %v1533 = vunpack.c.l.b16 %v1256
      %v1534 = vunpack.c.l.b16 %v1257
      %v1535 = vunpack.c.l.b16 %v1258
      %v1536 = vunpack.c.l.b16 %v1259
      %v1537 = vunpack.c.l.b16 %v1260
      %v1538 = vunpack.c.l.b16 %v1261
      %v1539 = vunpack.c.l.b16 %v1262
      %v1540 = vunpack.c.l.b16 %v1263
      %v1541 = vunpack.c.l.b16 %v1264
      %v1542 = vunpack.c.l.b16 %v1265
      %v1543 = vunpack.c.l.b16 %v1266
      %v1544 = vunpack.c.l.b16 %v1267
      %v1545 = vunpack.c.l.b16 %v1268
      %v1546 = vunpack.c.l.b16 %v1269
      %v1547 = vunpack.c.l.b16 %v1270
      %v1548 = vunpack.c.l.b16 %v1271
      %v1549 = vunpack.c.l.b16 %v1272
      %v1550 = vunpack.c.l.b16 %v1273
      %v1551 = vunpack.c.l.b16 %v1274
      %v1552 = vunpack.c.l.b16 %v1275
      %v1553 = vunpack.c.l.b16 %v1276
      %v1554 = vunpack.c.l.b16 %v1277
      %v1555 = vunpack.c.l.b16 %v1278
      %v1556 = vunpack.c.l.b16 %v1279
      %v1557 = vunpack.c.l.b16 %v1280
      %v1558 = vunpack.c.l.b16 %v1281
      %v1559 = vunpack.c.l.b16 %v1282
      %v1560 = vunpack.c.l.b16 %v1283
      %v1561 = vunpack.c.l.b16 %v1284
      %v1562 = vunpack.c.l.b16 %v1285
      %v1563 = vunpack.c.l.b16 %v1286
      %v1564 = vunpack.c.l.b16 %v1287
      %v1565 = vunpack.c.l.b16 %v1288
      %v1566 = vunpack.c.l.b16 %v1289
      %v1567 = vunpack.c.l.b16 %v1290
      %v1568 = vunpack.c.l.b16 %v1291
      %v1569 = vunpack.c.l.b16 %v1292
      %v1570 = vunpack.c.l.b16 %v1293
      %v1571 = vunpack.c.l.b16 %v1294
      %v1572 = vunpack.c.l.b16 %v1295
      %v1573 = vunpack.c.l.b16 %v1296
      %v1574 = vunpack.c.l.b16 %v1297
      %v1575 = vunpack.c.l.b16 %v1298
      %v1576 = vunpack.c.l.b16 %v1299
      %v1577 = vunpack.c.l.b16 %v1300
      %v1578 = vunpack.c.l.b16 %v1301
      %v1579 = vunpack.c.l.b16 %v1302
      %v1580 = vunpack.c.l.b16 %v1303
      %v1581 = vunpack.c.l.b16 %v1304
      %v1582 = vunpack.c.l.b16 %v1305
      %v1583 = vunpack.c.l.b16 %v1306
      %v1584 = vunpack.c.l.b16 %v1307
      %v1585 = vunpack.c.l.b16 %v1308
      %v1586 = vunpack.c.l.b16 %v1309
      %v1587 = vunpack.c.l.b16 %v1310
      %v1588 = vunpack.c.l.b16 %v1311
      %v1589 = vunpack.c.l.b16 %v1312
      %v1590 = vunpack.c.l.b16 %v1313
      %v1591 = vunpack.c.l.b16 %v1314
      %v1592 = vunpack.c.l.b16 %v1315
      %v1593 = vunpack.c.l.b16 %v1316
      %v1594 = vunpack.c.l.b16 %v1317
      %v1595 = vunpack.c.l.b16 %v1318
      %v1596 = vunpack.c.l.b16 %v1319
      %v1597 = vunpack.c.l.b16 %v1320
      %v1598 = vunpack.c.l.b16 %v1321
      %v1599 = vunpack.c.l.b16 %v1322
      %v1600 = vunpack.c.l.b16 %v1323
      %v1601 = vunpack.c.l.b16 %v1324
      %v1602 = vunpack.c.l.b16 %v1325
      %v1603 = vunpack.c.l.b16 %v1326
      %v1604 = vunpack.c.l.b16 %v1327
      %v1605 = vunpack.c.l.b16 %v1328
      %v1606 = vunpack.c.l.b16 %v1329
      %v1607 = vunpack.c.l.b16 %v1330
      %v1608 = vunpack.c.l.b16 %v1331
      %v1609 = vunpack.c.l.b16 %v1332
      %v1610 = vunpack.c.l.b16 %v1333
      %v1611 = vunpack.c.l.b16 %v1334
      %v1612 = vunpack.c.l.b16 %v1335
      %v1613 = vunpack.c.l.b16 %v1336
      %v1614 = vunpack.c.l.b16 %v1337
      %v1615 = vunpack.c.l.b16 %v1338
      %v1616 = vunpack.c.l.b16 %v1339
      %v1617 = vunpack.c.l.b16 %v1340
      %v1618 = vunpack.c.l.b16 %v1341
      %v1619 = vunpack.c.l.b16 %v1342
      %v1620 = vunpack.c.l.b16 %v1343
      %v1621 = vunpack.c.l.b16 %v1344
      %v1622 = vunpack.c.l.b16 %v1345
      %v1623 = vunpack.c.l.b16 %v1346
      %v1624 = vunpack.c.l.b16 %v1347
      %v1625 = vunpack.c.l.b16 %v1348
      %v1626 = vunpack.c.l.b16 %v1349
      %v1627 = vunpack.c.l.b16 %v1350
      %v1628 = vunpack.c.l.b16 %v1351
      %v1629 = vunpack.c.l.b16 %v1352
      %v1630 = vunpack.c.l.b16 %v1353
      %v1631 = vunpack.c.l.b16 %v1354
      %v1632 = vunpack.c.l.b16 %v1355
      %v1633 = vunpack.c.l.b16 %v1356
      %v1634 = vunpack.c.l.b16 %v1357
      %v1635 = vpack.c.b16 %v1508, %v1507
      %v1636 = vpack.c.b16 %v1510, %v1509
      %v1637 = vpack.c.b16 %v1512, %v1511
      %v1638 = vpack.c.b16 %v1514, %v1513
      %v1639 = vpack.c.b16 %v1516, %v1515
      %v1640 = vpack.c.b16 %v1518, %v1517
      %v1641 = vpack.c.b16 %v1520, %v1519
      %v1642 = vpack.c.b16 %v1522, %v1521
      %v1643 = vpack.c.b16 %v1524, %v1523
      %v1644 = vpack.c.b16 %v1526, %v1525
      %v1645 = vpack.c.b16 %v1528, %v1527
      %v1646 = vpack.c.b16 %v1530, %v1529
      %v1647 = vpack.c.b16 %v1532, %v1531
      %v1648 = vpack.c.b16 %v1534, %v1533
      %v1649 = vpack.c.b16 %v1536, %v1535
      %v1650 = vpack.c.b16 %v1538, %v1537
      %v1651 = vpack.c.b16 %v1540, %v1539
      %v1652 = vpack.c.b16 %v1542, %v1541
      %v1653 = vpack.c.b16 %v1544, %v1543
      %v1654 = vpack.c.b16 %v1546, %v1545
      %v1655 = vpack.c.b16 %v1548, %v1547
      %v1656 = vpack.c.b16 %v1550, %v1549
      %v1657 = vpack.c.b16 %v1552, %v1551
      %v1658 = vpack.c.b16 %v1554, %v1553
      %v1659 = vpack.c.b16 %v1556, %v1555
      %v1660 = vpack.c.b16 %v1558, %v1557
      %v1661 = vpack.c.b16 %v1560, %v1559
      %v1662 = vpack.c.b16 %v1562, %v1561
      %v1663 = vpack.c.b16 %v1564, %v1563
      %v1664 = vpack.c.b16 %v1566, %v1565
      %v1665 = vpack.c.b16 %v1568, %v1567
      %v1666 = vpack.c.b16 %v1570, %v1569
      %v1667 = vpack.c.b16 %v1572, %v1571
      %v1668 = vpack.c.b16 %v1574, %v1573
      %v1669 = vpack.c.b16 %v1576, %v1575
      %v1670 = vpack.c.b16 %v1578, %v1577
      %v1671 = vpack.c.b16 %v1580, %v1579
      %v1672 = vpack.c.b16 %v1582, %v1581
      %v1673 = vpack.c.b16 %v1584, %v1583
      %v1674 = vpack.c.b16 %v1586, %v1585
      %v1675 = vpack.c.b16 %v1588, %v1587
      %v1676 = vpack.c.b16 %v1590, %v1589
      %v1677 = vpack.c.b16 %v1592, %v1591
      %v1678 = vpack.c.b16 %v1594, %v1593
      %v1679 = vpack.c.b16 %v1596, %v1595
      %v1680 = vpack.c.b16 %v1598, %v1597
      %v1681 = vpack.c.b16 %v1600, %v1599
      %v1682 = vpack.c.b16 %v1602, %v1601
      %v1683 = vpack.c.b16 %v1604, %v1603
      %v1684 = vpack.c.b16 %v1606, %v1605
      %v1685 = vpack.c.b16 %v1608, %v1607
      %v1686 = vpack.c.b16 %v1610, %v1609
      %v1687 = vpack.c.b16 %v1612, %v1611
      %v1688 = vpack.c.b16 %v1614, %v1613
      %v1689 = vpack.c.b16 %v1616, %v1615
      %v1690 = vpack.c.b16 %v1618, %v1617
      %v1691 = vpack.c.b16 %v1620, %v1619
      %v1692 = vpack.c.b16 %v1622, %v1621
      %v1693 = vpack.c.b16 %v1624, %v1623
      %v1694 = vpack.c.b16 %v1626, %v1625
      %v1695 = vpack.c.b16 %v1628, %v1627
      %v1696 = vpack.c.b16 %v1630, %v1629
      %v1697 = vpack.c.b16 %v1632, %v1631
      %v1698 = vpack.c.b16 %v1634, %v1633
      %1763 = vmatprep.subr.bf16.mxu0 0
      %1764 = vmatpush1.bf16.msra.mxu0 %v1635
      %1765 = vmatprep.subr.bf16.mxu0 0
      %1766 = vmatpush1.bf16.msra.mxu0 %v1636
      %1767 = vmatprep.subr.bf16.mxu0 0
      %1768 = vmatpush1.bf16.msra.mxu0 %v1637
      %1769 = vmatprep.subr.bf16.mxu0 0
      %1770 = vmatpush1.bf16.msra.mxu0 %v1638
      %1771 = vmatprep.subr.bf16.mxu0 0
      %1772 = vmatpush1.bf16.msra.mxu0 %v1639
      %1773 = vmatprep.subr.bf16.mxu0 0
      %1774 = vmatpush1.bf16.msra.mxu0 %v1640
      %1775 = vmatprep.subr.bf16.mxu0 0
      %1776 = vmatpush1.bf16.msra.mxu0 %v1641
      %1777 = vmatprep.subr.bf16.mxu0 0
      %1778 = vmatpush1.bf16.msra.mxu0 %v1642
      %1779 = vmatprep.subr.bf16.mxu0 0
      %1780 = vmatpush1.bf16.msra.mxu0 %v1643
      %1781 = vmatprep.subr.bf16.mxu0 0
      %1782 = vmatpush1.bf16.msra.mxu0 %v1644
      %1783 = vmatprep.subr.bf16.mxu0 0
      %1784 = vmatpush1.bf16.msra.mxu0 %v1645
      %1785 = vmatprep.subr.bf16.mxu0 0
      %1786 = vmatpush1.bf16.msra.mxu0 %v1646
      %1787 = vmatprep.subr.bf16.mxu0 0
      %1788 = vmatpush1.bf16.msra.mxu0 %v1647
      %1789 = vmatprep.subr.bf16.mxu0 0
      %1790 = vmatpush1.bf16.msra.mxu0 %v1648
      %1791 = vmatprep.subr.bf16.mxu0 0
      %1792 = vmatpush1.bf16.msra.mxu0 %v1649
      %1793 = vmatprep.subr.bf16.mxu0 0
      %1794 = vmatpush1.bf16.msra.mxu0 %v1650
      %1795 = vmatprep.mubr.bf16.mxu0 %v1360
      %1796 = vmatmul.mubr.bf16.gmra.mrb[0].mxu0 %v1359
      %v1797 = vpop.f32.mrb[0].mxu0
      %v1798 = vadd.f32 %v1378, %v1797
      %v1799 = vpop.f32.mrb[0].mxu0
      %v1800 = vpop.f32.mrb[0].mxu0
      %v1801 = vadd.f32 %v1378, %v1800
      %v1802 = vpop.f32.mrb[0].mxu0
      %1803 = vmatprep.mubr.bf16.mxu0 %v1368
      %1804 = vmatmul.mubr.bf16.gmra.mrb[0].mxu0 %v1367
      %v1805 = vpop.f32.mrb[0].mxu0
      %v1806 = vadd.f32 %v1378, %v1805
      %v1807 = vpop.f32.mrb[0].mxu0
      %v1808 = vpop.f32.mrb[0].mxu0
      %v1809 = vadd.f32 %v1378, %v1808
      %v1810 = vpop.f32.mrb[0].mxu0
      %1811 = vdwg.mxu0
      %1812 = vmatprep.subr.bf16.mxu0 0
      %1813 = vmatpush1.bf16.msra.mxu0 %v1651
      %1814 = vmatprep.subr.bf16.mxu0 0
      %1815 = vmatpush1.bf16.msra.mxu0 %v1652
      %1816 = vmatprep.subr.bf16.mxu0 0
      %1817 = vmatpush1.bf16.msra.mxu0 %v1653
      %1818 = vmatprep.subr.bf16.mxu0 0
      %1819 = vmatpush1.bf16.msra.mxu0 %v1654
      %1820 = vmatprep.subr.bf16.mxu0 0
      %1821 = vmatpush1.bf16.msra.mxu0 %v1655
      %1822 = vmatprep.subr.bf16.mxu0 0
      %1823 = vmatpush1.bf16.msra.mxu0 %v1656
      %1824 = vmatprep.subr.bf16.mxu0 0
      %1825 = vmatpush1.bf16.msra.mxu0 %v1657
      %1826 = vmatprep.subr.bf16.mxu0 0
      %1827 = vmatpush1.bf16.msra.mxu0 %v1658
      %1828 = vmatprep.subr.bf16.mxu0 0
      %1829 = vmatpush1.bf16.msra.mxu0 %v1659
      %1830 = vmatprep.subr.bf16.mxu0 0
      %1831 = vmatpush1.bf16.msra.mxu0 %v1660
      %1832 = vmatprep.subr.bf16.mxu0 0
      %1833 = vmatpush1.bf16.msra.mxu0 %v1661
      %1834 = vmatprep.subr.bf16.mxu0 0
      %1835 = vmatpush1.bf16.msra.mxu0 %v1662
      %1836 = vmatprep.subr.bf16.mxu0 0
      %1837 = vmatpush1.bf16.msra.mxu0 %v1663
      %1838 = vmatprep.subr.bf16.mxu0 0
      %1839 = vmatpush1.bf16.msra.mxu0 %v1664
      %1840 = vmatprep.subr.bf16.mxu0 0
      %1841 = vmatpush1.bf16.msra.mxu0 %v1665
      %1842 = vmatprep.subr.bf16.mxu0 0
      %1843 = vmatpush1.bf16.msra.mxu0 %v1666
      %1844 = vmatprep.mubr.bf16.mxu0 %v1362
      %1845 = vmatmul.mubr.bf16.gmra.mrb[0].mxu0 %v1361
      %v1846 = vpop.f32.mrb[0].mxu0
      %v1847 = vadd.f32 %v1798, %v1846
      %v1848 = vpop.f32.mrb[0].mxu0
      %v1849 = vpop.f32.mrb[0].mxu0
      %v1850 = vadd.f32 %v1801, %v1849
      %v1851 = vpop.f32.mrb[0].mxu0
      %1852 = vmatprep.mubr.bf16.mxu0 %v1370
      %1853 = vmatmul.mubr.bf16.gmra.mrb[0].mxu0 %v1369
      %v1854 = vpop.f32.mrb[0].mxu0
      %v1855 = vadd.f32 %v1806, %v1854
      %v1856 = vpop.f32.mrb[0].mxu0
      %v1857 = vpop.f32.mrb[0].mxu0
      %v1858 = vadd.f32 %v1809, %v1857
      %v1859 = vpop.f32.mrb[0].mxu0
      %1860 = vdwg.mxu0
      %1861 = vmatprep.subr.bf16.mxu0 0
      %1862 = vmatpush1.bf16.msra.mxu0 %v1667
      %1863 = vmatprep.subr.bf16.mxu0 0
      %1864 = vmatpush1.bf16.msra.mxu0 %v1668
      %1865 = vmatprep.subr.bf16.mxu0 0
      %1866 = vmatpush1.bf16.msra.mxu0 %v1669
      %1867 = vmatprep.subr.bf16.mxu0 0
      %1868 = vmatpush1.bf16.msra.mxu0 %v1670
      %1869 = vmatprep.subr.bf16.mxu0 0
      %1870 = vmatpush1.bf16.msra.mxu0 %v1671
      %1871 = vmatprep.subr.bf16.mxu0 0
      %1872 = vmatpush1.bf16.msra.mxu0 %v1672
      %1873 = vmatprep.subr.bf16.mxu0 0
      %1874 = vmatpush1.bf16.msra.mxu0 %v1673
      %1875 = vmatprep.subr.bf16.mxu0 0
      %1876 = vmatpush1.bf16.msra.mxu0 %v1674
      %1877 = vmatprep.subr.bf16.mxu0 0
      %1878 = vmatpush1.bf16.msra.mxu0 %v1675
      %1879 = vmatprep.subr.bf16.mxu0 0
      %1880 = vmatpush1.bf16.msra.mxu0 %v1676
      %1881 = vmatprep.subr.bf16.mxu0 0
      %1882 = vmatpush1.bf16.msra.mxu0 %v1677
      %1883 = vmatprep.subr.bf16.mxu0 0
      %1884 = vmatpush1.bf16.msra.mxu0 %v1678
      %1885 = vmatprep.subr.bf16.mxu0 0
      %1886 = vmatpush1.bf16.msra.mxu0 %v1679
      %1887 = vmatprep.subr.bf16.mxu0 0
      %1888 = vmatpush1.bf16.msra.mxu0 %v1680
      %1889 = vmatprep.subr.bf16.mxu0 0
      %1890 = vmatpush1.bf16.msra.mxu0 %v1681
      %1891 = vmatprep.subr.bf16.mxu0 0
      %1892 = vmatpush1.bf16.msra.mxu0 %v1682
      %1893 = vmatprep.mubr.bf16.mxu0 %v1364
      %1894 = vmatmul.mubr.bf16.gmra.mrb[0].mxu0 %v1363
      %v1895 = vpop.f32.mrb[0].mxu0
      %v1896 = vadd.f32 %v1847, %v1895
      %v1897 = vpop.f32.mrb[0].mxu0
      %v1898 = vpop.f32.mrb[0].mxu0
      %v1899 = vadd.f32 %v1850, %v1898
      %v1900 = vpop.f32.mrb[0].mxu0
      %1901 = vmatprep.mubr.bf16.mxu0 %v1372
      %1902 = vmatmul.mubr.bf16.gmra.mrb[0].mxu0 %v1371
      %v1903 = vpop.f32.mrb[0].mxu0
      %v1904 = vadd.f32 %v1855, %v1903
      %v1905 = vpop.f32.mrb[0].mxu0
      %v1906 = vpop.f32.mrb[0].mxu0
      %v1907 = vadd.f32 %v1858, %v1906
      %v1908 = vpop.f32.mrb[0].mxu0
      %1909 = vdwg.mxu0
      %1910 = vmatprep.subr.bf16.mxu0 0
      %1911 = vmatpush1.bf16.msra.mxu0 %v1683
      %1912 = vmatprep.subr.bf16.mxu0 0
      %1913 = vmatpush1.bf16.msra.mxu0 %v1684
      %1914 = vmatprep.subr.bf16.mxu0 0
      %1915 = vmatpush1.bf16.msra.mxu0 %v1685
      %1916 = vmatprep.subr.bf16.mxu0 0
      %1917 = vmatpush1.bf16.msra.mxu0 %v1686
      %1918 = vmatprep.subr.bf16.mxu0 0
      %1919 = vmatpush1.bf16.msra.mxu0 %v1687
      %1920 = vmatprep.subr.bf16.mxu0 0
      %1921 = vmatpush1.bf16.msra.mxu0 %v1688
      %1922 = vmatprep.subr.bf16.mxu0 0
      %1923 = vmatpush1.bf16.msra.mxu0 %v1689
      %1924 = vmatprep.subr.bf16.mxu0 0
      %1925 = vmatpush1.bf16.msra.mxu0 %v1690
      %1926 = vmatprep.subr.bf16.mxu0 0
      %1927 = vmatpush1.bf16.msra.mxu0 %v1691
      %1928 = vmatprep.subr.bf16.mxu0 0
      %1929 = vmatpush1.bf16.msra.mxu0 %v1692
      %1930 = vmatprep.subr.bf16.mxu0 0
      %1931 = vmatpush1.bf16.msra.mxu0 %v1693
      %1932 = vmatprep.subr.bf16.mxu0 0
      %1933 = vmatpush1.bf16.msra.mxu0 %v1694
      %1934 = vmatprep.subr.bf16.mxu0 0
      %1935 = vmatpush1.bf16.msra.mxu0 %v1695
      %1936 = vmatprep.subr.bf16.mxu0 0
      %1937 = vmatpush1.bf16.msra.mxu0 %v1696
      %1938 = vmatprep.subr.bf16.mxu0 0
      %1939 = vmatpush1.bf16.msra.mxu0 %v1697
      %1940 = vmatprep.subr.bf16.mxu0 0
      %1941 = vmatpush1.bf16.msra.mxu0 %v1698
      %1942 = vmatprep.mubr.bf16.mxu0 %v1366
      %1943 = vmatmul.mubr.bf16.gmra.mrb[0].mxu0 %v1365
      %v1944 = vpop.f32.mrb[0].mxu0
      %v1945 = vadd.f32 %v1896, %v1944
      %v1946 = vpop.f32.mrb[0].mxu0
      %v1947 = vpop.f32.mrb[0].mxu0
      %v1948 = vadd.f32 %v1899, %v1947
      %v1949 = vpop.f32.mrb[0].mxu0
      %1950 = vmatprep.mubr.bf16.mxu0 %v1374
      %1951 = vmatmul.mubr.bf16.gmra.mrb[0].mxu0 %v1373
      %v1952 = vpop.f32.mrb[0].mxu0
      %v1953 = vadd.f32 %v1904, %v1952
      %v1954 = vpop.f32.mrb[0].mxu0
      %v1955 = vpop.f32.mrb[0].mxu0
      %v1956 = vadd.f32 %v1907, %v1955
      %v1957 = vpop.f32.mrb[0].mxu0
      %1958 = vdwg.mxu0
      %vm1959 = vcmp.gt.f32.partialorder %v1945, 0.0
      %vm1960 = vcmp.gt.f32.partialorder %v1948, 0.0
      %vm1961 = vcmp.gt.f32.partialorder %v1953, 0.0
      %vm1962 = vcmp.gt.f32.partialorder %v1956, 0.0
      %v1963 = vmul.f32 %v1945, 1.442695
      %v1964 = vpow.pop %v1963
      %v1965 = vmul.f32 %v1948, 1.442695
      %v1966 = vpow.pop %v1965
      %v1967 = vmul.f32 %v1953, 1.442695
      %v1968 = vpow.pop %v1967
      %v1969 = vmul.f32 %v1956, 1.442695
      %v1970 = vpow.pop %v1969
      %v1971 = vsub.f32 %v1964, 1.0
      %v1972 = vsub.f32 %v1966, 1.0
      %v1973 = vsub.f32 %v1968, 1.0
      %v1974 = vsub.f32 %v1970, 1.0
      %v1975 = vmul.f32 %v1971, 1.6732632
      %v1976 = vmul.f32 %v1972, 1.6732632
      %v1977 = vmul.f32 %v1973, 1.6732632
      %v1978 = vmul.f32 %v1974, 1.6732632
      %v1979 = vsel %vm1959, %v1945, %v1975
      %v1980 = vsel %vm1960, %v1948, %v1976
      %v1981 = vsel %vm1961, %v1953, %v1977
      %v1982 = vsel %vm1962, %v1956, %v1978
      %v1983 = vmul.f32 %v1979, 1.050701
      %v1984 = vmul.f32 %v1980, 1.050701
      %v1985 = vmul.f32 %v1981, 1.050701
      %v1986 = vmul.f32 %v1982, 1.050701
      %v1987 = vld [vmem:[%s3 + $0x1] sm:$0x1]
      %1989 = vset.pattern.permute.xlu0 0
      %1990 = vperm.xlu0 %1989, %v469
      %v1991 = vpop.permute.xlu0 %1990
      %1994 = vset.pattern.permute.xlu0 0
      %1995 = vperm.xlu0 %1994, %v470
      %v1996 = vpop.permute.xlu0 %1995
      %1999 = vset.pattern.permute.xlu0 0
      %2000 = vperm.xlu0 %1999, %v471
      %v2001 = vpop.permute.xlu0 %2000
      %2004 = vset.pattern.permute.xlu0 0
      %2005 = vperm.xlu0 %2004, %v472
      %v2006 = vpop.permute.xlu0 %2005
      %v2008 = vlaneseq
      %v2009 = vshrl.u32 %v2008, 7
      %v2010 = vsub.s32 0, %v2009
      %v2011 = vrot.slane %v1987, %v2010
      %v2012 = vmul.f32 %v1991, %v2011
      %v2013 = vmul.f32 %v1996, %v2011
      %v2014 = vmul.f32 %v2001, %v2011
      %v2015 = vmul.f32 %v2006, %v2011
      %2016 = vset.pattern.permute.xlu0 1
      %2017 = vperm.xlu0 %2016, %v469
      %v2018 = vpop.permute.xlu0 %2017
      %2020 = vset.pattern.permute.xlu0 1
      %2021 = vperm.xlu0 %2020, %v470
      %v2022 = vpop.permute.xlu0 %2021
      %2024 = vset.pattern.permute.xlu0 1
      %2025 = vperm.xlu0 %2024, %v471
      %v2026 = vpop.permute.xlu0 %2025
      %2028 = vset.pattern.permute.xlu0 1
      %2029 = vperm.xlu0 %2028, %v472
      %v2030 = vpop.permute.xlu0 %2029
      %v2032 = vmul.f32 %v2018, %v1983
      %v2033 = vmul.f32 %v2022, %v1984
      %v2034 = vmul.f32 %v2026, %v1985
      %v2035 = vmul.f32 %v2030, %v1986
      %v2036 = vadd.f32 %v2012, %v2032
      %v2037 = vadd.f32 %v2013, %v2033
      %v2038 = vadd.f32 %v2014, %v2034
      %v2039 = vadd.f32 %v2015, %v2035
      %v2040 = vld [vmem:[%s3 + $0x2] sm:$0x1]
      %v2041 = vld [vmem:[%s3 + $0x3] sm:$0x1]
      %v2042 = vsel %vm1011, %v2036, 0.0
      %2043 = vadd.xlane.f32.xlu0 %v2042
      %v2044 = vpop.xlane.xlu0 %2043
      %v2045 = vsel %vm1011, %v2037, 0.0
      %2046 = vadd.xlane.f32.xlu0 %v2045
      %v2047 = vpop.xlane.xlu0 %2046
      %v2048 = vsel %vm1011, %v2038, 0.0
      %2049 = vadd.xlane.f32.xlu0 %v2048
      %v2050 = vpop.xlane.xlu0 %2049
      %v2051 = vsel %vm1011, %v2039, 0.0
      %2052 = vadd.xlane.f32.xlu0 %v2051
      %v2053 = vpop.xlane.xlu0 %2052
      %v2054 = vrcp.pop 32.0
      %v2055 = vmul.f32 %v2044, %v2054
      %v2056 = vmul.f32 %v2047, %v2054
      %v2057 = vmul.f32 %v2050, %v2054
      %v2058 = vmul.f32 %v2053, %v2054
      %v2059 = vsub.f32 %v2036, %v2055
      %v2060 = vsub.f32 %v2037, %v2056
      %v2061 = vsub.f32 %v2038, %v2057
      %v2062 = vsub.f32 %v2039, %v2058
      %v2063 = vmul.f32 %v2059, %v2059
      %v2064 = vmul.f32 %v2060, %v2060
      %v2065 = vmul.f32 %v2061, %v2061
      %v2066 = vmul.f32 %v2062, %v2062
      %v2067 = vsel %vm1011, %v2063, 0.0
      %2068 = vadd.xlane.f32.xlu0 %v2067
      %v2069 = vpop.xlane.xlu0 %2068
      %v2070 = vsel %vm1011, %v2064, 0.0
      %2071 = vadd.xlane.f32.xlu0 %v2070
      %v2072 = vpop.xlane.xlu0 %2071
      %v2073 = vsel %vm1011, %v2065, 0.0
      %2074 = vadd.xlane.f32.xlu0 %v2073
      %v2075 = vpop.xlane.xlu0 %2074
      %v2076 = vsel %vm1011, %v2066, 0.0
      %2077 = vadd.xlane.f32.xlu0 %v2076
      %v2078 = vpop.xlane.xlu0 %2077
      %v2079 = vmul.f32 %v2069, %v2054
      %v2080 = vmul.f32 %v2072, %v2054
      %v2081 = vmul.f32 %v2075, %v2054
      %v2082 = vmul.f32 %v2078, %v2054
      %v2083 = vadd.f32 %v2079, 1e-05
      %v2084 = vadd.f32 %v2080, 1e-05
      %v2085 = vadd.f32 %v2081, 1e-05
      %v2086 = vadd.f32 %v2082, 1e-05
      %v2087 = vrsqrt.pop %v2083
      %v2088 = vrsqrt.pop %v2084
      %v2089 = vrsqrt.pop %v2085
      %v2090 = vrsqrt.pop %v2086
      %v2091 = vmul.f32 %v2059, %v2087
      %v2092 = vmul.f32 %v2060, %v2088
      %v2093 = vmul.f32 %v2061, %v2089
      %v2094 = vmul.f32 %v2062, %v2090
      %v2095 = vlaneseq
      %v2096 = vshrl.u32 %v2095, 7
      %v2097 = vsub.s32 0, %v2096
      %v2098 = vrot.slane %v2040, %v2097
      %v2099 = vmul.f32 %v2091, %v2098
      %v2100 = vmul.f32 %v2092, %v2098
      %v2101 = vmul.f32 %v2093, %v2098
      %v2102 = vmul.f32 %v2094, %v2098
      %v2103 = vlaneseq
      %v2104 = vshrl.u32 %v2103, 7
      %v2105 = vsub.s32 0, %v2104
      %v2106 = vrot.slane %v2041, %v2105
      %v2107 = vadd.f32 %v2099, %v2106
      %v2108 = vadd.f32 %v2100, %v2106
      %v2109 = vadd.f32 %v2101, %v2106
      %v2110 = vadd.f32 %v2102, %v2106
      %v2111 = vld [vmem:[%s9] sm:$0xf]
      %v2112 = vld [vmem:[%s9 + $0x4] sm:$0xf]
      %v2113 = vld [vmem:[%s9 + $0x8] sm:$0xf]
      %v2114 = vld [vmem:[%s9 + $0xc] sm:$0xf]
      %v2115 = vld [vmem:[%s4] sm:$0x1]
      %v2116 = vpack.c.bf16 %v2108, %v2107
      %v2117 = vpack.c.bf16 %v2110, %v2109
      %v2118 = vlaneseq
      %v2119 = vshrl.u32 %v2118, 7
      %v2120 = vsub.s32 0, %v2119
      %v2121 = vrot.slane %v2115, %v2120
      %v2126 = vunpack.c.l.b16 %v2111
      %v2127 = vunpack.c.l.b16 %v2112
      %v2128 = vunpack.c.l.b16 %v2113
      %v2129 = vunpack.c.l.b16 %v2114
      %v2130 = vpack.c.b16 %v2127, %v2126
      %v2131 = vpack.c.b16 %v2129, %v2128
      %v2135 = vsel %vm1011, %v2116, 0
      %v2138 = vsel %vm1011, %v2117, 0
      %2140 = vmatprep.subr.bf16.mxu0 0
      %2141 = vmatpush1.bf16.msra.mxu0 %v2130
      %2142 = vmatprep.subr.bf16.mxu0 0
      %2143 = vmatpush1.bf16.msra.mxu0 %v2131
      %2144 = vmatprep.subr.bf16.mxu0 0
      %2145 = vmatpush1.bf16.msra.mxu0 0
      %2146 = vmatprep.subr.bf16.mxu0 0
      %2147 = vmatpush1.bf16.msra.mxu0 0
      %2148 = vmatprep.subr.bf16.mxu0 0
      %2149 = vmatpush1.bf16.msra.mxu0 0
      %2150 = vmatprep.subr.bf16.mxu0 0
      %2151 = vmatpush1.bf16.msra.mxu0 0
      %2152 = vmatprep.subr.bf16.mxu0 0
      %2153 = vmatpush1.bf16.msra.mxu0 0
      %2154 = vmatprep.subr.bf16.mxu0 0
      %2155 = vmatpush1.bf16.msra.mxu0 0
      %2156 = vmatprep.subr.bf16.mxu0 0
      %2157 = vmatpush1.bf16.msra.mxu0 0
      %2158 = vmatprep.subr.bf16.mxu0 0
      %2159 = vmatpush1.bf16.msra.mxu0 0
      %2160 = vmatprep.subr.bf16.mxu0 0
      %2161 = vmatpush1.bf16.msra.mxu0 0
      %2162 = vmatprep.subr.bf16.mxu0 0
      %2163 = vmatpush1.bf16.msra.mxu0 0
      %2164 = vmatprep.subr.bf16.mxu0 0
      %2165 = vmatpush1.bf16.msra.mxu0 0
      %2166 = vmatprep.subr.bf16.mxu0 0
      %2167 = vmatpush1.bf16.msra.mxu0 0
      %2168 = vmatprep.subr.bf16.mxu0 0
      %2169 = vmatpush1.bf16.msra.mxu0 0
      %2170 = vmatprep.subr.bf16.mxu0 0
      %2171 = vmatpush1.bf16.msra.mxu0 0
      %2172 = vmatprep.mubr.bf16.mxu0 0
      %2173 = vmatmul.mubr.bf16.gmra.mrb[0].mxu0 %v2135
      %v2174 = vpop.f32.mrb[0].mxu0
      %v2175 = vadd.f32 %v2121, %v2174
      %v2176 = vpop.f32.mrb[0].mxu0
      %v2177 = vpop.f32.mrb[0].mxu0
      %v2178 = vadd.f32 %v2121, %v2177
      %v2179 = vpop.f32.mrb[0].mxu0
      %2180 = vmatprep.mubr.bf16.mxu0 0
      %2181 = vmatmul.mubr.bf16.gmra.mrb[0].mxu0 %v2138
      %v2182 = vpop.f32.mrb[0].mxu0
      %v2183 = vadd.f32 %v2121, %v2182
      %v2184 = vpop.f32.mrb[0].mxu0
      %v2185 = vpop.f32.mrb[0].mxu0
      %v2186 = vadd.f32 %v2121, %v2185
      %v2187 = vpop.f32.mrb[0].mxu0
      %2188 = vdwg.mxu0
      %v2189 = vxor.u32 %v2175, 2147483648
      %v2190 = vxor.u32 %v2178, 2147483648
      %v2191 = vxor.u32 %v2183, 2147483648
      %v2192 = vxor.u32 %v2186, 2147483648
      %v2193 = vmul.f32 %v2189, 1.442695
      %v2194 = vpow.pop %v2193
      %v2195 = vmul.f32 %v2190, 1.442695
      %v2196 = vpow.pop %v2195
      %v2197 = vmul.f32 %v2191, 1.442695
      %v2198 = vpow.pop %v2197
      %v2199 = vmul.f32 %v2192, 1.442695
      %v2200 = vpow.pop %v2199
      %v2201 = vadd.f32 %v2194, 1.0
      %v2202 = vadd.f32 %v2196, 1.0
      %v2203 = vadd.f32 %v2198, 1.0
      %v2204 = vadd.f32 %v2200, 1.0
      %v2205 = vrcp.pop %v2201
      %v2206 = vmul.f32 1.0, %v2205
      %v2207 = vrcp.pop %v2202
      %v2208 = vmul.f32 1.0, %v2207
      %v2209 = vrcp.pop %v2203
      %v2210 = vmul.f32 1.0, %v2209
      %v2211 = vrcp.pop %v2204
      %v2212 = vmul.f32 1.0, %v2211
      %v2213 = vmul.f32 %v2175, %v2206
      %v2214 = vmul.f32 %v2178, %v2208
      %v2215 = vmul.f32 %v2183, %v2210
      %v2216 = vmul.f32 %v2186, %v2212
      %v2217 = vld [vmem:[%s10] sm:$0xf]
      %v2218 = vld [vmem:[%s10 + $0x4] sm:$0xf]
      %v2219 = vld [vmem:[%s10 + $0x8] sm:$0xf]
      %v2220 = vld [vmem:[%s10 + $0xc] sm:$0xf]
      %v2221 = vld [vmem:[%s10 + $0x10] sm:$0xf]
      %v2222 = vld [vmem:[%s10 + $0x14] sm:$0xf]
      %v2223 = vld [vmem:[%s10 + $0x18] sm:$0xf]
      %v2224 = vld [vmem:[%s10 + $0x1c] sm:$0xf]
      %v2225 = vld [vmem:[%s10 + $0x20] sm:$0xf]
      %v2226 = vld [vmem:[%s10 + $0x24] sm:$0xf]
      %v2227 = vld [vmem:[%s10 + $0x28] sm:$0xf]
      %v2228 = vld [vmem:[%s10 + $0x2c] sm:$0xf]
      %v2229 = vld [vmem:[%s10 + $0x30] sm:$0xf]
      %v2230 = vld [vmem:[%s10 + $0x34] sm:$0xf]
      %v2231 = vld [vmem:[%s10 + $0x38] sm:$0xf]
      %v2232 = vld [vmem:[%s10 + $0x3c] sm:$0xf]
      %v2233 = vld [vmem:[%s3 + $0x4] sm:$0x1]
      %v2234 = vpack.c.bf16 %v2214, %v2213
      %v2235 = vpack.c.bf16 %v2216, %v2215
      %v2236 = vlaneseq
      %v2237 = vshrl.u32 %v2236, 7
      %v2238 = vsub.s32 0, %v2237
      %v2239 = vrot.slane %v2233, %v2238
      %v2256 = vunpack.c.l.b16 %v2217
      %v2257 = vunpack.c.l.b16 %v2218
      %v2258 = vunpack.c.l.b16 %v2219
      %v2259 = vunpack.c.l.b16 %v2220
      %v2260 = vunpack.c.l.b16 %v2221
      %v2261 = vunpack.c.l.b16 %v2222
      %v2262 = vunpack.c.l.b16 %v2223
      %v2263 = vunpack.c.l.b16 %v2224
      %v2264 = vunpack.c.l.b16 %v2225
      %v2265 = vunpack.c.l.b16 %v2226
      %v2266 = vunpack.c.l.b16 %v2227
      %v2267 = vunpack.c.l.b16 %v2228
      %v2268 = vunpack.c.l.b16 %v2229
      %v2269 = vunpack.c.l.b16 %v2230
      %v2270 = vunpack.c.l.b16 %v2231
      %v2271 = vunpack.c.l.b16 %v2232
      %v2272 = vpack.c.b16 %v2257, %v2256
      %v2273 = vpack.c.b16 %v2259, %v2258
      %v2274 = vpack.c.b16 %v2261, %v2260
      %v2275 = vpack.c.b16 %v2263, %v2262
      %v2276 = vpack.c.b16 %v2265, %v2264
      %v2277 = vpack.c.b16 %v2267, %v2266
      %v2278 = vpack.c.b16 %v2269, %v2268
      %v2279 = vpack.c.b16 %v2271, %v2270
      %2288 = vmatprep.subr.bf16.mxu0 0
      %2289 = vmatpush1.bf16.msra.mxu0 %v2272
      %2290 = vmatprep.subr.bf16.mxu0 0
      %2291 = vmatpush1.bf16.msra.mxu0 %v2273
      %2292 = vmatprep.subr.bf16.mxu0 0
      %2293 = vmatpush1.bf16.msra.mxu0 %v2274
      %2294 = vmatprep.subr.bf16.mxu0 0
      %2295 = vmatpush1.bf16.msra.mxu0 %v2275
      %2296 = vmatprep.subr.bf16.mxu0 0
      %2297 = vmatpush1.bf16.msra.mxu0 %v2276
      %2298 = vmatprep.subr.bf16.mxu0 0
      %2299 = vmatpush1.bf16.msra.mxu0 %v2277
      %2300 = vmatprep.subr.bf16.mxu0 0
      %2301 = vmatpush1.bf16.msra.mxu0 %v2278
      %2302 = vmatprep.subr.bf16.mxu0 0
      %2303 = vmatpush1.bf16.msra.mxu0 %v2279
      %2304 = vmatprep.subr.bf16.mxu0 0
      %2305 = vmatpush1.bf16.msra.mxu0 0
      %2306 = vmatprep.subr.bf16.mxu0 0
      %2307 = vmatpush1.bf16.msra.mxu0 0
      %2308 = vmatprep.subr.bf16.mxu0 0
      %2309 = vmatpush1.bf16.msra.mxu0 0
      %2310 = vmatprep.subr.bf16.mxu0 0
      %2311 = vmatpush1.bf16.msra.mxu0 0
      %2312 = vmatprep.subr.bf16.mxu0 0
      %2313 = vmatpush1.bf16.msra.mxu0 0
      %2314 = vmatprep.subr.bf16.mxu0 0
      %2315 = vmatpush1.bf16.msra.mxu0 0
      %2316 = vmatprep.subr.bf16.mxu0 0
      %2317 = vmatpush1.bf16.msra.mxu0 0
      %2318 = vmatprep.subr.bf16.mxu0 0
      %2319 = vmatpush1.bf16.msra.mxu0 0
      %2320 = vmatprep.mubr.bf16.mxu0 0
      %2321 = vmatmul.mubr.bf16.gmra.mrb[0].mxu0 %v2234
      %v2322 = vpop.f32.mrb[0].mxu0
      %v2323 = vadd.f32 %v2239, %v2322
      %v2324 = vpop.f32.mrb[0].mxu0
      %v2325 = vpop.f32.mrb[0].mxu0
      %v2326 = vadd.f32 %v2239, %v2325
      %v2327 = vpop.f32.mrb[0].mxu0
      %2328 = vmatprep.mubr.bf16.mxu0 0
      %2329 = vmatmul.mubr.bf16.gmra.mrb[0].mxu0 %v2235
      %v2330 = vpop.f32.mrb[0].mxu0
      %v2331 = vadd.f32 %v2239, %v2330
      %v2332 = vpop.f32.mrb[0].mxu0
      %v2333 = vpop.f32.mrb[0].mxu0
      %v2334 = vadd.f32 %v2239, %v2333
      %v2335 = vpop.f32.mrb[0].mxu0
      %2336 = vdwg.mxu0
      %v2337 = vmul.f32 %v2323, 0.5
      %v2338 = vmul.f32 %v2326, 0.5
      %v2339 = vmul.f32 %v2331, 0.5
      %v2340 = vmul.f32 %v2334, 0.5
      %v2341 = vadd.f32 %v2036, %v2337
      %v2342 = vadd.f32 %v2037, %v2338
      %v2343 = vadd.f32 %v2038, %v2339
      %v2344 = vadd.f32 %v2039, %v2340
      %v2345 = vld [vmem:[%s3 + $0x5] sm:$0x1]
      %v2346 = vld [vmem:[%s3 + $0x6] sm:$0x1]
      %v2347 = vsel %vm1011, %v2341, 0.0
      %2348 = vadd.xlane.f32.xlu0 %v2347
      %v2349 = vpop.xlane.xlu0 %2348
      %v2350 = vsel %vm1011, %v2342, 0.0
      %2351 = vadd.xlane.f32.xlu0 %v2350
      %v2352 = vpop.xlane.xlu0 %2351
      %v2353 = vsel %vm1011, %v2343, 0.0
      %2354 = vadd.xlane.f32.xlu0 %v2353
      %v2355 = vpop.xlane.xlu0 %2354
      %v2356 = vsel %vm1011, %v2344, 0.0
      %2357 = vadd.xlane.f32.xlu0 %v2356
      %v2358 = vpop.xlane.xlu0 %2357
      %v2359 = vmul.f32 %v2349, %v2054
      %v2360 = vmul.f32 %v2352, %v2054
      %v2361 = vmul.f32 %v2355, %v2054
      %v2362 = vmul.f32 %v2358, %v2054
      %v2363 = vsub.f32 %v2341, %v2359
      %v2364 = vsub.f32 %v2342, %v2360
      %v2365 = vsub.f32 %v2343, %v2361
      %v2366 = vsub.f32 %v2344, %v2362
      %v2367 = vmul.f32 %v2363, %v2363
      %v2368 = vmul.f32 %v2364, %v2364
      %v2369 = vmul.f32 %v2365, %v2365
      %v2370 = vmul.f32 %v2366, %v2366
      %v2371 = vsel %vm1011, %v2367, 0.0
      %2372 = vadd.xlane.f32.xlu0 %v2371
      %v2373 = vpop.xlane.xlu0 %2372
      %v2374 = vsel %vm1011, %v2368, 0.0
      %2375 = vadd.xlane.f32.xlu0 %v2374
      %v2376 = vpop.xlane.xlu0 %2375
      %v2377 = vsel %vm1011, %v2369, 0.0
      %2378 = vadd.xlane.f32.xlu0 %v2377
      %v2379 = vpop.xlane.xlu0 %2378
      %v2380 = vsel %vm1011, %v2370, 0.0
      %2381 = vadd.xlane.f32.xlu0 %v2380
      %v2382 = vpop.xlane.xlu0 %2381
      %v2383 = vmul.f32 %v2373, %v2054
      %v2384 = vmul.f32 %v2376, %v2054
      %v2385 = vmul.f32 %v2379, %v2054
      %v2386 = vmul.f32 %v2382, %v2054
      %v2387 = vadd.f32 %v2383, 1e-05
      %v2388 = vadd.f32 %v2384, 1e-05
      %v2389 = vadd.f32 %v2385, 1e-05
      %v2390 = vadd.f32 %v2386, 1e-05
      %v2391 = vrsqrt.pop %v2387
      %v2392 = vrsqrt.pop %v2388
      %v2393 = vrsqrt.pop %v2389
      %v2394 = vrsqrt.pop %v2390
      %v2395 = vmul.f32 %v2363, %v2391
      %v2396 = vmul.f32 %v2364, %v2392
      %v2397 = vmul.f32 %v2365, %v2393
      %v2398 = vmul.f32 %v2366, %v2394
      %v2399 = vlaneseq
      %v2400 = vshrl.u32 %v2399, 7
      %v2401 = vsub.s32 0, %v2400
      %v2402 = vrot.slane %v2345, %v2401
      %v2403 = vmul.f32 %v2395, %v2402
      %v2404 = vmul.f32 %v2396, %v2402
      %v2405 = vmul.f32 %v2397, %v2402
      %v2406 = vmul.f32 %v2398, %v2402
      %v2407 = vlaneseq
      %v2408 = vshrl.u32 %v2407, 7
      %v2409 = vsub.s32 0, %v2408
      %v2410 = vrot.slane %v2346, %v2409
      %v2411 = vadd.f32 %v2403, %v2410
      %v2412 = vadd.f32 %v2404, %v2410
      %v2413 = vadd.f32 %v2405, %v2410
      %v2414 = vadd.f32 %v2406, %v2410
      %v2415 = vld [vmem:[%s11] sm:$0xf]
      %v2416 = vld [vmem:[%s11 + $0x4] sm:$0xf]
      %v2417 = vld [vmem:[%s11 + $0x8] sm:$0xf]
      %v2418 = vld [vmem:[%s11 + $0xc] sm:$0xf]
      %v2419 = vpack.c.bf16 %v2412, %v2411
      %v2420 = vpack.c.bf16 %v2414, %v2413
      %v2425 = vunpack.c.l.b16 %v2415
      %v2426 = vunpack.c.l.b16 %v2416
      %v2427 = vunpack.c.l.b16 %v2417
      %v2428 = vunpack.c.l.b16 %v2418
      %v2429 = vpack.c.b16 %v2426, %v2425
      %v2430 = vpack.c.b16 %v2428, %v2427
      %v2434 = vsel %vm1011, %v2419, 0
      %v2437 = vsel %vm1011, %v2420, 0
      %2439 = vmatprep.subr.bf16.mxu0 0
      %2440 = vmatpush1.bf16.msra.mxu0 %v2429
      %2441 = vmatprep.subr.bf16.mxu0 0
      %2442 = vmatpush1.bf16.msra.mxu0 %v2430
      %2443 = vmatprep.subr.bf16.mxu0 0
      %2444 = vmatpush1.bf16.msra.mxu0 0
      %2445 = vmatprep.subr.bf16.mxu0 0
      %2446 = vmatpush1.bf16.msra.mxu0 0
      %2447 = vmatprep.subr.bf16.mxu0 0
      %2448 = vmatpush1.bf16.msra.mxu0 0
      %2449 = vmatprep.subr.bf16.mxu0 0
      %2450 = vmatpush1.bf16.msra.mxu0 0
      %2451 = vmatprep.subr.bf16.mxu0 0
      %2452 = vmatpush1.bf16.msra.mxu0 0
      %2453 = vmatprep.subr.bf16.mxu0 0
      %2454 = vmatpush1.bf16.msra.mxu0 0
      %2455 = vmatprep.subr.bf16.mxu0 0
      %2456 = vmatpush1.bf16.msra.mxu0 0
      %2457 = vmatprep.subr.bf16.mxu0 0
      %2458 = vmatpush1.bf16.msra.mxu0 0
      %2459 = vmatprep.subr.bf16.mxu0 0
      %2460 = vmatpush1.bf16.msra.mxu0 0
      %2461 = vmatprep.subr.bf16.mxu0 0
      %2462 = vmatpush1.bf16.msra.mxu0 0
      %2463 = vmatprep.subr.bf16.mxu0 0
      %2464 = vmatpush1.bf16.msra.mxu0 0
      %2465 = vmatprep.subr.bf16.mxu0 0
      %2466 = vmatpush1.bf16.msra.mxu0 0
      %2467 = vmatprep.subr.bf16.mxu0 0
      %2468 = vmatpush1.bf16.msra.mxu0 0
      %2469 = vmatprep.subr.bf16.mxu0 0
      %2470 = vmatpush1.bf16.msra.mxu0 0
      %2471 = vmatprep.mubr.bf16.mxu0 0
      %2472 = vmatmul.mubr.bf16.gmra.mrb[0].mxu0 %v2434
      %v2473 = vpop.f32.mrb[0].mxu0
      %v2474 = vadd.f32 0.0, %v2473
      %v2475 = vpop.f32.mrb[0].mxu0
      %v2476 = vpop.f32.mrb[0].mxu0
      %v2477 = vadd.f32 0.0, %v2476
      %v2478 = vpop.f32.mrb[0].mxu0
      %2479 = vmatprep.mubr.bf16.mxu0 0
      %2480 = vmatmul.mubr.bf16.gmra.mrb[0].mxu0 %v2437
      %v2481 = vpop.f32.mrb[0].mxu0
      %v2482 = vadd.f32 0.0, %v2481
      %v2483 = vpop.f32.mrb[0].mxu0
      %v2484 = vpop.f32.mrb[0].mxu0
      %v2485 = vadd.f32 0.0, %v2484
      %v2486 = vpop.f32.mrb[0].mxu0
      %2487 = vdwg.mxu0
      %v2488 = vpack.c.bf16 %v2477, %v2474
      %v2489 = vpack.c.bf16 %v2485, %v2482
      %2492 = vrot.lane.b32.xlu0 %v2488, 96
      %v2493 = vpop.permute.xlu0 %2492
      %2494 = vrot.lane.b32.xlu0 %v2489, 96
      %v2495 = vpop.permute.xlu0 %2494
      %vm2496 = vcmask 64512
      %v2498 = vsel %vm2496, %v2488, 0
      %v2501 = vsel %vm2496, %v2489, 0
      %v2504 = vsel %vm2496, %v2493, 0
      %v2507 = vsel %vm2496, %v2495, 0
      %2509 = vmatprep.subr.bf16.mxu0 0
      %2510 = vmatpush1.bf16.xpose.msra.mxu0 %v2504
      %2511 = vmatprep.subr.bf16.mxu0 0
      %2512 = vmatpush1.bf16.xpose.msra.mxu0 %v2507
      %2513 = vmatprep.subr.bf16.mxu0 0
      %2514 = vmatpush1.bf16.xpose.msra.mxu0 0
      %2515 = vmatprep.subr.bf16.mxu0 0
      %2516 = vmatpush1.bf16.xpose.msra.mxu0 0
      %2517 = vmatprep.subr.bf16.mxu0 0
      %2518 = vmatpush1.bf16.xpose.msra.mxu0 0
      %2519 = vmatprep.subr.bf16.mxu0 0
      %2520 = vmatpush1.bf16.xpose.msra.mxu0 0
      %2521 = vmatprep.subr.bf16.mxu0 0
      %2522 = vmatpush1.bf16.xpose.msra.mxu0 0
      %2523 = vmatprep.subr.bf16.mxu0 0
      %2524 = vmatpush1.bf16.xpose.msra.mxu0 0
      %2525 = vmatprep.subr.bf16.mxu0 0
      %2526 = vmatpush1.bf16.xpose.msra.mxu0 0
      %2527 = vmatprep.subr.bf16.mxu0 0
      %2528 = vmatpush1.bf16.xpose.msra.mxu0 0
      %2529 = vmatprep.subr.bf16.mxu0 0
      %2530 = vmatpush1.bf16.xpose.msra.mxu0 0
      %2531 = vmatprep.subr.bf16.mxu0 0
      %2532 = vmatpush1.bf16.xpose.msra.mxu0 0
      %2533 = vmatprep.subr.bf16.mxu0 0
      %2534 = vmatpush1.bf16.xpose.msra.mxu0 0
      %2535 = vmatprep.subr.bf16.mxu0 0
      %2536 = vmatpush1.bf16.xpose.msra.mxu0 0
      %2537 = vmatprep.subr.bf16.mxu0 0
      %2538 = vmatpush1.bf16.xpose.msra.mxu0 0
      %2539 = vmatprep.subr.bf16.mxu0 0
      %2540 = vmatpush1.bf16.xpose.msra.mxu0 0
      %2541 = vmatprep.mubr.bf16.mxu0 0
      %2542 = vmatmul.mubr.bf16.gmra.mrb[0].mxu0 %v2498
      %v2543 = vpop.f32.mrb[0].mxu0
      %v2544 = vadd.f32 0.0, %v2543
      %v2545 = vpop.f32.mrb[0].mxu0
      %v2546 = vpop.f32.mrb[0].mxu0
      %v2547 = vadd.f32 0.0, %v2546
      %v2548 = vpop.f32.mrb[0].mxu0
      %2549 = vmatprep.mubr.bf16.mxu0 0
      %2550 = vmatmul.mubr.bf16.gmra.mrb[0].mxu0 %v2501
      %v2551 = vpop.f32.mrb[0].mxu0
      %v2552 = vadd.f32 0.0, %v2551
      %v2553 = vpop.f32.mrb[0].mxu0
      %v2554 = vpop.f32.mrb[0].mxu0
      %v2555 = vadd.f32 0.0, %v2554
      %v2556 = vpop.f32.mrb[0].mxu0
      %2557 = vdwg.mxu0
      %v2558 = vmul.f32 %v2544, 0.35355338
      %v2559 = vmul.f32 %v2547, 0.35355338
      %v2560 = vmul.f32 %v2552, 0.35355338
      %v2561 = vmul.f32 %v2555, 0.35355338
      %v2562 = vadd.f32 %v2558, %v473
      %v2563 = vadd.f32 %v2559, %v474
      %v2564 = vadd.f32 %v2560, %v475
      %v2565 = vadd.f32 %v2561, %v476
      %v2566 = vsel %vm1011, %v2562, -inf
      %2567 = vmax.xlane.f32.xlu0 %v2566
      %v2568 = vpop.xlane.xlu0 %2567
      %v2569 = vsel %vm1011, %v2563, -inf
      %2570 = vmax.xlane.f32.xlu0 %v2569
      %v2571 = vpop.xlane.xlu0 %2570
      %v2572 = vsel %vm1011, %v2564, -inf
      %2573 = vmax.xlane.f32.xlu0 %v2572
      %v2574 = vpop.xlane.xlu0 %2573
      %v2575 = vsel %vm1011, %v2565, -inf
      %2576 = vmax.xlane.f32.xlu0 %v2575
      %v2577 = vpop.xlane.xlu0 %2576
      %v2578 = vsub.f32 %v2562, %v2568
      %v2579 = vsub.f32 %v2563, %v2571
      %v2580 = vsub.f32 %v2564, %v2574
      %v2581 = vsub.f32 %v2565, %v2577
      %v2582 = vmul.f32 %v2578, 1.442695
      %v2583 = vpow.pop %v2582
      %v2584 = vmul.f32 %v2579, 1.442695
      %v2585 = vpow.pop %v2584
      %v2586 = vmul.f32 %v2580, 1.442695
      %v2587 = vpow.pop %v2586
      %v2588 = vmul.f32 %v2581, 1.442695
      %v2589 = vpow.pop %v2588
      %v2590 = vsel %vm1011, %v2583, 0.0
      %2591 = vadd.xlane.f32.xlu0 %v2590
      %v2592 = vpop.xlane.xlu0 %2591
      %v2593 = vsel %vm1011, %v2585, 0.0
      %2594 = vadd.xlane.f32.xlu0 %v2593
      %v2595 = vpop.xlane.xlu0 %2594
      %v2596 = vsel %vm1011, %v2587, 0.0
      %2597 = vadd.xlane.f32.xlu0 %v2596
      %v2598 = vpop.xlane.xlu0 %2597
      %v2599 = vsel %vm1011, %v2589, 0.0
      %2600 = vadd.xlane.f32.xlu0 %v2599
      %v2601 = vpop.xlane.xlu0 %2600
      %v2602 = vrcp.pop %v2592
      %v2603 = vmul.f32 %v2583, %v2602
      %v2604 = vrcp.pop %v2595
      %v2605 = vmul.f32 %v2585, %v2604
      %v2606 = vrcp.pop %v2598
      %v2607 = vmul.f32 %v2587, %v2606
      %v2608 = vrcp.pop %v2601
      %v2609 = vmul.f32 %v2589, %v2608
      %v2610 = vpack.c.bf16 %v2605, %v2603
      %v2611 = vpack.c.bf16 %v2609, %v2607
      %2612 = vrot.lane.b32.xlu0 %v2488, 64
      %v2613 = vpop.permute.xlu0 %2612
      %2614 = vrot.lane.b32.xlu0 %v2489, 64
      %v2615 = vpop.permute.xlu0 %2614
      %v2619 = vsel %vm1011, %v2610, 0
      %v2622 = vsel %vm1011, %v2611, 0
      %2624 = vmatprep.subr.bf16.mxu0 0
      %2625 = vmatpush1.bf16.msra.mxu0 %v2613
      %2626 = vmatprep.subr.bf16.mxu0 0
      %2627 = vmatpush1.bf16.msra.mxu0 %v2615
      %2628 = vmatprep.subr.bf16.mxu0 0
      %2629 = vmatpush1.bf16.msra.mxu0 0
      %2630 = vmatprep.subr.bf16.mxu0 0
      %2631 = vmatpush1.bf16.msra.mxu0 0
      %2632 = vmatprep.subr.bf16.mxu0 0
      %2633 = vmatpush1.bf16.msra.mxu0 0
      %2634 = vmatprep.subr.bf16.mxu0 0
      %2635 = vmatpush1.bf16.msra.mxu0 0
      %2636 = vmatprep.subr.bf16.mxu0 0
      %2637 = vmatpush1.bf16.msra.mxu0 0
      %2638 = vmatprep.subr.bf16.mxu0 0
      %2639 = vmatpush1.bf16.msra.mxu0 0
      %2640 = vmatprep.subr.bf16.mxu0 0
      %2641 = vmatpush1.bf16.msra.mxu0 0
      %2642 = vmatprep.subr.bf16.mxu0 0
      %2643 = vmatpush1.bf16.msra.mxu0 0
      %2644 = vmatprep.subr.bf16.mxu0 0
      %2645 = vmatpush1.bf16.msra.mxu0 0
      %2646 = vmatprep.subr.bf16.mxu0 0
      %2647 = vmatpush1.bf16.msra.mxu0 0
      %2648 = vmatprep.subr.bf16.mxu0 0
      %2649 = vmatpush1.bf16.msra.mxu0 0
      %2650 = vmatprep.subr.bf16.mxu0 0
      %2651 = vmatpush1.bf16.msra.mxu0 0
      %2652 = vmatprep.subr.bf16.mxu0 0
      %2653 = vmatpush1.bf16.msra.mxu0 0
      %2654 = vmatprep.subr.bf16.mxu0 0
      %2655 = vmatpush1.bf16.msra.mxu0 0
      %2656 = vmatprep.mubr.bf16.mxu0 0
      %2657 = vmatmul.mubr.bf16.gmra.mrb[0].mxu0 %v2619
      %v2658 = vpop.f32.mrb[0].mxu0
      %v2659 = vadd.f32 0.0, %v2658
      %v2660 = vpop.f32.mrb[0].mxu0
      %v2661 = vpop.f32.mrb[0].mxu0
      %v2662 = vadd.f32 0.0, %v2661
      %v2663 = vpop.f32.mrb[0].mxu0
      %2664 = vmatprep.mubr.bf16.mxu0 0
      %2665 = vmatmul.mubr.bf16.gmra.mrb[0].mxu0 %v2622
      %v2666 = vpop.f32.mrb[0].mxu0
      %v2667 = vadd.f32 0.0, %v2666
      %v2668 = vpop.f32.mrb[0].mxu0
      %v2669 = vpop.f32.mrb[0].mxu0
      %v2670 = vadd.f32 0.0, %v2669
      %v2671 = vpop.f32.mrb[0].mxu0
      %2672 = vdwg.mxu0
      %v2673 = vpack.c.bf16 %v2662, %v2659
      %v2674 = vpack.c.bf16 %v2670, %v2667
      %2675 = vrot.lane.b32.xlu0 %v2488, 120
      %v2676 = vpop.permute.xlu0 %2675
      %2677 = vrot.lane.b32.xlu0 %v2489, 120
      %v2678 = vpop.permute.xlu0 %2677
      %2679 = vrot.lane.b32.xlu0 %v2488, 88
      %v2680 = vpop.permute.xlu0 %2679
      %2681 = vrot.lane.b32.xlu0 %v2489, 88
      %v2682 = vpop.permute.xlu0 %2681
      %v2684 = vsel %vm2496, %v2676, 0
      %v2687 = vsel %vm2496, %v2678, 0
      %v2690 = vsel %vm2496, %v2680, 0
      %v2693 = vsel %vm2496, %v2682, 0
      %2695 = vmatprep.subr.bf16.mxu0 0
      %2696 = vmatpush1.bf16.xpose.msra.mxu0 %v2690
      %2697 = vmatprep.subr.bf16.mxu0 0
      %2698 = vmatpush1.bf16.xpose.msra.mxu0 %v2693
      %2699 = vmatprep.subr.bf16.mxu0 0
      %2700 = vmatpush1.bf16.xpose.msra.mxu0 0
      %2701 = vmatprep.subr.bf16.mxu0 0
      %2702 = vmatpush1.bf16.xpose.msra.mxu0 0
      %2703 = vmatprep.subr.bf16.mxu0 0
      %2704 = vmatpush1.bf16.xpose.msra.mxu0 0
      %2705 = vmatprep.subr.bf16.mxu0 0
      %2706 = vmatpush1.bf16.xpose.msra.mxu0 0
      %2707 = vmatprep.subr.bf16.mxu0 0
      %2708 = vmatpush1.bf16.xpose.msra.mxu0 0
      %2709 = vmatprep.subr.bf16.mxu0 0
      %2710 = vmatpush1.bf16.xpose.msra.mxu0 0
      %2711 = vmatprep.subr.bf16.mxu0 0
      %2712 = vmatpush1.bf16.xpose.msra.mxu0 0
      %2713 = vmatprep.subr.bf16.mxu0 0
      %2714 = vmatpush1.bf16.xpose.msra.mxu0 0
      %2715 = vmatprep.subr.bf16.mxu0 0
      %2716 = vmatpush1.bf16.xpose.msra.mxu0 0
      %2717 = vmatprep.subr.bf16.mxu0 0
      %2718 = vmatpush1.bf16.xpose.msra.mxu0 0
      %2719 = vmatprep.subr.bf16.mxu0 0
      %2720 = vmatpush1.bf16.xpose.msra.mxu0 0
      %2721 = vmatprep.subr.bf16.mxu0 0
      %2722 = vmatpush1.bf16.xpose.msra.mxu0 0
      %2723 = vmatprep.subr.bf16.mxu0 0
      %2724 = vmatpush1.bf16.xpose.msra.mxu0 0
      %2725 = vmatprep.subr.bf16.mxu0 0
      %2726 = vmatpush1.bf16.xpose.msra.mxu0 0
      %2727 = vmatprep.mubr.bf16.mxu0 0
      %2728 = vmatmul.mubr.bf16.gmra.mrb[0].mxu0 %v2684
      %v2729 = vpop.f32.mrb[0].mxu0
      %v2730 = vadd.f32 0.0, %v2729
      %v2731 = vpop.f32.mrb[0].mxu0
      %v2732 = vpop.f32.mrb[0].mxu0
      %v2733 = vadd.f32 0.0, %v2732
      %v2734 = vpop.f32.mrb[0].mxu0
      %2735 = vmatprep.mubr.bf16.mxu0 0
      %2736 = vmatmul.mubr.bf16.gmra.mrb[0].mxu0 %v2687
      %v2737 = vpop.f32.mrb[0].mxu0
      %v2738 = vadd.f32 0.0, %v2737
      %v2739 = vpop.f32.mrb[0].mxu0
      %v2740 = vpop.f32.mrb[0].mxu0
      %v2741 = vadd.f32 0.0, %v2740
      %v2742 = vpop.f32.mrb[0].mxu0
      %2743 = vdwg.mxu0
      %v2744 = vmul.f32 %v2730, 0.35355338
      %v2745 = vmul.f32 %v2733, 0.35355338
      %v2746 = vmul.f32 %v2738, 0.35355338
      %v2747 = vmul.f32 %v2741, 0.35355338
      %v2748 = vadd.f32 %v2744, %v473
      %v2749 = vadd.f32 %v2745, %v474
      %v2750 = vadd.f32 %v2746, %v475
      %v2751 = vadd.f32 %v2747, %v476
      %v2752 = vsel %vm1011, %v2748, -inf
      %2753 = vmax.xlane.f32.xlu0 %v2752
      %v2754 = vpop.xlane.xlu0 %2753
      %v2755 = vsel %vm1011, %v2749, -inf
      %2756 = vmax.xlane.f32.xlu0 %v2755
      %v2757 = vpop.xlane.xlu0 %2756
      %v2758 = vsel %vm1011, %v2750, -inf
      %2759 = vmax.xlane.f32.xlu0 %v2758
      %v2760 = vpop.xlane.xlu0 %2759
      %v2761 = vsel %vm1011, %v2751, -inf
      %2762 = vmax.xlane.f32.xlu0 %v2761
      %v2763 = vpop.xlane.xlu0 %2762
      %v2764 = vsub.f32 %v2748, %v2754
      %v2765 = vsub.f32 %v2749, %v2757
      %v2766 = vsub.f32 %v2750, %v2760
      %v2767 = vsub.f32 %v2751, %v2763
      %v2768 = vmul.f32 %v2764, 1.442695
      %v2769 = vpow.pop %v2768
      %v2770 = vmul.f32 %v2765, 1.442695
      %v2771 = vpow.pop %v2770
      %v2772 = vmul.f32 %v2766, 1.442695
      %v2773 = vpow.pop %v2772
      %v2774 = vmul.f32 %v2767, 1.442695
      %v2775 = vpow.pop %v2774
      %v2776 = vsel %vm1011, %v2769, 0.0
      %2777 = vadd.xlane.f32.xlu0 %v2776
      %v2778 = vpop.xlane.xlu0 %2777
      %v2779 = vsel %vm1011, %v2771, 0.0
      %2780 = vadd.xlane.f32.xlu0 %v2779
      %v2781 = vpop.xlane.xlu0 %2780
      %v2782 = vsel %vm1011, %v2773, 0.0
      %2783 = vadd.xlane.f32.xlu0 %v2782
      %v2784 = vpop.xlane.xlu0 %2783
      %v2785 = vsel %vm1011, %v2775, 0.0
      %2786 = vadd.xlane.f32.xlu0 %v2785
      %v2787 = vpop.xlane.xlu0 %2786
      %v2788 = vrcp.pop %v2778
      %v2789 = vmul.f32 %v2769, %v2788
      %v2790 = vrcp.pop %v2781
      %v2791 = vmul.f32 %v2771, %v2790
      %v2792 = vrcp.pop %v2784
      %v2793 = vmul.f32 %v2773, %v2792
      %v2794 = vrcp.pop %v2787
      %v2795 = vmul.f32 %v2775, %v2794
      %v2796 = vpack.c.bf16 %v2791, %v2789
      %v2797 = vpack.c.bf16 %v2795, %v2793
      %2798 = vrot.lane.b32.xlu0 %v2488, 56
      %v2799 = vpop.permute.xlu0 %2798
      %2800 = vrot.lane.b32.xlu0 %v2489, 56
      %v2801 = vpop.permute.xlu0 %2800
      %v2805 = vsel %vm1011, %v2796, 0
      %v2808 = vsel %vm1011, %v2797, 0
      %2810 = vmatprep.subr.bf16.mxu0 0
      %2811 = vmatpush1.bf16.msra.mxu0 %v2799
      %2812 = vmatprep.subr.bf16.mxu0 0
      %2813 = vmatpush1.bf16.msra.mxu0 %v2801
      %2814 = vmatprep.subr.bf16.mxu0 0
      %2815 = vmatpush1.bf16.msra.mxu0 0
      %2816 = vmatprep.subr.bf16.mxu0 0
      %2817 = vmatpush1.bf16.msra.mxu0 0
      %2818 = vmatprep.subr.bf16.mxu0 0
      %2819 = vmatpush1.bf16.msra.mxu0 0
      %2820 = vmatprep.subr.bf16.mxu0 0
      %2821 = vmatpush1.bf16.msra.mxu0 0
      %2822 = vmatprep.subr.bf16.mxu0 0
      %2823 = vmatpush1.bf16.msra.mxu0 0
      %2824 = vmatprep.subr.bf16.mxu0 0
      %2825 = vmatpush1.bf16.msra.mxu0 0
      %2826 = vmatprep.subr.bf16.mxu0 0
      %2827 = vmatpush1.bf16.msra.mxu0 0
      %2828 = vmatprep.subr.bf16.mxu0 0
      %2829 = vmatpush1.bf16.msra.mxu0 0
      %2830 = vmatprep.subr.bf16.mxu0 0
      %2831 = vmatpush1.bf16.msra.mxu0 0
      %2832 = vmatprep.subr.bf16.mxu0 0
      %2833 = vmatpush1.bf16.msra.mxu0 0
      %2834 = vmatprep.subr.bf16.mxu0 0
      %2835 = vmatpush1.bf16.msra.mxu0 0
      %2836 = vmatprep.subr.bf16.mxu0 0
      %2837 = vmatpush1.bf16.msra.mxu0 0
      %2838 = vmatprep.subr.bf16.mxu0 0
      %2839 = vmatpush1.bf16.msra.mxu0 0
      %2840 = vmatprep.subr.bf16.mxu0 0
      %2841 = vmatpush1.bf16.msra.mxu0 0
      %2842 = vmatprep.mubr.bf16.mxu0 0
      %2843 = vmatmul.mubr.bf16.gmra.mrb[0].mxu0 %v2805
      %v2844 = vpop.f32.mrb[0].mxu0
      %v2845 = vadd.f32 0.0, %v2844
      %v2846 = vpop.f32.mrb[0].mxu0
      %v2847 = vpop.f32.mrb[0].mxu0
      %v2848 = vadd.f32 0.0, %v2847
      %v2849 = vpop.f32.mrb[0].mxu0
      %2850 = vmatprep.mubr.bf16.mxu0 0
      %2851 = vmatmul.mubr.bf16.gmra.mrb[0].mxu0 %v2808
      %v2852 = vpop.f32.mrb[0].mxu0
      %v2853 = vadd.f32 0.0, %v2852
      %v2854 = vpop.f32.mrb[0].mxu0
      %v2855 = vpop.f32.mrb[0].mxu0
      %v2856 = vadd.f32 0.0, %v2855
      %v2857 = vpop.f32.mrb[0].mxu0
      %2858 = vdwg.mxu0
      %v2859 = vpack.c.bf16 %v2848, %v2845
      %v2860 = vpack.c.bf16 %v2856, %v2853
      %2861 = vrot.lane.b32.xlu0 %v2488, 112
      %v2862 = vpop.permute.xlu0 %2861
      %2863 = vrot.lane.b32.xlu0 %v2489, 112
      %v2864 = vpop.permute.xlu0 %2863
      %2865 = vrot.lane.b32.xlu0 %v2488, 80
      %v2866 = vpop.permute.xlu0 %2865
      %2867 = vrot.lane.b32.xlu0 %v2489, 80
      %v2868 = vpop.permute.xlu0 %2867
      %v2870 = vsel %vm2496, %v2862, 0
      %v2873 = vsel %vm2496, %v2864, 0
      %v2876 = vsel %vm2496, %v2866, 0
      %v2879 = vsel %vm2496, %v2868, 0
      %2881 = vmatprep.subr.bf16.mxu0 0
      %2882 = vmatpush1.bf16.xpose.msra.mxu0 %v2876
      %2883 = vmatprep.subr.bf16.mxu0 0
      %2884 = vmatpush1.bf16.xpose.msra.mxu0 %v2879
      %2885 = vmatprep.subr.bf16.mxu0 0
      %2886 = vmatpush1.bf16.xpose.msra.mxu0 0
      %2887 = vmatprep.subr.bf16.mxu0 0
      %2888 = vmatpush1.bf16.xpose.msra.mxu0 0
      %2889 = vmatprep.subr.bf16.mxu0 0
      %2890 = vmatpush1.bf16.xpose.msra.mxu0 0
      %2891 = vmatprep.subr.bf16.mxu0 0
      %2892 = vmatpush1.bf16.xpose.msra.mxu0 0
      %2893 = vmatprep.subr.bf16.mxu0 0
      %2894 = vmatpush1.bf16.xpose.msra.mxu0 0
      %2895 = vmatprep.subr.bf16.mxu0 0
      %2896 = vmatpush1.bf16.xpose.msra.mxu0 0
      %2897 = vmatprep.subr.bf16.mxu0 0
      %2898 = vmatpush1.bf16.xpose.msra.mxu0 0
      %2899 = vmatprep.subr.bf16.mxu0 0
      %2900 = vmatpush1.bf16.xpose.msra.mxu0 0
      %2901 = vmatprep.subr.bf16.mxu0 0
      %2902 = vmatpush1.bf16.xpose.msra.mxu0 0
      %2903 = vmatprep.subr.bf16.mxu0 0
      %2904 = vmatpush1.bf16.xpose.msra.mxu0 0
      %2905 = vmatprep.subr.bf16.mxu0 0
      %2906 = vmatpush1.bf16.xpose.msra.mxu0 0
      %2907 = vmatprep.subr.bf16.mxu0 0
      %2908 = vmatpush1.bf16.xpose.msra.mxu0 0
      %2909 = vmatprep.subr.bf16.mxu0 0
      %2910 = vmatpush1.bf16.xpose.msra.mxu0 0
      %2911 = vmatprep.subr.bf16.mxu0 0
      %2912 = vmatpush1.bf16.xpose.msra.mxu0 0
      %2913 = vmatprep.mubr.bf16.mxu0 0
      %2914 = vmatmul.mubr.bf16.gmra.mrb[0].mxu0 %v2870
      %v2915 = vpop.f32.mrb[0].mxu0
      %v2916 = vadd.f32 0.0, %v2915
      %v2917 = vpop.f32.mrb[0].mxu0
      %v2918 = vpop.f32.mrb[0].mxu0
      %v2919 = vadd.f32 0.0, %v2918
      %v2920 = vpop.f32.mrb[0].mxu0
      %2921 = vmatprep.mubr.bf16.mxu0 0
      %2922 = vmatmul.mubr.bf16.gmra.mrb[0].mxu0 %v2873
      %v2923 = vpop.f32.mrb[0].mxu0
      %v2924 = vadd.f32 0.0, %v2923
      %v2925 = vpop.f32.mrb[0].mxu0
      %v2926 = vpop.f32.mrb[0].mxu0
      %v2927 = vadd.f32 0.0, %v2926
      %v2928 = vpop.f32.mrb[0].mxu0
      %2929 = vdwg.mxu0
      %v2930 = vmul.f32 %v2916, 0.35355338
      %v2931 = vmul.f32 %v2919, 0.35355338
      %v2932 = vmul.f32 %v2924, 0.35355338
      %v2933 = vmul.f32 %v2927, 0.35355338
      %v2934 = vadd.f32 %v2930, %v473
      %v2935 = vadd.f32 %v2931, %v474
      %v2936 = vadd.f32 %v2932, %v475
      %v2937 = vadd.f32 %v2933, %v476
      %v2938 = vsel %vm1011, %v2934, -inf
      %2939 = vmax.xlane.f32.xlu0 %v2938
      %v2940 = vpop.xlane.xlu0 %2939
      %v2941 = vsel %vm1011, %v2935, -inf
      %2942 = vmax.xlane.f32.xlu0 %v2941
      %v2943 = vpop.xlane.xlu0 %2942
      %v2944 = vsel %vm1011, %v2936, -inf
      %2945 = vmax.xlane.f32.xlu0 %v2944
      %v2946 = vpop.xlane.xlu0 %2945
      %v2947 = vsel %vm1011, %v2937, -inf
      %2948 = vmax.xlane.f32.xlu0 %v2947
      %v2949 = vpop.xlane.xlu0 %2948
      %v2950 = vsub.f32 %v2934, %v2940
      %v2951 = vsub.f32 %v2935, %v2943
      %v2952 = vsub.f32 %v2936, %v2946
      %v2953 = vsub.f32 %v2937, %v2949
      %v2954 = vmul.f32 %v2950, 1.442695
      %v2955 = vpow.pop %v2954
      %v2956 = vmul.f32 %v2951, 1.442695
      %v2957 = vpow.pop %v2956
      %v2958 = vmul.f32 %v2952, 1.442695
      %v2959 = vpow.pop %v2958
      %v2960 = vmul.f32 %v2953, 1.442695
      %v2961 = vpow.pop %v2960
      %v2962 = vsel %vm1011, %v2955, 0.0
      %2963 = vadd.xlane.f32.xlu0 %v2962
      %v2964 = vpop.xlane.xlu0 %2963
      %v2965 = vsel %vm1011, %v2957, 0.0
      %2966 = vadd.xlane.f32.xlu0 %v2965
      %v2967 = vpop.xlane.xlu0 %2966
      %v2968 = vsel %vm1011, %v2959, 0.0
      %2969 = vadd.xlane.f32.xlu0 %v2968
      %v2970 = vpop.xlane.xlu0 %2969
      %v2971 = vsel %vm1011, %v2961, 0.0
      %2972 = vadd.xlane.f32.xlu0 %v2971
      %v2973 = vpop.xlane.xlu0 %2972
      %v2974 = vrcp.pop %v2964
      %v2975 = vmul.f32 %v2955, %v2974
      %v2976 = vrcp.pop %v2967
      %v2977 = vmul.f32 %v2957, %v2976
      %v2978 = vrcp.pop %v2970
      %v2979 = vmul.f32 %v2959, %v2978
      %v2980 = vrcp.pop %v2973
      %v2981 = vmul.f32 %v2961, %v2980
      %v2982 = vpack.c.bf16 %v2977, %v2975
      %v2983 = vpack.c.bf16 %v2981, %v2979
      %2984 = vrot.lane.b32.xlu0 %v2488, 48
      %v2985 = vpop.permute.xlu0 %2984
      %2986 = vrot.lane.b32.xlu0 %v2489, 48
      %v2987 = vpop.permute.xlu0 %2986
      %v2991 = vsel %vm1011, %v2982, 0
      %v2994 = vsel %vm1011, %v2983, 0
      %2996 = vmatprep.subr.bf16.mxu0 0
      %2997 = vmatpush1.bf16.msra.mxu0 %v2985
      %2998 = vmatprep.subr.bf16.mxu0 0
      %2999 = vmatpush1.bf16.msra.mxu0 %v2987
      %3000 = vmatprep.subr.bf16.mxu0 0
      %3001 = vmatpush1.bf16.msra.mxu0 0
      %3002 = vmatprep.subr.bf16.mxu0 0
      %3003 = vmatpush1.bf16.msra.mxu0 0
      %3004 = vmatprep.subr.bf16.mxu0 0
      %3005 = vmatpush1.bf16.msra.mxu0 0
      %3006 = vmatprep.subr.bf16.mxu0 0
      %3007 = vmatpush1.bf16.msra.mxu0 0
      %3008 = vmatprep.subr.bf16.mxu0 0
      %3009 = vmatpush1.bf16.msra.mxu0 0
      %3010 = vmatprep.subr.bf16.mxu0 0
      %3011 = vmatpush1.bf16.msra.mxu0 0
      %3012 = vmatprep.subr.bf16.mxu0 0
      %3013 = vmatpush1.bf16.msra.mxu0 0
      %3014 = vmatprep.subr.bf16.mxu0 0
      %3015 = vmatpush1.bf16.msra.mxu0 0
      %3016 = vmatprep.subr.bf16.mxu0 0
      %3017 = vmatpush1.bf16.msra.mxu0 0
      %3018 = vmatprep.subr.bf16.mxu0 0
      %3019 = vmatpush1.bf16.msra.mxu0 0
      %3020 = vmatprep.subr.bf16.mxu0 0
      %3021 = vmatpush1.bf16.msra.mxu0 0
      %3022 = vmatprep.subr.bf16.mxu0 0
      %3023 = vmatpush1.bf16.msra.mxu0 0
      %3024 = vmatprep.subr.bf16.mxu0 0
      %3025 = vmatpush1.bf16.msra.mxu0 0
      %3026 = vmatprep.subr.bf16.mxu0 0
      %3027 = vmatpush1.bf16.msra.mxu0 0
      %3028 = vmatprep.mubr.bf16.mxu0 0
      %3029 = vmatmul.mubr.bf16.gmra.mrb[0].mxu0 %v2991
      %v3030 = vpop.f32.mrb[0].mxu0
      %v3031 = vadd.f32 0.0, %v3030
      %v3032 = vpop.f32.mrb[0].mxu0
      %v3033 = vpop.f32.mrb[0].mxu0
      %v3034 = vadd.f32 0.0, %v3033
      %v3035 = vpop.f32.mrb[0].mxu0
      %3036 = vmatprep.mubr.bf16.mxu0 0
      %3037 = vmatmul.mubr.bf16.gmra.mrb[0].mxu0 %v2994
      %v3038 = vpop.f32.mrb[0].mxu0
      %v3039 = vadd.f32 0.0, %v3038
      %v3040 = vpop.f32.mrb[0].mxu0
      %v3041 = vpop.f32.mrb[0].mxu0
      %v3042 = vadd.f32 0.0, %v3041
      %v3043 = vpop.f32.mrb[0].mxu0
      %3044 = vdwg.mxu0
      %v3045 = vpack.c.bf16 %v3034, %v3031
      %v3046 = vpack.c.bf16 %v3042, %v3039
      %3047 = vrot.lane.b32.xlu0 %v2488, 104
      %v3048 = vpop.permute.xlu0 %3047
      %3049 = vrot.lane.b32.xlu0 %v2489, 104
      %v3050 = vpop.permute.xlu0 %3049
      %3051 = vrot.lane.b32.xlu0 %v2488, 72
      %v3052 = vpop.permute.xlu0 %3051
      %3053 = vrot.lane.b32.xlu0 %v2489, 72
      %v3054 = vpop.permute.xlu0 %3053
      %v3056 = vsel %vm2496, %v3048, 0
      %v3059 = vsel %vm2496, %v3050, 0
      %v3062 = vsel %vm2496, %v3052, 0
      %v3065 = vsel %vm2496, %v3054, 0
      %3067 = vmatprep.subr.bf16.mxu0 0
      %3068 = vmatpush1.bf16.xpose.msra.mxu0 %v3062
      %3069 = vmatprep.subr.bf16.mxu0 0
      %3070 = vmatpush1.bf16.xpose.msra.mxu0 %v3065
      %3071 = vmatprep.subr.bf16.mxu0 0
      %3072 = vmatpush1.bf16.xpose.msra.mxu0 0
      %3073 = vmatprep.subr.bf16.mxu0 0
      %3074 = vmatpush1.bf16.xpose.msra.mxu0 0
      %3075 = vmatprep.subr.bf16.mxu0 0
      %3076 = vmatpush1.bf16.xpose.msra.mxu0 0
      %3077 = vmatprep.subr.bf16.mxu0 0
      %3078 = vmatpush1.bf16.xpose.msra.mxu0 0
      %3079 = vmatprep.subr.bf16.mxu0 0
      %3080 = vmatpush1.bf16.xpose.msra.mxu0 0
      %3081 = vmatprep.subr.bf16.mxu0 0
      %3082 = vmatpush1.bf16.xpose.msra.mxu0 0
      %3083 = vmatprep.subr.bf16.mxu0 0
      %3084 = vmatpush1.bf16.xpose.msra.mxu0 0
      %3085 = vmatprep.subr.bf16.mxu0 0
      %3086 = vmatpush1.bf16.xpose.msra.mxu0 0
      %3087 = vmatprep.subr.bf16.mxu0 0
      %3088 = vmatpush1.bf16.xpose.msra.mxu0 0
      %3089 = vmatprep.subr.bf16.mxu0 0
      %3090 = vmatpush1.bf16.xpose.msra.mxu0 0
      %3091 = vmatprep.subr.bf16.mxu0 0
      %3092 = vmatpush1.bf16.xpose.msra.mxu0 0
      %3093 = vmatprep.subr.bf16.mxu0 0
      %3094 = vmatpush1.bf16.xpose.msra.mxu0 0
      %3095 = vmatprep.subr.bf16.mxu0 0
      %3096 = vmatpush1.bf16.xpose.msra.mxu0 0
      %3097 = vmatprep.subr.bf16.mxu0 0
      %3098 = vmatpush1.bf16.xpose.msra.mxu0 0
      %3099 = vmatprep.mubr.bf16.mxu0 0
      %3100 = vmatmul.mubr.bf16.gmra.mrb[0].mxu0 %v3056
      %v3101 = vpop.f32.mrb[0].mxu0
      %v3102 = vadd.f32 0.0, %v3101
      %v3103 = vpop.f32.mrb[0].mxu0
      %v3104 = vpop.f32.mrb[0].mxu0
      %v3105 = vadd.f32 0.0, %v3104
      %v3106 = vpop.f32.mrb[0].mxu0
      %3107 = vmatprep.mubr.bf16.mxu0 0
      %3108 = vmatmul.mubr.bf16.gmra.mrb[0].mxu0 %v3059
      %v3109 = vpop.f32.mrb[0].mxu0
      %v3110 = vadd.f32 0.0, %v3109
      %v3111 = vpop.f32.mrb[0].mxu0
      %v3112 = vpop.f32.mrb[0].mxu0
      %v3113 = vadd.f32 0.0, %v3112
      %v3114 = vpop.f32.mrb[0].mxu0
      %3115 = vdwg.mxu0
      %v3116 = vmul.f32 %v3102, 0.35355338
      %v3117 = vmul.f32 %v3105, 0.35355338
      %v3118 = vmul.f32 %v3110, 0.35355338
      %v3119 = vmul.f32 %v3113, 0.35355338
      %v3120 = vadd.f32 %v3116, %v473
      %v3121 = vadd.f32 %v3117, %v474
      %v3122 = vadd.f32 %v3118, %v475
      %v3123 = vadd.f32 %v3119, %v476
      %v3124 = vsel %vm1011, %v3120, -inf
      %3125 = vmax.xlane.f32.xlu0 %v3124
      %v3126 = vpop.xlane.xlu0 %3125
      %v3127 = vsel %vm1011, %v3121, -inf
      %3128 = vmax.xlane.f32.xlu0 %v3127
      %v3129 = vpop.xlane.xlu0 %3128
      %v3130 = vsel %vm1011, %v3122, -inf
      %3131 = vmax.xlane.f32.xlu0 %v3130
      %v3132 = vpop.xlane.xlu0 %3131
      %v3133 = vsel %vm1011, %v3123, -inf
      %3134 = vmax.xlane.f32.xlu0 %v3133
      %v3135 = vpop.xlane.xlu0 %3134
      %v3136 = vsub.f32 %v3120, %v3126
      %v3137 = vsub.f32 %v3121, %v3129
      %v3138 = vsub.f32 %v3122, %v3132
      %v3139 = vsub.f32 %v3123, %v3135
      %v3140 = vmul.f32 %v3136, 1.442695
      %v3141 = vpow.pop %v3140
      %v3142 = vmul.f32 %v3137, 1.442695
      %v3143 = vpow.pop %v3142
      %v3144 = vmul.f32 %v3138, 1.442695
      %v3145 = vpow.pop %v3144
      %v3146 = vmul.f32 %v3139, 1.442695
      %v3147 = vpow.pop %v3146
      %v3148 = vsel %vm1011, %v3141, 0.0
      %3149 = vadd.xlane.f32.xlu0 %v3148
      %v3150 = vpop.xlane.xlu0 %3149
      %v3151 = vsel %vm1011, %v3143, 0.0
      %3152 = vadd.xlane.f32.xlu0 %v3151
      %v3153 = vpop.xlane.xlu0 %3152
      %v3154 = vsel %vm1011, %v3145, 0.0
      %3155 = vadd.xlane.f32.xlu0 %v3154
      %v3156 = vpop.xlane.xlu0 %3155
      %v3157 = vsel %vm1011, %v3147, 0.0
      %3158 = vadd.xlane.f32.xlu0 %v3157
      %v3159 = vpop.xlane.xlu0 %3158
      %v3160 = vrcp.pop %v3150
      %v3161 = vmul.f32 %v3141, %v3160
      %v3162 = vrcp.pop %v3153
      %v3163 = vmul.f32 %v3143, %v3162
      %v3164 = vrcp.pop %v3156
      %v3165 = vmul.f32 %v3145, %v3164
      %v3166 = vrcp.pop %v3159
      %v3167 = vmul.f32 %v3147, %v3166
      %v3168 = vpack.c.bf16 %v3163, %v3161
      %v3169 = vpack.c.bf16 %v3167, %v3165
      %3170 = vrot.lane.b32.xlu0 %v2488, 40
      %v3171 = vpop.permute.xlu0 %3170
      %3172 = vrot.lane.b32.xlu0 %v2489, 40
      %v3173 = vpop.permute.xlu0 %3172
      %v3177 = vsel %vm1011, %v3168, 0
      %v3180 = vsel %vm1011, %v3169, 0
      %3182 = vmatprep.subr.bf16.mxu0 0
      %3183 = vmatpush1.bf16.msra.mxu0 %v3171
      %3184 = vmatprep.subr.bf16.mxu0 0
      %3185 = vmatpush1.bf16.msra.mxu0 %v3173
      %3186 = vmatprep.subr.bf16.mxu0 0
      %3187 = vmatpush1.bf16.msra.mxu0 0
      %3188 = vmatprep.subr.bf16.mxu0 0
      %3189 = vmatpush1.bf16.msra.mxu0 0
      %3190 = vmatprep.subr.bf16.mxu0 0
      %3191 = vmatpush1.bf16.msra.mxu0 0
      %3192 = vmatprep.subr.bf16.mxu0 0
      %3193 = vmatpush1.bf16.msra.mxu0 0
      %3194 = vmatprep.subr.bf16.mxu0 0
      %3195 = vmatpush1.bf16.msra.mxu0 0
      %3196 = vmatprep.subr.bf16.mxu0 0
      %3197 = vmatpush1.bf16.msra.mxu0 0
      %3198 = vmatprep.subr.bf16.mxu0 0
      %3199 = vmatpush1.bf16.msra.mxu0 0
      %3200 = vmatprep.subr.bf16.mxu0 0
      %3201 = vmatpush1.bf16.msra.mxu0 0
      %3202 = vmatprep.subr.bf16.mxu0 0
      %3203 = vmatpush1.bf16.msra.mxu0 0
      %3204 = vmatprep.subr.bf16.mxu0 0
      %3205 = vmatpush1.bf16.msra.mxu0 0
      %3206 = vmatprep.subr.bf16.mxu0 0
      %3207 = vmatpush1.bf16.msra.mxu0 0
      %3208 = vmatprep.subr.bf16.mxu0 0
      %3209 = vmatpush1.bf16.msra.mxu0 0
      %3210 = vmatprep.subr.bf16.mxu0 0
      %3211 = vmatpush1.bf16.msra.mxu0 0
      %3212 = vmatprep.subr.bf16.mxu0 0
      %3213 = vmatpush1.bf16.msra.mxu0 0
      %3214 = vmatprep.mubr.bf16.mxu0 0
      %3215 = vmatmul.mubr.bf16.gmra.mrb[0].mxu0 %v3177
      %v3216 = vpop.f32.mrb[0].mxu0
      %v3217 = vadd.f32 0.0, %v3216
      %v3218 = vpop.f32.mrb[0].mxu0
      %v3219 = vpop.f32.mrb[0].mxu0
      %v3220 = vadd.f32 0.0, %v3219
      %v3221 = vpop.f32.mrb[0].mxu0
      %3222 = vmatprep.mubr.bf16.mxu0 0
      %3223 = vmatmul.mubr.bf16.gmra.mrb[0].mxu0 %v3180
      %v3224 = vpop.f32.mrb[0].mxu0
      %v3225 = vadd.f32 0.0, %v3224
      %v3226 = vpop.f32.mrb[0].mxu0
      %v3227 = vpop.f32.mrb[0].mxu0
      %v3228 = vadd.f32 0.0, %v3227
      %v3229 = vpop.f32.mrb[0].mxu0
      %3230 = vdwg.mxu0
      %v3231 = vpack.c.bf16 %v3220, %v3217
      %v3232 = vpack.c.bf16 %v3228, %v3225
      %v3233 = vld [vmem:[%s3 + $0x7] sm:$0x1]
      %v3234 = vld [vmem:[%s10 + $0x40] sm:$0xf]
      %v3236 = vsel %vm2496, %v2673, 0
      %v3239 = vsel %vm2496, %v2674, 0
      %vm3241 = vcmask 1043456
      %v3243 = vsel %vm3241, %v3234, 0
      %3245 = vmatprep.subr.bf16.mxu0 0
      %3246 = vmatpush1.bf16.msra.mxu0 %v3243
      %3247 = vmatprep.subr.bf16.mxu0 0
      %3248 = vmatpush1.bf16.msra.mxu0 0
      %3249 = vmatprep.subr.bf16.mxu0 0
      %3250 = vmatpush1.bf16.msra.mxu0 0
      %3251 = vmatprep.subr.bf16.mxu0 0
      %3252 = vmatpush1.bf16.msra.mxu0 0
      %3253 = vmatprep.subr.bf16.mxu0 0
      %3254 = vmatpush1.bf16.msra.mxu0 0
      %3255 = vmatprep.subr.bf16.mxu0 0
      %3256 = vmatpush1.bf16.msra.mxu0 0
      %3257 = vmatprep.subr.bf16.mxu0 0
      %3258 = vmatpush1.bf16.msra.mxu0 0
      %3259 = vmatprep.subr.bf16.mxu0 0
      %3260 = vmatpush1.bf16.msra.mxu0 0
      %3261 = vmatprep.subr.bf16.mxu0 0
      %3262 = vmatpush1.bf16.msra.mxu0 0
      %3263 = vmatprep.subr.bf16.mxu0 0
      %3264 = vmatpush1.bf16.msra.mxu0 0
      %3265 = vmatprep.subr.bf16.mxu0 0
      %3266 = vmatpush1.bf16.msra.mxu0 0
      %3267 = vmatprep.subr.bf16.mxu0 0
      %3268 = vmatpush1.bf16.msra.mxu0 0
      %3269 = vmatprep.subr.bf16.mxu0 0
      %3270 = vmatpush1.bf16.msra.mxu0 0
      %3271 = vmatprep.subr.bf16.mxu0 0
      %3272 = vmatpush1.bf16.msra.mxu0 0
      %3273 = vmatprep.subr.bf16.mxu0 0
      %3274 = vmatpush1.bf16.msra.mxu0 0
      %3275 = vmatprep.subr.bf16.mxu0 0
      %3276 = vmatpush1.bf16.msra.mxu0 0
      %3277 = vmatprep.mubr.bf16.mxu0 0
      %3278 = vmatmul.mubr.bf16.gmra.mrb[0].mxu0 %v3236
      %v3279 = vpop.f32.mrb[0].mxu0
      %v3280 = vadd.f32 0.0, %v3279
      %v3281 = vpop.f32.mrb[0].mxu0
      %v3282 = vpop.f32.mrb[0].mxu0
      %v3283 = vadd.f32 0.0, %v3282
      %v3284 = vpop.f32.mrb[0].mxu0
      %3285 = vmatprep.mubr.bf16.mxu0 0
      %3286 = vmatmul.mubr.bf16.gmra.mrb[0].mxu0 %v3239
      %v3287 = vpop.f32.mrb[0].mxu0
      %v3288 = vadd.f32 0.0, %v3287
      %v3289 = vpop.f32.mrb[0].mxu0
      %v3290 = vpop.f32.mrb[0].mxu0
      %v3291 = vadd.f32 0.0, %v3290
      %v3292 = vpop.f32.mrb[0].mxu0
      %3293 = vdwg.mxu0
      %v3294 = vlaneseq
      %v3295 = vshrl.u32 %v3294, 7
      %v3296 = vsub.s32 0, %v3295
      %v3297 = vrot.slane %v3233, %v3296
      %v3298 = vadd.f32 %v3297, %v3280
      %v3299 = vadd.f32 %v3297, %v3283
      %v3300 = vadd.f32 %v3297, %v3288
      %v3301 = vadd.f32 %v3297, %v3291
      %v3302 = vld [vmem:[%s10 + $0x44] sm:$0xf]
      %v3304 = vsel %vm2496, %v2859, 0
      %v3307 = vsel %vm2496, %v2860, 0
      %v3310 = vsel %vm3241, %v3302, 0
      %3312 = vmatprep.subr.bf16.mxu0 0
      %3313 = vmatpush1.bf16.msra.mxu0 %v3310
      %3314 = vmatprep.subr.bf16.mxu0 0
      %3315 = vmatpush1.bf16.msra.mxu0 0
      %3316 = vmatprep.subr.bf16.mxu0 0
      %3317 = vmatpush1.bf16.msra.mxu0 0
      %3318 = vmatprep.subr.bf16.mxu0 0
      %3319 = vmatpush1.bf16.msra.mxu0 0
      %3320 = vmatprep.subr.bf16.mxu0 0
      %3321 = vmatpush1.bf16.msra.mxu0 0
      %3322 = vmatprep.subr.bf16.mxu0 0
      %3323 = vmatpush1.bf16.msra.mxu0 0
      %3324 = vmatprep.subr.bf16.mxu0 0
      %3325 = vmatpush1.bf16.msra.mxu0 0
      %3326 = vmatprep.subr.bf16.mxu0 0
      %3327 = vmatpush1.bf16.msra.mxu0 0
      %3328 = vmatprep.subr.bf16.mxu0 0
      %3329 = vmatpush1.bf16.msra.mxu0 0
      %3330 = vmatprep.subr.bf16.mxu0 0
      %3331 = vmatpush1.bf16.msra.mxu0 0
      %3332 = vmatprep.subr.bf16.mxu0 0
      %3333 = vmatpush1.bf16.msra.mxu0 0
      %3334 = vmatprep.subr.bf16.mxu0 0
      %3335 = vmatpush1.bf16.msra.mxu0 0
      %3336 = vmatprep.subr.bf16.mxu0 0
      %3337 = vmatpush1.bf16.msra.mxu0 0
      %3338 = vmatprep.subr.bf16.mxu0 0
      %3339 = vmatpush1.bf16.msra.mxu0 0
      %3340 = vmatprep.subr.bf16.mxu0 0
      %3341 = vmatpush1.bf16.msra.mxu0 0
      %3342 = vmatprep.subr.bf16.mxu0 0
      %3343 = vmatpush1.bf16.msra.mxu0 0
      %3344 = vmatprep.mubr.bf16.mxu0 0
      %3345 = vmatmul.mubr.bf16.gmra.mrb[0].mxu0 %v3304
      %v3346 = vpop.f32.mrb[0].mxu0
      %v3347 = vadd.f32 0.0, %v3346
      %v3348 = vpop.f32.mrb[0].mxu0
      %v3349 = vpop.f32.mrb[0].mxu0
      %v3350 = vadd.f32 0.0, %v3349
      %v3351 = vpop.f32.mrb[0].mxu0
      %3352 = vmatprep.mubr.bf16.mxu0 0
      %3353 = vmatmul.mubr.bf16.gmra.mrb[0].mxu0 %v3307
      %v3354 = vpop.f32.mrb[0].mxu0
      %v3355 = vadd.f32 0.0, %v3354
      %v3356 = vpop.f32.mrb[0].mxu0
      %v3357 = vpop.f32.mrb[0].mxu0
      %v3358 = vadd.f32 0.0, %v3357
      %v3359 = vpop.f32.mrb[0].mxu0
      %3360 = vdwg.mxu0
      %v3361 = vadd.f32 %v3298, %v3347
      %v3362 = vadd.f32 %v3299, %v3350
      %v3363 = vadd.f32 %v3300, %v3355
      %v3364 = vadd.f32 %v3301, %v3358
      %v3365 = vld [vmem:[%s10 + $0x48] sm:$0xf]
      %v3367 = vsel %vm2496, %v3045, 0
      %v3370 = vsel %vm2496, %v3046, 0
      %v3373 = vsel %vm3241, %v3365, 0
      %3375 = vmatprep.subr.bf16.mxu0 0
      %3376 = vmatpush1.bf16.msra.mxu0 %v3373
      %3377 = vmatprep.subr.bf16.mxu0 0
      %3378 = vmatpush1.bf16.msra.mxu0 0
      %3379 = vmatprep.subr.bf16.mxu0 0
      %3380 = vmatpush1.bf16.msra.mxu0 0
      %3381 = vmatprep.subr.bf16.mxu0 0
      %3382 = vmatpush1.bf16.msra.mxu0 0
      %3383 = vmatprep.subr.bf16.mxu0 0
      %3384 = vmatpush1.bf16.msra.mxu0 0
      %3385 = vmatprep.subr.bf16.mxu0 0
      %3386 = vmatpush1.bf16.msra.mxu0 0
      %3387 = vmatprep.subr.bf16.mxu0 0
      %3388 = vmatpush1.bf16.msra.mxu0 0
      %3389 = vmatprep.subr.bf16.mxu0 0
      %3390 = vmatpush1.bf16.msra.mxu0 0
      %3391 = vmatprep.subr.bf16.mxu0 0
      %3392 = vmatpush1.bf16.msra.mxu0 0
      %3393 = vmatprep.subr.bf16.mxu0 0
      %3394 = vmatpush1.bf16.msra.mxu0 0
      %3395 = vmatprep.subr.bf16.mxu0 0
      %3396 = vmatpush1.bf16.msra.mxu0 0
      %3397 = vmatprep.subr.bf16.mxu0 0
      %3398 = vmatpush1.bf16.msra.mxu0 0
      %3399 = vmatprep.subr.bf16.mxu0 0
      %3400 = vmatpush1.bf16.msra.mxu0 0
      %3401 = vmatprep.subr.bf16.mxu0 0
      %3402 = vmatpush1.bf16.msra.mxu0 0
      %3403 = vmatprep.subr.bf16.mxu0 0
      %3404 = vmatpush1.bf16.msra.mxu0 0
      %3405 = vmatprep.subr.bf16.mxu0 0
      %3406 = vmatpush1.bf16.msra.mxu0 0
      %3407 = vmatprep.mubr.bf16.mxu0 0
      %3408 = vmatmul.mubr.bf16.gmra.mrb[0].mxu0 %v3367
      %v3409 = vpop.f32.mrb[0].mxu0
      %v3410 = vadd.f32 0.0, %v3409
      %v3411 = vpop.f32.mrb[0].mxu0
      %v3412 = vpop.f32.mrb[0].mxu0
      %v3413 = vadd.f32 0.0, %v3412
      %v3414 = vpop.f32.mrb[0].mxu0
      %3415 = vmatprep.mubr.bf16.mxu0 0
      %3416 = vmatmul.mubr.bf16.gmra.mrb[0].mxu0 %v3370
      %v3417 = vpop.f32.mrb[0].mxu0
      %v3418 = vadd.f32 0.0, %v3417
      %v3419 = vpop.f32.mrb[0].mxu0
      %v3420 = vpop.f32.mrb[0].mxu0
      %v3421 = vadd.f32 0.0, %v3420
      %v3422 = vpop.f32.mrb[0].mxu0
      %3423 = vdwg.mxu0
      %v3424 = vadd.f32 %v3361, %v3410
      %v3425 = vadd.f32 %v3362, %v3413
      %v3426 = vadd.f32 %v3363, %v3418
      %v3427 = vadd.f32 %v3364, %v3421
      %v3428 = vld [vmem:[%s10 + $0x4c] sm:$0xf]
      %v3430 = vsel %vm2496, %v3231, 0
      %v3433 = vsel %vm2496, %v3232, 0
      %v3436 = vsel %vm3241, %v3428, 0
      %3438 = vmatprep.subr.bf16.mxu0 0
      %3439 = vmatpush1.bf16.msra.mxu0 %v3436
      %3440 = vmatprep.subr.bf16.mxu0 0
      %3441 = vmatpush1.bf16.msra.mxu0 0
      %3442 = vmatprep.subr.bf16.mxu0 0
      %3443 = vmatpush1.bf16.msra.mxu0 0
      %3444 = vmatprep.subr.bf16.mxu0 0
      %3445 = vmatpush1.bf16.msra.mxu0 0
      %3446 = vmatprep.subr.bf16.mxu0 0
      %3447 = vmatpush1.bf16.msra.mxu0 0
      %3448 = vmatprep.subr.bf16.mxu0 0
      %3449 = vmatpush1.bf16.msra.mxu0 0
      %3450 = vmatprep.subr.bf16.mxu0 0
      %3451 = vmatpush1.bf16.msra.mxu0 0
      %3452 = vmatprep.subr.bf16.mxu0 0
      %3453 = vmatpush1.bf16.msra.mxu0 0
      %3454 = vmatprep.subr.bf16.mxu0 0
      %3455 = vmatpush1.bf16.msra.mxu0 0
      %3456 = vmatprep.subr.bf16.mxu0 0
      %3457 = vmatpush1.bf16.msra.mxu0 0
      %3458 = vmatprep.subr.bf16.mxu0 0
      %3459 = vmatpush1.bf16.msra.mxu0 0
      %3460 = vmatprep.subr.bf16.mxu0 0
      %3461 = vmatpush1.bf16.msra.mxu0 0
      %3462 = vmatprep.subr.bf16.mxu0 0
      %3463 = vmatpush1.bf16.msra.mxu0 0
      %3464 = vmatprep.subr.bf16.mxu0 0
      %3465 = vmatpush1.bf16.msra.mxu0 0
      %3466 = vmatprep.subr.bf16.mxu0 0
      %3467 = vmatpush1.bf16.msra.mxu0 0
      %3468 = vmatprep.subr.bf16.mxu0 0
      %3469 = vmatpush1.bf16.msra.mxu0 0
      %3470 = vmatprep.mubr.bf16.mxu0 0
      %3471 = vmatmul.mubr.bf16.gmra.mrb[0].mxu0 %v3430
      %v3472 = vpop.f32.mrb[0].mxu0
      %v3473 = vadd.f32 0.0, %v3472
      %v3474 = vpop.f32.mrb[0].mxu0
      %v3475 = vpop.f32.mrb[0].mxu0
      %v3476 = vadd.f32 0.0, %v3475
      %v3477 = vpop.f32.mrb[0].mxu0
      %3478 = vmatprep.mubr.bf16.mxu0 0
      %3479 = vmatmul.mubr.bf16.gmra.mrb[0].mxu0 %v3433
      %v3480 = vpop.f32.mrb[0].mxu0
      %v3481 = vadd.f32 0.0, %v3480
      %v3482 = vpop.f32.mrb[0].mxu0
      %v3483 = vpop.f32.mrb[0].mxu0
      %v3484 = vadd.f32 0.0, %v3483
      %v3485 = vpop.f32.mrb[0].mxu0
      %3486 = vdwg.mxu0
      %v3487 = vadd.f32 %v3424, %v3473
      %v3488 = vadd.f32 %v3425, %v3476
      %v3489 = vadd.f32 %v3426, %v3481
      %v3490 = vadd.f32 %v3427, %v3484
      %v3491 = vadd.f32 %v2341, %v3487
      %v3492 = vadd.f32 %v2342, %v3488
      %v3493 = vadd.f32 %v2343, %v3489
      %v3494 = vadd.f32 %v2344, %v3490
      %v3495 = vld [vmem:[%s3 + $0x8] sm:$0x1]
      %v3496 = vld [vmem:[%s3 + $0x9] sm:$0x1]
      %v3497 = vsel %vm1011, %v3491, 0.0
      %3498 = vadd.xlane.f32.xlu0 %v3497
      %v3499 = vpop.xlane.xlu0 %3498
      %v3500 = vsel %vm1011, %v3492, 0.0
      %3501 = vadd.xlane.f32.xlu0 %v3500
      %v3502 = vpop.xlane.xlu0 %3501
      %v3503 = vsel %vm1011, %v3493, 0.0
      %3504 = vadd.xlane.f32.xlu0 %v3503
      %v3505 = vpop.xlane.xlu0 %3504
      %v3506 = vsel %vm1011, %v3494, 0.0
      %3507 = vadd.xlane.f32.xlu0 %v3506
      %v3508 = vpop.xlane.xlu0 %3507
      %v3509 = vmul.f32 %v3499, %v2054
      %v3510 = vmul.f32 %v3502, %v2054
      %v3511 = vmul.f32 %v3505, %v2054
      %v3512 = vmul.f32 %v3508, %v2054
      %v3513 = vsub.f32 %v3491, %v3509
      %v3514 = vsub.f32 %v3492, %v3510
      %v3515 = vsub.f32 %v3493, %v3511
      %v3516 = vsub.f32 %v3494, %v3512
      %v3517 = vmul.f32 %v3513, %v3513
      %v3518 = vmul.f32 %v3514, %v3514
      %v3519 = vmul.f32 %v3515, %v3515
      %v3520 = vmul.f32 %v3516, %v3516
      %v3521 = vsel %vm1011, %v3517, 0.0
      %3522 = vadd.xlane.f32.xlu0 %v3521
      %v3523 = vpop.xlane.xlu0 %3522
      %v3524 = vsel %vm1011, %v3518, 0.0
      %3525 = vadd.xlane.f32.xlu0 %v3524
      %v3526 = vpop.xlane.xlu0 %3525
      %v3527 = vsel %vm1011, %v3519, 0.0
      %3528 = vadd.xlane.f32.xlu0 %v3527
      %v3529 = vpop.xlane.xlu0 %3528
      %v3530 = vsel %vm1011, %v3520, 0.0
      %3531 = vadd.xlane.f32.xlu0 %v3530
      %v3532 = vpop.xlane.xlu0 %3531
      %v3533 = vmul.f32 %v3523, %v2054
      %v3534 = vmul.f32 %v3526, %v2054
      %v3535 = vmul.f32 %v3529, %v2054
      %v3536 = vmul.f32 %v3532, %v2054
      %v3537 = vadd.f32 %v3533, 1e-05
      %v3538 = vadd.f32 %v3534, 1e-05
      %v3539 = vadd.f32 %v3535, 1e-05
      %v3540 = vadd.f32 %v3536, 1e-05
      %v3541 = vrsqrt.pop %v3537
      %v3542 = vrsqrt.pop %v3538
      %v3543 = vrsqrt.pop %v3539
      %v3544 = vrsqrt.pop %v3540
      %v3545 = vmul.f32 %v3513, %v3541
      %v3546 = vmul.f32 %v3514, %v3542
      %v3547 = vmul.f32 %v3515, %v3543
      %v3548 = vmul.f32 %v3516, %v3544
      %v3549 = vlaneseq
      %v3550 = vshrl.u32 %v3549, 7
      %v3551 = vsub.s32 0, %v3550
      %v3552 = vrot.slane %v3495, %v3551
      %v3553 = vmul.f32 %v3545, %v3552
      %v3554 = vmul.f32 %v3546, %v3552
      %v3555 = vmul.f32 %v3547, %v3552
      %v3556 = vmul.f32 %v3548, %v3552
      %v3557 = vlaneseq
      %v3558 = vshrl.u32 %v3557, 7
      %v3559 = vsub.s32 0, %v3558
      %v3560 = vrot.slane %v3496, %v3559
      %v3561 = vadd.f32 %v3553, %v3560
      %v3562 = vadd.f32 %v3554, %v3560
      %v3563 = vadd.f32 %v3555, %v3560
      %v3564 = vadd.f32 %v3556, %v3560
      %v3565 = vld [vmem:[%s12] sm:$0xf]
      %v3566 = vld [vmem:[%s12 + $0x4] sm:$0xf]
      %v3567 = vld [vmem:[%s12 + $0x8] sm:$0xf]
      %v3568 = vld [vmem:[%s12 + $0xc] sm:$0xf]
      %v3569 = vld [vmem:[%s5] sm:$0x1]
      %v3570 = vpack.c.bf16 %v3562, %v3561
      %v3571 = vpack.c.bf16 %v3564, %v3563
      %v3572 = vlaneseq
      %v3573 = vshrl.u32 %v3572, 7
      %v3574 = vsub.s32 0, %v3573
      %v3575 = vrot.slane %v3569, %v3574
      %v3580 = vunpack.c.l.b16 %v3565
      %v3581 = vunpack.c.l.b16 %v3566
      %v3582 = vunpack.c.l.b16 %v3567
      %v3583 = vunpack.c.l.b16 %v3568
      %v3584 = vpack.c.b16 %v3581, %v3580
      %v3585 = vpack.c.b16 %v3583, %v3582
      %v3589 = vsel %vm1011, %v3570, 0
      %v3592 = vsel %vm1011, %v3571, 0
      %3594 = vmatprep.subr.bf16.mxu0 0
      %3595 = vmatpush1.bf16.msra.mxu0 %v3584
      %3596 = vmatprep.subr.bf16.mxu0 0
      %3597 = vmatpush1.bf16.msra.mxu0 %v3585
      %3598 = vmatprep.subr.bf16.mxu0 0
      %3599 = vmatpush1.bf16.msra.mxu0 0
      %3600 = vmatprep.subr.bf16.mxu0 0
      %3601 = vmatpush1.bf16.msra.mxu0 0
      %3602 = vmatprep.subr.bf16.mxu0 0
      %3603 = vmatpush1.bf16.msra.mxu0 0
      %3604 = vmatprep.subr.bf16.mxu0 0
      %3605 = vmatpush1.bf16.msra.mxu0 0
      %3606 = vmatprep.subr.bf16.mxu0 0
      %3607 = vmatpush1.bf16.msra.mxu0 0
      %3608 = vmatprep.subr.bf16.mxu0 0
      %3609 = vmatpush1.bf16.msra.mxu0 0
      %3610 = vmatprep.subr.bf16.mxu0 0
      %3611 = vmatpush1.bf16.msra.mxu0 0
      %3612 = vmatprep.subr.bf16.mxu0 0
      %3613 = vmatpush1.bf16.msra.mxu0 0
      %3614 = vmatprep.subr.bf16.mxu0 0
      %3615 = vmatpush1.bf16.msra.mxu0 0
      %3616 = vmatprep.subr.bf16.mxu0 0
      %3617 = vmatpush1.bf16.msra.mxu0 0
      %3618 = vmatprep.subr.bf16.mxu0 0
      %3619 = vmatpush1.bf16.msra.mxu0 0
      %3620 = vmatprep.subr.bf16.mxu0 0
      %3621 = vmatpush1.bf16.msra.mxu0 0
      %3622 = vmatprep.subr.bf16.mxu0 0
      %3623 = vmatpush1.bf16.msra.mxu0 0
      %3624 = vmatprep.subr.bf16.mxu0 0
      %3625 = vmatpush1.bf16.msra.mxu0 0
      %3626 = vmatprep.mubr.bf16.mxu0 0
      %3627 = vmatmul.mubr.bf16.gmra.mrb[0].mxu0 %v3589
      %v3628 = vpop.f32.mrb[0].mxu0
      %v3629 = vadd.f32 %v3575, %v3628
      %v3630 = vpop.f32.mrb[0].mxu0
      %v3631 = vpop.f32.mrb[0].mxu0
      %v3632 = vadd.f32 %v3575, %v3631
      %v3633 = vpop.f32.mrb[0].mxu0
      %3634 = vmatprep.mubr.bf16.mxu0 0
      %3635 = vmatmul.mubr.bf16.gmra.mrb[0].mxu0 %v3592
      %v3636 = vpop.f32.mrb[0].mxu0
      %v3637 = vadd.f32 %v3575, %v3636
      %v3638 = vpop.f32.mrb[0].mxu0
      %v3639 = vpop.f32.mrb[0].mxu0
      %v3640 = vadd.f32 %v3575, %v3639
      %v3641 = vpop.f32.mrb[0].mxu0
      %3642 = vdwg.mxu0
      %v3643 = vld [vmem:[%s12 + $0x10] sm:$0xf]
      %v3644 = vld [vmem:[%s12 + $0x14] sm:$0xf]
      %v3645 = vld [vmem:[%s12 + $0x18] sm:$0xf]
      %v3646 = vld [vmem:[%s12 + $0x1c] sm:$0xf]
      %v3647 = vld [vmem:[%s5 + $0x1] sm:$0x1]
      %v3648 = vlaneseq
      %v3649 = vshrl.u32 %v3648, 7
      %v3650 = vsub.s32 0, %v3649
      %v3651 = vrot.slane %v3647, %v3650
      %v3656 = vunpack.c.l.b16 %v3643
      %v3657 = vunpack.c.l.b16 %v3644
      %v3658 = vunpack.c.l.b16 %v3645
      %v3659 = vunpack.c.l.b16 %v3646
      %v3660 = vpack.c.b16 %v3657, %v3656
      %v3661 = vpack.c.b16 %v3659, %v3658
      %3664 = vmatprep.subr.bf16.mxu0 0
      %3665 = vmatpush1.bf16.msra.mxu0 %v3660
      %3666 = vmatprep.subr.bf16.mxu0 0
      %3667 = vmatpush1.bf16.msra.mxu0 %v3661
      %3668 = vmatprep.subr.bf16.mxu0 0
      %3669 = vmatpush1.bf16.msra.mxu0 0
      %3670 = vmatprep.subr.bf16.mxu0 0
      %3671 = vmatpush1.bf16.msra.mxu0 0
      %3672 = vmatprep.subr.bf16.mxu0 0
      %3673 = vmatpush1.bf16.msra.mxu0 0
      %3674 = vmatprep.subr.bf16.mxu0 0
      %3675 = vmatpush1.bf16.msra.mxu0 0
      %3676 = vmatprep.subr.bf16.mxu0 0
      %3677 = vmatpush1.bf16.msra.mxu0 0
      %3678 = vmatprep.subr.bf16.mxu0 0
      %3679 = vmatpush1.bf16.msra.mxu0 0
      %3680 = vmatprep.subr.bf16.mxu0 0
      %3681 = vmatpush1.bf16.msra.mxu0 0
      %3682 = vmatprep.subr.bf16.mxu0 0
      %3683 = vmatpush1.bf16.msra.mxu0 0
      %3684 = vmatprep.subr.bf16.mxu0 0
      %3685 = vmatpush1.bf16.msra.mxu0 0
      %3686 = vmatprep.subr.bf16.mxu0 0
      %3687 = vmatpush1.bf16.msra.mxu0 0
      %3688 = vmatprep.subr.bf16.mxu0 0
      %3689 = vmatpush1.bf16.msra.mxu0 0
      %3690 = vmatprep.subr.bf16.mxu0 0
      %3691 = vmatpush1.bf16.msra.mxu0 0
      %3692 = vmatprep.subr.bf16.mxu0 0
      %3693 = vmatpush1.bf16.msra.mxu0 0
      %3694 = vmatprep.subr.bf16.mxu0 0
      %3695 = vmatpush1.bf16.msra.mxu0 0
      %3696 = vmatprep.mubr.bf16.mxu0 0
      %3697 = vmatmul.mubr.bf16.gmra.mrb[0].mxu0 %v3589
      %v3698 = vpop.f32.mrb[0].mxu0
      %v3699 = vadd.f32 %v3651, %v3698
      %v3700 = vpop.f32.mrb[0].mxu0
      %v3701 = vpop.f32.mrb[0].mxu0
      %v3702 = vadd.f32 %v3651, %v3701
      %v3703 = vpop.f32.mrb[0].mxu0
      %3704 = vmatprep.mubr.bf16.mxu0 0
      %3705 = vmatmul.mubr.bf16.gmra.mrb[0].mxu0 %v3592
      %v3706 = vpop.f32.mrb[0].mxu0
      %v3707 = vadd.f32 %v3651, %v3706
      %v3708 = vpop.f32.mrb[0].mxu0
      %v3709 = vpop.f32.mrb[0].mxu0
      %v3710 = vadd.f32 %v3651, %v3709
      %v3711 = vpop.f32.mrb[0].mxu0
      %3712 = vdwg.mxu0
      %v3713 = vxor.u32 %v3699, 2147483648
      %v3714 = vxor.u32 %v3702, 2147483648
      %v3715 = vxor.u32 %v3707, 2147483648
      %v3716 = vxor.u32 %v3710, 2147483648
      %v3717 = vmul.f32 %v3713, 1.442695
      %v3718 = vpow.pop %v3717
      %v3719 = vmul.f32 %v3714, 1.442695
      %v3720 = vpow.pop %v3719
      %v3721 = vmul.f32 %v3715, 1.442695
      %v3722 = vpow.pop %v3721
      %v3723 = vmul.f32 %v3716, 1.442695
      %v3724 = vpow.pop %v3723
      %v3725 = vadd.f32 %v3718, 1.0
      %v3726 = vadd.f32 %v3720, 1.0
      %v3727 = vadd.f32 %v3722, 1.0
      %v3728 = vadd.f32 %v3724, 1.0
      %v3729 = vrcp.pop %v3725
      %v3730 = vmul.f32 1.0, %v3729
      %v3731 = vrcp.pop %v3726
      %v3732 = vmul.f32 1.0, %v3731
      %v3733 = vrcp.pop %v3727
      %v3734 = vmul.f32 1.0, %v3733
      %v3735 = vrcp.pop %v3728
      %v3736 = vmul.f32 1.0, %v3735
      %v3737 = vmul.f32 %v3629, %v3730
      %v3738 = vmul.f32 %v3632, %v3732
      %v3739 = vmul.f32 %v3637, %v3734
      %v3740 = vmul.f32 %v3640, %v3736
      %v3741 = vrot.slane %v3737, 5
      %v3742 = vrot.slane %v3738, 5
      %v3743 = vrot.slane %v3739, 5
      %v3744 = vrot.slane %v3740, 5
      %v3745 = vlaneseq
      %v3746 = vshrl.u32 %v3745, 7
      %vm3747 = vcmp.lt.s32.totalorder %v3746, 3
      %v3748 = vsel %vm3747, %v3743, %v3744
      %v3749 = vsel %vm3747, %v3742, %v3743
      %v3750 = vsel %vm3747, %v3741, %v3742
      %v3751 = vsel %vm3747, %v3744, %v3741
      %3752 = vset.pattern.permute.xlu0 2
      %3753 = vperm.xlu0 %3752, %v469
      %v3754 = vpop.permute.xlu0 %3753
      %3756 = vset.pattern.permute.xlu0 2
      %3757 = vperm.xlu0 %3756, %v470
      %v3758 = vpop.permute.xlu0 %3757
      %3760 = vset.pattern.permute.xlu0 2
      %3761 = vperm.xlu0 %3760, %v471
      %v3762 = vpop.permute.xlu0 %3761
      %3764 = vset.pattern.permute.xlu0 2
      %3765 = vperm.xlu0 %3764, %v472
      %v3766 = vpop.permute.xlu0 %3765
      %v3768 = vmul.f32 %v3751, %v3754
      %v3769 = vmul.f32 %v3750, %v3758
      %v3770 = vmul.f32 %v3749, %v3762
      %v3771 = vmul.f32 %v3748, %v3766
      %v3772 = vld [vmem:[%s5 + $0x3] sm:$0x1]
      %v3773 = vlaneseq
      %v3774 = vshrl.u32 %v3773, 7
      %v3775 = vsub.s32 0, %v3774
      %v3776 = vrot.slane %v3772, %v3775
      %v3777 = vmul.f32 %v3768, %v3776
      %v3778 = vmul.f32 %v3769, %v3776
      %v3779 = vmul.f32 %v3770, %v3776
      %v3780 = vmul.f32 %v3771, %v3776
      %v3781 = vrot.slane %v3737, 6
      %v3782 = vrot.slane %v3738, 6
      %v3783 = vrot.slane %v3739, 6
      %v3784 = vrot.slane %v3740, 6
      %vm3785 = vcmp.lt.s32.totalorder %v3746, 2
      %v3786 = vsel %vm3785, %v3783, %v3784
      %v3787 = vsel %vm3785, %v3782, %v3783
      %v3788 = vsel %vm3785, %v3781, %v3782
      %v3789 = vsel %vm3785, %v3784, %v3781
      %3790 = vset.pattern.permute.xlu0 3
      %3791 = vperm.xlu0 %3790, %v469
      %v3792 = vpop.permute.xlu0 %3791
      %3794 = vset.pattern.permute.xlu0 3
      %3795 = vperm.xlu0 %3794, %v470
      %v3796 = vpop.permute.xlu0 %3795
      %3798 = vset.pattern.permute.xlu0 3
      %3799 = vperm.xlu0 %3798, %v471
      %v3800 = vpop.permute.xlu0 %3799
      %3802 = vset.pattern.permute.xlu0 3
      %3803 = vperm.xlu0 %3802, %v472
      %v3804 = vpop.permute.xlu0 %3803
      %v3806 = vmul.f32 %v3789, %v3792
      %v3807 = vmul.f32 %v3788, %v3796
      %v3808 = vmul.f32 %v3787, %v3800
      %v3809 = vmul.f32 %v3786, %v3804
      %v3810 = vld [vmem:[%s5 + $0x4] sm:$0x1]
      %v3811 = vlaneseq
      %v3812 = vshrl.u32 %v3811, 7
      %v3813 = vsub.s32 0, %v3812
      %v3814 = vrot.slane %v3810, %v3813
      %v3815 = vmul.f32 %v3806, %v3814
      %v3816 = vmul.f32 %v3807, %v3814
      %v3817 = vmul.f32 %v3808, %v3814
      %v3818 = vmul.f32 %v3809, %v3814
      %v3819 = vadd.f32 %v3777, %v3815
      %v3820 = vadd.f32 %v3778, %v3816
      %v3821 = vadd.f32 %v3779, %v3817
      %v3822 = vadd.f32 %v3780, %v3818
      %v3823 = vrot.slane %v3737, 7
      %v3824 = vrot.slane %v3738, 7
      %v3825 = vrot.slane %v3739, 7
      %v3826 = vrot.slane %v3740, 7
      %vm3827 = vcmp.lt.s32.totalorder %v3746, 1
      %v3828 = vsel %vm3827, %v3825, %v3826
      %v3829 = vsel %vm3827, %v3824, %v3825
      %v3830 = vsel %vm3827, %v3823, %v3824
      %v3831 = vsel %vm3827, %v3826, %v3823
      %3832 = vset.pattern.permute.xlu0 4
      %3833 = vperm.xlu0 %3832, %v469
      %v3834 = vpop.permute.xlu0 %3833
      %3836 = vset.pattern.permute.xlu0 4
      %3837 = vperm.xlu0 %3836, %v470
      %v3838 = vpop.permute.xlu0 %3837
      %3840 = vset.pattern.permute.xlu0 4
      %3841 = vperm.xlu0 %3840, %v471
      %v3842 = vpop.permute.xlu0 %3841
      %3844 = vset.pattern.permute.xlu0 4
      %3845 = vperm.xlu0 %3844, %v472
      %v3846 = vpop.permute.xlu0 %3845
      %v3848 = vmul.f32 %v3831, %v3834
      %v3849 = vmul.f32 %v3830, %v3838
      %v3850 = vmul.f32 %v3829, %v3842
      %v3851 = vmul.f32 %v3828, %v3846
      %v3852 = vld [vmem:[%s5 + $0x5] sm:$0x1]
      %v3853 = vlaneseq
      %v3854 = vshrl.u32 %v3853, 7
      %v3855 = vsub.s32 0, %v3854
      %v3856 = vrot.slane %v3852, %v3855
      %v3857 = vmul.f32 %v3848, %v3856
      %v3858 = vmul.f32 %v3849, %v3856
      %v3859 = vmul.f32 %v3850, %v3856
      %v3860 = vmul.f32 %v3851, %v3856
      %v3861 = vadd.f32 %v3819, %v3857
      %v3862 = vadd.f32 %v3820, %v3858
      %v3863 = vadd.f32 %v3821, %v3859
      %v3864 = vadd.f32 %v3822, %v3860
      %3865 = vset.pattern.permute.xlu0 5
      %3866 = vperm.xlu0 %3865, %v469
      %v3867 = vpop.permute.xlu0 %3866
      %3869 = vset.pattern.permute.xlu0 5
      %3870 = vperm.xlu0 %3869, %v470
      %v3871 = vpop.permute.xlu0 %3870
      %3873 = vset.pattern.permute.xlu0 5
      %3874 = vperm.xlu0 %3873, %v471
      %v3875 = vpop.permute.xlu0 %3874
      %3877 = vset.pattern.permute.xlu0 5
      %3878 = vperm.xlu0 %3877, %v472
      %v3879 = vpop.permute.xlu0 %3878
      %v3881 = vmul.f32 %v3737, %v3867
      %v3882 = vmul.f32 %v3738, %v3871
      %v3883 = vmul.f32 %v3739, %v3875
      %v3884 = vmul.f32 %v3740, %v3879
      %v3885 = vld [vmem:[%s5 + $0x6] sm:$0x1]
      %v3886 = vlaneseq
      %v3887 = vshrl.u32 %v3886, 7
      %v3888 = vsub.s32 0, %v3887
      %v3889 = vrot.slane %v3885, %v3888
      %v3890 = vmul.f32 %v3881, %v3889
      %v3891 = vmul.f32 %v3882, %v3889
      %v3892 = vmul.f32 %v3883, %v3889
      %v3893 = vmul.f32 %v3884, %v3889
      %v3894 = vadd.f32 %v3861, %v3890
      %v3895 = vadd.f32 %v3862, %v3891
      %v3896 = vadd.f32 %v3863, %v3892
      %v3897 = vadd.f32 %v3864, %v3893
      %v3898 = vrot.slane %v3737, 1
      %v3899 = vrot.slane %v3738, 1
      %v3900 = vrot.slane %v3739, 1
      %v3901 = vrot.slane %v3740, 1
      %vm3902 = vcmp.lt.s32.totalorder %v3746, 7
      %v3903 = vsel %vm3902, %v3900, %v3901
      %v3904 = vsel %vm3902, %v3899, %v3900
      %v3905 = vsel %vm3902, %v3898, %v3899
      %v3906 = vsel %vm3902, %v3901, %v3898
      %3907 = vset.pattern.permute.xlu0 6
      %3908 = vperm.xlu0 %3907, %v469
      %v3909 = vpop.permute.xlu0 %3908
      %3911 = vset.pattern.permute.xlu0 6
      %3912 = vperm.xlu0 %3911, %v470
      %v3913 = vpop.permute.xlu0 %3912
      %3915 = vset.pattern.permute.xlu0 6
      %3916 = vperm.xlu0 %3915, %v471
      %v3917 = vpop.permute.xlu0 %3916
      %3919 = vset.pattern.permute.xlu0 6
      %3920 = vperm.xlu0 %3919, %v472
      %v3921 = vpop.permute.xlu0 %3920
      %v3923 = vmul.f32 %v3905, %v3909
      %v3924 = vmul.f32 %v3904, %v3913
      %v3925 = vmul.f32 %v3903, %v3917
      %v3926 = vmul.f32 %v3906, %v3921
      %v3927 = vld [vmem:[%s5 + $0x7] sm:$0x1]
      %v3928 = vlaneseq
      %v3929 = vshrl.u32 %v3928, 7
      %v3930 = vsub.s32 0, %v3929
      %v3931 = vrot.slane %v3927, %v3930
      %v3932 = vmul.f32 %v3923, %v3931
      %v3933 = vmul.f32 %v3924, %v3931
      %v3934 = vmul.f32 %v3925, %v3931
      %v3935 = vmul.f32 %v3926, %v3931
      %v3936 = vadd.f32 %v3894, %v3932
      %v3937 = vadd.f32 %v3895, %v3933
      %v3938 = vadd.f32 %v3896, %v3934
      %v3939 = vadd.f32 %v3897, %v3935
      %v3940 = vrot.slane %v3737, 2
      %v3941 = vrot.slane %v3738, 2
      %v3942 = vrot.slane %v3739, 2
      %v3943 = vrot.slane %v3740, 2
      %vm3944 = vcmp.lt.s32.totalorder %v3746, 6
      %v3945 = vsel %vm3944, %v3942, %v3943
      %v3946 = vsel %vm3944, %v3941, %v3942
      %v3947 = vsel %vm3944, %v3940, %v3941
      %v3948 = vsel %vm3944, %v3943, %v3940
      %3949 = vset.pattern.permute.xlu0 7
      %3950 = vperm.xlu0 %3949, %v469
      %v3951 = vpop.permute.xlu0 %3950
      %3953 = vset.pattern.permute.xlu0 7
      %3954 = vperm.xlu0 %3953, %v470
      %v3955 = vpop.permute.xlu0 %3954
      %3957 = vset.pattern.permute.xlu0 7
      %3958 = vperm.xlu0 %3957, %v471
      %v3959 = vpop.permute.xlu0 %3958
      %3961 = vset.pattern.permute.xlu0 7
      %3962 = vperm.xlu0 %3961, %v472
      %v3963 = vpop.permute.xlu0 %3962
      %v3965 = vmul.f32 %v3947, %v3951
      %v3966 = vmul.f32 %v3946, %v3955
      %v3967 = vmul.f32 %v3945, %v3959
      %v3968 = vmul.f32 %v3948, %v3963
      %v3969 = vld [vmem:[%s5 + $0x8] sm:$0x1]
      %v3970 = vlaneseq
      %v3971 = vshrl.u32 %v3970, 7
      %v3972 = vsub.s32 0, %v3971
      %v3973 = vrot.slane %v3969, %v3972
      %v3974 = vmul.f32 %v3965, %v3973
      %v3975 = vmul.f32 %v3966, %v3973
      %v3976 = vmul.f32 %v3967, %v3973
      %v3977 = vmul.f32 %v3968, %v3973
      %v3978 = vadd.f32 %v3936, %v3974
      %v3979 = vadd.f32 %v3937, %v3975
      %v3980 = vadd.f32 %v3938, %v3976
      %v3981 = vadd.f32 %v3939, %v3977
      %v3982 = vrot.slane %v3737, 3
      %v3983 = vrot.slane %v3738, 3
      %v3984 = vrot.slane %v3739, 3
      %v3985 = vrot.slane %v3740, 3
      %vm3986 = vcmp.lt.s32.totalorder %v3746, 5
      %v3987 = vsel %vm3986, %v3984, %v3985
      %v3988 = vsel %vm3986, %v3983, %v3984
      %v3989 = vsel %vm3986, %v3982, %v3983
      %v3990 = vsel %vm3986, %v3985, %v3982
      %3991 = vset.pattern.permute.xlu0 8
      %3992 = vperm.xlu0 %3991, %v469
      %v3993 = vpop.permute.xlu0 %3992
      %3995 = vset.pattern.permute.xlu0 8
      %3996 = vperm.xlu0 %3995, %v470
      %v3997 = vpop.permute.xlu0 %3996
      %3999 = vset.pattern.permute.xlu0 8
      %4000 = vperm.xlu0 %3999, %v471
      %v4001 = vpop.permute.xlu0 %4000
      %4003 = vset.pattern.permute.xlu0 8
      %4004 = vperm.xlu0 %4003, %v472
      %v4005 = vpop.permute.xlu0 %4004
      %v4007 = vmul.f32 %v3989, %v3993
      %v4008 = vmul.f32 %v3988, %v3997
      %v4009 = vmul.f32 %v3987, %v4001
      %v4010 = vmul.f32 %v3990, %v4005
      %v4011 = vld [vmem:[%s5 + $0x9] sm:$0x1]
      %v4012 = vlaneseq
      %v4013 = vshrl.u32 %v4012, 7
      %v4014 = vsub.s32 0, %v4013
      %v4015 = vrot.slane %v4011, %v4014
      %v4016 = vmul.f32 %v4007, %v4015
      %v4017 = vmul.f32 %v4008, %v4015
      %v4018 = vmul.f32 %v4009, %v4015
      %v4019 = vmul.f32 %v4010, %v4015
      %v4020 = vadd.f32 %v3978, %v4016
      %v4021 = vadd.f32 %v3979, %v4017
      %v4022 = vadd.f32 %v3980, %v4018
      %v4023 = vadd.f32 %v3981, %v4019
      %v4024 = vld [vmem:[%s5 + $0x2] sm:$0x1]
      %v4025 = vlaneseq
      %v4026 = vshrl.u32 %v4025, 7
      %v4027 = vsub.s32 0, %v4026
      %v4028 = vrot.slane %v4024, %v4027
      %v4029 = vadd.f32 %v4020, %v4028
      %v4030 = vadd.f32 %v4021, %v4028
      %v4031 = vadd.f32 %v4022, %v4028
      %v4032 = vadd.f32 %v4023, %v4028
      %v4033 = vld [vmem:[%s10 + $0x50] sm:$0xf]
      %v4034 = vld [vmem:[%s10 + $0x54] sm:$0xf]
      %v4035 = vld [vmem:[%s10 + $0x58] sm:$0xf]
      %v4036 = vld [vmem:[%s10 + $0x5c] sm:$0xf]
      %v4037 = vld [vmem:[%s10 + $0x60] sm:$0xf]
      %v4038 = vld [vmem:[%s10 + $0x64] sm:$0xf]
      %v4039 = vld [vmem:[%s10 + $0x68] sm:$0xf]
      %v4040 = vld [vmem:[%s10 + $0x6c] sm:$0xf]
      %v4041 = vxor.u32 %v4029, 2147483648
      %v4042 = vxor.u32 %v4030, 2147483648
      %v4043 = vxor.u32 %v4031, 2147483648
      %v4044 = vxor.u32 %v4032, 2147483648
      %v4045 = vmul.f32 %v4041, 1.442695
      %v4046 = vpow.pop %v4045
      %v4047 = vmul.f32 %v4042, 1.442695
      %v4048 = vpow.pop %v4047
      %v4049 = vmul.f32 %v4043, 1.442695
      %v4050 = vpow.pop %v4049
      %v4051 = vmul.f32 %v4044, 1.442695
      %v4052 = vpow.pop %v4051
      %v4053 = vadd.f32 %v4046, 1.0
      %v4054 = vadd.f32 %v4048, 1.0
      %v4055 = vadd.f32 %v4050, 1.0
      %v4056 = vadd.f32 %v4052, 1.0
      %v4057 = vrcp.pop %v4053
      %v4058 = vmul.f32 1.0, %v4057
      %v4059 = vrcp.pop %v4054
      %v4060 = vmul.f32 1.0, %v4059
      %v4061 = vrcp.pop %v4055
      %v4062 = vmul.f32 1.0, %v4061
      %v4063 = vrcp.pop %v4056
      %v4064 = vmul.f32 1.0, %v4063
      %v4065 = vmul.f32 %v4029, %v4058
      %v4066 = vmul.f32 %v4030, %v4060
      %v4067 = vmul.f32 %v4031, %v4062
      %v4068 = vmul.f32 %v4032, %v4064
      %v4069 = vld [vmem:[%s3 + $0xa] sm:$0x1]
      %v4070 = vpack.c.bf16 %v4066, %v4065
      %v4071 = vpack.c.bf16 %v4068, %v4067
      %v4072 = vlaneseq
      %v4073 = vshrl.u32 %v4072, 7
      %v4074 = vsub.s32 0, %v4073
      %v4075 = vrot.slane %v4069, %v4074
      %v4084 = vunpack.c.l.b16 %v4033
      %v4085 = vunpack.c.l.b16 %v4034
      %v4086 = vunpack.c.l.b16 %v4035
      %v4087 = vunpack.c.l.b16 %v4036
      %v4088 = vunpack.c.l.b16 %v4037
      %v4089 = vunpack.c.l.b16 %v4038
      %v4090 = vunpack.c.l.b16 %v4039
      %v4091 = vunpack.c.l.b16 %v4040
      %v4092 = vpack.c.b16 %v4085, %v4084
      %v4093 = vpack.c.b16 %v4087, %v4086
      %v4094 = vpack.c.b16 %v4089, %v4088
      %v4095 = vpack.c.b16 %v4091, %v4090
      %vm4100 = vcmask 523264
      %v4102 = vsel %vm4100, %v4070, 0
      %v4105 = vsel %vm4100, %v4071, 0
      %4107 = vmatprep.subr.bf16.mxu0 0
      %4108 = vmatpush1.bf16.msra.mxu0 %v4092
      %4109 = vmatprep.subr.bf16.mxu0 0
      %4110 = vmatpush1.bf16.msra.mxu0 %v4093
      %4111 = vmatprep.subr.bf16.mxu0 0
      %4112 = vmatpush1.bf16.msra.mxu0 %v4094
      %4113 = vmatprep.subr.bf16.mxu0 0
      %4114 = vmatpush1.bf16.msra.mxu0 %v4095
      %4115 = vmatprep.subr.bf16.mxu0 0
      %4116 = vmatpush1.bf16.msra.mxu0 0
      %4117 = vmatprep.subr.bf16.mxu0 0
      %4118 = vmatpush1.bf16.msra.mxu0 0
      %4119 = vmatprep.subr.bf16.mxu0 0
      %4120 = vmatpush1.bf16.msra.mxu0 0
      %4121 = vmatprep.subr.bf16.mxu0 0
      %4122 = vmatpush1.bf16.msra.mxu0 0
      %4123 = vmatprep.subr.bf16.mxu0 0
      %4124 = vmatpush1.bf16.msra.mxu0 0
      %4125 = vmatprep.subr.bf16.mxu0 0
      %4126 = vmatpush1.bf16.msra.mxu0 0
      %4127 = vmatprep.subr.bf16.mxu0 0
      %4128 = vmatpush1.bf16.msra.mxu0 0
      %4129 = vmatprep.subr.bf16.mxu0 0
      %4130 = vmatpush1.bf16.msra.mxu0 0
      %4131 = vmatprep.subr.bf16.mxu0 0
      %4132 = vmatpush1.bf16.msra.mxu0 0
      %4133 = vmatprep.subr.bf16.mxu0 0
      %4134 = vmatpush1.bf16.msra.mxu0 0
      %4135 = vmatprep.subr.bf16.mxu0 0
      %4136 = vmatpush1.bf16.msra.mxu0 0
      %4137 = vmatprep.subr.bf16.mxu0 0
      %4138 = vmatpush1.bf16.msra.mxu0 0
      %4139 = vmatprep.mubr.bf16.mxu0 0
      %4140 = vmatmul.mubr.bf16.gmra.mrb[0].mxu0 %v4102
      %v4141 = vpop.f32.mrb[0].mxu0
      %v4142 = vadd.f32 %v4075, %v4141
      %v4143 = vpop.f32.mrb[0].mxu0
      %v4144 = vpop.f32.mrb[0].mxu0
      %v4145 = vadd.f32 %v4075, %v4144
      %v4146 = vpop.f32.mrb[0].mxu0
      %4147 = vmatprep.mubr.bf16.mxu0 0
      %4148 = vmatmul.mubr.bf16.gmra.mrb[0].mxu0 %v4105
      %v4149 = vpop.f32.mrb[0].mxu0
      %v4150 = vadd.f32 %v4075, %v4149
      %v4151 = vpop.f32.mrb[0].mxu0
      %v4152 = vpop.f32.mrb[0].mxu0
      %v4153 = vadd.f32 %v4075, %v4152
      %v4154 = vpop.f32.mrb[0].mxu0
      %4155 = vdwg.mxu0
      %v4156 = vadd.f32 %v3491, %v4142
      %v4157 = vadd.f32 %v3492, %v4145
      %v4158 = vadd.f32 %v3493, %v4150
      %v4159 = vadd.f32 %v3494, %v4153
      %v4160 = vld [vmem:[%s3 + $0xb] sm:$0x1]
      %v4161 = vld [vmem:[%s3 + $0xc] sm:$0x1]
      %v4162 = vsel %vm1011, %v4156, 0.0
      %4163 = vadd.xlane.f32.xlu0 %v4162
      %v4164 = vpop.xlane.xlu0 %4163
      %v4165 = vsel %vm1011, %v4157, 0.0
      %4166 = vadd.xlane.f32.xlu0 %v4165
      %v4167 = vpop.xlane.xlu0 %4166
      %v4168 = vsel %vm1011, %v4158, 0.0
      %4169 = vadd.xlane.f32.xlu0 %v4168
      %v4170 = vpop.xlane.xlu0 %4169
      %v4171 = vsel %vm1011, %v4159, 0.0
      %4172 = vadd.xlane.f32.xlu0 %v4171
      %v4173 = vpop.xlane.xlu0 %4172
      %v4174 = vmul.f32 %v4164, %v2054
      %v4175 = vmul.f32 %v4167, %v2054
      %v4176 = vmul.f32 %v4170, %v2054
      %v4177 = vmul.f32 %v4173, %v2054
      %v4178 = vsub.f32 %v4156, %v4174
      %v4179 = vsub.f32 %v4157, %v4175
      %v4180 = vsub.f32 %v4158, %v4176
      %v4181 = vsub.f32 %v4159, %v4177
      %v4182 = vmul.f32 %v4178, %v4178
      %v4183 = vmul.f32 %v4179, %v4179
      %v4184 = vmul.f32 %v4180, %v4180
      %v4185 = vmul.f32 %v4181, %v4181
      %v4186 = vsel %vm1011, %v4182, 0.0
      %4187 = vadd.xlane.f32.xlu0 %v4186
      %v4188 = vpop.xlane.xlu0 %4187
      %v4189 = vsel %vm1011, %v4183, 0.0
      %4190 = vadd.xlane.f32.xlu0 %v4189
      %v4191 = vpop.xlane.xlu0 %4190
      %v4192 = vsel %vm1011, %v4184, 0.0
      %4193 = vadd.xlane.f32.xlu0 %v4192
      %v4194 = vpop.xlane.xlu0 %4193
      %v4195 = vsel %vm1011, %v4185, 0.0
      %4196 = vadd.xlane.f32.xlu0 %v4195
      %v4197 = vpop.xlane.xlu0 %4196
      %v4198 = vmul.f32 %v4188, %v2054
      %v4199 = vmul.f32 %v4191, %v2054
      %v4200 = vmul.f32 %v4194, %v2054
      %v4201 = vmul.f32 %v4197, %v2054
      %v4202 = vadd.f32 %v4198, 1e-05
      %v4203 = vadd.f32 %v4199, 1e-05
      %v4204 = vadd.f32 %v4200, 1e-05
      %v4205 = vadd.f32 %v4201, 1e-05
      %v4206 = vrsqrt.pop %v4202
      %v4207 = vrsqrt.pop %v4203
      %v4208 = vrsqrt.pop %v4204
      %v4209 = vrsqrt.pop %v4205
      %v4210 = vmul.f32 %v4178, %v4206
      %v4211 = vmul.f32 %v4179, %v4207
      %v4212 = vmul.f32 %v4180, %v4208
      %v4213 = vmul.f32 %v4181, %v4209
      %v4214 = vlaneseq
      %v4215 = vshrl.u32 %v4214, 7
      %v4216 = vsub.s32 0, %v4215
      %v4217 = vrot.slane %v4160, %v4216
      %v4218 = vmul.f32 %v4210, %v4217
      %v4219 = vmul.f32 %v4211, %v4217
      %v4220 = vmul.f32 %v4212, %v4217
      %v4221 = vmul.f32 %v4213, %v4217
      %v4222 = vlaneseq
      %v4223 = vshrl.u32 %v4222, 7
      %v4224 = vsub.s32 0, %v4223
      %v4225 = vrot.slane %v4161, %v4224
      %v4226 = vadd.f32 %v4218, %v4225
      %v4227 = vadd.f32 %v4219, %v4225
      %v4228 = vadd.f32 %v4220, %v4225
      %v4229 = vadd.f32 %v4221, %v4225
      %v4230 = vld [vmem:[%s9 + $0x10] sm:$0xf]
      %v4231 = vld [vmem:[%s9 + $0x14] sm:$0xf]
      %v4232 = vld [vmem:[%s9 + $0x18] sm:$0xf]
      %v4233 = vld [vmem:[%s9 + $0x1c] sm:$0xf]
      %v4234 = vld [vmem:[%s4 + $0x1] sm:$0x1]
      %v4235 = vpack.c.bf16 %v4227, %v4226
      %v4236 = vpack.c.bf16 %v4229, %v4228
      %v4237 = vlaneseq
      %v4238 = vshrl.u32 %v4237, 7
      %v4239 = vsub.s32 0, %v4238
      %v4240 = vrot.slane %v4234, %v4239
      %v4245 = vunpack.c.l.b16 %v4230
      %v4246 = vunpack.c.l.b16 %v4231
      %v4247 = vunpack.c.l.b16 %v4232
      %v4248 = vunpack.c.l.b16 %v4233
      %v4249 = vpack.c.b16 %v4246, %v4245
      %v4250 = vpack.c.b16 %v4248, %v4247
      %v4254 = vsel %vm1011, %v4235, 0
      %v4257 = vsel %vm1011, %v4236, 0
      %4259 = vmatprep.subr.bf16.mxu0 0
      %4260 = vmatpush1.bf16.msra.mxu0 %v4249
      %4261 = vmatprep.subr.bf16.mxu0 0
      %4262 = vmatpush1.bf16.msra.mxu0 %v4250
      %4263 = vmatprep.subr.bf16.mxu0 0
      %4264 = vmatpush1.bf16.msra.mxu0 0
      %4265 = vmatprep.subr.bf16.mxu0 0
      %4266 = vmatpush1.bf16.msra.mxu0 0
      %4267 = vmatprep.subr.bf16.mxu0 0
      %4268 = vmatpush1.bf16.msra.mxu0 0
      %4269 = vmatprep.subr.bf16.mxu0 0
      %4270 = vmatpush1.bf16.msra.mxu0 0
      %4271 = vmatprep.subr.bf16.mxu0 0
      %4272 = vmatpush1.bf16.msra.mxu0 0
      %4273 = vmatprep.subr.bf16.mxu0 0
      %4274 = vmatpush1.bf16.msra.mxu0 0
      %4275 = vmatprep.subr.bf16.mxu0 0
      %4276 = vmatpush1.bf16.msra.mxu0 0
      %4277 = vmatprep.subr.bf16.mxu0 0
      %4278 = vmatpush1.bf16.msra.mxu0 0
      %4279 = vmatprep.subr.bf16.mxu0 0
      %4280 = vmatpush1.bf16.msra.mxu0 0
      %4281 = vmatprep.subr.bf16.mxu0 0
      %4282 = vmatpush1.bf16.msra.mxu0 0
      %4283 = vmatprep.subr.bf16.mxu0 0
      %4284 = vmatpush1.bf16.msra.mxu0 0
      %4285 = vmatprep.subr.bf16.mxu0 0
      %4286 = vmatpush1.bf16.msra.mxu0 0
      %4287 = vmatprep.subr.bf16.mxu0 0
      %4288 = vmatpush1.bf16.msra.mxu0 0
      %4289 = vmatprep.subr.bf16.mxu0 0
      %4290 = vmatpush1.bf16.msra.mxu0 0
      %4291 = vmatprep.mubr.bf16.mxu0 0
      %4292 = vmatmul.mubr.bf16.gmra.mrb[0].mxu0 %v4254
      %v4293 = vpop.f32.mrb[0].mxu0
      %v4294 = vadd.f32 %v4240, %v4293
      %v4295 = vpop.f32.mrb[0].mxu0
      %v4296 = vpop.f32.mrb[0].mxu0
      %v4297 = vadd.f32 %v4240, %v4296
      %v4298 = vpop.f32.mrb[0].mxu0
      %4299 = vmatprep.mubr.bf16.mxu0 0
      %4300 = vmatmul.mubr.bf16.gmra.mrb[0].mxu0 %v4257
      %v4301 = vpop.f32.mrb[0].mxu0
      %v4302 = vadd.f32 %v4240, %v4301
      %v4303 = vpop.f32.mrb[0].mxu0
      %v4304 = vpop.f32.mrb[0].mxu0
      %v4305 = vadd.f32 %v4240, %v4304
      %v4306 = vpop.f32.mrb[0].mxu0
      %4307 = vdwg.mxu0
      %v4308 = vxor.u32 %v4294, 2147483648
      %v4309 = vxor.u32 %v4297, 2147483648
      %v4310 = vxor.u32 %v4302, 2147483648
      %v4311 = vxor.u32 %v4305, 2147483648
      %v4312 = vmul.f32 %v4308, 1.442695
      %v4313 = vpow.pop %v4312
      %v4314 = vmul.f32 %v4309, 1.442695
      %v4315 = vpow.pop %v4314
      %v4316 = vmul.f32 %v4310, 1.442695
      %v4317 = vpow.pop %v4316
      %v4318 = vmul.f32 %v4311, 1.442695
      %v4319 = vpow.pop %v4318
      %v4320 = vadd.f32 %v4313, 1.0
      %v4321 = vadd.f32 %v4315, 1.0
      %v4322 = vadd.f32 %v4317, 1.0
      %v4323 = vadd.f32 %v4319, 1.0
      %v4324 = vrcp.pop %v4320
      %v4325 = vmul.f32 1.0, %v4324
      %v4326 = vrcp.pop %v4321
      %v4327 = vmul.f32 1.0, %v4326
      %v4328 = vrcp.pop %v4322
      %v4329 = vmul.f32 1.0, %v4328
      %v4330 = vrcp.pop %v4323
      %v4331 = vmul.f32 1.0, %v4330
      %v4332 = vmul.f32 %v4294, %v4325
      %v4333 = vmul.f32 %v4297, %v4327
      %v4334 = vmul.f32 %v4302, %v4329
      %v4335 = vmul.f32 %v4305, %v4331
      %v4336 = vld [vmem:[%s10 + $0x70] sm:$0xf]
      %v4337 = vld [vmem:[%s10 + $0x74] sm:$0xf]
      %v4338 = vld [vmem:[%s10 + $0x78] sm:$0xf]
      %v4339 = vld [vmem:[%s10 + $0x7c] sm:$0xf]
      %v4340 = vld [vmem:[%s10 + $0x80] sm:$0xf]
      %v4341 = vld [vmem:[%s10 + $0x84] sm:$0xf]
      %v4342 = vld [vmem:[%s10 + $0x88] sm:$0xf]
      %v4343 = vld [vmem:[%s10 + $0x8c] sm:$0xf]
      %v4344 = vld [vmem:[%s10 + $0x90] sm:$0xf]
      %v4345 = vld [vmem:[%s10 + $0x94] sm:$0xf]
      %v4346 = vld [vmem:[%s10 + $0x98] sm:$0xf]
      %v4347 = vld [vmem:[%s10 + $0x9c] sm:$0xf]
      %v4348 = vld [vmem:[%s10 + $0xa0] sm:$0xf]
      %v4349 = vld [vmem:[%s10 + $0xa4] sm:$0xf]
      %v4350 = vld [vmem:[%s10 + $0xa8] sm:$0xf]
      %v4351 = vld [vmem:[%s10 + $0xac] sm:$0xf]
      %v4352 = vld [vmem:[%s3 + $0xd] sm:$0x1]
      %v4353 = vpack.c.bf16 %v4333, %v4332
      %v4354 = vpack.c.bf16 %v4335, %v4334
      %v4355 = vlaneseq
      %v4356 = vshrl.u32 %v4355, 7
      %v4357 = vsub.s32 0, %v4356
      %v4358 = vrot.slane %v4352, %v4357
      %v4375 = vunpack.c.l.b16 %v4336
      %v4376 = vunpack.c.l.b16 %v4337
      %v4377 = vunpack.c.l.b16 %v4338
      %v4378 = vunpack.c.l.b16 %v4339
      %v4379 = vunpack.c.l.b16 %v4340
      %v4380 = vunpack.c.l.b16 %v4341
      %v4381 = vunpack.c.l.b16 %v4342
      %v4382 = vunpack.c.l.b16 %v4343
      %v4383 = vunpack.c.l.b16 %v4344
      %v4384 = vunpack.c.l.b16 %v4345
      %v4385 = vunpack.c.l.b16 %v4346
      %v4386 = vunpack.c.l.b16 %v4347
      %v4387 = vunpack.c.l.b16 %v4348
      %v4388 = vunpack.c.l.b16 %v4349
      %v4389 = vunpack.c.l.b16 %v4350
      %v4390 = vunpack.c.l.b16 %v4351
      %v4391 = vpack.c.b16 %v4376, %v4375
      %v4392 = vpack.c.b16 %v4378, %v4377
      %v4393 = vpack.c.b16 %v4380, %v4379
      %v4394 = vpack.c.b16 %v4382, %v4381
      %v4395 = vpack.c.b16 %v4384, %v4383
      %v4396 = vpack.c.b16 %v4386, %v4385
      %v4397 = vpack.c.b16 %v4388, %v4387
      %v4398 = vpack.c.b16 %v4390, %v4389
      %4407 = vmatprep.subr.bf16.mxu0 0
      %4408 = vmatpush1.bf16.msra.mxu0 %v4391
      %4409 = vmatprep.subr.bf16.mxu0 0
      %4410 = vmatpush1.bf16.msra.mxu0 %v4392
      %4411 = vmatprep.subr.bf16.mxu0 0
      %4412 = vmatpush1.bf16.msra.mxu0 %v4393
      %4413 = vmatprep.subr.bf16.mxu0 0
      %4414 = vmatpush1.bf16.msra.mxu0 %v4394
      %4415 = vmatprep.subr.bf16.mxu0 0
      %4416 = vmatpush1.bf16.msra.mxu0 %v4395
      %4417 = vmatprep.subr.bf16.mxu0 0
      %4418 = vmatpush1.bf16.msra.mxu0 %v4396
      %4419 = vmatprep.subr.bf16.mxu0 0
      %4420 = vmatpush1.bf16.msra.mxu0 %v4397
      %4421 = vmatprep.subr.bf16.mxu0 0
      %4422 = vmatpush1.bf16.msra.mxu0 %v4398
      %4423 = vmatprep.subr.bf16.mxu0 0
      %4424 = vmatpush1.bf16.msra.mxu0 0
      %4425 = vmatprep.subr.bf16.mxu0 0
      %4426 = vmatpush1.bf16.msra.mxu0 0
      %4427 = vmatprep.subr.bf16.mxu0 0
      %4428 = vmatpush1.bf16.msra.mxu0 0
      %4429 = vmatprep.subr.bf16.mxu0 0
      %4430 = vmatpush1.bf16.msra.mxu0 0
      %4431 = vmatprep.subr.bf16.mxu0 0
      %4432 = vmatpush1.bf16.msra.mxu0 0
      %4433 = vmatprep.subr.bf16.mxu0 0
      %4434 = vmatpush1.bf16.msra.mxu0 0
      %4435 = vmatprep.subr.bf16.mxu0 0
      %4436 = vmatpush1.bf16.msra.mxu0 0
      %4437 = vmatprep.subr.bf16.mxu0 0
      %4438 = vmatpush1.bf16.msra.mxu0 0
      %4439 = vmatprep.mubr.bf16.mxu0 0
      %4440 = vmatmul.mubr.bf16.gmra.mrb[0].mxu0 %v4353
      %v4441 = vpop.f32.mrb[0].mxu0
      %v4442 = vadd.f32 %v4358, %v4441
      %v4443 = vpop.f32.mrb[0].mxu0
      %v4444 = vpop.f32.mrb[0].mxu0
      %v4445 = vadd.f32 %v4358, %v4444
      %v4446 = vpop.f32.mrb[0].mxu0
      %4447 = vmatprep.mubr.bf16.mxu0 0
      %4448 = vmatmul.mubr.bf16.gmra.mrb[0].mxu0 %v4354
      %v4449 = vpop.f32.mrb[0].mxu0
      %v4450 = vadd.f32 %v4358, %v4449
      %v4451 = vpop.f32.mrb[0].mxu0
      %v4452 = vpop.f32.mrb[0].mxu0
      %v4453 = vadd.f32 %v4358, %v4452
      %v4454 = vpop.f32.mrb[0].mxu0
      %4455 = vdwg.mxu0
      %v4456 = vmul.f32 %v4442, 0.5
      %v4457 = vmul.f32 %v4445, 0.5
      %v4458 = vmul.f32 %v4450, 0.5
      %v4459 = vmul.f32 %v4453, 0.5
      %v4460 = vadd.f32 %v4156, %v4456
      %v4461 = vadd.f32 %v4157, %v4457
      %v4462 = vadd.f32 %v4158, %v4458
      %v4463 = vadd.f32 %v4159, %v4459
      %v4464 = vld [vmem:[%s3 + $0xe] sm:$0x1]
      %v4465 = vld [vmem:[%s3 + $0xf] sm:$0x1]
      %v4466 = vsel %vm1011, %v4460, 0.0
      %4467 = vadd.xlane.f32.xlu0 %v4466
      %v4468 = vpop.xlane.xlu0 %4467
      %v4469 = vsel %vm1011, %v4461, 0.0
      %4470 = vadd.xlane.f32.xlu0 %v4469
      %v4471 = vpop.xlane.xlu0 %4470
      %v4472 = vsel %vm1011, %v4462, 0.0
      %4473 = vadd.xlane.f32.xlu0 %v4472
      %v4474 = vpop.xlane.xlu0 %4473
      %v4475 = vsel %vm1011, %v4463, 0.0
      %4476 = vadd.xlane.f32.xlu0 %v4475
      %v4477 = vpop.xlane.xlu0 %4476
      %v4478 = vmul.f32 %v4468, %v2054
      %v4479 = vmul.f32 %v4471, %v2054
      %v4480 = vmul.f32 %v4474, %v2054
      %v4481 = vmul.f32 %v4477, %v2054
      %v4482 = vsub.f32 %v4460, %v4478
      %v4483 = vsub.f32 %v4461, %v4479
      %v4484 = vsub.f32 %v4462, %v4480
      %v4485 = vsub.f32 %v4463, %v4481
      %v4486 = vmul.f32 %v4482, %v4482
      %v4487 = vmul.f32 %v4483, %v4483
      %v4488 = vmul.f32 %v4484, %v4484
      %v4489 = vmul.f32 %v4485, %v4485
      %v4490 = vsel %vm1011, %v4486, 0.0
      %4491 = vadd.xlane.f32.xlu0 %v4490
      %v4492 = vpop.xlane.xlu0 %4491
      %v4493 = vsel %vm1011, %v4487, 0.0
      %4494 = vadd.xlane.f32.xlu0 %v4493
      %v4495 = vpop.xlane.xlu0 %4494
      %v4496 = vsel %vm1011, %v4488, 0.0
      %4497 = vadd.xlane.f32.xlu0 %v4496
      %v4498 = vpop.xlane.xlu0 %4497
      %v4499 = vsel %vm1011, %v4489, 0.0
      %4500 = vadd.xlane.f32.xlu0 %v4499
      %v4501 = vpop.xlane.xlu0 %4500
      %v4502 = vmul.f32 %v4492, %v2054
      %v4503 = vmul.f32 %v4495, %v2054
      %v4504 = vmul.f32 %v4498, %v2054
      %v4505 = vmul.f32 %v4501, %v2054
      %v4506 = vadd.f32 %v4502, 1e-05
      %v4507 = vadd.f32 %v4503, 1e-05
      %v4508 = vadd.f32 %v4504, 1e-05
      %v4509 = vadd.f32 %v4505, 1e-05
      %v4510 = vrsqrt.pop %v4506
      %v4511 = vrsqrt.pop %v4507
      %v4512 = vrsqrt.pop %v4508
      %v4513 = vrsqrt.pop %v4509
      %v4514 = vmul.f32 %v4482, %v4510
      %v4515 = vmul.f32 %v4483, %v4511
      %v4516 = vmul.f32 %v4484, %v4512
      %v4517 = vmul.f32 %v4485, %v4513
      %v4518 = vlaneseq
      %v4519 = vshrl.u32 %v4518, 7
      %v4520 = vsub.s32 0, %v4519
      %v4521 = vrot.slane %v4464, %v4520
      %v4522 = vmul.f32 %v4514, %v4521
      %v4523 = vmul.f32 %v4515, %v4521
      %v4524 = vmul.f32 %v4516, %v4521
      %v4525 = vmul.f32 %v4517, %v4521
      %v4526 = vlaneseq
      %v4527 = vshrl.u32 %v4526, 7
      %v4528 = vsub.s32 0, %v4527
      %v4529 = vrot.slane %v4465, %v4528
      %v4530 = vadd.f32 %v4522, %v4529
      %v4531 = vadd.f32 %v4523, %v4529
      %v4532 = vadd.f32 %v4524, %v4529
      %v4533 = vadd.f32 %v4525, %v4529
      %v4534 = vld [vmem:[%s3 + $0x10] sm:$0x1]
      %v4535 = vld [vmem:[%s3 + $0x11] sm:$0x1]
      %v4536 = vsel %vm1011, %v4530, 0.0
      %4537 = vadd.xlane.f32.xlu0 %v4536
      %v4538 = vpop.xlane.xlu0 %4537
      %v4539 = vsel %vm1011, %v4531, 0.0
      %4540 = vadd.xlane.f32.xlu0 %v4539
      %v4541 = vpop.xlane.xlu0 %4540
      %v4542 = vsel %vm1011, %v4532, 0.0
      %4543 = vadd.xlane.f32.xlu0 %v4542
      %v4544 = vpop.xlane.xlu0 %4543
      %v4545 = vsel %vm1011, %v4533, 0.0
      %4546 = vadd.xlane.f32.xlu0 %v4545
      %v4547 = vpop.xlane.xlu0 %4546
      %v4548 = vmul.f32 %v4538, %v2054
      %v4549 = vmul.f32 %v4541, %v2054
      %v4550 = vmul.f32 %v4544, %v2054
      %v4551 = vmul.f32 %v4547, %v2054
      %v4552 = vsub.f32 %v4530, %v4548
      %v4553 = vsub.f32 %v4531, %v4549
      %v4554 = vsub.f32 %v4532, %v4550
      %v4555 = vsub.f32 %v4533, %v4551
      %v4556 = vmul.f32 %v4552, %v4552
      %v4557 = vmul.f32 %v4553, %v4553
      %v4558 = vmul.f32 %v4554, %v4554
      %v4559 = vmul.f32 %v4555, %v4555
      %v4560 = vsel %vm1011, %v4556, 0.0
      %4561 = vadd.xlane.f32.xlu0 %v4560
      %v4562 = vpop.xlane.xlu0 %4561
      %v4563 = vsel %vm1011, %v4557, 0.0
      %4564 = vadd.xlane.f32.xlu0 %v4563
      %v4565 = vpop.xlane.xlu0 %4564
      %v4566 = vsel %vm1011, %v4558, 0.0
      %4567 = vadd.xlane.f32.xlu0 %v4566
      %v4568 = vpop.xlane.xlu0 %4567
      %v4569 = vsel %vm1011, %v4559, 0.0
      %4570 = vadd.xlane.f32.xlu0 %v4569
      %v4571 = vpop.xlane.xlu0 %4570
      %v4572 = vmul.f32 %v4562, %v2054
      %v4573 = vmul.f32 %v4565, %v2054
      %v4574 = vmul.f32 %v4568, %v2054
      %v4575 = vmul.f32 %v4571, %v2054
      %v4576 = vadd.f32 %v4572, 1e-05
      %v4577 = vadd.f32 %v4573, 1e-05
      %v4578 = vadd.f32 %v4574, 1e-05
      %v4579 = vadd.f32 %v4575, 1e-05
      %v4580 = vrsqrt.pop %v4576
      %v4581 = vrsqrt.pop %v4577
      %v4582 = vrsqrt.pop %v4578
      %v4583 = vrsqrt.pop %v4579
      %v4584 = vmul.f32 %v4552, %v4580
      %v4585 = vmul.f32 %v4553, %v4581
      %v4586 = vmul.f32 %v4554, %v4582
      %v4587 = vmul.f32 %v4555, %v4583
      %v4588 = vlaneseq
      %v4589 = vshrl.u32 %v4588, 7
      %v4590 = vsub.s32 0, %v4589
      %v4591 = vrot.slane %v4534, %v4590
      %v4592 = vmul.f32 %v4584, %v4591
      %v4593 = vmul.f32 %v4585, %v4591
      %v4594 = vmul.f32 %v4586, %v4591
      %v4595 = vmul.f32 %v4587, %v4591
      %v4596 = vlaneseq
      %v4597 = vshrl.u32 %v4596, 7
      %v4598 = vsub.s32 0, %v4597
      %v4599 = vrot.slane %v4535, %v4598
      %v4600 = vadd.f32 %v4592, %v4599
      %v4601 = vadd.f32 %v4593, %v4599
      %v4602 = vadd.f32 %v4594, %v4599
      %v4603 = vadd.f32 %v4595, %v4599
      %v4604 = vld [vmem:[%s9 + $0x20] sm:$0xf]
      %v4605 = vld [vmem:[%s9 + $0x24] sm:$0xf]
      %v4606 = vld [vmem:[%s9 + $0x28] sm:$0xf]
      %v4607 = vld [vmem:[%s9 + $0x2c] sm:$0xf]
      %v4608 = vld [vmem:[%s4 + $0x2] sm:$0x1]
      %v4609 = vpack.c.bf16 %v4601, %v4600
      %v4610 = vpack.c.bf16 %v4603, %v4602
      %v4611 = vlaneseq
      %v4612 = vshrl.u32 %v4611, 7
      %v4613 = vsub.s32 0, %v4612
      %v4614 = vrot.slane %v4608, %v4613
      %v4619 = vunpack.c.l.b16 %v4604
      %v4620 = vunpack.c.l.b16 %v4605
      %v4621 = vunpack.c.l.b16 %v4606
      %v4622 = vunpack.c.l.b16 %v4607
      %v4623 = vpack.c.b16 %v4620, %v4619
      %v4624 = vpack.c.b16 %v4622, %v4621
      %v4628 = vsel %vm1011, %v4609, 0
      %v4631 = vsel %vm1011, %v4610, 0
      %4633 = vmatprep.subr.bf16.mxu0 0
      %4634 = vmatpush1.bf16.msra.mxu0 %v4623
      %4635 = vmatprep.subr.bf16.mxu0 0
      %4636 = vmatpush1.bf16.msra.mxu0 %v4624
      %4637 = vmatprep.subr.bf16.mxu0 0
      %4638 = vmatpush1.bf16.msra.mxu0 0
      %4639 = vmatprep.subr.bf16.mxu0 0
      %4640 = vmatpush1.bf16.msra.mxu0 0
      %4641 = vmatprep.subr.bf16.mxu0 0
      %4642 = vmatpush1.bf16.msra.mxu0 0
      %4643 = vmatprep.subr.bf16.mxu0 0
      %4644 = vmatpush1.bf16.msra.mxu0 0
      %4645 = vmatprep.subr.bf16.mxu0 0
      %4646 = vmatpush1.bf16.msra.mxu0 0
      %4647 = vmatprep.subr.bf16.mxu0 0
      %4648 = vmatpush1.bf16.msra.mxu0 0
      %4649 = vmatprep.subr.bf16.mxu0 0
      %4650 = vmatpush1.bf16.msra.mxu0 0
      %4651 = vmatprep.subr.bf16.mxu0 0
      %4652 = vmatpush1.bf16.msra.mxu0 0
      %4653 = vmatprep.subr.bf16.mxu0 0
      %4654 = vmatpush1.bf16.msra.mxu0 0
      %4655 = vmatprep.subr.bf16.mxu0 0
      %4656 = vmatpush1.bf16.msra.mxu0 0
      %4657 = vmatprep.subr.bf16.mxu0 0
      %4658 = vmatpush1.bf16.msra.mxu0 0
      %4659 = vmatprep.subr.bf16.mxu0 0
      %4660 = vmatpush1.bf16.msra.mxu0 0
      %4661 = vmatprep.subr.bf16.mxu0 0
      %4662 = vmatpush1.bf16.msra.mxu0 0
      %4663 = vmatprep.subr.bf16.mxu0 0
      %4664 = vmatpush1.bf16.msra.mxu0 0
      %4665 = vmatprep.mubr.bf16.mxu0 0
      %4666 = vmatmul.mubr.bf16.gmra.mrb[0].mxu0 %v4628
      %v4667 = vpop.f32.mrb[0].mxu0
      %v4668 = vadd.f32 %v4614, %v4667
      %v4669 = vpop.f32.mrb[0].mxu0
      %v4670 = vpop.f32.mrb[0].mxu0
      %v4671 = vadd.f32 %v4614, %v4670
      %v4672 = vpop.f32.mrb[0].mxu0
      %4673 = vmatprep.mubr.bf16.mxu0 0
      %4674 = vmatmul.mubr.bf16.gmra.mrb[0].mxu0 %v4631
      %v4675 = vpop.f32.mrb[0].mxu0
      %v4676 = vadd.f32 %v4614, %v4675
      %v4677 = vpop.f32.mrb[0].mxu0
      %v4678 = vpop.f32.mrb[0].mxu0
      %v4679 = vadd.f32 %v4614, %v4678
      %v4680 = vpop.f32.mrb[0].mxu0
      %4681 = vdwg.mxu0
      %v4682 = vxor.u32 %v4668, 2147483648
      %v4683 = vxor.u32 %v4671, 2147483648
      %v4684 = vxor.u32 %v4676, 2147483648
      %v4685 = vxor.u32 %v4679, 2147483648
      %v4686 = vmul.f32 %v4682, 1.442695
      %v4687 = vpow.pop %v4686
      %v4688 = vmul.f32 %v4683, 1.442695
      %v4689 = vpow.pop %v4688
      %v4690 = vmul.f32 %v4684, 1.442695
      %v4691 = vpow.pop %v4690
      %v4692 = vmul.f32 %v4685, 1.442695
      %v4693 = vpow.pop %v4692
      %v4694 = vadd.f32 %v4687, 1.0
      %v4695 = vadd.f32 %v4689, 1.0
      %v4696 = vadd.f32 %v4691, 1.0
      %v4697 = vadd.f32 %v4693, 1.0
      %v4698 = vrcp.pop %v4694
      %v4699 = vmul.f32 1.0, %v4698
      %v4700 = vrcp.pop %v4695
      %v4701 = vmul.f32 1.0, %v4700
      %v4702 = vrcp.pop %v4696
      %v4703 = vmul.f32 1.0, %v4702
      %v4704 = vrcp.pop %v4697
      %v4705 = vmul.f32 1.0, %v4704
      %v4706 = vmul.f32 %v4668, %v4699
      %v4707 = vmul.f32 %v4671, %v4701
      %v4708 = vmul.f32 %v4676, %v4703
      %v4709 = vmul.f32 %v4679, %v4705
      %v4710 = vld [vmem:[%s10 + $0xb0] sm:$0xf]
      %v4711 = vld [vmem:[%s10 + $0xb4] sm:$0xf]
      %v4712 = vld [vmem:[%s10 + $0xb8] sm:$0xf]
      %v4713 = vld [vmem:[%s10 + $0xbc] sm:$0xf]
      %v4714 = vld [vmem:[%s10 + $0xc0] sm:$0xf]
      %v4715 = vld [vmem:[%s10 + $0xc4] sm:$0xf]
      %v4716 = vld [vmem:[%s10 + $0xc8] sm:$0xf]
      %v4717 = vld [vmem:[%s10 + $0xcc] sm:$0xf]
      %v4718 = vld [vmem:[%s10 + $0xd0] sm:$0xf]
      %v4719 = vld [vmem:[%s10 + $0xd4] sm:$0xf]
      %v4720 = vld [vmem:[%s10 + $0xd8] sm:$0xf]
      %v4721 = vld [vmem:[%s10 + $0xdc] sm:$0xf]
      %v4722 = vld [vmem:[%s10 + $0xe0] sm:$0xf]
      %v4723 = vld [vmem:[%s10 + $0xe4] sm:$0xf]
      %v4724 = vld [vmem:[%s10 + $0xe8] sm:$0xf]
      %v4725 = vld [vmem:[%s10 + $0xec] sm:$0xf]
      %v4726 = vld [vmem:[%s3 + $0x12] sm:$0x1]
      %v4727 = vpack.c.bf16 %v4707, %v4706
      %v4728 = vpack.c.bf16 %v4709, %v4708
      %v4729 = vlaneseq
      %v4730 = vshrl.u32 %v4729, 7
      %v4731 = vsub.s32 0, %v4730
      %v4732 = vrot.slane %v4726, %v4731
      %v4749 = vunpack.c.l.b16 %v4710
      %v4750 = vunpack.c.l.b16 %v4711
      %v4751 = vunpack.c.l.b16 %v4712
      %v4752 = vunpack.c.l.b16 %v4713
      %v4753 = vunpack.c.l.b16 %v4714
      %v4754 = vunpack.c.l.b16 %v4715
      %v4755 = vunpack.c.l.b16 %v4716
      %v4756 = vunpack.c.l.b16 %v4717
      %v4757 = vunpack.c.l.b16 %v4718
      %v4758 = vunpack.c.l.b16 %v4719
      %v4759 = vunpack.c.l.b16 %v4720
      %v4760 = vunpack.c.l.b16 %v4721
      %v4761 = vunpack.c.l.b16 %v4722
      %v4762 = vunpack.c.l.b16 %v4723
      %v4763 = vunpack.c.l.b16 %v4724
      %v4764 = vunpack.c.l.b16 %v4725
      %v4765 = vpack.c.b16 %v4750, %v4749
      %v4766 = vpack.c.b16 %v4752, %v4751
      %v4767 = vpack.c.b16 %v4754, %v4753
      %v4768 = vpack.c.b16 %v4756, %v4755
      %v4769 = vpack.c.b16 %v4758, %v4757
      %v4770 = vpack.c.b16 %v4760, %v4759
      %v4771 = vpack.c.b16 %v4762, %v4761
      %v4772 = vpack.c.b16 %v4764, %v4763
      %4781 = vmatprep.subr.bf16.mxu0 0
      %4782 = vmatpush1.bf16.msra.mxu0 %v4765
      %4783 = vmatprep.subr.bf16.mxu0 0
      %4784 = vmatpush1.bf16.msra.mxu0 %v4766
      %4785 = vmatprep.subr.bf16.mxu0 0
      %4786 = vmatpush1.bf16.msra.mxu0 %v4767
      %4787 = vmatprep.subr.bf16.mxu0 0
      %4788 = vmatpush1.bf16.msra.mxu0 %v4768
      %4789 = vmatprep.subr.bf16.mxu0 0
      %4790 = vmatpush1.bf16.msra.mxu0 %v4769
      %4791 = vmatprep.subr.bf16.mxu0 0
      %4792 = vmatpush1.bf16.msra.mxu0 %v4770
      %4793 = vmatprep.subr.bf16.mxu0 0
      %4794 = vmatpush1.bf16.msra.mxu0 %v4771
      %4795 = vmatprep.subr.bf16.mxu0 0
      %4796 = vmatpush1.bf16.msra.mxu0 %v4772
      %4797 = vmatprep.subr.bf16.mxu0 0
      %4798 = vmatpush1.bf16.msra.mxu0 0
      %4799 = vmatprep.subr.bf16.mxu0 0
      %4800 = vmatpush1.bf16.msra.mxu0 0
      %4801 = vmatprep.subr.bf16.mxu0 0
      %4802 = vmatpush1.bf16.msra.mxu0 0
      %4803 = vmatprep.subr.bf16.mxu0 0
      %4804 = vmatpush1.bf16.msra.mxu0 0
      %4805 = vmatprep.subr.bf16.mxu0 0
      %4806 = vmatpush1.bf16.msra.mxu0 0
      %4807 = vmatprep.subr.bf16.mxu0 0
      %4808 = vmatpush1.bf16.msra.mxu0 0
      %4809 = vmatprep.subr.bf16.mxu0 0
      %4810 = vmatpush1.bf16.msra.mxu0 0
      %4811 = vmatprep.subr.bf16.mxu0 0
      %4812 = vmatpush1.bf16.msra.mxu0 0
      %4813 = vmatprep.mubr.bf16.mxu0 0
      %4814 = vmatmul.mubr.bf16.gmra.mrb[0].mxu0 %v4727
      %v4815 = vpop.f32.mrb[0].mxu0
      %v4816 = vadd.f32 %v4732, %v4815
      %v4817 = vpop.f32.mrb[0].mxu0
      %v4818 = vpop.f32.mrb[0].mxu0
      %v4819 = vadd.f32 %v4732, %v4818
      %v4820 = vpop.f32.mrb[0].mxu0
      %4821 = vmatprep.mubr.bf16.mxu0 0
      %4822 = vmatmul.mubr.bf16.gmra.mrb[0].mxu0 %v4728
      %v4823 = vpop.f32.mrb[0].mxu0
      %v4824 = vadd.f32 %v4732, %v4823
      %v4825 = vpop.f32.mrb[0].mxu0
      %v4826 = vpop.f32.mrb[0].mxu0
      %v4827 = vadd.f32 %v4732, %v4826
      %v4828 = vpop.f32.mrb[0].mxu0
      %4829 = vdwg.mxu0
      %v4830 = vmul.f32 %v4816, 0.5
      %v4831 = vmul.f32 %v4819, 0.5
      %v4832 = vmul.f32 %v4824, 0.5
      %v4833 = vmul.f32 %v4827, 0.5
      %v4834 = vadd.f32 %v4530, %v4830
      %v4835 = vadd.f32 %v4531, %v4831
      %v4836 = vadd.f32 %v4532, %v4832
      %v4837 = vadd.f32 %v4533, %v4833
      %v4838 = vld [vmem:[%s3 + $0x13] sm:$0x1]
      %v4839 = vld [vmem:[%s3 + $0x14] sm:$0x1]
      %v4840 = vsel %vm1011, %v4834, 0.0
      %4841 = vadd.xlane.f32.xlu0 %v4840
      %v4842 = vpop.xlane.xlu0 %4841
      %v4843 = vsel %vm1011, %v4835, 0.0
      %4844 = vadd.xlane.f32.xlu0 %v4843
      %v4845 = vpop.xlane.xlu0 %4844
      %v4846 = vsel %vm1011, %v4836, 0.0
      %4847 = vadd.xlane.f32.xlu0 %v4846
      %v4848 = vpop.xlane.xlu0 %4847
      %v4849 = vsel %vm1011, %v4837, 0.0
      %4850 = vadd.xlane.f32.xlu0 %v4849
      %v4851 = vpop.xlane.xlu0 %4850
      %v4852 = vmul.f32 %v4842, %v2054
      %v4853 = vmul.f32 %v4845, %v2054
      %v4854 = vmul.f32 %v4848, %v2054
      %v4855 = vmul.f32 %v4851, %v2054
      %v4856 = vsub.f32 %v4834, %v4852
      %v4857 = vsub.f32 %v4835, %v4853
      %v4858 = vsub.f32 %v4836, %v4854
      %v4859 = vsub.f32 %v4837, %v4855
      %v4860 = vmul.f32 %v4856, %v4856
      %v4861 = vmul.f32 %v4857, %v4857
      %v4862 = vmul.f32 %v4858, %v4858
      %v4863 = vmul.f32 %v4859, %v4859
      %v4864 = vsel %vm1011, %v4860, 0.0
      %4865 = vadd.xlane.f32.xlu0 %v4864
      %v4866 = vpop.xlane.xlu0 %4865
      %v4867 = vsel %vm1011, %v4861, 0.0
      %4868 = vadd.xlane.f32.xlu0 %v4867
      %v4869 = vpop.xlane.xlu0 %4868
      %v4870 = vsel %vm1011, %v4862, 0.0
      %4871 = vadd.xlane.f32.xlu0 %v4870
      %v4872 = vpop.xlane.xlu0 %4871
      %v4873 = vsel %vm1011, %v4863, 0.0
      %4874 = vadd.xlane.f32.xlu0 %v4873
      %v4875 = vpop.xlane.xlu0 %4874
      %v4876 = vmul.f32 %v4866, %v2054
      %v4877 = vmul.f32 %v4869, %v2054
      %v4878 = vmul.f32 %v4872, %v2054
      %v4879 = vmul.f32 %v4875, %v2054
      %v4880 = vadd.f32 %v4876, 1e-05
      %v4881 = vadd.f32 %v4877, 1e-05
      %v4882 = vadd.f32 %v4878, 1e-05
      %v4883 = vadd.f32 %v4879, 1e-05
      %v4884 = vrsqrt.pop %v4880
      %v4885 = vrsqrt.pop %v4881
      %v4886 = vrsqrt.pop %v4882
      %v4887 = vrsqrt.pop %v4883
      %v4888 = vmul.f32 %v4856, %v4884
      %v4889 = vmul.f32 %v4857, %v4885
      %v4890 = vmul.f32 %v4858, %v4886
      %v4891 = vmul.f32 %v4859, %v4887
      %v4892 = vlaneseq
      %v4893 = vshrl.u32 %v4892, 7
      %v4894 = vsub.s32 0, %v4893
      %v4895 = vrot.slane %v4838, %v4894
      %v4896 = vmul.f32 %v4888, %v4895
      %v4897 = vmul.f32 %v4889, %v4895
      %v4898 = vmul.f32 %v4890, %v4895
      %v4899 = vmul.f32 %v4891, %v4895
      %v4900 = vlaneseq
      %v4901 = vshrl.u32 %v4900, 7
      %v4902 = vsub.s32 0, %v4901
      %v4903 = vrot.slane %v4839, %v4902
      %v4904 = vadd.f32 %v4896, %v4903
      %v4905 = vadd.f32 %v4897, %v4903
      %v4906 = vadd.f32 %v4898, %v4903
      %v4907 = vadd.f32 %v4899, %v4903
      %v4908 = vld [vmem:[%s11 + $0x10] sm:$0xf]
      %v4909 = vld [vmem:[%s11 + $0x14] sm:$0xf]
      %v4910 = vld [vmem:[%s11 + $0x18] sm:$0xf]
      %v4911 = vld [vmem:[%s11 + $0x1c] sm:$0xf]
      %v4912 = vpack.c.bf16 %v4905, %v4904
      %v4913 = vpack.c.bf16 %v4907, %v4906
      %v4918 = vunpack.c.l.b16 %v4908
      %v4919 = vunpack.c.l.b16 %v4909
      %v4920 = vunpack.c.l.b16 %v4910
      %v4921 = vunpack.c.l.b16 %v4911
      %v4922 = vpack.c.b16 %v4919, %v4918
      %v4923 = vpack.c.b16 %v4921, %v4920
      %v4927 = vsel %vm1011, %v4912, 0
      %v4930 = vsel %vm1011, %v4913, 0
      %4932 = vmatprep.subr.bf16.mxu0 0
      %4933 = vmatpush1.bf16.msra.mxu0 %v4922
      %4934 = vmatprep.subr.bf16.mxu0 0
      %4935 = vmatpush1.bf16.msra.mxu0 %v4923
      %4936 = vmatprep.subr.bf16.mxu0 0
      %4937 = vmatpush1.bf16.msra.mxu0 0
      %4938 = vmatprep.subr.bf16.mxu0 0
      %4939 = vmatpush1.bf16.msra.mxu0 0
      %4940 = vmatprep.subr.bf16.mxu0 0
      %4941 = vmatpush1.bf16.msra.mxu0 0
      %4942 = vmatprep.subr.bf16.mxu0 0
      %4943 = vmatpush1.bf16.msra.mxu0 0
      %4944 = vmatprep.subr.bf16.mxu0 0
      %4945 = vmatpush1.bf16.msra.mxu0 0
      %4946 = vmatprep.subr.bf16.mxu0 0
      %4947 = vmatpush1.bf16.msra.mxu0 0
      %4948 = vmatprep.subr.bf16.mxu0 0
      %4949 = vmatpush1.bf16.msra.mxu0 0
      %4950 = vmatprep.subr.bf16.mxu0 0
      %4951 = vmatpush1.bf16.msra.mxu0 0
      %4952 = vmatprep.subr.bf16.mxu0 0
      %4953 = vmatpush1.bf16.msra.mxu0 0
      %4954 = vmatprep.subr.bf16.mxu0 0
      %4955 = vmatpush1.bf16.msra.mxu0 0
      %4956 = vmatprep.subr.bf16.mxu0 0
      %4957 = vmatpush1.bf16.msra.mxu0 0
      %4958 = vmatprep.subr.bf16.mxu0 0
      %4959 = vmatpush1.bf16.msra.mxu0 0
      %4960 = vmatprep.subr.bf16.mxu0 0
      %4961 = vmatpush1.bf16.msra.mxu0 0
      %4962 = vmatprep.subr.bf16.mxu0 0
      %4963 = vmatpush1.bf16.msra.mxu0 0
      %4964 = vmatprep.mubr.bf16.mxu0 0
      %4965 = vmatmul.mubr.bf16.gmra.mrb[0].mxu0 %v4927
      %v4966 = vpop.f32.mrb[0].mxu0
      %v4967 = vadd.f32 0.0, %v4966
      %v4968 = vpop.f32.mrb[0].mxu0
      %v4969 = vpop.f32.mrb[0].mxu0
      %v4970 = vadd.f32 0.0, %v4969
      %v4971 = vpop.f32.mrb[0].mxu0
      %4972 = vmatprep.mubr.bf16.mxu0 0
      %4973 = vmatmul.mubr.bf16.gmra.mrb[0].mxu0 %v4930
      %v4974 = vpop.f32.mrb[0].mxu0
      %v4975 = vadd.f32 0.0, %v4974
      %v4976 = vpop.f32.mrb[0].mxu0
      %v4977 = vpop.f32.mrb[0].mxu0
      %v4978 = vadd.f32 0.0, %v4977
      %v4979 = vpop.f32.mrb[0].mxu0
      %4980 = vdwg.mxu0
      %v4981 = vpack.c.bf16 %v4970, %v4967
      %v4982 = vpack.c.bf16 %v4978, %v4975
      %4985 = vrot.lane.b32.xlu0 %v4981, 96
      %v4986 = vpop.permute.xlu0 %4985
      %4987 = vrot.lane.b32.xlu0 %v4982, 96
      %v4988 = vpop.permute.xlu0 %4987
      %v4990 = vsel %vm2496, %v4981, 0
      %v4993 = vsel %vm2496, %v4982, 0
      %v4996 = vsel %vm2496, %v4986, 0
      %v4999 = vsel %vm2496, %v4988, 0
      %5001 = vmatprep.subr.bf16.mxu0 0
      %5002 = vmatpush1.bf16.xpose.msra.mxu0 %v4996
      %5003 = vmatprep.subr.bf16.mxu0 0
      %5004 = vmatpush1.bf16.xpose.msra.mxu0 %v4999
      %5005 = vmatprep.subr.bf16.mxu0 0
      %5006 = vmatpush1.bf16.xpose.msra.mxu0 0
      %5007 = vmatprep.subr.bf16.mxu0 0
      %5008 = vmatpush1.bf16.xpose.msra.mxu0 0
      %5009 = vmatprep.subr.bf16.mxu0 0
      %5010 = vmatpush1.bf16.xpose.msra.mxu0 0
      %5011 = vmatprep.subr.bf16.mxu0 0
      %5012 = vmatpush1.bf16.xpose.msra.mxu0 0
      %5013 = vmatprep.subr.bf16.mxu0 0
      %5014 = vmatpush1.bf16.xpose.msra.mxu0 0
      %5015 = vmatprep.subr.bf16.mxu0 0
      %5016 = vmatpush1.bf16.xpose.msra.mxu0 0
      %5017 = vmatprep.subr.bf16.mxu0 0
      %5018 = vmatpush1.bf16.xpose.msra.mxu0 0
      %5019 = vmatprep.subr.bf16.mxu0 0
      %5020 = vmatpush1.bf16.xpose.msra.mxu0 0
      %5021 = vmatprep.subr.bf16.mxu0 0
      %5022 = vmatpush1.bf16.xpose.msra.mxu0 0
      %5023 = vmatprep.subr.bf16.mxu0 0
      %5024 = vmatpush1.bf16.xpose.msra.mxu0 0
      %5025 = vmatprep.subr.bf16.mxu0 0
      %5026 = vmatpush1.bf16.xpose.msra.mxu0 0
      %5027 = vmatprep.subr.bf16.mxu0 0
      %5028 = vmatpush1.bf16.xpose.msra.mxu0 0
      %5029 = vmatprep.subr.bf16.mxu0 0
      %5030 = vmatpush1.bf16.xpose.msra.mxu0 0
      %5031 = vmatprep.subr.bf16.mxu0 0
      %5032 = vmatpush1.bf16.xpose.msra.mxu0 0
      %5033 = vmatprep.mubr.bf16.mxu0 0
      %5034 = vmatmul.mubr.bf16.gmra.mrb[0].mxu0 %v4990
      %v5035 = vpop.f32.mrb[0].mxu0
      %v5036 = vadd.f32 0.0, %v5035
      %v5037 = vpop.f32.mrb[0].mxu0
      %v5038 = vpop.f32.mrb[0].mxu0
      %v5039 = vadd.f32 0.0, %v5038
      %v5040 = vpop.f32.mrb[0].mxu0
      %5041 = vmatprep.mubr.bf16.mxu0 0
      %5042 = vmatmul.mubr.bf16.gmra.mrb[0].mxu0 %v4993
      %v5043 = vpop.f32.mrb[0].mxu0
      %v5044 = vadd.f32 0.0, %v5043
      %v5045 = vpop.f32.mrb[0].mxu0
      %v5046 = vpop.f32.mrb[0].mxu0
      %v5047 = vadd.f32 0.0, %v5046
      %v5048 = vpop.f32.mrb[0].mxu0
      %5049 = vdwg.mxu0
      %v5050 = vmul.f32 %v5036, 0.35355338
      %v5051 = vmul.f32 %v5039, 0.35355338
      %v5052 = vmul.f32 %v5044, 0.35355338
      %v5053 = vmul.f32 %v5047, 0.35355338
      %v5054 = vadd.f32 %v5050, %v473
      %v5055 = vadd.f32 %v5051, %v474
      %v5056 = vadd.f32 %v5052, %v475
      %v5057 = vadd.f32 %v5053, %v476
      %v5058 = vsel %vm1011, %v5054, -inf
      %5059 = vmax.xlane.f32.xlu0 %v5058
      %v5060 = vpop.xlane.xlu0 %5059
      %v5061 = vsel %vm1011, %v5055, -inf
      %5062 = vmax.xlane.f32.xlu0 %v5061
      %v5063 = vpop.xlane.xlu0 %5062
      %v5064 = vsel %vm1011, %v5056, -inf
      %5065 = vmax.xlane.f32.xlu0 %v5064
      %v5066 = vpop.xlane.xlu0 %5065
      %v5067 = vsel %vm1011, %v5057, -inf
      %5068 = vmax.xlane.f32.xlu0 %v5067
      %v5069 = vpop.xlane.xlu0 %5068
      %v5070 = vsub.f32 %v5054, %v5060
      %v5071 = vsub.f32 %v5055, %v5063
      %v5072 = vsub.f32 %v5056, %v5066
      %v5073 = vsub.f32 %v5057, %v5069
      %v5074 = vmul.f32 %v5070, 1.442695
      %v5075 = vpow.pop %v5074
      %v5076 = vmul.f32 %v5071, 1.442695
      %v5077 = vpow.pop %v5076
      %v5078 = vmul.f32 %v5072, 1.442695
      %v5079 = vpow.pop %v5078
      %v5080 = vmul.f32 %v5073, 1.442695
      %v5081 = vpow.pop %v5080
      %v5082 = vsel %vm1011, %v5075, 0.0
      %5083 = vadd.xlane.f32.xlu0 %v5082
      %v5084 = vpop.xlane.xlu0 %5083
      %v5085 = vsel %vm1011, %v5077, 0.0
      %5086 = vadd.xlane.f32.xlu0 %v5085
      %v5087 = vpop.xlane.xlu0 %5086
      %v5088 = vsel %vm1011, %v5079, 0.0
      %5089 = vadd.xlane.f32.xlu0 %v5088
      %v5090 = vpop.xlane.xlu0 %5089
      %v5091 = vsel %vm1011, %v5081, 0.0
      %5092 = vadd.xlane.f32.xlu0 %v5091
      %v5093 = vpop.xlane.xlu0 %5092
      %v5094 = vrcp.pop %v5084
      %v5095 = vmul.f32 %v5075, %v5094
      %v5096 = vrcp.pop %v5087
      %v5097 = vmul.f32 %v5077, %v5096
      %v5098 = vrcp.pop %v5090
      %v5099 = vmul.f32 %v5079, %v5098
      %v5100 = vrcp.pop %v5093
      %v5101 = vmul.f32 %v5081, %v5100
      %v5102 = vpack.c.bf16 %v5097, %v5095
      %v5103 = vpack.c.bf16 %v5101, %v5099
      %5104 = vrot.lane.b32.xlu0 %v4981, 64
      %v5105 = vpop.permute.xlu0 %5104
      %5106 = vrot.lane.b32.xlu0 %v4982, 64
      %v5107 = vpop.permute.xlu0 %5106
      %v5111 = vsel %vm1011, %v5102, 0
      %v5114 = vsel %vm1011, %v5103, 0
      %5116 = vmatprep.subr.bf16.mxu0 0
      %5117 = vmatpush1.bf16.msra.mxu0 %v5105
      %5118 = vmatprep.subr.bf16.mxu0 0
      %5119 = vmatpush1.bf16.msra.mxu0 %v5107
      %5120 = vmatprep.subr.bf16.mxu0 0
      %5121 = vmatpush1.bf16.msra.mxu0 0
      %5122 = vmatprep.subr.bf16.mxu0 0
      %5123 = vmatpush1.bf16.msra.mxu0 0
      %5124 = vmatprep.subr.bf16.mxu0 0
      %5125 = vmatpush1.bf16.msra.mxu0 0
      %5126 = vmatprep.subr.bf16.mxu0 0
      %5127 = vmatpush1.bf16.msra.mxu0 0
      %5128 = vmatprep.subr.bf16.mxu0 0
      %5129 = vmatpush1.bf16.msra.mxu0 0
      %5130 = vmatprep.subr.bf16.mxu0 0
      %5131 = vmatpush1.bf16.msra.mxu0 0
      %5132 = vmatprep.subr.bf16.mxu0 0
      %5133 = vmatpush1.bf16.msra.mxu0 0
      %5134 = vmatprep.subr.bf16.mxu0 0
      %5135 = vmatpush1.bf16.msra.mxu0 0
      %5136 = vmatprep.subr.bf16.mxu0 0
      %5137 = vmatpush1.bf16.msra.mxu0 0
      %5138 = vmatprep.subr.bf16.mxu0 0
      %5139 = vmatpush1.bf16.msra.mxu0 0
      %5140 = vmatprep.subr.bf16.mxu0 0
      %5141 = vmatpush1.bf16.msra.mxu0 0
      %5142 = vmatprep.subr.bf16.mxu0 0
      %5143 = vmatpush1.bf16.msra.mxu0 0
      %5144 = vmatprep.subr.bf16.mxu0 0
      %5145 = vmatpush1.bf16.msra.mxu0 0
      %5146 = vmatprep.subr.bf16.mxu0 0
      %5147 = vmatpush1.bf16.msra.mxu0 0
      %5148 = vmatprep.mubr.bf16.mxu0 0
      %5149 = vmatmul.mubr.bf16.gmra.mrb[0].mxu0 %v5111
      %v5150 = vpop.f32.mrb[0].mxu0
      %v5151 = vadd.f32 0.0, %v5150
      %v5152 = vpop.f32.mrb[0].mxu0
      %v5153 = vpop.f32.mrb[0].mxu0
      %v5154 = vadd.f32 0.0, %v5153
      %v5155 = vpop.f32.mrb[0].mxu0
      %5156 = vmatprep.mubr.bf16.mxu0 0
      %5157 = vmatmul.mubr.bf16.gmra.mrb[0].mxu0 %v5114
      %v5158 = vpop.f32.mrb[0].mxu0
      %v5159 = vadd.f32 0.0, %v5158
      %v5160 = vpop.f32.mrb[0].mxu0
      %v5161 = vpop.f32.mrb[0].mxu0
      %v5162 = vadd.f32 0.0, %v5161
      %v5163 = vpop.f32.mrb[0].mxu0
      %5164 = vdwg.mxu0
      %v5165 = vpack.c.bf16 %v5154, %v5151
      %v5166 = vpack.c.bf16 %v5162, %v5159
      %5167 = vrot.lane.b32.xlu0 %v4981, 120
      %v5168 = vpop.permute.xlu0 %5167
      %5169 = vrot.lane.b32.xlu0 %v4982, 120
      %v5170 = vpop.permute.xlu0 %5169
      %5171 = vrot.lane.b32.xlu0 %v4981, 88
      %v5172 = vpop.permute.xlu0 %5171
      %5173 = vrot.lane.b32.xlu0 %v4982, 88
      %v5174 = vpop.permute.xlu0 %5173
      %v5176 = vsel %vm2496, %v5168, 0
      %v5179 = vsel %vm2496, %v5170, 0
      %v5182 = vsel %vm2496, %v5172, 0
      %v5185 = vsel %vm2496, %v5174, 0
      %5187 = vmatprep.subr.bf16.mxu0 0
      %5188 = vmatpush1.bf16.xpose.msra.mxu0 %v5182
      %5189 = vmatprep.subr.bf16.mxu0 0
      %5190 = vmatpush1.bf16.xpose.msra.mxu0 %v5185
      %5191 = vmatprep.subr.bf16.mxu0 0
      %5192 = vmatpush1.bf16.xpose.msra.mxu0 0
      %5193 = vmatprep.subr.bf16.mxu0 0
      %5194 = vmatpush1.bf16.xpose.msra.mxu0 0
      %5195 = vmatprep.subr.bf16.mxu0 0
      %5196 = vmatpush1.bf16.xpose.msra.mxu0 0
      %5197 = vmatprep.subr.bf16.mxu0 0
      %5198 = vmatpush1.bf16.xpose.msra.mxu0 0
      %5199 = vmatprep.subr.bf16.mxu0 0
      %5200 = vmatpush1.bf16.xpose.msra.mxu0 0
      %5201 = vmatprep.subr.bf16.mxu0 0
      %5202 = vmatpush1.bf16.xpose.msra.mxu0 0
      %5203 = vmatprep.subr.bf16.mxu0 0
      %5204 = vmatpush1.bf16.xpose.msra.mxu0 0
      %5205 = vmatprep.subr.bf16.mxu0 0
      %5206 = vmatpush1.bf16.xpose.msra.mxu0 0
      %5207 = vmatprep.subr.bf16.mxu0 0
      %5208 = vmatpush1.bf16.xpose.msra.mxu0 0
      %5209 = vmatprep.subr.bf16.mxu0 0
      %5210 = vmatpush1.bf16.xpose.msra.mxu0 0
      %5211 = vmatprep.subr.bf16.mxu0 0
      %5212 = vmatpush1.bf16.xpose.msra.mxu0 0
      %5213 = vmatprep.subr.bf16.mxu0 0
      %5214 = vmatpush1.bf16.xpose.msra.mxu0 0
      %5215 = vmatprep.subr.bf16.mxu0 0
      %5216 = vmatpush1.bf16.xpose.msra.mxu0 0
      %5217 = vmatprep.subr.bf16.mxu0 0
      %5218 = vmatpush1.bf16.xpose.msra.mxu0 0
      %5219 = vmatprep.mubr.bf16.mxu0 0
      %5220 = vmatmul.mubr.bf16.gmra.mrb[0].mxu0 %v5176
      %v5221 = vpop.f32.mrb[0].mxu0
      %v5222 = vadd.f32 0.0, %v5221
      %v5223 = vpop.f32.mrb[0].mxu0
      %v5224 = vpop.f32.mrb[0].mxu0
      %v5225 = vadd.f32 0.0, %v5224
      %v5226 = vpop.f32.mrb[0].mxu0
      %5227 = vmatprep.mubr.bf16.mxu0 0
      %5228 = vmatmul.mubr.bf16.gmra.mrb[0].mxu0 %v5179
      %v5229 = vpop.f32.mrb[0].mxu0
      %v5230 = vadd.f32 0.0, %v5229
      %v5231 = vpop.f32.mrb[0].mxu0
      %v5232 = vpop.f32.mrb[0].mxu0
      %v5233 = vadd.f32 0.0, %v5232
      %v5234 = vpop.f32.mrb[0].mxu0
      %5235 = vdwg.mxu0
      %v5236 = vmul.f32 %v5222, 0.35355338
      %v5237 = vmul.f32 %v5225, 0.35355338
      %v5238 = vmul.f32 %v5230, 0.35355338
      %v5239 = vmul.f32 %v5233, 0.35355338
      %v5240 = vadd.f32 %v5236, %v473
      %v5241 = vadd.f32 %v5237, %v474
      %v5242 = vadd.f32 %v5238, %v475
      %v5243 = vadd.f32 %v5239, %v476
      %v5244 = vsel %vm1011, %v5240, -inf
      %5245 = vmax.xlane.f32.xlu0 %v5244
      %v5246 = vpop.xlane.xlu0 %5245
      %v5247 = vsel %vm1011, %v5241, -inf
      %5248 = vmax.xlane.f32.xlu0 %v5247
      %v5249 = vpop.xlane.xlu0 %5248
      %v5250 = vsel %vm1011, %v5242, -inf
      %5251 = vmax.xlane.f32.xlu0 %v5250
      %v5252 = vpop.xlane.xlu0 %5251
      %v5253 = vsel %vm1011, %v5243, -inf
      %5254 = vmax.xlane.f32.xlu0 %v5253
      %v5255 = vpop.xlane.xlu0 %5254
      %v5256 = vsub.f32 %v5240, %v5246
      %v5257 = vsub.f32 %v5241, %v5249
      %v5258 = vsub.f32 %v5242, %v5252
      %v5259 = vsub.f32 %v5243, %v5255
      %v5260 = vmul.f32 %v5256, 1.442695
      %v5261 = vpow.pop %v5260
      %v5262 = vmul.f32 %v5257, 1.442695
      %v5263 = vpow.pop %v5262
      %v5264 = vmul.f32 %v5258, 1.442695
      %v5265 = vpow.pop %v5264
      %v5266 = vmul.f32 %v5259, 1.442695
      %v5267 = vpow.pop %v5266
      %v5268 = vsel %vm1011, %v5261, 0.0
      %5269 = vadd.xlane.f32.xlu0 %v5268
      %v5270 = vpop.xlane.xlu0 %5269
      %v5271 = vsel %vm1011, %v5263, 0.0
      %5272 = vadd.xlane.f32.xlu0 %v5271
      %v5273 = vpop.xlane.xlu0 %5272
      %v5274 = vsel %vm1011, %v5265, 0.0
      %5275 = vadd.xlane.f32.xlu0 %v5274
      %v5276 = vpop.xlane.xlu0 %5275
      %v5277 = vsel %vm1011, %v5267, 0.0
      %5278 = vadd.xlane.f32.xlu0 %v5277
      %v5279 = vpop.xlane.xlu0 %5278
      %v5280 = vrcp.pop %v5270
      %v5281 = vmul.f32 %v5261, %v5280
      %v5282 = vrcp.pop %v5273
      %v5283 = vmul.f32 %v5263, %v5282
      %v5284 = vrcp.pop %v5276
      %v5285 = vmul.f32 %v5265, %v5284
      %v5286 = vrcp.pop %v5279
      %v5287 = vmul.f32 %v5267, %v5286
      %v5288 = vpack.c.bf16 %v5283, %v5281
      %v5289 = vpack.c.bf16 %v5287, %v5285
      %5290 = vrot.lane.b32.xlu0 %v4981, 56
      %v5291 = vpop.permute.xlu0 %5290
      %5292 = vrot.lane.b32.xlu0 %v4982, 56
      %v5293 = vpop.permute.xlu0 %5292
      %v5297 = vsel %vm1011, %v5288, 0
      %v5300 = vsel %vm1011, %v5289, 0
      %5302 = vmatprep.subr.bf16.mxu0 0
      %5303 = vmatpush1.bf16.msra.mxu0 %v5291
      %5304 = vmatprep.subr.bf16.mxu0 0
      %5305 = vmatpush1.bf16.msra.mxu0 %v5293
      %5306 = vmatprep.subr.bf16.mxu0 0
      %5307 = vmatpush1.bf16.msra.mxu0 0
      %5308 = vmatprep.subr.bf16.mxu0 0
      %5309 = vmatpush1.bf16.msra.mxu0 0
      %5310 = vmatprep.subr.bf16.mxu0 0
      %5311 = vmatpush1.bf16.msra.mxu0 0
      %5312 = vmatprep.subr.bf16.mxu0 0
      %5313 = vmatpush1.bf16.msra.mxu0 0
      %5314 = vmatprep.subr.bf16.mxu0 0
      %5315 = vmatpush1.bf16.msra.mxu0 0
      %5316 = vmatprep.subr.bf16.mxu0 0
      %5317 = vmatpush1.bf16.msra.mxu0 0
      %5318 = vmatprep.subr.bf16.mxu0 0
      %5319 = vmatpush1.bf16.msra.mxu0 0
      %5320 = vmatprep.subr.bf16.mxu0 0
      %5321 = vmatpush1.bf16.msra.mxu0 0
      %5322 = vmatprep.subr.bf16.mxu0 0
      %5323 = vmatpush1.bf16.msra.mxu0 0
      %5324 = vmatprep.subr.bf16.mxu0 0
      %5325 = vmatpush1.bf16.msra.mxu0 0
      %5326 = vmatprep.subr.bf16.mxu0 0
      %5327 = vmatpush1.bf16.msra.mxu0 0
      %5328 = vmatprep.subr.bf16.mxu0 0
      %5329 = vmatpush1.bf16.msra.mxu0 0
      %5330 = vmatprep.subr.bf16.mxu0 0
      %5331 = vmatpush1.bf16.msra.mxu0 0
      %5332 = vmatprep.subr.bf16.mxu0 0
      %5333 = vmatpush1.bf16.msra.mxu0 0
      %5334 = vmatprep.mubr.bf16.mxu0 0
      %5335 = vmatmul.mubr.bf16.gmra.mrb[0].mxu0 %v5297
      %v5336 = vpop.f32.mrb[0].mxu0
      %v5337 = vadd.f32 0.0, %v5336
      %v5338 = vpop.f32.mrb[0].mxu0
      %v5339 = vpop.f32.mrb[0].mxu0
      %v5340 = vadd.f32 0.0, %v5339
      %v5341 = vpop.f32.mrb[0].mxu0
      %5342 = vmatprep.mubr.bf16.mxu0 0
      %5343 = vmatmul.mubr.bf16.gmra.mrb[0].mxu0 %v5300
      %v5344 = vpop.f32.mrb[0].mxu0
      %v5345 = vadd.f32 0.0, %v5344
      %v5346 = vpop.f32.mrb[0].mxu0
      %v5347 = vpop.f32.mrb[0].mxu0
      %v5348 = vadd.f32 0.0, %v5347
      %v5349 = vpop.f32.mrb[0].mxu0
      %5350 = vdwg.mxu0
      %v5351 = vpack.c.bf16 %v5340, %v5337
      %v5352 = vpack.c.bf16 %v5348, %v5345
      %5353 = vrot.lane.b32.xlu0 %v4981, 112
      %v5354 = vpop.permute.xlu0 %5353
      %5355 = vrot.lane.b32.xlu0 %v4982, 112
      %v5356 = vpop.permute.xlu0 %5355
      %5357 = vrot.lane.b32.xlu0 %v4981, 80
      %v5358 = vpop.permute.xlu0 %5357
      %5359 = vrot.lane.b32.xlu0 %v4982, 80
      %v5360 = vpop.permute.xlu0 %5359
      %v5362 = vsel %vm2496, %v5354, 0
      %v5365 = vsel %vm2496, %v5356, 0
      %v5368 = vsel %vm2496, %v5358, 0
      %v5371 = vsel %vm2496, %v5360, 0
      %5373 = vmatprep.subr.bf16.mxu0 0
      %5374 = vmatpush1.bf16.xpose.msra.mxu0 %v5368
      %5375 = vmatprep.subr.bf16.mxu0 0
      %5376 = vmatpush1.bf16.xpose.msra.mxu0 %v5371
      %5377 = vmatprep.subr.bf16.mxu0 0
      %5378 = vmatpush1.bf16.xpose.msra.mxu0 0
      %5379 = vmatprep.subr.bf16.mxu0 0
      %5380 = vmatpush1.bf16.xpose.msra.mxu0 0
      %5381 = vmatprep.subr.bf16.mxu0 0
      %5382 = vmatpush1.bf16.xpose.msra.mxu0 0
      %5383 = vmatprep.subr.bf16.mxu0 0
      %5384 = vmatpush1.bf16.xpose.msra.mxu0 0
      %5385 = vmatprep.subr.bf16.mxu0 0
      %5386 = vmatpush1.bf16.xpose.msra.mxu0 0
      %5387 = vmatprep.subr.bf16.mxu0 0
      %5388 = vmatpush1.bf16.xpose.msra.mxu0 0
      %5389 = vmatprep.subr.bf16.mxu0 0
      %5390 = vmatpush1.bf16.xpose.msra.mxu0 0
      %5391 = vmatprep.subr.bf16.mxu0 0
      %5392 = vmatpush1.bf16.xpose.msra.mxu0 0
      %5393 = vmatprep.subr.bf16.mxu0 0
      %5394 = vmatpush1.bf16.xpose.msra.mxu0 0
      %5395 = vmatprep.subr.bf16.mxu0 0
      %5396 = vmatpush1.bf16.xpose.msra.mxu0 0
      %5397 = vmatprep.subr.bf16.mxu0 0
      %5398 = vmatpush1.bf16.xpose.msra.mxu0 0
      %5399 = vmatprep.subr.bf16.mxu0 0
      %5400 = vmatpush1.bf16.xpose.msra.mxu0 0
      %5401 = vmatprep.subr.bf16.mxu0 0
      %5402 = vmatpush1.bf16.xpose.msra.mxu0 0
      %5403 = vmatprep.subr.bf16.mxu0 0
      %5404 = vmatpush1.bf16.xpose.msra.mxu0 0
      %5405 = vmatprep.mubr.bf16.mxu0 0
      %5406 = vmatmul.mubr.bf16.gmra.mrb[0].mxu0 %v5362
      %v5407 = vpop.f32.mrb[0].mxu0
      %v5408 = vadd.f32 0.0, %v5407
      %v5409 = vpop.f32.mrb[0].mxu0
      %v5410 = vpop.f32.mrb[0].mxu0
      %v5411 = vadd.f32 0.0, %v5410
      %v5412 = vpop.f32.mrb[0].mxu0
      %5413 = vmatprep.mubr.bf16.mxu0 0
      %5414 = vmatmul.mubr.bf16.gmra.mrb[0].mxu0 %v5365
      %v5415 = vpop.f32.mrb[0].mxu0
      %v5416 = vadd.f32 0.0, %v5415
      %v5417 = vpop.f32.mrb[0].mxu0
      %v5418 = vpop.f32.mrb[0].mxu0
      %v5419 = vadd.f32 0.0, %v5418
      %v5420 = vpop.f32.mrb[0].mxu0
      %5421 = vdwg.mxu0
      %v5422 = vmul.f32 %v5408, 0.35355338
      %v5423 = vmul.f32 %v5411, 0.35355338
      %v5424 = vmul.f32 %v5416, 0.35355338
      %v5425 = vmul.f32 %v5419, 0.35355338
      %v5426 = vadd.f32 %v5422, %v473
      %v5427 = vadd.f32 %v5423, %v474
      %v5428 = vadd.f32 %v5424, %v475
      %v5429 = vadd.f32 %v5425, %v476
      %v5430 = vsel %vm1011, %v5426, -inf
      %5431 = vmax.xlane.f32.xlu0 %v5430
      %v5432 = vpop.xlane.xlu0 %5431
      %v5433 = vsel %vm1011, %v5427, -inf
      %5434 = vmax.xlane.f32.xlu0 %v5433
      %v5435 = vpop.xlane.xlu0 %5434
      %v5436 = vsel %vm1011, %v5428, -inf
      %5437 = vmax.xlane.f32.xlu0 %v5436
      %v5438 = vpop.xlane.xlu0 %5437
      %v5439 = vsel %vm1011, %v5429, -inf
      %5440 = vmax.xlane.f32.xlu0 %v5439
      %v5441 = vpop.xlane.xlu0 %5440
      %v5442 = vsub.f32 %v5426, %v5432
      %v5443 = vsub.f32 %v5427, %v5435
      %v5444 = vsub.f32 %v5428, %v5438
      %v5445 = vsub.f32 %v5429, %v5441
      %v5446 = vmul.f32 %v5442, 1.442695
      %v5447 = vpow.pop %v5446
      %v5448 = vmul.f32 %v5443, 1.442695
      %v5449 = vpow.pop %v5448
      %v5450 = vmul.f32 %v5444, 1.442695
      %v5451 = vpow.pop %v5450
      %v5452 = vmul.f32 %v5445, 1.442695
      %v5453 = vpow.pop %v5452
      %v5454 = vsel %vm1011, %v5447, 0.0
      %5455 = vadd.xlane.f32.xlu0 %v5454
      %v5456 = vpop.xlane.xlu0 %5455
      %v5457 = vsel %vm1011, %v5449, 0.0
      %5458 = vadd.xlane.f32.xlu0 %v5457
      %v5459 = vpop.xlane.xlu0 %5458
      %v5460 = vsel %vm1011, %v5451, 0.0
      %5461 = vadd.xlane.f32.xlu0 %v5460
      %v5462 = vpop.xlane.xlu0 %5461
      %v5463 = vsel %vm1011, %v5453, 0.0
      %5464 = vadd.xlane.f32.xlu0 %v5463
      %v5465 = vpop.xlane.xlu0 %5464
      %v5466 = vrcp.pop %v5456
      %v5467 = vmul.f32 %v5447, %v5466
      %v5468 = vrcp.pop %v5459
      %v5469 = vmul.f32 %v5449, %v5468
      %v5470 = vrcp.pop %v5462
      %v5471 = vmul.f32 %v5451, %v5470
      %v5472 = vrcp.pop %v5465
      %v5473 = vmul.f32 %v5453, %v5472
      %v5474 = vpack.c.bf16 %v5469, %v5467
      %v5475 = vpack.c.bf16 %v5473, %v5471
      %5476 = vrot.lane.b32.xlu0 %v4981, 48
      %v5477 = vpop.permute.xlu0 %5476
      %5478 = vrot.lane.b32.xlu0 %v4982, 48
      %v5479 = vpop.permute.xlu0 %5478
      %v5483 = vsel %vm1011, %v5474, 0
      %v5486 = vsel %vm1011, %v5475, 0
      %5488 = vmatprep.subr.bf16.mxu0 0
      %5489 = vmatpush1.bf16.msra.mxu0 %v5477
      %5490 = vmatprep.subr.bf16.mxu0 0
      %5491 = vmatpush1.bf16.msra.mxu0 %v5479
      %5492 = vmatprep.subr.bf16.mxu0 0
      %5493 = vmatpush1.bf16.msra.mxu0 0
      %5494 = vmatprep.subr.bf16.mxu0 0
      %5495 = vmatpush1.bf16.msra.mxu0 0
      %5496 = vmatprep.subr.bf16.mxu0 0
      %5497 = vmatpush1.bf16.msra.mxu0 0
      %5498 = vmatprep.subr.bf16.mxu0 0
      %5499 = vmatpush1.bf16.msra.mxu0 0
      %5500 = vmatprep.subr.bf16.mxu0 0
      %5501 = vmatpush1.bf16.msra.mxu0 0
      %5502 = vmatprep.subr.bf16.mxu0 0
      %5503 = vmatpush1.bf16.msra.mxu0 0
      %5504 = vmatprep.subr.bf16.mxu0 0
      %5505 = vmatpush1.bf16.msra.mxu0 0
      %5506 = vmatprep.subr.bf16.mxu0 0
      %5507 = vmatpush1.bf16.msra.mxu0 0
      %5508 = vmatprep.subr.bf16.mxu0 0
      %5509 = vmatpush1.bf16.msra.mxu0 0
      %5510 = vmatprep.subr.bf16.mxu0 0
      %5511 = vmatpush1.bf16.msra.mxu0 0
      %5512 = vmatprep.subr.bf16.mxu0 0
      %5513 = vmatpush1.bf16.msra.mxu0 0
      %5514 = vmatprep.subr.bf16.mxu0 0
      %5515 = vmatpush1.bf16.msra.mxu0 0
      %5516 = vmatprep.subr.bf16.mxu0 0
      %5517 = vmatpush1.bf16.msra.mxu0 0
      %5518 = vmatprep.subr.bf16.mxu0 0
      %5519 = vmatpush1.bf16.msra.mxu0 0
      %5520 = vmatprep.mubr.bf16.mxu0 0
      %5521 = vmatmul.mubr.bf16.gmra.mrb[0].mxu0 %v5483
      %v5522 = vpop.f32.mrb[0].mxu0
      %v5523 = vadd.f32 0.0, %v5522
      %v5524 = vpop.f32.mrb[0].mxu0
      %v5525 = vpop.f32.mrb[0].mxu0
      %v5526 = vadd.f32 0.0, %v5525
      %v5527 = vpop.f32.mrb[0].mxu0
      %5528 = vmatprep.mubr.bf16.mxu0 0
      %5529 = vmatmul.mubr.bf16.gmra.mrb[0].mxu0 %v5486
      %v5530 = vpop.f32.mrb[0].mxu0
      %v5531 = vadd.f32 0.0, %v5530
      %v5532 = vpop.f32.mrb[0].mxu0
      %v5533 = vpop.f32.mrb[0].mxu0
      %v5534 = vadd.f32 0.0, %v5533
      %v5535 = vpop.f32.mrb[0].mxu0
      %5536 = vdwg.mxu0
      %v5537 = vpack.c.bf16 %v5526, %v5523
      %v5538 = vpack.c.bf16 %v5534, %v5531
      %5539 = vrot.lane.b32.xlu0 %v4981, 104
      %v5540 = vpop.permute.xlu0 %5539
      %5541 = vrot.lane.b32.xlu0 %v4982, 104
      %v5542 = vpop.permute.xlu0 %5541
      %5543 = vrot.lane.b32.xlu0 %v4981, 72
      %v5544 = vpop.permute.xlu0 %5543
      %5545 = vrot.lane.b32.xlu0 %v4982, 72
      %v5546 = vpop.permute.xlu0 %5545
      %v5548 = vsel %vm2496, %v5540, 0
      %v5551 = vsel %vm2496, %v5542, 0
      %v5554 = vsel %vm2496, %v5544, 0
      %v5557 = vsel %vm2496, %v5546, 0
      %5559 = vmatprep.subr.bf16.mxu0 0
      %5560 = vmatpush1.bf16.xpose.msra.mxu0 %v5554
      %5561 = vmatprep.subr.bf16.mxu0 0
      %5562 = vmatpush1.bf16.xpose.msra.mxu0 %v5557
      %5563 = vmatprep.subr.bf16.mxu0 0
      %5564 = vmatpush1.bf16.xpose.msra.mxu0 0
      %5565 = vmatprep.subr.bf16.mxu0 0
      %5566 = vmatpush1.bf16.xpose.msra.mxu0 0
      %5567 = vmatprep.subr.bf16.mxu0 0
      %5568 = vmatpush1.bf16.xpose.msra.mxu0 0
      %5569 = vmatprep.subr.bf16.mxu0 0
      %5570 = vmatpush1.bf16.xpose.msra.mxu0 0
      %5571 = vmatprep.subr.bf16.mxu0 0
      %5572 = vmatpush1.bf16.xpose.msra.mxu0 0
      %5573 = vmatprep.subr.bf16.mxu0 0
      %5574 = vmatpush1.bf16.xpose.msra.mxu0 0
      %5575 = vmatprep.subr.bf16.mxu0 0
      %5576 = vmatpush1.bf16.xpose.msra.mxu0 0
      %5577 = vmatprep.subr.bf16.mxu0 0
      %5578 = vmatpush1.bf16.xpose.msra.mxu0 0
      %5579 = vmatprep.subr.bf16.mxu0 0
      %5580 = vmatpush1.bf16.xpose.msra.mxu0 0
      %5581 = vmatprep.subr.bf16.mxu0 0
      %5582 = vmatpush1.bf16.xpose.msra.mxu0 0
      %5583 = vmatprep.subr.bf16.mxu0 0
      %5584 = vmatpush1.bf16.xpose.msra.mxu0 0
      %5585 = vmatprep.subr.bf16.mxu0 0
      %5586 = vmatpush1.bf16.xpose.msra.mxu0 0
      %5587 = vmatprep.subr.bf16.mxu0 0
      %5588 = vmatpush1.bf16.xpose.msra.mxu0 0
      %5589 = vmatprep.subr.bf16.mxu0 0
      %5590 = vmatpush1.bf16.xpose.msra.mxu0 0
      %5591 = vmatprep.mubr.bf16.mxu0 0
      %5592 = vmatmul.mubr.bf16.gmra.mrb[0].mxu0 %v5548
      %v5593 = vpop.f32.mrb[0].mxu0
      %v5594 = vadd.f32 0.0, %v5593
      %v5595 = vpop.f32.mrb[0].mxu0
      %v5596 = vpop.f32.mrb[0].mxu0
      %v5597 = vadd.f32 0.0, %v5596
      %v5598 = vpop.f32.mrb[0].mxu0
      %5599 = vmatprep.mubr.bf16.mxu0 0
      %5600 = vmatmul.mubr.bf16.gmra.mrb[0].mxu0 %v5551
      %v5601 = vpop.f32.mrb[0].mxu0
      %v5602 = vadd.f32 0.0, %v5601
      %v5603 = vpop.f32.mrb[0].mxu0
      %v5604 = vpop.f32.mrb[0].mxu0
      %v5605 = vadd.f32 0.0, %v5604
      %v5606 = vpop.f32.mrb[0].mxu0
      %5607 = vdwg.mxu0
      %v5608 = vmul.f32 %v5594, 0.35355338
      %v5609 = vmul.f32 %v5597, 0.35355338
      %v5610 = vmul.f32 %v5602, 0.35355338
      %v5611 = vmul.f32 %v5605, 0.35355338
      %v5612 = vadd.f32 %v5608, %v473
      %v5613 = vadd.f32 %v5609, %v474
      %v5614 = vadd.f32 %v5610, %v475
      %v5615 = vadd.f32 %v5611, %v476
      %v5616 = vsel %vm1011, %v5612, -inf
      %5617 = vmax.xlane.f32.xlu0 %v5616
      %v5618 = vpop.xlane.xlu0 %5617
      %v5619 = vsel %vm1011, %v5613, -inf
      %5620 = vmax.xlane.f32.xlu0 %v5619
      %v5621 = vpop.xlane.xlu0 %5620
      %v5622 = vsel %vm1011, %v5614, -inf
      %5623 = vmax.xlane.f32.xlu0 %v5622
      %v5624 = vpop.xlane.xlu0 %5623
      %v5625 = vsel %vm1011, %v5615, -inf
      %5626 = vmax.xlane.f32.xlu0 %v5625
      %v5627 = vpop.xlane.xlu0 %5626
      %v5628 = vsub.f32 %v5612, %v5618
      %v5629 = vsub.f32 %v5613, %v5621
      %v5630 = vsub.f32 %v5614, %v5624
      %v5631 = vsub.f32 %v5615, %v5627
      %v5632 = vmul.f32 %v5628, 1.442695
      %v5633 = vpow.pop %v5632
      %v5634 = vmul.f32 %v5629, 1.442695
      %v5635 = vpow.pop %v5634
      %v5636 = vmul.f32 %v5630, 1.442695
      %v5637 = vpow.pop %v5636
      %v5638 = vmul.f32 %v5631, 1.442695
      %v5639 = vpow.pop %v5638
      %v5640 = vsel %vm1011, %v5633, 0.0
      %5641 = vadd.xlane.f32.xlu0 %v5640
      %v5642 = vpop.xlane.xlu0 %5641
      %v5643 = vsel %vm1011, %v5635, 0.0
      %5644 = vadd.xlane.f32.xlu0 %v5643
      %v5645 = vpop.xlane.xlu0 %5644
      %v5646 = vsel %vm1011, %v5637, 0.0
      %5647 = vadd.xlane.f32.xlu0 %v5646
      %v5648 = vpop.xlane.xlu0 %5647
      %v5649 = vsel %vm1011, %v5639, 0.0
      %5650 = vadd.xlane.f32.xlu0 %v5649
      %v5651 = vpop.xlane.xlu0 %5650
      %v5652 = vrcp.pop %v5642
      %v5653 = vmul.f32 %v5633, %v5652
      %v5654 = vrcp.pop %v5645
      %v5655 = vmul.f32 %v5635, %v5654
      %v5656 = vrcp.pop %v5648
      %v5657 = vmul.f32 %v5637, %v5656
      %v5658 = vrcp.pop %v5651
      %v5659 = vmul.f32 %v5639, %v5658
      %v5660 = vpack.c.bf16 %v5655, %v5653
      %v5661 = vpack.c.bf16 %v5659, %v5657
      %5662 = vrot.lane.b32.xlu0 %v4981, 40
      %v5663 = vpop.permute.xlu0 %5662
      %5664 = vrot.lane.b32.xlu0 %v4982, 40
      %v5665 = vpop.permute.xlu0 %5664
      %v5669 = vsel %vm1011, %v5660, 0
      %v5672 = vsel %vm1011, %v5661, 0
      %5674 = vmatprep.subr.bf16.mxu0 0
      %5675 = vmatpush1.bf16.msra.mxu0 %v5663
      %5676 = vmatprep.subr.bf16.mxu0 0
      %5677 = vmatpush1.bf16.msra.mxu0 %v5665
      %5678 = vmatprep.subr.bf16.mxu0 0
      %5679 = vmatpush1.bf16.msra.mxu0 0
      %5680 = vmatprep.subr.bf16.mxu0 0
      %5681 = vmatpush1.bf16.msra.mxu0 0
      %5682 = vmatprep.subr.bf16.mxu0 0
      %5683 = vmatpush1.bf16.msra.mxu0 0
      %5684 = vmatprep.subr.bf16.mxu0 0
      %5685 = vmatpush1.bf16.msra.mxu0 0
      %5686 = vmatprep.subr.bf16.mxu0 0
      %5687 = vmatpush1.bf16.msra.mxu0 0
      %5688 = vmatprep.subr.bf16.mxu0 0
      %5689 = vmatpush1.bf16.msra.mxu0 0
      %5690 = vmatprep.subr.bf16.mxu0 0
      %5691 = vmatpush1.bf16.msra.mxu0 0
      %5692 = vmatprep.subr.bf16.mxu0 0
      %5693 = vmatpush1.bf16.msra.mxu0 0
      %5694 = vmatprep.subr.bf16.mxu0 0
      %5695 = vmatpush1.bf16.msra.mxu0 0
      %5696 = vmatprep.subr.bf16.mxu0 0
      %5697 = vmatpush1.bf16.msra.mxu0 0
      %5698 = vmatprep.subr.bf16.mxu0 0
      %5699 = vmatpush1.bf16.msra.mxu0 0
      %5700 = vmatprep.subr.bf16.mxu0 0
      %5701 = vmatpush1.bf16.msra.mxu0 0
      %5702 = vmatprep.subr.bf16.mxu0 0
      %5703 = vmatpush1.bf16.msra.mxu0 0
      %5704 = vmatprep.subr.bf16.mxu0 0
      %5705 = vmatpush1.bf16.msra.mxu0 0
      %5706 = vmatprep.mubr.bf16.mxu0 0
      %5707 = vmatmul.mubr.bf16.gmra.mrb[0].mxu0 %v5669
      %v5708 = vpop.f32.mrb[0].mxu0
      %v5709 = vadd.f32 0.0, %v5708
      %v5710 = vpop.f32.mrb[0].mxu0
      %v5711 = vpop.f32.mrb[0].mxu0
      %v5712 = vadd.f32 0.0, %v5711
      %v5713 = vpop.f32.mrb[0].mxu0
      %5714 = vmatprep.mubr.bf16.mxu0 0
      %5715 = vmatmul.mubr.bf16.gmra.mrb[0].mxu0 %v5672
      %v5716 = vpop.f32.mrb[0].mxu0
      %v5717 = vadd.f32 0.0, %v5716
      %v5718 = vpop.f32.mrb[0].mxu0
      %v5719 = vpop.f32.mrb[0].mxu0
      %v5720 = vadd.f32 0.0, %v5719
      %v5721 = vpop.f32.mrb[0].mxu0
      %5722 = vdwg.mxu0
      %v5723 = vpack.c.bf16 %v5712, %v5709
      %v5724 = vpack.c.bf16 %v5720, %v5717
      %v5725 = vld [vmem:[%s3 + $0x15] sm:$0x1]
      %v5726 = vld [vmem:[%s10 + $0xf0] sm:$0xf]
      %v5728 = vsel %vm2496, %v5165, 0
      %v5731 = vsel %vm2496, %v5166, 0
      %v5734 = vsel %vm3241, %v5726, 0
      %5736 = vmatprep.subr.bf16.mxu0 0
      %5737 = vmatpush1.bf16.msra.mxu0 %v5734
      %5738 = vmatprep.subr.bf16.mxu0 0
      %5739 = vmatpush1.bf16.msra.mxu0 0
      %5740 = vmatprep.subr.bf16.mxu0 0
      %5741 = vmatpush1.bf16.msra.mxu0 0
      %5742 = vmatprep.subr.bf16.mxu0 0
      %5743 = vmatpush1.bf16.msra.mxu0 0
      %5744 = vmatprep.subr.bf16.mxu0 0
      %5745 = vmatpush1.bf16.msra.mxu0 0
      %5746 = vmatprep.subr.bf16.mxu0 0
      %5747 = vmatpush1.bf16.msra.mxu0 0
      %5748 = vmatprep.subr.bf16.mxu0 0
      %5749 = vmatpush1.bf16.msra.mxu0 0
      %5750 = vmatprep.subr.bf16.mxu0 0
      %5751 = vmatpush1.bf16.msra.mxu0 0
      %5752 = vmatprep.subr.bf16.mxu0 0
      %5753 = vmatpush1.bf16.msra.mxu0 0
      %5754 = vmatprep.subr.bf16.mxu0 0
      %5755 = vmatpush1.bf16.msra.mxu0 0
      %5756 = vmatprep.subr.bf16.mxu0 0
      %5757 = vmatpush1.bf16.msra.mxu0 0
      %5758 = vmatprep.subr.bf16.mxu0 0
      %5759 = vmatpush1.bf16.msra.mxu0 0
      %5760 = vmatprep.subr.bf16.mxu0 0
      %5761 = vmatpush1.bf16.msra.mxu0 0
      %5762 = vmatprep.subr.bf16.mxu0 0
      %5763 = vmatpush1.bf16.msra.mxu0 0
      %5764 = vmatprep.subr.bf16.mxu0 0
      %5765 = vmatpush1.bf16.msra.mxu0 0
      %5766 = vmatprep.subr.bf16.mxu0 0
      %5767 = vmatpush1.bf16.msra.mxu0 0
      %5768 = vmatprep.mubr.bf16.mxu0 0
      %5769 = vmatmul.mubr.bf16.gmra.mrb[0].mxu0 %v5728
      %v5770 = vpop.f32.mrb[0].mxu0
      %v5771 = vadd.f32 0.0, %v5770
      %v5772 = vpop.f32.mrb[0].mxu0
      %v5773 = vpop.f32.mrb[0].mxu0
      %v5774 = vadd.f32 0.0, %v5773
      %v5775 = vpop.f32.mrb[0].mxu0
      %5776 = vmatprep.mubr.bf16.mxu0 0
      %5777 = vmatmul.mubr.bf16.gmra.mrb[0].mxu0 %v5731
      %v5778 = vpop.f32.mrb[0].mxu0
      %v5779 = vadd.f32 0.0, %v5778
      %v5780 = vpop.f32.mrb[0].mxu0
      %v5781 = vpop.f32.mrb[0].mxu0
      %v5782 = vadd.f32 0.0, %v5781
      %v5783 = vpop.f32.mrb[0].mxu0
      %5784 = vdwg.mxu0
      %v5785 = vlaneseq
      %v5786 = vshrl.u32 %v5785, 7
      %v5787 = vsub.s32 0, %v5786
      %v5788 = vrot.slane %v5725, %v5787
      %v5789 = vadd.f32 %v5788, %v5771
      %v5790 = vadd.f32 %v5788, %v5774
      %v5791 = vadd.f32 %v5788, %v5779
      %v5792 = vadd.f32 %v5788, %v5782
      %v5793 = vld [vmem:[%s10 + $0xf4] sm:$0xf]
      %v5795 = vsel %vm2496, %v5351, 0
      %v5798 = vsel %vm2496, %v5352, 0
      %v5801 = vsel %vm3241, %v5793, 0
      %5803 = vmatprep.subr.bf16.mxu0 0
      %5804 = vmatpush1.bf16.msra.mxu0 %v5801
      %5805 = vmatprep.subr.bf16.mxu0 0
      %5806 = vmatpush1.bf16.msra.mxu0 0
      %5807 = vmatprep.subr.bf16.mxu0 0
      %5808 = vmatpush1.bf16.msra.mxu0 0
      %5809 = vmatprep.subr.bf16.mxu0 0
      %5810 = vmatpush1.bf16.msra.mxu0 0
      %5811 = vmatprep.subr.bf16.mxu0 0
      %5812 = vmatpush1.bf16.msra.mxu0 0
      %5813 = vmatprep.subr.bf16.mxu0 0
      %5814 = vmatpush1.bf16.msra.mxu0 0
      %5815 = vmatprep.subr.bf16.mxu0 0
      %5816 = vmatpush1.bf16.msra.mxu0 0
      %5817 = vmatprep.subr.bf16.mxu0 0
      %5818 = vmatpush1.bf16.msra.mxu0 0
      %5819 = vmatprep.subr.bf16.mxu0 0
      %5820 = vmatpush1.bf16.msra.mxu0 0
      %5821 = vmatprep.subr.bf16.mxu0 0
      %5822 = vmatpush1.bf16.msra.mxu0 0
      %5823 = vmatprep.subr.bf16.mxu0 0
      %5824 = vmatpush1.bf16.msra.mxu0 0
      %5825 = vmatprep.subr.bf16.mxu0 0
      %5826 = vmatpush1.bf16.msra.mxu0 0
      %5827 = vmatprep.subr.bf16.mxu0 0
      %5828 = vmatpush1.bf16.msra.mxu0 0
      %5829 = vmatprep.subr.bf16.mxu0 0
      %5830 = vmatpush1.bf16.msra.mxu0 0
      %5831 = vmatprep.subr.bf16.mxu0 0
      %5832 = vmatpush1.bf16.msra.mxu0 0
      %5833 = vmatprep.subr.bf16.mxu0 0
      %5834 = vmatpush1.bf16.msra.mxu0 0
      %5835 = vmatprep.mubr.bf16.mxu0 0
      %5836 = vmatmul.mubr.bf16.gmra.mrb[0].mxu0 %v5795
      %v5837 = vpop.f32.mrb[0].mxu0
      %v5838 = vadd.f32 0.0, %v5837
      %v5839 = vpop.f32.mrb[0].mxu0
      %v5840 = vpop.f32.mrb[0].mxu0
      %v5841 = vadd.f32 0.0, %v5840
      %v5842 = vpop.f32.mrb[0].mxu0
      %5843 = vmatprep.mubr.bf16.mxu0 0
      %5844 = vmatmul.mubr.bf16.gmra.mrb[0].mxu0 %v5798
      %v5845 = vpop.f32.mrb[0].mxu0
      %v5846 = vadd.f32 0.0, %v5845
      %v5847 = vpop.f32.mrb[0].mxu0
      %v5848 = vpop.f32.mrb[0].mxu0
      %v5849 = vadd.f32 0.0, %v5848
      %v5850 = vpop.f32.mrb[0].mxu0
      %5851 = vdwg.mxu0
      %v5852 = vadd.f32 %v5789, %v5838
      %v5853 = vadd.f32 %v5790, %v5841
      %v5854 = vadd.f32 %v5791, %v5846
      %v5855 = vadd.f32 %v5792, %v5849
      %v5856 = vld [vmem:[%s10 + $0xf8] sm:$0xf]
      %v5858 = vsel %vm2496, %v5537, 0
      %v5861 = vsel %vm2496, %v5538, 0
      %v5864 = vsel %vm3241, %v5856, 0
      %5866 = vmatprep.subr.bf16.mxu0 0
      %5867 = vmatpush1.bf16.msra.mxu0 %v5864
      %5868 = vmatprep.subr.bf16.mxu0 0
      %5869 = vmatpush1.bf16.msra.mxu0 0
      %5870 = vmatprep.subr.bf16.mxu0 0
      %5871 = vmatpush1.bf16.msra.mxu0 0
      %5872 = vmatprep.subr.bf16.mxu0 0
      %5873 = vmatpush1.bf16.msra.mxu0 0
      %5874 = vmatprep.subr.bf16.mxu0 0
      %5875 = vmatpush1.bf16.msra.mxu0 0
      %5876 = vmatprep.subr.bf16.mxu0 0
      %5877 = vmatpush1.bf16.msra.mxu0 0
      %5878 = vmatprep.subr.bf16.mxu0 0
      %5879 = vmatpush1.bf16.msra.mxu0 0
      %5880 = vmatprep.subr.bf16.mxu0 0
      %5881 = vmatpush1.bf16.msra.mxu0 0
      %5882 = vmatprep.subr.bf16.mxu0 0
      %5883 = vmatpush1.bf16.msra.mxu0 0
      %5884 = vmatprep.subr.bf16.mxu0 0
      %5885 = vmatpush1.bf16.msra.mxu0 0
      %5886 = vmatprep.subr.bf16.mxu0 0
      %5887 = vmatpush1.bf16.msra.mxu0 0
      %5888 = vmatprep.subr.bf16.mxu0 0
      %5889 = vmatpush1.bf16.msra.mxu0 0
      %5890 = vmatprep.subr.bf16.mxu0 0
      %5891 = vmatpush1.bf16.msra.mxu0 0
      %5892 = vmatprep.subr.bf16.mxu0 0
      %5893 = vmatpush1.bf16.msra.mxu0 0
      %5894 = vmatprep.subr.bf16.mxu0 0
      %5895 = vmatpush1.bf16.msra.mxu0 0
      %5896 = vmatprep.subr.bf16.mxu0 0
      %5897 = vmatpush1.bf16.msra.mxu0 0
      %5898 = vmatprep.mubr.bf16.mxu0 0
      %5899 = vmatmul.mubr.bf16.gmra.mrb[0].mxu0 %v5858
      %v5900 = vpop.f32.mrb[0].mxu0
      %v5901 = vadd.f32 0.0, %v5900
      %v5902 = vpop.f32.mrb[0].mxu0
      %v5903 = vpop.f32.mrb[0].mxu0
      %v5904 = vadd.f32 0.0, %v5903
      %v5905 = vpop.f32.mrb[0].mxu0
      %5906 = vmatprep.mubr.bf16.mxu0 0
      %5907 = vmatmul.mubr.bf16.gmra.mrb[0].mxu0 %v5861
      %v5908 = vpop.f32.mrb[0].mxu0
      %v5909 = vadd.f32 0.0, %v5908
      %v5910 = vpop.f32.mrb[0].mxu0
      %v5911 = vpop.f32.mrb[0].mxu0
      %v5912 = vadd.f32 0.0, %v5911
      %v5913 = vpop.f32.mrb[0].mxu0
      %5914 = vdwg.mxu0
      %v5915 = vadd.f32 %v5852, %v5901
      %v5916 = vadd.f32 %v5853, %v5904
      %v5917 = vadd.f32 %v5854, %v5909
      %v5918 = vadd.f32 %v5855, %v5912
      %v5919 = vld [vmem:[%s10 + $0xfc] sm:$0xf]
      %v5921 = vsel %vm2496, %v5723, 0
      %v5924 = vsel %vm2496, %v5724, 0
      %v5927 = vsel %vm3241, %v5919, 0
      %5929 = vmatprep.subr.bf16.mxu0 0
      %5930 = vmatpush1.bf16.msra.mxu0 %v5927
      %5931 = vmatprep.subr.bf16.mxu0 0
      %5932 = vmatpush1.bf16.msra.mxu0 0
      %5933 = vmatprep.subr.bf16.mxu0 0
      %5934 = vmatpush1.bf16.msra.mxu0 0
      %5935 = vmatprep.subr.bf16.mxu0 0
      %5936 = vmatpush1.bf16.msra.mxu0 0
      %5937 = vmatprep.subr.bf16.mxu0 0
      %5938 = vmatpush1.bf16.msra.mxu0 0
      %5939 = vmatprep.subr.bf16.mxu0 0
      %5940 = vmatpush1.bf16.msra.mxu0 0
      %5941 = vmatprep.subr.bf16.mxu0 0
      %5942 = vmatpush1.bf16.msra.mxu0 0
      %5943 = vmatprep.subr.bf16.mxu0 0
      %5944 = vmatpush1.bf16.msra.mxu0 0
      %5945 = vmatprep.subr.bf16.mxu0 0
      %5946 = vmatpush1.bf16.msra.mxu0 0
      %5947 = vmatprep.subr.bf16.mxu0 0
      %5948 = vmatpush1.bf16.msra.mxu0 0
      %5949 = vmatprep.subr.bf16.mxu0 0
      %5950 = vmatpush1.bf16.msra.mxu0 0
      %5951 = vmatprep.subr.bf16.mxu0 0
      %5952 = vmatpush1.bf16.msra.mxu0 0
      %5953 = vmatprep.subr.bf16.mxu0 0
      %5954 = vmatpush1.bf16.msra.mxu0 0
      %5955 = vmatprep.subr.bf16.mxu0 0
      %5956 = vmatpush1.bf16.msra.mxu0 0
      %5957 = vmatprep.subr.bf16.mxu0 0
      %5958 = vmatpush1.bf16.msra.mxu0 0
      %5959 = vmatprep.subr.bf16.mxu0 0
      %5960 = vmatpush1.bf16.msra.mxu0 0
      %5961 = vmatprep.mubr.bf16.mxu0 0
      %5962 = vmatmul.mubr.bf16.gmra.mrb[0].mxu0 %v5921
      %v5963 = vpop.f32.mrb[0].mxu0
      %v5964 = vadd.f32 0.0, %v5963
      %v5965 = vpop.f32.mrb[0].mxu0
      %v5966 = vpop.f32.mrb[0].mxu0
      %v5967 = vadd.f32 0.0, %v5966
      %v5968 = vpop.f32.mrb[0].mxu0
      %5969 = vmatprep.mubr.bf16.mxu0 0
      %5970 = vmatmul.mubr.bf16.gmra.mrb[0].mxu0 %v5924
      %v5971 = vpop.f32.mrb[0].mxu0
      %v5972 = vadd.f32 0.0, %v5971
      %v5973 = vpop.f32.mrb[0].mxu0
      %v5974 = vpop.f32.mrb[0].mxu0
      %v5975 = vadd.f32 0.0, %v5974
      %v5976 = vpop.f32.mrb[0].mxu0
      %5977 = vdwg.mxu0
      %v5978 = vadd.f32 %v5915, %v5964
      %v5979 = vadd.f32 %v5916, %v5967
      %v5980 = vadd.f32 %v5917, %v5972
      %v5981 = vadd.f32 %v5918, %v5975
      %v5982 = vadd.f32 %v4834, %v5978
      %v5983 = vadd.f32 %v4835, %v5979
      %v5984 = vadd.f32 %v4836, %v5980
      %v5985 = vadd.f32 %v4837, %v5981
      %v5986 = vld [vmem:[%s3 + $0x16] sm:$0x1]
      %v5987 = vld [vmem:[%s3 + $0x17] sm:$0x1]
      %v5988 = vsel %vm1011, %v5982, 0.0
      %5989 = vadd.xlane.f32.xlu0 %v5988
      %v5990 = vpop.xlane.xlu0 %5989
      %v5991 = vsel %vm1011, %v5983, 0.0
      %5992 = vadd.xlane.f32.xlu0 %v5991
      %v5993 = vpop.xlane.xlu0 %5992
      %v5994 = vsel %vm1011, %v5984, 0.0
      %5995 = vadd.xlane.f32.xlu0 %v5994
      %v5996 = vpop.xlane.xlu0 %5995
      %v5997 = vsel %vm1011, %v5985, 0.0
      %5998 = vadd.xlane.f32.xlu0 %v5997
      %v5999 = vpop.xlane.xlu0 %5998
      %v6000 = vmul.f32 %v5990, %v2054
      %v6001 = vmul.f32 %v5993, %v2054
      %v6002 = vmul.f32 %v5996, %v2054
      %v6003 = vmul.f32 %v5999, %v2054
      %v6004 = vsub.f32 %v5982, %v6000
      %v6005 = vsub.f32 %v5983, %v6001
      %v6006 = vsub.f32 %v5984, %v6002
      %v6007 = vsub.f32 %v5985, %v6003
      %v6008 = vmul.f32 %v6004, %v6004
      %v6009 = vmul.f32 %v6005, %v6005
      %v6010 = vmul.f32 %v6006, %v6006
      %v6011 = vmul.f32 %v6007, %v6007
      %v6012 = vsel %vm1011, %v6008, 0.0
      %6013 = vadd.xlane.f32.xlu0 %v6012
      %v6014 = vpop.xlane.xlu0 %6013
      %v6015 = vsel %vm1011, %v6009, 0.0
      %6016 = vadd.xlane.f32.xlu0 %v6015
      %v6017 = vpop.xlane.xlu0 %6016
      %v6018 = vsel %vm1011, %v6010, 0.0
      %6019 = vadd.xlane.f32.xlu0 %v6018
      %v6020 = vpop.xlane.xlu0 %6019
      %v6021 = vsel %vm1011, %v6011, 0.0
      %6022 = vadd.xlane.f32.xlu0 %v6021
      %v6023 = vpop.xlane.xlu0 %6022
      %v6024 = vmul.f32 %v6014, %v2054
      %v6025 = vmul.f32 %v6017, %v2054
      %v6026 = vmul.f32 %v6020, %v2054
      %v6027 = vmul.f32 %v6023, %v2054
      %v6028 = vadd.f32 %v6024, 1e-05
      %v6029 = vadd.f32 %v6025, 1e-05
      %v6030 = vadd.f32 %v6026, 1e-05
      %v6031 = vadd.f32 %v6027, 1e-05
      %v6032 = vrsqrt.pop %v6028
      %v6033 = vrsqrt.pop %v6029
      %v6034 = vrsqrt.pop %v6030
      %v6035 = vrsqrt.pop %v6031
      %v6036 = vmul.f32 %v6004, %v6032
      %v6037 = vmul.f32 %v6005, %v6033
      %v6038 = vmul.f32 %v6006, %v6034
      %v6039 = vmul.f32 %v6007, %v6035
      %v6040 = vlaneseq
      %v6041 = vshrl.u32 %v6040, 7
      %v6042 = vsub.s32 0, %v6041
      %v6043 = vrot.slane %v5986, %v6042
      %v6044 = vmul.f32 %v6036, %v6043
      %v6045 = vmul.f32 %v6037, %v6043
      %v6046 = vmul.f32 %v6038, %v6043
      %v6047 = vmul.f32 %v6039, %v6043
      %v6048 = vlaneseq
      %v6049 = vshrl.u32 %v6048, 7
      %v6050 = vsub.s32 0, %v6049
      %v6051 = vrot.slane %v5987, %v6050
      %v6052 = vadd.f32 %v6044, %v6051
      %v6053 = vadd.f32 %v6045, %v6051
      %v6054 = vadd.f32 %v6046, %v6051
      %v6055 = vadd.f32 %v6047, %v6051
      %v6056 = vld [vmem:[%s12 + $0x20] sm:$0xf]
      %v6057 = vld [vmem:[%s12 + $0x24] sm:$0xf]
      %v6058 = vld [vmem:[%s12 + $0x28] sm:$0xf]
      %v6059 = vld [vmem:[%s12 + $0x2c] sm:$0xf]
      %v6060 = vld [vmem:[%s5 + $0xa] sm:$0x1]
      %v6061 = vpack.c.bf16 %v6053, %v6052
      %v6062 = vpack.c.bf16 %v6055, %v6054
      %v6063 = vlaneseq
      %v6064 = vshrl.u32 %v6063, 7
      %v6065 = vsub.s32 0, %v6064
      %v6066 = vrot.slane %v6060, %v6065
      %v6071 = vunpack.c.l.b16 %v6056
      %v6072 = vunpack.c.l.b16 %v6057
      %v6073 = vunpack.c.l.b16 %v6058
      %v6074 = vunpack.c.l.b16 %v6059
      %v6075 = vpack.c.b16 %v6072, %v6071
      %v6076 = vpack.c.b16 %v6074, %v6073
      %v6080 = vsel %vm1011, %v6061, 0
      %v6083 = vsel %vm1011, %v6062, 0
      %6085 = vmatprep.subr.bf16.mxu0 0
      %6086 = vmatpush1.bf16.msra.mxu0 %v6075
      %6087 = vmatprep.subr.bf16.mxu0 0
      %6088 = vmatpush1.bf16.msra.mxu0 %v6076
      %6089 = vmatprep.subr.bf16.mxu0 0
      %6090 = vmatpush1.bf16.msra.mxu0 0
      %6091 = vmatprep.subr.bf16.mxu0 0
      %6092 = vmatpush1.bf16.msra.mxu0 0
      %6093 = vmatprep.subr.bf16.mxu0 0
      %6094 = vmatpush1.bf16.msra.mxu0 0
      %6095 = vmatprep.subr.bf16.mxu0 0
      %6096 = vmatpush1.bf16.msra.mxu0 0
      %6097 = vmatprep.subr.bf16.mxu0 0
      %6098 = vmatpush1.bf16.msra.mxu0 0
      %6099 = vmatprep.subr.bf16.mxu0 0
      %6100 = vmatpush1.bf16.msra.mxu0 0
      %6101 = vmatprep.subr.bf16.mxu0 0
      %6102 = vmatpush1.bf16.msra.mxu0 0
      %6103 = vmatprep.subr.bf16.mxu0 0
      %6104 = vmatpush1.bf16.msra.mxu0 0
      %6105 = vmatprep.subr.bf16.mxu0 0
      %6106 = vmatpush1.bf16.msra.mxu0 0
      %6107 = vmatprep.subr.bf16.mxu0 0
      %6108 = vmatpush1.bf16.msra.mxu0 0
      %6109 = vmatprep.subr.bf16.mxu0 0
      %6110 = vmatpush1.bf16.msra.mxu0 0
      %6111 = vmatprep.subr.bf16.mxu0 0
      %6112 = vmatpush1.bf16.msra.mxu0 0
      %6113 = vmatprep.subr.bf16.mxu0 0
      %6114 = vmatpush1.bf16.msra.mxu0 0
      %6115 = vmatprep.subr.bf16.mxu0 0
      %6116 = vmatpush1.bf16.msra.mxu0 0
      %6117 = vmatprep.mubr.bf16.mxu0 0
      %6118 = vmatmul.mubr.bf16.gmra.mrb[0].mxu0 %v6080
      %v6119 = vpop.f32.mrb[0].mxu0
      %v6120 = vadd.f32 %v6066, %v6119
      %v6121 = vpop.f32.mrb[0].mxu0
      %v6122 = vpop.f32.mrb[0].mxu0
      %v6123 = vadd.f32 %v6066, %v6122
      %v6124 = vpop.f32.mrb[0].mxu0
      %6125 = vmatprep.mubr.bf16.mxu0 0
      %6126 = vmatmul.mubr.bf16.gmra.mrb[0].mxu0 %v6083
      %v6127 = vpop.f32.mrb[0].mxu0
      %v6128 = vadd.f32 %v6066, %v6127
      %v6129 = vpop.f32.mrb[0].mxu0
      %v6130 = vpop.f32.mrb[0].mxu0
      %v6131 = vadd.f32 %v6066, %v6130
      %v6132 = vpop.f32.mrb[0].mxu0
      %6133 = vdwg.mxu0
      %v6134 = vld [vmem:[%s12 + $0x30] sm:$0xf]
      %v6135 = vld [vmem:[%s12 + $0x34] sm:$0xf]
      %v6136 = vld [vmem:[%s12 + $0x38] sm:$0xf]
      %v6137 = vld [vmem:[%s12 + $0x3c] sm:$0xf]
      %v6138 = vld [vmem:[%s5 + $0xb] sm:$0x1]
      %v6139 = vlaneseq
      %v6140 = vshrl.u32 %v6139, 7
      %v6141 = vsub.s32 0, %v6140
      %v6142 = vrot.slane %v6138, %v6141
      %v6147 = vunpack.c.l.b16 %v6134
      %v6148 = vunpack.c.l.b16 %v6135
      %v6149 = vunpack.c.l.b16 %v6136
      %v6150 = vunpack.c.l.b16 %v6137
      %v6151 = vpack.c.b16 %v6148, %v6147
      %v6152 = vpack.c.b16 %v6150, %v6149
      %6155 = vmatprep.subr.bf16.mxu0 0
      %6156 = vmatpush1.bf16.msra.mxu0 %v6151
      %6157 = vmatprep.subr.bf16.mxu0 0
      %6158 = vmatpush1.bf16.msra.mxu0 %v6152
      %6159 = vmatprep.subr.bf16.mxu0 0
      %6160 = vmatpush1.bf16.msra.mxu0 0
      %6161 = vmatprep.subr.bf16.mxu0 0
      %6162 = vmatpush1.bf16.msra.mxu0 0
      %6163 = vmatprep.subr.bf16.mxu0 0
      %6164 = vmatpush1.bf16.msra.mxu0 0
      %6165 = vmatprep.subr.bf16.mxu0 0
      %6166 = vmatpush1.bf16.msra.mxu0 0
      %6167 = vmatprep.subr.bf16.mxu0 0
      %6168 = vmatpush1.bf16.msra.mxu0 0
      %6169 = vmatprep.subr.bf16.mxu0 0
      %6170 = vmatpush1.bf16.msra.mxu0 0
      %6171 = vmatprep.subr.bf16.mxu0 0
      %6172 = vmatpush1.bf16.msra.mxu0 0
      %6173 = vmatprep.subr.bf16.mxu0 0
      %6174 = vmatpush1.bf16.msra.mxu0 0
      %6175 = vmatprep.subr.bf16.mxu0 0
      %6176 = vmatpush1.bf16.msra.mxu0 0
      %6177 = vmatprep.subr.bf16.mxu0 0
      %6178 = vmatpush1.bf16.msra.mxu0 0
      %6179 = vmatprep.subr.bf16.mxu0 0
      %6180 = vmatpush1.bf16.msra.mxu0 0
      %6181 = vmatprep.subr.bf16.mxu0 0
      %6182 = vmatpush1.bf16.msra.mxu0 0
      %6183 = vmatprep.subr.bf16.mxu0 0
      %6184 = vmatpush1.bf16.msra.mxu0 0
      %6185 = vmatprep.subr.bf16.mxu0 0
      %6186 = vmatpush1.bf16.msra.mxu0 0
      %6187 = vmatprep.mubr.bf16.mxu0 0
      %6188 = vmatmul.mubr.bf16.gmra.mrb[0].mxu0 %v6080
      %v6189 = vpop.f32.mrb[0].mxu0
      %v6190 = vadd.f32 %v6142, %v6189
      %v6191 = vpop.f32.mrb[0].mxu0
      %v6192 = vpop.f32.mrb[0].mxu0
      %v6193 = vadd.f32 %v6142, %v6192
      %v6194 = vpop.f32.mrb[0].mxu0
      %6195 = vmatprep.mubr.bf16.mxu0 0
      %6196 = vmatmul.mubr.bf16.gmra.mrb[0].mxu0 %v6083
      %v6197 = vpop.f32.mrb[0].mxu0
      %v6198 = vadd.f32 %v6142, %v6197
      %v6199 = vpop.f32.mrb[0].mxu0
      %v6200 = vpop.f32.mrb[0].mxu0
      %v6201 = vadd.f32 %v6142, %v6200
      %v6202 = vpop.f32.mrb[0].mxu0
      %6203 = vdwg.mxu0
      %v6204 = vxor.u32 %v6190, 2147483648
      %v6205 = vxor.u32 %v6193, 2147483648
      %v6206 = vxor.u32 %v6198, 2147483648
      %v6207 = vxor.u32 %v6201, 2147483648
      %v6208 = vmul.f32 %v6204, 1.442695
      %v6209 = vpow.pop %v6208
      %v6210 = vmul.f32 %v6205, 1.442695
      %v6211 = vpow.pop %v6210
      %v6212 = vmul.f32 %v6206, 1.442695
      %v6213 = vpow.pop %v6212
      %v6214 = vmul.f32 %v6207, 1.442695
      %v6215 = vpow.pop %v6214
      %v6216 = vadd.f32 %v6209, 1.0
      %v6217 = vadd.f32 %v6211, 1.0
      %v6218 = vadd.f32 %v6213, 1.0
      %v6219 = vadd.f32 %v6215, 1.0
      %v6220 = vrcp.pop %v6216
      %v6221 = vmul.f32 1.0, %v6220
      %v6222 = vrcp.pop %v6217
      %v6223 = vmul.f32 1.0, %v6222
      %v6224 = vrcp.pop %v6218
      %v6225 = vmul.f32 1.0, %v6224
      %v6226 = vrcp.pop %v6219
      %v6227 = vmul.f32 1.0, %v6226
      %v6228 = vmul.f32 %v6120, %v6221
      %v6229 = vmul.f32 %v6123, %v6223
      %v6230 = vmul.f32 %v6128, %v6225
      %v6231 = vmul.f32 %v6131, %v6227
      %v6232 = vrot.slane %v6228, 5
      %v6233 = vrot.slane %v6229, 5
      %v6234 = vrot.slane %v6230, 5
      %v6235 = vrot.slane %v6231, 5
      %v6236 = vsel %vm3747, %v6234, %v6235
      %v6237 = vsel %vm3747, %v6233, %v6234
      %v6238 = vsel %vm3747, %v6232, %v6233
      %v6239 = vsel %vm3747, %v6235, %v6232
      %v6240 = vmul.f32 %v6239, %v3754
      %v6241 = vmul.f32 %v6238, %v3758
      %v6242 = vmul.f32 %v6237, %v3762
      %v6243 = vmul.f32 %v6236, %v3766
      %v6244 = vld [vmem:[%s5 + $0xd] sm:$0x1]
      %v6245 = vlaneseq
      %v6246 = vshrl.u32 %v6245, 7
      %v6247 = vsub.s32 0, %v6246
      %v6248 = vrot.slane %v6244, %v6247
      %v6249 = vmul.f32 %v6240, %v6248
      %v6250 = vmul.f32 %v6241, %v6248
      %v6251 = vmul.f32 %v6242, %v6248
      %v6252 = vmul.f32 %v6243, %v6248
      %v6253 = vrot.slane %v6228, 6
      %v6254 = vrot.slane %v6229, 6
      %v6255 = vrot.slane %v6230, 6
      %v6256 = vrot.slane %v6231, 6
      %v6257 = vsel %vm3785, %v6255, %v6256
      %v6258 = vsel %vm3785, %v6254, %v6255
      %v6259 = vsel %vm3785, %v6253, %v6254
      %v6260 = vsel %vm3785, %v6256, %v6253
      %v6261 = vmul.f32 %v6260, %v3792
      %v6262 = vmul.f32 %v6259, %v3796
      %v6263 = vmul.f32 %v6258, %v3800
      %v6264 = vmul.f32 %v6257, %v3804
      %v6265 = vld [vmem:[%s5 + $0xe] sm:$0x1]
      %v6266 = vlaneseq
      %v6267 = vshrl.u32 %v6266, 7
      %v6268 = vsub.s32 0, %v6267
      %v6269 = vrot.slane %v6265, %v6268
      %v6270 = vmul.f32 %v6261, %v6269
      %v6271 = vmul.f32 %v6262, %v6269
      %v6272 = vmul.f32 %v6263, %v6269
      %v6273 = vmul.f32 %v6264, %v6269
      %v6274 = vadd.f32 %v6249, %v6270
      %v6275 = vadd.f32 %v6250, %v6271
      %v6276 = vadd.f32 %v6251, %v6272
      %v6277 = vadd.f32 %v6252, %v6273
      %v6278 = vrot.slane %v6228, 7
      %v6279 = vrot.slane %v6229, 7
      %v6280 = vrot.slane %v6230, 7
      %v6281 = vrot.slane %v6231, 7
      %v6282 = vsel %vm3827, %v6280, %v6281
      %v6283 = vsel %vm3827, %v6279, %v6280
      %v6284 = vsel %vm3827, %v6278, %v6279
      %v6285 = vsel %vm3827, %v6281, %v6278
      %v6286 = vmul.f32 %v6285, %v3834
      %v6287 = vmul.f32 %v6284, %v3838
      %v6288 = vmul.f32 %v6283, %v3842
      %v6289 = vmul.f32 %v6282, %v3846
      %v6290 = vld [vmem:[%s5 + $0xf] sm:$0x1]
      %v6291 = vlaneseq
      %v6292 = vshrl.u32 %v6291, 7
      %v6293 = vsub.s32 0, %v6292
      %v6294 = vrot.slane %v6290, %v6293
      %v6295 = vmul.f32 %v6286, %v6294
      %v6296 = vmul.f32 %v6287, %v6294
      %v6297 = vmul.f32 %v6288, %v6294
      %v6298 = vmul.f32 %v6289, %v6294
      %v6299 = vadd.f32 %v6274, %v6295
      %v6300 = vadd.f32 %v6275, %v6296
      %v6301 = vadd.f32 %v6276, %v6297
      %v6302 = vadd.f32 %v6277, %v6298
      %v6303 = vmul.f32 %v6228, %v3867
      %v6304 = vmul.f32 %v6229, %v3871
      %v6305 = vmul.f32 %v6230, %v3875
      %v6306 = vmul.f32 %v6231, %v3879
      %v6307 = vld [vmem:[%s5 + $0x10] sm:$0x1]
      %v6308 = vlaneseq
      %v6309 = vshrl.u32 %v6308, 7
      %v6310 = vsub.s32 0, %v6309
      %v6311 = vrot.slane %v6307, %v6310
      %v6312 = vmul.f32 %v6303, %v6311
      %v6313 = vmul.f32 %v6304, %v6311
      %v6314 = vmul.f32 %v6305, %v6311
      %v6315 = vmul.f32 %v6306, %v6311
      %v6316 = vadd.f32 %v6299, %v6312
      %v6317 = vadd.f32 %v6300, %v6313
      %v6318 = vadd.f32 %v6301, %v6314
      %v6319 = vadd.f32 %v6302, %v6315
      %v6320 = vrot.slane %v6228, 1
      %v6321 = vrot.slane %v6229, 1
      %v6322 = vrot.slane %v6230, 1
      %v6323 = vrot.slane %v6231, 1
      %v6324 = vsel %vm3902, %v6322, %v6323
      %v6325 = vsel %vm3902, %v6321, %v6322
      %v6326 = vsel %vm3902, %v6320, %v6321
      %v6327 = vsel %vm3902, %v6323, %v6320
      %v6328 = vmul.f32 %v6326, %v3909
      %v6329 = vmul.f32 %v6325, %v3913
      %v6330 = vmul.f32 %v6324, %v3917
      %v6331 = vmul.f32 %v6327, %v3921
      %v6332 = vld [vmem:[%s5 + $0x11] sm:$0x1]
      %v6333 = vlaneseq
      %v6334 = vshrl.u32 %v6333, 7
      %v6335 = vsub.s32 0, %v6334
      %v6336 = vrot.slane %v6332, %v6335
      %v6337 = vmul.f32 %v6328, %v6336
      %v6338 = vmul.f32 %v6329, %v6336
      %v6339 = vmul.f32 %v6330, %v6336
      %v6340 = vmul.f32 %v6331, %v6336
      %v6341 = vadd.f32 %v6316, %v6337
      %v6342 = vadd.f32 %v6317, %v6338
      %v6343 = vadd.f32 %v6318, %v6339
      %v6344 = vadd.f32 %v6319, %v6340
      %v6345 = vrot.slane %v6228, 2
      %v6346 = vrot.slane %v6229, 2
      %v6347 = vrot.slane %v6230, 2
      %v6348 = vrot.slane %v6231, 2
      %v6349 = vsel %vm3944, %v6347, %v6348
      %v6350 = vsel %vm3944, %v6346, %v6347
      %v6351 = vsel %vm3944, %v6345, %v6346
      %v6352 = vsel %vm3944, %v6348, %v6345
      %v6353 = vmul.f32 %v6351, %v3951
      %v6354 = vmul.f32 %v6350, %v3955
      %v6355 = vmul.f32 %v6349, %v3959
      %v6356 = vmul.f32 %v6352, %v3963
      %v6357 = vld [vmem:[%s5 + $0x12] sm:$0x1]
      %v6358 = vlaneseq
      %v6359 = vshrl.u32 %v6358, 7
      %v6360 = vsub.s32 0, %v6359
      %v6361 = vrot.slane %v6357, %v6360
      %v6362 = vmul.f32 %v6353, %v6361
      %v6363 = vmul.f32 %v6354, %v6361
      %v6364 = vmul.f32 %v6355, %v6361
      %v6365 = vmul.f32 %v6356, %v6361
      %v6366 = vadd.f32 %v6341, %v6362
      %v6367 = vadd.f32 %v6342, %v6363
      %v6368 = vadd.f32 %v6343, %v6364
      %v6369 = vadd.f32 %v6344, %v6365
      %v6370 = vrot.slane %v6228, 3
      %v6371 = vrot.slane %v6229, 3
      %v6372 = vrot.slane %v6230, 3
      %v6373 = vrot.slane %v6231, 3
      %v6374 = vsel %vm3986, %v6372, %v6373
      %v6375 = vsel %vm3986, %v6371, %v6372
      %v6376 = vsel %vm3986, %v6370, %v6371
      %v6377 = vsel %vm3986, %v6373, %v6370
      %v6378 = vmul.f32 %v6376, %v3993
      %v6379 = vmul.f32 %v6375, %v3997
      %v6380 = vmul.f32 %v6374, %v4001
      %v6381 = vmul.f32 %v6377, %v4005
      %v6382 = vld [vmem:[%s5 + $0x13] sm:$0x1]
      %v6383 = vlaneseq
      %v6384 = vshrl.u32 %v6383, 7
      %v6385 = vsub.s32 0, %v6384
      %v6386 = vrot.slane %v6382, %v6385
      %v6387 = vmul.f32 %v6378, %v6386
      %v6388 = vmul.f32 %v6379, %v6386
      %v6389 = vmul.f32 %v6380, %v6386
      %v6390 = vmul.f32 %v6381, %v6386
      %v6391 = vadd.f32 %v6366, %v6387
      %v6392 = vadd.f32 %v6367, %v6388
      %v6393 = vadd.f32 %v6368, %v6389
      %v6394 = vadd.f32 %v6369, %v6390
      %v6395 = vld [vmem:[%s5 + $0xc] sm:$0x1]
      %v6396 = vlaneseq
      %v6397 = vshrl.u32 %v6396, 7
      %v6398 = vsub.s32 0, %v6397
      %v6399 = vrot.slane %v6395, %v6398
      %v6400 = vadd.f32 %v6391, %v6399
      %v6401 = vadd.f32 %v6392, %v6399
      %v6402 = vadd.f32 %v6393, %v6399
      %v6403 = vadd.f32 %v6394, %v6399
      %v6404 = vld [vmem:[%s10 + $0x100] sm:$0xf]
      %v6405 = vld [vmem:[%s10 + $0x104] sm:$0xf]
      %v6406 = vld [vmem:[%s10 + $0x108] sm:$0xf]
      %v6407 = vld [vmem:[%s10 + $0x10c] sm:$0xf]
      %v6408 = vld [vmem:[%s10 + $0x110] sm:$0xf]
      %v6409 = vld [vmem:[%s10 + $0x114] sm:$0xf]
      %v6410 = vld [vmem:[%s10 + $0x118] sm:$0xf]
      %v6411 = vld [vmem:[%s10 + $0x11c] sm:$0xf]
      %v6412 = vxor.u32 %v6400, 2147483648
      %v6413 = vxor.u32 %v6401, 2147483648
      %v6414 = vxor.u32 %v6402, 2147483648
      %v6415 = vxor.u32 %v6403, 2147483648
      %v6416 = vmul.f32 %v6412, 1.442695
      %v6417 = vpow.pop %v6416
      %v6418 = vmul.f32 %v6413, 1.442695
      %v6419 = vpow.pop %v6418
      %v6420 = vmul.f32 %v6414, 1.442695
      %v6421 = vpow.pop %v6420
      %v6422 = vmul.f32 %v6415, 1.442695
      %v6423 = vpow.pop %v6422
      %v6424 = vadd.f32 %v6417, 1.0
      %v6425 = vadd.f32 %v6419, 1.0
      %v6426 = vadd.f32 %v6421, 1.0
      %v6427 = vadd.f32 %v6423, 1.0
      %v6428 = vrcp.pop %v6424
      %v6429 = vmul.f32 1.0, %v6428
      %v6430 = vrcp.pop %v6425
      %v6431 = vmul.f32 1.0, %v6430
      %v6432 = vrcp.pop %v6426
      %v6433 = vmul.f32 1.0, %v6432
      %v6434 = vrcp.pop %v6427
      %v6435 = vmul.f32 1.0, %v6434
      %v6436 = vmul.f32 %v6400, %v6429
      %v6437 = vmul.f32 %v6401, %v6431
      %v6438 = vmul.f32 %v6402, %v6433
      %v6439 = vmul.f32 %v6403, %v6435
      %v6440 = vld [vmem:[%s3 + $0x18] sm:$0x1]
      %v6441 = vpack.c.bf16 %v6437, %v6436
      %v6442 = vpack.c.bf16 %v6439, %v6438
      %v6443 = vlaneseq
      %v6444 = vshrl.u32 %v6443, 7
      %v6445 = vsub.s32 0, %v6444
      %v6446 = vrot.slane %v6440, %v6445
      %v6455 = vunpack.c.l.b16 %v6404
      %v6456 = vunpack.c.l.b16 %v6405
      %v6457 = vunpack.c.l.b16 %v6406
      %v6458 = vunpack.c.l.b16 %v6407
      %v6459 = vunpack.c.l.b16 %v6408
      %v6460 = vunpack.c.l.b16 %v6409
      %v6461 = vunpack.c.l.b16 %v6410
      %v6462 = vunpack.c.l.b16 %v6411
      %v6463 = vpack.c.b16 %v6456, %v6455
      %v6464 = vpack.c.b16 %v6458, %v6457
      %v6465 = vpack.c.b16 %v6460, %v6459
      %v6466 = vpack.c.b16 %v6462, %v6461
      %v6472 = vsel %vm4100, %v6441, 0
      %v6475 = vsel %vm4100, %v6442, 0
      %6477 = vmatprep.subr.bf16.mxu0 0
      %6478 = vmatpush1.bf16.msra.mxu0 %v6463
      %6479 = vmatprep.subr.bf16.mxu0 0
      %6480 = vmatpush1.bf16.msra.mxu0 %v6464
      %6481 = vmatprep.subr.bf16.mxu0 0
      %6482 = vmatpush1.bf16.msra.mxu0 %v6465
      %6483 = vmatprep.subr.bf16.mxu0 0
      %6484 = vmatpush1.bf16.msra.mxu0 %v6466
      %6485 = vmatprep.subr.bf16.mxu0 0
      %6486 = vmatpush1.bf16.msra.mxu0 0
      %6487 = vmatprep.subr.bf16.mxu0 0
      %6488 = vmatpush1.bf16.msra.mxu0 0
      %6489 = vmatprep.subr.bf16.mxu0 0
      %6490 = vmatpush1.bf16.msra.mxu0 0
      %6491 = vmatprep.subr.bf16.mxu0 0
      %6492 = vmatpush1.bf16.msra.mxu0 0
      %6493 = vmatprep.subr.bf16.mxu0 0
      %6494 = vmatpush1.bf16.msra.mxu0 0
      %6495 = vmatprep.subr.bf16.mxu0 0
      %6496 = vmatpush1.bf16.msra.mxu0 0
      %6497 = vmatprep.subr.bf16.mxu0 0
      %6498 = vmatpush1.bf16.msra.mxu0 0
      %6499 = vmatprep.subr.bf16.mxu0 0
      %6500 = vmatpush1.bf16.msra.mxu0 0
      %6501 = vmatprep.subr.bf16.mxu0 0
      %6502 = vmatpush1.bf16.msra.mxu0 0
      %6503 = vmatprep.subr.bf16.mxu0 0
      %6504 = vmatpush1.bf16.msra.mxu0 0
      %6505 = vmatprep.subr.bf16.mxu0 0
      %6506 = vmatpush1.bf16.msra.mxu0 0
      %6507 = vmatprep.subr.bf16.mxu0 0
      %6508 = vmatpush1.bf16.msra.mxu0 0
      %6509 = vmatprep.mubr.bf16.mxu0 0
      %6510 = vmatmul.mubr.bf16.gmra.mrb[0].mxu0 %v6472
      %v6511 = vpop.f32.mrb[0].mxu0
      %v6512 = vadd.f32 %v6446, %v6511
      %v6513 = vpop.f32.mrb[0].mxu0
      %v6514 = vpop.f32.mrb[0].mxu0
      %v6515 = vadd.f32 %v6446, %v6514
      %v6516 = vpop.f32.mrb[0].mxu0
      %6517 = vmatprep.mubr.bf16.mxu0 0
      %6518 = vmatmul.mubr.bf16.gmra.mrb[0].mxu0 %v6475
      %v6519 = vpop.f32.mrb[0].mxu0
      %v6520 = vadd.f32 %v6446, %v6519
      %v6521 = vpop.f32.mrb[0].mxu0
      %v6522 = vpop.f32.mrb[0].mxu0
      %v6523 = vadd.f32 %v6446, %v6522
      %v6524 = vpop.f32.mrb[0].mxu0
      %6525 = vdwg.mxu0
      %v6526 = vadd.f32 %v5982, %v6512
      %v6527 = vadd.f32 %v5983, %v6515
      %v6528 = vadd.f32 %v5984, %v6520
      %v6529 = vadd.f32 %v5985, %v6523
      %v6530 = vld [vmem:[%s3 + $0x19] sm:$0x1]
      %v6531 = vld [vmem:[%s3 + $0x1a] sm:$0x1]
      %v6532 = vsel %vm1011, %v6526, 0.0
      %6533 = vadd.xlane.f32.xlu0 %v6532
      %v6534 = vpop.xlane.xlu0 %6533
      %v6535 = vsel %vm1011, %v6527, 0.0
      %6536 = vadd.xlane.f32.xlu0 %v6535
      %v6537 = vpop.xlane.xlu0 %6536
      %v6538 = vsel %vm1011, %v6528, 0.0
      %6539 = vadd.xlane.f32.xlu0 %v6538
      %v6540 = vpop.xlane.xlu0 %6539
      %v6541 = vsel %vm1011, %v6529, 0.0
      %6542 = vadd.xlane.f32.xlu0 %v6541
      %v6543 = vpop.xlane.xlu0 %6542
      %v6544 = vmul.f32 %v6534, %v2054
      %v6545 = vmul.f32 %v6537, %v2054
      %v6546 = vmul.f32 %v6540, %v2054
      %v6547 = vmul.f32 %v6543, %v2054
      %v6548 = vsub.f32 %v6526, %v6544
      %v6549 = vsub.f32 %v6527, %v6545
      %v6550 = vsub.f32 %v6528, %v6546
      %v6551 = vsub.f32 %v6529, %v6547
      %v6552 = vmul.f32 %v6548, %v6548
      %v6553 = vmul.f32 %v6549, %v6549
      %v6554 = vmul.f32 %v6550, %v6550
      %v6555 = vmul.f32 %v6551, %v6551
      %v6556 = vsel %vm1011, %v6552, 0.0
      %6557 = vadd.xlane.f32.xlu0 %v6556
      %v6558 = vpop.xlane.xlu0 %6557
      %v6559 = vsel %vm1011, %v6553, 0.0
      %6560 = vadd.xlane.f32.xlu0 %v6559
      %v6561 = vpop.xlane.xlu0 %6560
      %v6562 = vsel %vm1011, %v6554, 0.0
      %6563 = vadd.xlane.f32.xlu0 %v6562
      %v6564 = vpop.xlane.xlu0 %6563
      %v6565 = vsel %vm1011, %v6555, 0.0
      %6566 = vadd.xlane.f32.xlu0 %v6565
      %v6567 = vpop.xlane.xlu0 %6566
      %v6568 = vmul.f32 %v6558, %v2054
      %v6569 = vmul.f32 %v6561, %v2054
      %v6570 = vmul.f32 %v6564, %v2054
      %v6571 = vmul.f32 %v6567, %v2054
      %v6572 = vadd.f32 %v6568, 1e-05
      %v6573 = vadd.f32 %v6569, 1e-05
      %v6574 = vadd.f32 %v6570, 1e-05
      %v6575 = vadd.f32 %v6571, 1e-05
      %v6576 = vrsqrt.pop %v6572
      %v6577 = vrsqrt.pop %v6573
      %v6578 = vrsqrt.pop %v6574
      %v6579 = vrsqrt.pop %v6575
      %v6580 = vmul.f32 %v6548, %v6576
      %v6581 = vmul.f32 %v6549, %v6577
      %v6582 = vmul.f32 %v6550, %v6578
      %v6583 = vmul.f32 %v6551, %v6579
      %v6584 = vlaneseq
      %v6585 = vshrl.u32 %v6584, 7
      %v6586 = vsub.s32 0, %v6585
      %v6587 = vrot.slane %v6530, %v6586
      %v6588 = vmul.f32 %v6580, %v6587
      %v6589 = vmul.f32 %v6581, %v6587
      %v6590 = vmul.f32 %v6582, %v6587
      %v6591 = vmul.f32 %v6583, %v6587
      %v6592 = vlaneseq
      %v6593 = vshrl.u32 %v6592, 7
      %v6594 = vsub.s32 0, %v6593
      %v6595 = vrot.slane %v6531, %v6594
      %v6596 = vadd.f32 %v6588, %v6595
      %v6597 = vadd.f32 %v6589, %v6595
      %v6598 = vadd.f32 %v6590, %v6595
      %v6599 = vadd.f32 %v6591, %v6595
      %v6600 = vld [vmem:[%s9 + $0x30] sm:$0xf]
      %v6601 = vld [vmem:[%s9 + $0x34] sm:$0xf]
      %v6602 = vld [vmem:[%s9 + $0x38] sm:$0xf]
      %v6603 = vld [vmem:[%s9 + $0x3c] sm:$0xf]
      %v6604 = vld [vmem:[%s4 + $0x3] sm:$0x1]
      %v6605 = vpack.c.bf16 %v6597, %v6596
      %v6606 = vpack.c.bf16 %v6599, %v6598
      %v6607 = vlaneseq
      %v6608 = vshrl.u32 %v6607, 7
      %v6609 = vsub.s32 0, %v6608
      %v6610 = vrot.slane %v6604, %v6609
      %v6615 = vunpack.c.l.b16 %v6600
      %v6616 = vunpack.c.l.b16 %v6601
      %v6617 = vunpack.c.l.b16 %v6602
      %v6618 = vunpack.c.l.b16 %v6603
      %v6619 = vpack.c.b16 %v6616, %v6615
      %v6620 = vpack.c.b16 %v6618, %v6617
      %v6624 = vsel %vm1011, %v6605, 0
      %v6627 = vsel %vm1011, %v6606, 0
      %6629 = vmatprep.subr.bf16.mxu0 0
      %6630 = vmatpush1.bf16.msra.mxu0 %v6619
      %6631 = vmatprep.subr.bf16.mxu0 0
      %6632 = vmatpush1.bf16.msra.mxu0 %v6620
      %6633 = vmatprep.subr.bf16.mxu0 0
      %6634 = vmatpush1.bf16.msra.mxu0 0
      %6635 = vmatprep.subr.bf16.mxu0 0
      %6636 = vmatpush1.bf16.msra.mxu0 0
      %6637 = vmatprep.subr.bf16.mxu0 0
      %6638 = vmatpush1.bf16.msra.mxu0 0
      %6639 = vmatprep.subr.bf16.mxu0 0
      %6640 = vmatpush1.bf16.msra.mxu0 0
      %6641 = vmatprep.subr.bf16.mxu0 0
      %6642 = vmatpush1.bf16.msra.mxu0 0
      %6643 = vmatprep.subr.bf16.mxu0 0
      %6644 = vmatpush1.bf16.msra.mxu0 0
      %6645 = vmatprep.subr.bf16.mxu0 0
      %6646 = vmatpush1.bf16.msra.mxu0 0
      %6647 = vmatprep.subr.bf16.mxu0 0
      %6648 = vmatpush1.bf16.msra.mxu0 0
      %6649 = vmatprep.subr.bf16.mxu0 0
      %6650 = vmatpush1.bf16.msra.mxu0 0
      %6651 = vmatprep.subr.bf16.mxu0 0
      %6652 = vmatpush1.bf16.msra.mxu0 0
      %6653 = vmatprep.subr.bf16.mxu0 0
      %6654 = vmatpush1.bf16.msra.mxu0 0
      %6655 = vmatprep.subr.bf16.mxu0 0
      %6656 = vmatpush1.bf16.msra.mxu0 0
      %6657 = vmatprep.subr.bf16.mxu0 0
      %6658 = vmatpush1.bf16.msra.mxu0 0
      %6659 = vmatprep.subr.bf16.mxu0 0
      %6660 = vmatpush1.bf16.msra.mxu0 0
      %6661 = vmatprep.mubr.bf16.mxu0 0
      %6662 = vmatmul.mubr.bf16.gmra.mrb[0].mxu0 %v6624
      %v6663 = vpop.f32.mrb[0].mxu0
      %v6664 = vadd.f32 %v6610, %v6663
      %v6665 = vpop.f32.mrb[0].mxu0
      %v6666 = vpop.f32.mrb[0].mxu0
      %v6667 = vadd.f32 %v6610, %v6666
      %v6668 = vpop.f32.mrb[0].mxu0
      %6669 = vmatprep.mubr.bf16.mxu0 0
      %6670 = vmatmul.mubr.bf16.gmra.mrb[0].mxu0 %v6627
      %v6671 = vpop.f32.mrb[0].mxu0
      %v6672 = vadd.f32 %v6610, %v6671
      %v6673 = vpop.f32.mrb[0].mxu0
      %v6674 = vpop.f32.mrb[0].mxu0
      %v6675 = vadd.f32 %v6610, %v6674
      %v6676 = vpop.f32.mrb[0].mxu0
      %6677 = vdwg.mxu0
      %v6678 = vxor.u32 %v6664, 2147483648
      %v6679 = vxor.u32 %v6667, 2147483648
      %v6680 = vxor.u32 %v6672, 2147483648
      %v6681 = vxor.u32 %v6675, 2147483648
      %v6682 = vmul.f32 %v6678, 1.442695
      %v6683 = vpow.pop %v6682
      %v6684 = vmul.f32 %v6679, 1.442695
      %v6685 = vpow.pop %v6684
      %v6686 = vmul.f32 %v6680, 1.442695
      %v6687 = vpow.pop %v6686
      %v6688 = vmul.f32 %v6681, 1.442695
      %v6689 = vpow.pop %v6688
      %v6690 = vadd.f32 %v6683, 1.0
      %v6691 = vadd.f32 %v6685, 1.0
      %v6692 = vadd.f32 %v6687, 1.0
      %v6693 = vadd.f32 %v6689, 1.0
      %v6694 = vrcp.pop %v6690
      %v6695 = vmul.f32 1.0, %v6694
      %v6696 = vrcp.pop %v6691
      %v6697 = vmul.f32 1.0, %v6696
      %v6698 = vrcp.pop %v6692
      %v6699 = vmul.f32 1.0, %v6698
      %v6700 = vrcp.pop %v6693
      %v6701 = vmul.f32 1.0, %v6700
      %v6702 = vmul.f32 %v6664, %v6695
      %v6703 = vmul.f32 %v6667, %v6697
      %v6704 = vmul.f32 %v6672, %v6699
      %v6705 = vmul.f32 %v6675, %v6701
      %v6706 = vld [vmem:[%s10 + $0x120] sm:$0xf]
      %v6707 = vld [vmem:[%s10 + $0x124] sm:$0xf]
      %v6708 = vld [vmem:[%s10 + $0x128] sm:$0xf]
      %v6709 = vld [vmem:[%s10 + $0x12c] sm:$0xf]
      %v6710 = vld [vmem:[%s10 + $0x130] sm:$0xf]
      %v6711 = vld [vmem:[%s10 + $0x134] sm:$0xf]
      %v6712 = vld [vmem:[%s10 + $0x138] sm:$0xf]
      %v6713 = vld [vmem:[%s10 + $0x13c] sm:$0xf]
      %v6714 = vld [vmem:[%s10 + $0x140] sm:$0xf]
      %v6715 = vld [vmem:[%s10 + $0x144] sm:$0xf]
      %v6716 = vld [vmem:[%s10 + $0x148] sm:$0xf]
      %v6717 = vld [vmem:[%s10 + $0x14c] sm:$0xf]
      %v6718 = vld [vmem:[%s10 + $0x150] sm:$0xf]
      %v6719 = vld [vmem:[%s10 + $0x154] sm:$0xf]
      %v6720 = vld [vmem:[%s10 + $0x158] sm:$0xf]
      %v6721 = vld [vmem:[%s10 + $0x15c] sm:$0xf]
      %v6722 = vld [vmem:[%s3 + $0x1b] sm:$0x1]
      %v6723 = vpack.c.bf16 %v6703, %v6702
      %v6724 = vpack.c.bf16 %v6705, %v6704
      %v6725 = vlaneseq
      %v6726 = vshrl.u32 %v6725, 7
      %v6727 = vsub.s32 0, %v6726
      %v6728 = vrot.slane %v6722, %v6727
      %v6745 = vunpack.c.l.b16 %v6706
      %v6746 = vunpack.c.l.b16 %v6707
      %v6747 = vunpack.c.l.b16 %v6708
      %v6748 = vunpack.c.l.b16 %v6709
      %v6749 = vunpack.c.l.b16 %v6710
      %v6750 = vunpack.c.l.b16 %v6711
      %v6751 = vunpack.c.l.b16 %v6712
      %v6752 = vunpack.c.l.b16 %v6713
      %v6753 = vunpack.c.l.b16 %v6714
      %v6754 = vunpack.c.l.b16 %v6715
      %v6755 = vunpack.c.l.b16 %v6716
      %v6756 = vunpack.c.l.b16 %v6717
      %v6757 = vunpack.c.l.b16 %v6718
      %v6758 = vunpack.c.l.b16 %v6719
      %v6759 = vunpack.c.l.b16 %v6720
      %v6760 = vunpack.c.l.b16 %v6721
      %v6761 = vpack.c.b16 %v6746, %v6745
      %v6762 = vpack.c.b16 %v6748, %v6747
      %v6763 = vpack.c.b16 %v6750, %v6749
      %v6764 = vpack.c.b16 %v6752, %v6751
      %v6765 = vpack.c.b16 %v6754, %v6753
      %v6766 = vpack.c.b16 %v6756, %v6755
      %v6767 = vpack.c.b16 %v6758, %v6757
      %v6768 = vpack.c.b16 %v6760, %v6759
      %6777 = vmatprep.subr.bf16.mxu0 0
      %6778 = vmatpush1.bf16.msra.mxu0 %v6761
      %6779 = vmatprep.subr.bf16.mxu0 0
      %6780 = vmatpush1.bf16.msra.mxu0 %v6762
      %6781 = vmatprep.subr.bf16.mxu0 0
      %6782 = vmatpush1.bf16.msra.mxu0 %v6763
      %6783 = vmatprep.subr.bf16.mxu0 0
      %6784 = vmatpush1.bf16.msra.mxu0 %v6764
      %6785 = vmatprep.subr.bf16.mxu0 0
      %6786 = vmatpush1.bf16.msra.mxu0 %v6765
      %6787 = vmatprep.subr.bf16.mxu0 0
      %6788 = vmatpush1.bf16.msra.mxu0 %v6766
      %6789 = vmatprep.subr.bf16.mxu0 0
      %6790 = vmatpush1.bf16.msra.mxu0 %v6767
      %6791 = vmatprep.subr.bf16.mxu0 0
      %6792 = vmatpush1.bf16.msra.mxu0 %v6768
      %6793 = vmatprep.subr.bf16.mxu0 0
      %6794 = vmatpush1.bf16.msra.mxu0 0
      %6795 = vmatprep.subr.bf16.mxu0 0
      %6796 = vmatpush1.bf16.msra.mxu0 0
      %6797 = vmatprep.subr.bf16.mxu0 0
      %6798 = vmatpush1.bf16.msra.mxu0 0
      %6799 = vmatprep.subr.bf16.mxu0 0
      %6800 = vmatpush1.bf16.msra.mxu0 0
      %6801 = vmatprep.subr.bf16.mxu0 0
      %6802 = vmatpush1.bf16.msra.mxu0 0
      %6803 = vmatprep.subr.bf16.mxu0 0
      %6804 = vmatpush1.bf16.msra.mxu0 0
      %6805 = vmatprep.subr.bf16.mxu0 0
      %6806 = vmatpush1.bf16.msra.mxu0 0
      %6807 = vmatprep.subr.bf16.mxu0 0
      %6808 = vmatpush1.bf16.msra.mxu0 0
      %6809 = vmatprep.mubr.bf16.mxu0 0
      %6810 = vmatmul.mubr.bf16.gmra.mrb[0].mxu0 %v6723
      %v6811 = vpop.f32.mrb[0].mxu0
      %v6812 = vadd.f32 %v6728, %v6811
      %v6813 = vpop.f32.mrb[0].mxu0
      %v6814 = vpop.f32.mrb[0].mxu0
      %v6815 = vadd.f32 %v6728, %v6814
      %v6816 = vpop.f32.mrb[0].mxu0
      %6817 = vmatprep.mubr.bf16.mxu0 0
      %6818 = vmatmul.mubr.bf16.gmra.mrb[0].mxu0 %v6724
      %v6819 = vpop.f32.mrb[0].mxu0
      %v6820 = vadd.f32 %v6728, %v6819
      %v6821 = vpop.f32.mrb[0].mxu0
      %v6822 = vpop.f32.mrb[0].mxu0
      %v6823 = vadd.f32 %v6728, %v6822
      %v6824 = vpop.f32.mrb[0].mxu0
      %6825 = vdwg.mxu0
      %v6826 = vmul.f32 %v6812, 0.5
      %v6827 = vmul.f32 %v6815, 0.5
      %v6828 = vmul.f32 %v6820, 0.5
      %v6829 = vmul.f32 %v6823, 0.5
      %v6830 = vadd.f32 %v6526, %v6826
      %v6831 = vadd.f32 %v6527, %v6827
      %v6832 = vadd.f32 %v6528, %v6828
      %v6833 = vadd.f32 %v6529, %v6829
      %v6834 = vld [vmem:[%s3 + $0x1c] sm:$0x1]
      %v6835 = vld [vmem:[%s3 + $0x1d] sm:$0x1]
      %v6836 = vsel %vm1011, %v6830, 0.0
      %6837 = vadd.xlane.f32.xlu0 %v6836
      %v6838 = vpop.xlane.xlu0 %6837
      %v6839 = vsel %vm1011, %v6831, 0.0
      %6840 = vadd.xlane.f32.xlu0 %v6839
      %v6841 = vpop.xlane.xlu0 %6840
      %v6842 = vsel %vm1011, %v6832, 0.0
      %6843 = vadd.xlane.f32.xlu0 %v6842
      %v6844 = vpop.xlane.xlu0 %6843
      %v6845 = vsel %vm1011, %v6833, 0.0
      %6846 = vadd.xlane.f32.xlu0 %v6845
      %v6847 = vpop.xlane.xlu0 %6846
      %v6848 = vmul.f32 %v6838, %v2054
      %v6849 = vmul.f32 %v6841, %v2054
      %v6850 = vmul.f32 %v6844, %v2054
      %v6851 = vmul.f32 %v6847, %v2054
      %v6852 = vsub.f32 %v6830, %v6848
      %v6853 = vsub.f32 %v6831, %v6849
      %v6854 = vsub.f32 %v6832, %v6850
      %v6855 = vsub.f32 %v6833, %v6851
      %v6856 = vmul.f32 %v6852, %v6852
      %v6857 = vmul.f32 %v6853, %v6853
      %v6858 = vmul.f32 %v6854, %v6854
      %v6859 = vmul.f32 %v6855, %v6855
      %v6860 = vsel %vm1011, %v6856, 0.0
      %6861 = vadd.xlane.f32.xlu0 %v6860
      %v6862 = vpop.xlane.xlu0 %6861
      %v6863 = vsel %vm1011, %v6857, 0.0
      %6864 = vadd.xlane.f32.xlu0 %v6863
      %v6865 = vpop.xlane.xlu0 %6864
      %v6866 = vsel %vm1011, %v6858, 0.0
      %6867 = vadd.xlane.f32.xlu0 %v6866
      %v6868 = vpop.xlane.xlu0 %6867
      %v6869 = vsel %vm1011, %v6859, 0.0
      %6870 = vadd.xlane.f32.xlu0 %v6869
      %v6871 = vpop.xlane.xlu0 %6870
      %v6872 = vmul.f32 %v6862, %v2054
      %v6873 = vmul.f32 %v6865, %v2054
      %v6874 = vmul.f32 %v6868, %v2054
      %v6875 = vmul.f32 %v6871, %v2054
      %v6876 = vadd.f32 %v6872, 1e-05
      %v6877 = vadd.f32 %v6873, 1e-05
      %v6878 = vadd.f32 %v6874, 1e-05
      %v6879 = vadd.f32 %v6875, 1e-05
      %v6880 = vrsqrt.pop %v6876
      %v6881 = vrsqrt.pop %v6877
      %v6882 = vrsqrt.pop %v6878
      %v6883 = vrsqrt.pop %v6879
      %v6884 = vmul.f32 %v6852, %v6880
      %v6885 = vmul.f32 %v6853, %v6881
      %v6886 = vmul.f32 %v6854, %v6882
      %v6887 = vmul.f32 %v6855, %v6883
      %v6888 = vlaneseq
      %v6889 = vshrl.u32 %v6888, 7
      %v6890 = vsub.s32 0, %v6889
      %v6891 = vrot.slane %v6834, %v6890
      %v6892 = vmul.f32 %v6884, %v6891
      %v6893 = vmul.f32 %v6885, %v6891
      %v6894 = vmul.f32 %v6886, %v6891
      %v6895 = vmul.f32 %v6887, %v6891
      %v6896 = vlaneseq
      %v6897 = vshrl.u32 %v6896, 7
      %v6898 = vsub.s32 0, %v6897
      %v6899 = vrot.slane %v6835, %v6898
      %v6900 = vadd.f32 %v6892, %v6899
      %v6901 = vadd.f32 %v6893, %v6899
      %v6902 = vadd.f32 %v6894, %v6899
      %v6903 = vadd.f32 %v6895, %v6899
      %v6904 = vld [vmem:[%s13] sm:$0xff]
      %v6905 = vld [vmem:[%s13 + $0x8] sm:$0xff]
      %v6906 = vld [vmem:[%s13 + $0x10] sm:$0xff]
      %v6907 = vld [vmem:[%s13 + $0x18] sm:$0xff]
      %v6908 = vpack.c.bf16 %v6905, %v6904
      %v6909 = vpack.c.bf16 %v6907, %v6906
      %v6910 = vld [vmem:[%s13 + $0x20] sm:$0x1]
      %v6911 = vpack.c.bf16 %v6901, %v6900
      %v6912 = vpack.c.bf16 %v6903, %v6902
      %v6913 = vlaneseq
      %v6914 = vshrl.u32 %v6913, 7
      %v6915 = vsub.s32 0, %v6914
      %v6916 = vrot.slane %v6910, %v6915
      %v6918 = vsel %vm1011, %v6911, 0
      %v6921 = vsel %vm1011, %v6912, 0
      %6923 = vmatprep.subr.bf16.mxu0 0
      %6924 = vmatpush1.bf16.msra.mxu0 %v6908
      %6925 = vmatprep.subr.bf16.mxu0 0
      %6926 = vmatpush1.bf16.msra.mxu0 %v6909
      %6927 = vmatprep.subr.bf16.mxu0 0
      %6928 = vmatpush1.bf16.msra.mxu0 0
      %6929 = vmatprep.subr.bf16.mxu0 0
      %6930 = vmatpush1.bf16.msra.mxu0 0
      %6931 = vmatprep.subr.bf16.mxu0 0
      %6932 = vmatpush1.bf16.msra.mxu0 0
      %6933 = vmatprep.subr.bf16.mxu0 0
      %6934 = vmatpush1.bf16.msra.mxu0 0
      %6935 = vmatprep.subr.bf16.mxu0 0
      %6936 = vmatpush1.bf16.msra.mxu0 0
      %6937 = vmatprep.subr.bf16.mxu0 0
      %6938 = vmatpush1.bf16.msra.mxu0 0
      %6939 = vmatprep.subr.bf16.mxu0 0
      %6940 = vmatpush1.bf16.msra.mxu0 0
      %6941 = vmatprep.subr.bf16.mxu0 0
      %6942 = vmatpush1.bf16.msra.mxu0 0
      %6943 = vmatprep.subr.bf16.mxu0 0
      %6944 = vmatpush1.bf16.msra.mxu0 0
      %6945 = vmatprep.subr.bf16.mxu0 0
      %6946 = vmatpush1.bf16.msra.mxu0 0
      %6947 = vmatprep.subr.bf16.mxu0 0
      %6948 = vmatpush1.bf16.msra.mxu0 0
      %6949 = vmatprep.subr.bf16.mxu0 0
      %6950 = vmatpush1.bf16.msra.mxu0 0
      %6951 = vmatprep.subr.bf16.mxu0 0
      %6952 = vmatpush1.bf16.msra.mxu0 0
      %6953 = vmatprep.subr.bf16.mxu0 0
      %6954 = vmatpush1.bf16.msra.mxu0 0
      %6955 = vmatprep.mubr.bf16.mxu0 0
      %6956 = vmatmul.mubr.bf16.gmra.mrb[0].mxu0 %v6918
      %v6957 = vpop.f32.mrb[0].mxu0
      %v6958 = vadd.f32 %v6916, %v6957
      %v6959 = vpop.f32.mrb[0].mxu0
      %v6960 = vpop.f32.mrb[0].mxu0
      %v6961 = vadd.f32 %v6916, %v6960
      %v6962 = vpop.f32.mrb[0].mxu0
      %6963 = vmatprep.mubr.bf16.mxu0 0
      %6964 = vmatmul.mubr.bf16.gmra.mrb[0].mxu0 %v6921
      %v6965 = vpop.f32.mrb[0].mxu0
      %v6966 = vadd.f32 %v6916, %v6965
      %v6967 = vpop.f32.mrb[0].mxu0
      %v6968 = vpop.f32.mrb[0].mxu0
      %v6969 = vadd.f32 %v6916, %v6968
      %v6970 = vpop.f32.mrb[0].mxu0
      %6971 = vdwg.mxu0
      %vm6972 = vcmask 15360
      %6973 = vst.msk [vmem:[%s467] sm:$0xff] %vm6972, %v6958
      %6974 = vst.msk [vmem:[%s467 + $0x8] sm:$0xff] %vm6972, %v6961
      %6975 = vst.msk [vmem:[%s467 + $0x10] sm:$0xff] %vm6972, %v6966
      %6976 = vst.msk [vmem:[%s467 + $0x18] sm:$0xff] %vm6972, %v6969
      %p6977 = scmp.lt.s32.totalorder %s25, 1
      %s6978 = scalar_select %p6977, %s25, 1
      %s6979 = smul.addr %s6978, 4
      %s6980 = smul.addr %s6979, 8
      %s6981 = scalar_lea.vmem %s14, %s6980
      // Predicated region
      $region77: #{_lambda_.1} parent=75 // pred_check
        %p6982 = pneg %p342
      $region78: #{_lambda_.1} parent=75 // pred_check_branch
        %6984 = sbr.rel (%p6982) target = $region80
      $region79: #{_lambda_.1} parent=75 // pred_region
        _
      $region80: #{_lambda_.1} parent=75 // pred_fallthru
        _
    $region76: #{_lambda_.1} parent=5 // pred_fallthru
      _
    %p6985 = scmp.le.s32.totalorder 2, %s20
    // Predicated region
    $region81: #{_lambda_.1} parent=5 // pred_check
      %p6986 = pneg %p6985
    $region82: #{_lambda_.1} parent=5 // pred_check_branch
      %6988 = sbr.rel (%p6986) target = $region84
    $region83: #{_lambda_.1} parent=5 // pred_region
      %s6989 = ssub.s32 %s20, 2
      // Predicated region
      $region85: #{_lambda_.1} parent=83 // pred_check
        %p6990 = pneg %p348
      $region86: #{_lambda_.1} parent=83 // pred_check_branch
        %6992 = sbr.rel (%p6990) target = $region88
      $region87: #{_lambda_.1} parent=83 // pred_region
        %p6993 = scmp.lt.s32.totalorder %s26, 1
        %s6994 = scalar_select %p6993, %s26, 1
        %s6995 = smul.addr %s6994, 4
        %s6996 = smul.addr %s6995, 8
        %s6997 = scalar_lea.vmem %s14, %s6996
      $region88: #{_lambda_.1} parent=83 // pred_fallthru
        _
    $region84: #{_lambda_.1} parent=5 // pred_fallthru
      _
  $region6: #{_lambda_.1} parent=0 // loop_footer
    %s24 = sadd.s32 1, %s20
  $region7: #{_lambda_.1} parent=0 // loop_footer_branch
    %19 = sbr.rel target = $region3
  $region8: #{_lambda_.1} parent=0 // loop_exit
    _

</llo_original>
